<compile_context>
chip_gen: v5e
topology: v5e:2x2
jax: 0.10.0
libtpu: 0.0.40
codegen_flags: <defaults>
</compile_context>

<pallas_src>
import functools

import jax
import jax.numpy as jnp
from jax.experimental import pallas as pl
from jax.experimental.pallas import tpu as pltpu

_BN_EPS = 1e-5
_ACT_DTYPE = jnp.bfloat16   # MXU operand dtype; accumulation stays in f32.


def _vmem_limit(*byte_counts):
    """Double-buffered block bytes + headroom, clamped to a safe scoped range."""
    est = 2 * sum(int(b) for b in byte_counts)
    return int(min(max(4 * est, 16 * 1024 * 1024), 48 * 1024 * 1024))


# ----------------------------------------------------------------------------
# Pallas kernels.
# ----------------------------------------------------------------------------
def _deconv2x2_row_kernel(x_ref, w_ref, shift_ref, o_ref):
    """One input row of ConvTranspose2d(k=2, s=2) + folded BN + ReLU.

    x_ref:     (1, 1, W, Cin)        bf16 input row
    w_ref:     (2, Cin, 2*Cout)      w[a][ic, b*Cout + oc], BN scale folded
    shift_ref: (1, 2*Cout)           f32 folded bias/BN shift
    o_ref:     (1, 2, W, 2*Cout)     output viewed as (N, 2H, W, 2*Cout)
    """
    x = x_ref[0, 0]                                   # (W, Cin)
    shift = shift_ref[...]                            # (1, 2*Cout)
    for a in range(2):                                # output sub-row 2h + a
        y = jnp.dot(x, w_ref[a], preferred_element_type=jnp.float32)
        y = jnp.maximum(y + shift, 0.0)
        o_ref[0, a] = y.astype(o_ref.dtype)


def _conv3x3_row_kernel(r0_ref, r1_ref, r2_ref, w_ref, shift_ref, o_ref, *,
                        width, relu):
    """One output row of Conv2d(k=3, s=1, pad=1) with im2col fused in-kernel.

    r{0,1,2}_ref: (1, 1, width+2, Cin)  padded input rows y, y+1, y+2
    w_ref:        (9, Cin, Cout)        tap-major, BN scale folded
    shift_ref:    (1, Cout)             f32 folded bias/BN shift
    o_ref:        (1, 1, width, Cout)
    """
    rows = (r0_ref, r1_ref, r2_ref)
    cout = w_ref.shape[-1]
    acc = jnp.zeros((width, cout), jnp.float32)
    for dy in range(3):
        for dx in range(3):
            xs = rows[dy][0, 0, dx:dx + width, :]          # (width, Cin)
            acc = acc + jnp.dot(xs, w_ref[3 * dy + dx],
                                preferred_element_type=jnp.float32)
    y = acc + shift_ref[...]
    if relu:
        y = jnp.maximum(y, 0.0)
    o_ref[0, 0] = y.astype(o_ref.dtype)


# ----------------------------------------------------------------------------
# Layer wrappers.
# ----------------------------------------------------------------------------
def deconv_bn_relu(x_nhwc, p):
    """ConvTranspose2d(2, 2) + BN(eval) + ReLU; pixel-shuffle fused in-kernel."""
    n, h, w, cin = x_nhwc.shape
    two_cout = p["w2"].shape[-1]
    cout = two_cout // 2
    bytes_io = (w * cin + 2 * w * two_cout) * 2
    bytes_w = 2 * cin * two_cout * 2 + two_cout * 4
    out = pl.pallas_call(
        _deconv2x2_row_kernel,
        out_shape=jax.ShapeDtypeStruct((n, 2 * h, w, two_cout), _ACT_DTYPE),
        grid_spec=pltpu.PrefetchScalarGridSpec(
            num_scalar_prefetch=0,
            grid=(n, h),
            in_specs=[
                pl.BlockSpec((1, 1, w, cin), lambda i, j: (i, j, 0, 0)),
                pl.BlockSpec((2, cin, two_cout), lambda i, j: (0, 0, 0)),
                pl.BlockSpec((1, two_cout), lambda i, j: (0, 0)),
            ],
            out_specs=pl.BlockSpec((1, 2, w, two_cout),
                                   lambda i, j: (i, j, 0, 0)),
        ),
        compiler_params=pltpu.CompilerParams(
            dimension_semantics=("parallel", "parallel"),
            vmem_limit_bytes=_vmem_limit(bytes_io, bytes_w),
        ),
    )(x_nhwc, p["w2"], p["shift2"])
    # (n, 2h, w, 2*cout) is the NHWC upsampled image with the minor (2w, cout)
    # dims merged -- this reshape is a free contiguous view (no transpose).
    return out.reshape(n, 2 * h, 2 * w, cout)


def conv3x3(x_nhwc, p, *, relu, out_dtype=_ACT_DTYPE):
    """Conv2d(k=3, s=1, pad=1) [+ BN(eval) + ReLU]; im2col fused in-kernel."""
    n, h, w, cin = x_nhwc.shape
    cout = p["w9"].shape[-1]
    xp = jnp.pad(x_nhwc, ((0, 0), (1, 1), (1, 1), (0, 0)))
    bytes_io = (3 * (w + 2) * cin * 2
                + w * cout * jnp.dtype(out_dtype).itemsize)
    bytes_w = 9 * cin * cout * 2 + cout * 4
    kernel = functools.partial(_conv3x3_row_kernel, width=w, relu=relu)

    def halo(dy):
        return pl.BlockSpec((1, 1, w + 2, cin),
                            lambda i, j, dy=dy: (i, j + dy, 0, 0))

    out = pl.pallas_call(
        kernel,
        out_shape=jax.ShapeDtypeStruct((n, h, w, cout), out_dtype),
        grid_spec=pltpu.PrefetchScalarGridSpec(
            num_scalar_prefetch=0,
            grid=(n, h),
            in_specs=[
                halo(0), halo(1), halo(2),
                pl.BlockSpec((9, cin, cout), lambda i, j: (0, 0, 0)),
                pl.BlockSpec((1, cout), lambda i, j: (0, 0)),
            ],
            out_specs=pl.BlockSpec((1, 1, w, cout), lambda i, j: (i, j, 0, 0)),
        ),
        compiler_params=pltpu.CompilerParams(
            dimension_semantics=("parallel", "parallel"),
            vmem_limit_bytes=_vmem_limit(bytes_io, bytes_w),
        ),
    )(xp, xp, xp, p["w9"], p["shift"])
    return out


# ----------------------------------------------------------------------------
# One-time parameter preparation (BN fold + bf16 cast), hoisted out of forward.
# ----------------------------------------------------------------------------
def _prepare_deconv(raw):
    scale = raw["gamma"] / jnp.sqrt(raw["var"] + _BN_EPS)
    shift = raw["beta"] + (raw["b"] - raw["mean"]) * scale
    cin, cout = raw["w"].shape[0], raw["w"].shape[1]
    # (Cin, Cout, kh, kw) -> (kh, Cin, kw, Cout), fold BN scale, flatten (kw,Cout).
    wt = jnp.transpose(raw["w"], (2, 0, 3, 1)) * scale
    return dict(
        w2=wt.reshape(2, cin, 2 * cout).astype(_ACT_DTYPE),
        shift2=jnp.tile(shift, 2)[None, :].astype(jnp.float32),
    )


def _prepare_conv(raw, *, bn):
    cout, cin = raw["w"].shape[0], raw["w"].shape[1]
    if bn:
        scale = raw["gamma"] / jnp.sqrt(raw["var"] + _BN_EPS)
        shift = raw["beta"] + (raw["b"] - raw["mean"]) * scale
    else:
        scale = jnp.ones((cout,), jnp.float32)
        shift = raw["b"]
    # (Cout, Cin, kh, kw) -> (kh, kw, Cin, Cout), fold BN scale, tap-major.
    wt = jnp.transpose(raw["w"], (2, 3, 1, 0)) * scale
    return dict(
        w9=wt.reshape(9, cin, cout).astype(_ACT_DTYPE),
        shift=shift[None, :].astype(jnp.float32),
    )


def prepare_params(raw):
    blocks = [dict(deconv=_prepare_deconv(b["deconv"]),
                   conv=_prepare_conv(b["conv"], bn=True))
              for b in raw["blocks"]]
    return dict(blocks=blocks, final=_prepare_conv(raw["final"], bn=False))


# ----------------------------------------------------------------------------
# Deterministic parameter init (PyTorch layouts + BN running stats) + forward.
# ----------------------------------------------------------------------------
def _init_deconv(key, cin, cout):
    k1, k2, k3, k4 = jax.random.split(key, 4)
    return dict(
        w=0.1 * jax.random.normal(k1, (cin, cout, 2, 2), jnp.float32),
        b=0.1 * jax.random.normal(k2, (cout,), jnp.float32),
        gamma=1.0 + 0.1 * jax.random.normal(k3, (cout,), jnp.float32),
        beta=0.1 * jax.random.normal(k4, (cout,), jnp.float32),
        mean=jnp.zeros((cout,), jnp.float32),
        var=jnp.ones((cout,), jnp.float32),
    )


def _init_conv(key, cin, cout, bn=True):
    k1, k2, k3, k4 = jax.random.split(key, 4)
    p = dict(
        w=0.1 * jax.random.normal(k1, (cout, cin, 3, 3), jnp.float32),
        b=0.1 * jax.random.normal(k2, (cout,), jnp.float32),
    )
    if bn:
        p.update(
            gamma=1.0 + 0.1 * jax.random.normal(k3, (cout,), jnp.float32),
            beta=0.1 * jax.random.normal(k4, (cout,), jnp.float32),
            mean=jnp.zeros((cout,), jnp.float32),
            var=jnp.ones((cout,), jnp.float32),
        )
    return p


def init_decoder(key, channels):
    channels = list(channels)
    channels.append(channels[-1] // 2)
    n_blocks = len(channels)
    keys = jax.random.split(key, 2 * n_blocks + 1)
    blocks = []
    ch = channels[0]
    blocks.append(dict(deconv=_init_deconv(keys[0], ch, ch),
                       conv=_init_conv(keys[1], ch, ch)))
    ki = 2
    for i in range(len(channels) - 1):
        in_ch, out_ch = channels[i], channels[i + 1]
        blocks.append(dict(deconv=_init_deconv(keys[ki], in_ch, out_ch),
                           conv=_init_conv(keys[ki + 1], out_ch, out_ch)))
        ki += 2
    # (the PyTorch `len(channels) < 4` truncation does not trigger here)
    final = _init_conv(keys[ki], channels[-1], 1, bn=False)
    return dict(blocks=blocks, final=final)


@jax.jit
def decoder_forward(x_nchw, prep):
    x = jnp.transpose(x_nchw, (0, 2, 3, 1)).astype(_ACT_DTYPE)   # NCHW -> NHWC
    for blk in prep["blocks"]:
        x = deconv_bn_relu(x, blk["deconv"])
        x = conv3x3(x, blk["conv"], relu=True)
    y = conv3x3(x, prep["final"], relu=False, out_dtype=jnp.float32)
    return jnp.transpose(y, (0, 3, 1, 2))                         # NHWC -> NCHW


if __name__ == "__main__":
    key = jax.random.PRNGKey(0)
    channels = [16, 8, 8, 4]                 # small analogue of [512,256,128,64]
    pkey, xkey = jax.random.split(key)
    raw_params = init_decoder(pkey, channels)
    prep_params = prepare_params(raw_params)           # one-time BN fold / bf16
    x = jax.random.normal(xkey, (2, channels[0], 4, 4), jnp.float32)  # NCHW
    y = decoder_forward(x, prep_params)
    jax.block_until_ready(y)
    assert y.shape == (2, 1, 128, 128), y.shape         # 5 upsamplings: 4 * 2**5
    assert y.dtype == jnp.float32
    print("KERNEL_OK")
</pallas_src>

<mosaic_0001>
module attributes {stable_mosaic.version = 11 : i64} {
  func.func @_deconv2x2_row_kernel(%arg0: i32, %arg1: i32, %arg2: memref<1x1x4x16xbf16, #tpu.memory_space<vmem>>, %arg3: memref<2x16x32xbf16, #tpu.memory_space<vmem>>, %arg4: memref<1x32xf32, #tpu.memory_space<vmem>>, %arg5: memref<1x2x4x32xbf16, #tpu.memory_space<vmem>>) attributes {dimension_semantics = [#tpu.dimension_semantics<parallel>, #tpu.dimension_semantics<parallel>], iteration_bounds = array<i64: 2, 4>, scalar_prefetch = 0 : i64, scratch_operands = 0 : i64, tpu.core_type = #tpu.core_type<tc>, window_params = [{transform_indices = @transform_0, window_bounds = array<i64: 1, 1, 4, 16>}, {pipeline_mode = #tpu.pipeline_mode<synchronous>, transform_indices = @transform_1, window_bounds = array<i64: 2, 16, 32>}, {pipeline_mode = #tpu.pipeline_mode<synchronous>, transform_indices = @transform_2, window_bounds = array<i64: 1, 32>}, {transform_indices = @transform_3, window_bounds = array<i64: 1, 2, 4, 32>}]} {
    %c0 = arith.constant 0 : index
    %c0_0 = arith.constant 0 : index
    %c0_1 = arith.constant 0 : index
    %c0_2 = arith.constant 0 : index
    %0 = vector.load %arg2[%c0, %c0_0, %c0_1, %c0_2] : memref<1x1x4x16xbf16, #tpu.memory_space<vmem>>, vector<1x1x4x16xbf16>
    %1 = vector.shape_cast %0 : vector<1x1x4x16xbf16> to vector<4x16xbf16>
    %c0_3 = arith.constant 0 : index
    %c0_4 = arith.constant 0 : index
    %2 = vector.load %arg4[%c0_3, %c0_4] : memref<1x32xf32, #tpu.memory_space<vmem>>, vector<1x32xf32>
    %c0_5 = arith.constant 0 : index
    %c0_6 = arith.constant 0 : index
    %c0_7 = arith.constant 0 : index
    %3 = vector.load %arg3[%c0_5, %c0_6, %c0_7] : memref<2x16x32xbf16, #tpu.memory_space<vmem>>, vector<1x16x32xbf16>
    %4 = vector.shape_cast %3 : vector<1x16x32xbf16> to vector<16x32xbf16>
    %cst = arith.constant dense<0.000000e+00> : vector<4x32xf32>
    %5 = tpu.matmul %1, %4, %cst {dimension_numbers = #tpu.dot_dimension_numbers<[1], [0], [0], [1], [0, 0, 1, 1], [], []>} : vector<4x16xbf16>, vector<16x32xbf16>, vector<4x32xf32> -> vector<4x32xf32>
    %6 = vector.broadcast %2 : vector<1x32xf32> to vector<4x32xf32>
    %7 = arith.addf %5, %6 : vector<4x32xf32>
    %cst_8 = arith.constant 0.000000e+00 : f32
    %8 = vector.broadcast %cst_8 : f32 to vector<4x32xf32>
    %9 = arith.maximumf %7, %8 : vector<4x32xf32>
    %10 = arith.truncf %9 : vector<4x32xf32> to vector<4x32xbf16>
    %c0_9 = arith.constant 0 : index
    %c0_10 = arith.constant 0 : index
    %c0_11 = arith.constant 0 : index
    %c0_12 = arith.constant 0 : index
    %11 = vector.load %arg5[%c0_9, %c0_10, %c0_11, %c0_12] : memref<1x2x4x32xbf16, #tpu.memory_space<vmem>>, vector<1x1x4x32xbf16>
    %12 = vector.shape_cast %11 : vector<1x1x4x32xbf16> to vector<4x32xbf16>
    %13 = vector.shape_cast %10 : vector<4x32xbf16> to vector<1x1x4x32xbf16>
    tpu.vector_store %arg5[%c0_9, %c0_10, %c0_11, %c0_12], %13 {strides = array<i32>} : memref<1x2x4x32xbf16, #tpu.memory_space<vmem>>, vector<1x1x4x32xbf16>,
    %c1 = arith.constant 1 : index
    %c0_13 = arith.constant 0 : index
    %c0_14 = arith.constant 0 : index
    %14 = vector.load %arg3[%c1, %c0_13, %c0_14] : memref<2x16x32xbf16, #tpu.memory_space<vmem>>, vector<1x16x32xbf16>
    %15 = vector.shape_cast %14 : vector<1x16x32xbf16> to vector<16x32xbf16>
    %cst_15 = arith.constant dense<0.000000e+00> : vector<4x32xf32>
    %16 = tpu.matmul %1, %15, %cst_15 {dimension_numbers = #tpu.dot_dimension_numbers<[1], [0], [0], [1], [0, 0, 1, 1], [], []>} : vector<4x16xbf16>, vector<16x32xbf16>, vector<4x32xf32> -> vector<4x32xf32>
    %17 = vector.broadcast %2 : vector<1x32xf32> to vector<4x32xf32>
    %18 = arith.addf %16, %17 : vector<4x32xf32>
    %cst_16 = arith.constant 0.000000e+00 : f32
    %19 = vector.broadcast %cst_16 : f32 to vector<4x32xf32>
    %20 = arith.maximumf %18, %19 : vector<4x32xf32>
    %21 = arith.truncf %20 : vector<4x32xf32> to vector<4x32xbf16>
    %c0_17 = arith.constant 0 : index
    %c1_18 = arith.constant 1 : index
    %c0_19 = arith.constant 0 : index
    %c0_20 = arith.constant 0 : index
    %22 = vector.load %arg5[%c0_17, %c1_18, %c0_19, %c0_20] : memref<1x2x4x32xbf16, #tpu.memory_space<vmem>>, vector<1x1x4x32xbf16>
    %23 = vector.shape_cast %22 : vector<1x1x4x32xbf16> to vector<4x32xbf16>
    %24 = vector.shape_cast %21 : vector<4x32xbf16> to vector<1x1x4x32xbf16>
    tpu.vector_store %arg5[%c0_17, %c1_18, %c0_19, %c0_20], %24 {strides = array<i32>} : memref<1x2x4x32xbf16, #tpu.memory_space<vmem>>, vector<1x1x4x32xbf16>,
    return
  }
  func.func @transform_0(%arg0: i32, %arg1: i32) -> (i32, i32, i32, i32) {
    %c0_i32 = arith.constant 0 : i32
    %c0_i32_0 = arith.constant 0 : i32
    %c0_i32_1 = arith.constant 0 : i32
    return %arg0, %arg1, %c0_i32, %c0_i32_0 : i32, i32, i32, i32
  }
  func.func @transform_1(%arg0: i32, %arg1: i32) -> (i32, i32, i32) {
    %c0_i32 = arith.constant 0 : i32
    %c0_i32_0 = arith.constant 0 : i32
    %c0_i32_1 = arith.constant 0 : i32
    %c0_i32_2 = arith.constant 0 : i32
    return %c0_i32, %c0_i32_0, %c0_i32_1 : i32, i32, i32
  }
  func.func @transform_2(%arg0: i32, %arg1: i32) -> (i32, i32) {
    %c0_i32 = arith.constant 0 : i32
    %c0_i32_0 = arith.constant 0 : i32
    %c0_i32_1 = arith.constant 0 : i32
    return %c0_i32, %c0_i32_0 : i32, i32
  }
  func.func @transform_3(%arg0: i32, %arg1: i32) -> (i32, i32, i32, i32) {
    %c0_i32 = arith.constant 0 : i32
    %c0_i32_0 = arith.constant 0 : i32
    %c0_i32_1 = arith.constant 0 : i32
    return %arg0, %arg1, %c0_i32, %c0_i32_0 : i32, i32, i32, i32
  }
}

module attributes {stable_mosaic.version = 11 : i64} {
  func.func @_conv3x3_row_kernel(%arg0: i32, %arg1: i32, %arg2: memref<1x1x10x16xbf16, #tpu.memory_space<vmem>>, %arg3: memref<1x1x10x16xbf16, #tpu.memory_space<vmem>>, %arg4: memref<1x1x10x16xbf16, #tpu.memory_space<vmem>>, %arg5: memref<9x16x16xbf16, #tpu.memory_space<vmem>>, %arg6: memref<1x16xf32, #tpu.memory_space<vmem>>, %arg7: memref<1x1x8x16xbf16, #tpu.memory_space<vmem>>) attributes {dimension_semantics = [#tpu.dimension_semantics<parallel>, #tpu.dimension_semantics<parallel>], iteration_bounds = array<i64: 2, 8>, scalar_prefetch = 0 : i64, scratch_operands = 0 : i64, tpu.core_type = #tpu.core_type<tc>, window_params = [{transform_indices = @transform_0, window_bounds = array<i64: 1, 1, 10, 16>}, {transform_indices = @transform_1, window_bounds = array<i64: 1, 1, 10, 16>}, {transform_indices = @transform_2, window_bounds = array<i64: 1, 1, 10, 16>}, {pipeline_mode = #tpu.pipeline_mode<synchronous>, transform_indices = @transform_3, window_bounds = array<i64: 9, 16, 16>}, {pipeline_mode = #tpu.pipeline_mode<synchronous>, transform_indices = @transform_4, window_bounds = array<i64: 1, 16>}, {transform_indices = @transform_5, window_bounds = array<i64: 1, 1, 8, 16>}]} {
    %cst = arith.constant 0.000000e+00 : f32
    %0 = vector.broadcast %cst : f32 to vector<8x16xf32>
    %c0 = arith.constant 0 : index
    %c0_0 = arith.constant 0 : index
    %c0_1 = arith.constant 0 : index
    %c0_2 = arith.constant 0 : index
    %1 = vector.load %arg2[%c0, %c0_0, %c0_1, %c0_2] : memref<1x1x10x16xbf16, #tpu.memory_space<vmem>>, vector<1x1x8x16xbf16>
    %2 = vector.shape_cast %1 : vector<1x1x8x16xbf16> to vector<8x16xbf16>
    %c0_3 = arith.constant 0 : index
    %c0_4 = arith.constant 0 : index
    %c0_5 = arith.constant 0 : index
    %3 = vector.load %arg5[%c0_3, %c0_4, %c0_5] : memref<9x16x16xbf16, #tpu.memory_space<vmem>>, vector<1x16x16xbf16>
    %4 = vector.shape_cast %3 : vector<1x16x16xbf16> to vector<16x16xbf16>
    %cst_6 = arith.constant dense<0.000000e+00> : vector<8x16xf32>
    %5 = tpu.matmul %2, %4, %cst_6 {dimension_numbers = #tpu.dot_dimension_numbers<[1], [0], [0], [1], [0, 0, 1, 1], [], []>} : vector<8x16xbf16>, vector<16x16xbf16>, vector<8x16xf32> -> vector<8x16xf32>
    %6 = arith.addf %0, %5 : vector<8x16xf32>
    %c0_7 = arith.constant 0 : index
    %c0_8 = arith.constant 0 : index
    %c1 = arith.constant 1 : index
    %c0_9 = arith.constant 0 : index
    %7 = vector.load %arg2[%c0_7, %c0_8, %c1, %c0_9] : memref<1x1x10x16xbf16, #tpu.memory_space<vmem>>, vector<1x1x8x16xbf16>
    %8 = vector.shape_cast %7 : vector<1x1x8x16xbf16> to vector<8x16xbf16>
    %c1_10 = arith.constant 1 : index
    %c0_11 = arith.constant 0 : index
    %c0_12 = arith.constant 0 : index
    %9 = vector.load %arg5[%c1_10, %c0_11, %c0_12] : memref<9x16x16xbf16, #tpu.memory_space<vmem>>, vector<1x16x16xbf16>
    %10 = vector.shape_cast %9 : vector<1x16x16xbf16> to vector<16x16xbf16>
    %cst_13 = arith.constant dense<0.000000e+00> : vector<8x16xf32>
    %11 = tpu.matmul %8, %10, %cst_13 {dimension_numbers = #tpu.dot_dimension_numbers<[1], [0], [0], [1], [0, 0, 1, 1], [], []>} : vector<8x16xbf16>, vector<16x16xbf16>, vector<8x16xf32> -> vector<8x16xf32>
    %12 = arith.addf %6, %11 : vector<8x16xf32>
    %c0_14 = arith.constant 0 : index
    %c0_15 = arith.constant 0 : index
    %c2 = arith.constant 2 : index
    %c0_16 = arith.constant 0 : index
    %13 = vector.load %arg2[%c0_14, %c0_15, %c2, %c0_16] : memref<1x1x10x16xbf16, #tpu.memory_space<vmem>>, vector<1x1x8x16xbf16>
    %14 = vector.shape_cast %13 : vector<1x1x8x16xbf16> to vector<8x16xbf16>
    %c2_17 = arith.constant 2 : index
    %c0_18 = arith.constant 0 : index
    %c0_19 = arith.constant 0 : index
    %15 = vector.load %arg5[%c2_17, %c0_18, %c0_19] : memref<9x16x16xbf16, #tpu.memory_space<vmem>>, vector<1x16x16xbf16>
    %16 = vector.shape_cast %15 : vector<1x16x16xbf16> to vector<16x16xbf16>
    %cst_20 = arith.constant dense<0.000000e+00> : vector<8x16xf32>
    %17 = tpu.matmul %14, %16, %cst_20 {dimension_numbers = #tpu.dot_dimension_numbers<[1], [0], [0], [1], [0, 0, 1, 1], [], []>} : vector<8x16xbf16>, vector<16x16xbf16>, vector<8x16xf32> -> vector<8x16xf32>
    %18 = arith.addf %12, %17 : vector<8x16xf32>
    %c0_21 = arith.constant 0 : index
    %c0_22 = arith.constant 0 : index
    %c0_23 = arith.constant 0 : index
    %c0_24 = arith.constant 0 : index
    %19 = vector.load %arg3[%c0_21, %c0_22, %c0_23, %c0_24] : memref<1x1x10x16xbf16, #tpu.memory_space<vmem>>, vector<1x1x8x16xbf16>
    %20 = vector.shape_cast %19 : vector<1x1x8x16xbf16> to vector<8x16xbf16>
    %c3 = arith.constant 3 : index
    %c0_25 = arith.constant 0 : index
    %c0_26 = arith.constant 0 : index
    %21 = vector.load %arg5[%c3, %c0_25, %c0_26] : memref<9x16x16xbf16, #tpu.memory_space<vmem>>, vector<1x16x16xbf16>
    %22 = vector.shape_cast %21 : vector<1x16x16xbf16> to vector<16x16xbf16>
    %cst_27 = arith.constant dense<0.000000e+00> : vector<8x16xf32>
    %23 = tpu.matmul %20, %22, %cst_27 {dimension_numbers = #tpu.dot_dimension_numbers<[1], [0], [0], [1], [0, 0, 1, 1], [], []>} : vector<8x16xbf16>, vector<16x16xbf16>, vector<8x16xf32> -> vector<8x16xf32>
    %24 = arith.addf %18, %23 : vector<8x16xf32>
    %c0_28 = arith.constant 0 : index
    %c0_29 = arith.constant 0 : index
    %c1_30 = arith.constant 1 : index
    %c0_31 = arith.constant 0 : index
    %25 = vector.load %arg3[%c0_28, %c0_29, %c1_30, %c0_31] : memref<1x1x10x16xbf16, #tpu.memory_space<vmem>>, vector<1x1x8x16xbf16>
    %26 = vector.shape_cast %25 : vector<1x1x8x16xbf16> to vector<8x16xbf16>
    %c4 = arith.constant 4 : index
    %c0_32 = arith.constant 0 : index
    %c0_33 = arith.constant 0 : index
    %27 = vector.load %arg5[%c4, %c0_32, %c0_33] : memref<9x16x16xbf16, #tpu.memory_space<vmem>>, vector<1x16x16xbf16>
    %28 = vector.shape_cast %27 : vector<1x16x16xbf16> to vector<16x16xbf16>
    %cst_34 = arith.constant dense<0.000000e+00> : vector<8x16xf32>
    %29 = tpu.matmul %26, %28, %cst_34 {dimension_numbers = #tpu.dot_dimension_numbers<[1], [0], [0], [1], [0, 0, 1, 1], [], []>} : vector<8x16xbf16>, vector<16x16xbf16>, vector<8x16xf32> -> vector<8x16xf32>
    %30 = arith.addf %24, %29 : vector<8x16xf32>
    %c0_35 = arith.constant 0 : index
    %c0_36 = arith.constant 0 : index
    %c2_37 = arith.constant 2 : index
    %c0_38 = arith.constant 0 : index
    %31 = vector.load %arg3[%c0_35, %c0_36, %c2_37, %c0_38] : memref<1x1x10x16xbf16, #tpu.memory_space<vmem>>, vector<1x1x8x16xbf16>
    %32 = vector.shape_cast %31 : vector<1x1x8x16xbf16> to vector<8x16xbf16>
    %c5 = arith.constant 5 : index
    %c0_39 = arith.constant 0 : index
    %c0_40 = arith.constant 0 : index
    %33 = vector.load %arg5[%c5, %c0_39, %c0_40] : memref<9x16x16xbf16, #tpu.memory_space<vmem>>, vector<1x16x16xbf16>
    %34 = vector.shape_cast %33 : vector<1x16x16xbf16> to vector<16x16xbf16>
    %cst_41 = arith.constant dense<0.000000e+00> : vector<8x16xf32>
    %35 = tpu.matmul %32, %34, %cst_41 {dimension_numbers = #tpu.dot_dimension_numbers<[1], [0], [0], [1], [0, 0, 1, 1], [], []>} : vector<8x16xbf16>, vector<16x16xbf16>, vector<8x16xf32> -> vector<8x16xf32>
    %36 = arith.addf %30, %35 : vector<8x16xf32>
    %c0_42 = arith.constant 0 : index
    %c0_43 = arith.constant 0 : index
    %c0_44 = arith.constant 0 : index
    %c0_45 = arith.constant 0 : index
    %37 = vector.load %arg4[%c0_42, %c0_43, %c0_44, %c0_45] : memref<1x1x10x16xbf16, #tpu.memory_space<vmem>>, vector<1x1x8x16xbf16>
    %38 = vector.shape_cast %37 : vector<1x1x8x16xbf16> to vector<8x16xbf16>
    %c6 = arith.constant 6 : index
    %c0_46 = arith.constant 0 : index
    %c0_47 = arith.constant 0 : index
    %39 = vector.load %arg5[%c6, %c0_46, %c0_47] : memref<9x16x16xbf16, #tpu.memory_space<vmem>>, vector<1x16x16xbf16>
    %40 = vector.shape_cast %39 : vector<1x16x16xbf16> to vector<16x16xbf16>
    %cst_48 = arith.constant dense<0.000000e+00> : vector<8x16xf32>
    %41 = tpu.matmul %38, %40, %cst_48 {dimension_numbers = #tpu.dot_dimension_numbers<[1], [0], [0], [1], [0, 0, 1, 1], [], []>} : vector<8x16xbf16>, vector<16x16xbf16>, vector<8x16xf32> -> vector<8x16xf32>
    %42 = arith.addf %36, %41 : vector<8x16xf32>
    %c0_49 = arith.constant 0 : index
    %c0_50 = arith.constant 0 : index
    %c1_51 = arith.constant 1 : index
    %c0_52 = arith.constant 0 : index
    %43 = vector.load %arg4[%c0_49, %c0_50, %c1_51, %c0_52] : memref<1x1x10x16xbf16, #tpu.memory_space<vmem>>, vector<1x1x8x16xbf16>
    %44 = vector.shape_cast %43 : vector<1x1x8x16xbf16> to vector<8x16xbf16>
    %c7 = arith.constant 7 : index
    %c0_53 = arith.constant 0 : index
    %c0_54 = arith.constant 0 : index
    %45 = vector.load %arg5[%c7, %c0_53, %c0_54] : memref<9x16x16xbf16, #tpu.memory_space<vmem>>, vector<1x16x16xbf16>
    %46 = vector.shape_cast %45 : vector<1x16x16xbf16> to vector<16x16xbf16>
    %cst_55 = arith.constant dense<0.000000e+00> : vector<8x16xf32>
    %47 = tpu.matmul %44, %46, %cst_55 {dimension_numbers = #tpu.dot_dimension_numbers<[1], [0], [0], [1], [0, 0, 1, 1], [], []>} : vector<8x16xbf16>, vector<16x16xbf16>, vector<8x16xf32> -> vector<8x16xf32>
    %48 = arith.addf %42, %47 : vector<8x16xf32>
    %c0_56 = arith.constant 0 : index
    %c0_57 = arith.constant 0 : index
    %c2_58 = arith.constant 2 : index
    %c0_59 = arith.constant 0 : index
    %49 = vector.load %arg4[%c0_56, %c0_57, %c2_58, %c0_59] : memref<1x1x10x16xbf16, #tpu.memory_space<vmem>>, vector<1x1x8x16xbf16>
    %50 = vector.shape_cast %49 : vector<1x1x8x16xbf16> to vector<8x16xbf16>
    %c8 = arith.constant 8 : index
    %c0_60 = arith.constant 0 : index
    %c0_61 = arith.constant 0 : index
    %51 = vector.load %arg5[%c8, %c0_60, %c0_61] : memref<9x16x16xbf16, #tpu.memory_space<vmem>>, vector<1x16x16xbf16>
    %52 = vector.shape_cast %51 : vector<1x16x16xbf16> to vector<16x16xbf16>
    %cst_62 = arith.constant dense<0.000000e+00> : vector<8x16xf32>
    %53 = tpu.matmul %50, %52, %cst_62 {dimension_numbers = #tpu.dot_dimension_numbers<[1], [0], [0], [1], [0, 0, 1, 1], [], []>} : vector<8x16xbf16>, vector<16x16xbf16>, vector<8x16xf32> -> vector<8x16xf32>
    %54 = arith.addf %48, %53 : vector<8x16xf32>
    %c0_63 = arith.constant 0 : index
    %c0_64 = arith.constant 0 : index
    %55 = vector.load %arg6[%c0_63, %c0_64] : memref<1x16xf32, #tpu.memory_space<vmem>>, vector<1x16xf32>
    %56 = vector.broadcast %55 : vector<1x16xf32> to vector<8x16xf32>
    %57 = arith.addf %54, %56 : vector<8x16xf32>
    %cst_65 = arith.constant 0.000000e+00 : f32
    %58 = vector.broadcast %cst_65 : f32 to vector<8x16xf32>
    %59 = arith.maximumf %57, %58 : vector<8x16xf32>
    %60 = arith.truncf %59 : vector<8x16xf32> to vector<8x16xbf16>
    %c0_66 = arith.constant 0 : index
    %c0_67 = arith.constant 0 : index
    %c0_68 = arith.constant 0 : index
    %c0_69 = arith.constant 0 : index
    %61 = vector.load %arg7[%c0_66, %c0_67, %c0_68, %c0_69] : memref<1x1x8x16xbf16, #tpu.memory_space<vmem>>, vector<1x1x8x16xbf16>
    %62 = vector.shape_cast %61 : vector<1x1x8x16xbf16> to vector<8x16xbf16>
    %63 = vector.shape_cast %60 : vector<8x16xbf16> to vector<1x1x8x16xbf16>
    tpu.vector_store %arg7[%c0_66, %c0_67, %c0_68, %c0_69], %63 {strides = array<i32>} : memref<1x1x8x16xbf16, #tpu.memory_space<vmem>>, vector<1x1x8x16xbf16>,
    return
  }
  func.func @transform_0(%arg0: i32, %arg1: i32) -> (i32, i32, i32, i32) {
    %c0_i32 = arith.constant 0 : i32
    %0 = arith.addi %arg1, %c0_i32 : i32
    %c0_i32_0 = arith.constant 0 : i32
    %c0_i32_1 = arith.constant 0 : i32
    %c0_i32_2 = arith.constant 0 : i32
    return %arg0, %0, %c0_i32_0, %c0_i32_1 : i32, i32, i32, i32
  }
  func.func @transform_1(%arg0: i32, %arg1: i32) -> (i32, i32, i32, i32) {
    %c1_i32 = arith.constant 1 : i32
    %0 = arith.addi %arg1, %c1_i32 : i32
    %c0_i32 = arith.constant 0 : i32
    %c0_i32_0 = arith.constant 0 : i32
    %c0_i32_1 = arith.constant 0 : i32
    return %arg0, %0, %c0_i32, %c0_i32_0 : i32, i32, i32, i32
  }
  func.func @transform_2(%arg0: i32, %arg1: i32) -> (i32, i32, i32, i32) {
    %c2_i32 = arith.constant 2 : i32
    %0 = arith.addi %arg1, %c2_i32 : i32
    %c0_i32 = arith.constant 0 : i32
    %c0_i32_0 = arith.constant 0 : i32
    %c0_i32_1 = arith.constant 0 : i32
    return %arg0, %0, %c0_i32, %c0_i32_0 : i32, i32, i32, i32
  }
  func.func @transform_3(%arg0: i32, %arg1: i32) -> (i32, i32, i32) {
    %c0_i32 = arith.constant 0 : i32
    %c0_i32_0 = arith.constant 0 : i32
    %c0_i32_1 = arith.constant 0 : i32
    %c0_i32_2 = arith.constant 0 : i32
    return %c0_i32, %c0_i32_0, %c0_i32_1 : i32, i32, i32
  }
  func.func @transform_4(%arg0: i32, %arg1: i32) -> (i32, i32) {
    %c0_i32 = arith.constant 0 : i32
    %c0_i32_0 = arith.constant 0 : i32
    %c0_i32_1 = arith.constant 0 : i32
    return %c0_i32, %c0_i32_0 : i32, i32
  }
  func.func @transform_5(%arg0: i32, %arg1: i32) -> (i32, i32, i32, i32) {
    %c0_i32 = arith.constant 0 : i32
    %c0_i32_0 = arith.constant 0 : i32
    %c0_i32_1 = arith.constant 0 : i32
    return %arg0, %arg1, %c0_i32, %c0_i32_0 : i32, i32, i32, i32
  }
}

module attributes {stable_mosaic.version = 11 : i64} {
  func.func @_deconv2x2_row_kernel(%arg0: i32, %arg1: i32, %arg2: memref<1x1x8x16xbf16, #tpu.memory_space<vmem>>, %arg3: memref<2x16x16xbf16, #tpu.memory_space<vmem>>, %arg4: memref<1x16xf32, #tpu.memory_space<vmem>>, %arg5: memref<1x2x8x16xbf16, #tpu.memory_space<vmem>>) attributes {dimension_semantics = [#tpu.dimension_semantics<parallel>, #tpu.dimension_semantics<parallel>], iteration_bounds = array<i64: 2, 8>, scalar_prefetch = 0 : i64, scratch_operands = 0 : i64, tpu.core_type = #tpu.core_type<tc>, window_params = [{transform_indices = @transform_0, window_bounds = array<i64: 1, 1, 8, 16>}, {pipeline_mode = #tpu.pipeline_mode<synchronous>, transform_indices = @transform_1, window_bounds = array<i64: 2, 16, 16>}, {pipeline_mode = #tpu.pipeline_mode<synchronous>, transform_indices = @transform_2, window_bounds = array<i64: 1, 16>}, {transform_indices = @transform_3, window_bounds = array<i64: 1, 2, 8, 16>}]} {
    %c0 = arith.constant 0 : index
    %c0_0 = arith.constant 0 : index
    %c0_1 = arith.constant 0 : index
    %c0_2 = arith.constant 0 : index
    %0 = vector.load %arg2[%c0, %c0_0, %c0_1, %c0_2] : memref<1x1x8x16xbf16, #tpu.memory_space<vmem>>, vector<1x1x8x16xbf16>
    %1 = vector.shape_cast %0 : vector<1x1x8x16xbf16> to vector<8x16xbf16>
    %c0_3 = arith.constant 0 : index
    %c0_4 = arith.constant 0 : index
    %2 = vector.load %arg4[%c0_3, %c0_4] : memref<1x16xf32, #tpu.memory_space<vmem>>, vector<1x16xf32>
    %c0_5 = arith.constant 0 : index
    %c0_6 = arith.constant 0 : index
    %c0_7 = arith.constant 0 : index
    %3 = vector.load %arg3[%c0_5, %c0_6, %c0_7] : memref<2x16x16xbf16, #tpu.memory_space<vmem>>, vector<1x16x16xbf16>
    %4 = vector.shape_cast %3 : vector<1x16x16xbf16> to vector<16x16xbf16>
    %cst = arith.constant dense<0.000000e+00> : vector<8x16xf32>
    %5 = tpu.matmul %1, %4, %cst {dimension_numbers = #tpu.dot_dimension_numbers<[1], [0], [0], [1], [0, 0, 1, 1], [], []>} : vector<8x16xbf16>, vector<16x16xbf16>, vector<8x16xf32> -> vector<8x16xf32>
    %6 = vector.broadcast %2 : vector<1x16xf32> to vector<8x16xf32>
    %7 = arith.addf %5, %6 : vector<8x16xf32>
    %cst_8 = arith.constant 0.000000e+00 : f32
    %8 = vector.broadcast %cst_8 : f32 to vector<8x16xf32>
    %9 = arith.maximumf %7, %8 : vector<8x16xf32>
    %10 = arith.truncf %9 : vector<8x16xf32> to vector<8x16xbf16>
    %c0_9 = arith.constant 0 : index
    %c0_10 = arith.constant 0 : index
    %c0_11 = arith.constant 0 : index
    %c0_12 = arith.constant 0 : index
    %11 = vector.load %arg5[%c0_9, %c0_10, %c0_11, %c0_12] : memref<1x2x8x16xbf16, #tpu.memory_space<vmem>>, vector<1x1x8x16xbf16>
    %12 = vector.shape_cast %11 : vector<1x1x8x16xbf16> to vector<8x16xbf16>
    %13 = vector.shape_cast %10 : vector<8x16xbf16> to vector<1x1x8x16xbf16>
    tpu.vector_store %arg5[%c0_9, %c0_10, %c0_11, %c0_12], %13 {strides = array<i32>} : memref<1x2x8x16xbf16, #tpu.memory_space<vmem>>, vector<1x1x8x16xbf16>,
    %c1 = arith.constant 1 : index
    %c0_13 = arith.constant 0 : index
    %c0_14 = arith.constant 0 : index
    %14 = vector.load %arg3[%c1, %c0_13, %c0_14] : memref<2x16x16xbf16, #tpu.memory_space<vmem>>, vector<1x16x16xbf16>
    %15 = vector.shape_cast %14 : vector<1x16x16xbf16> to vector<16x16xbf16>
    %cst_15 = arith.constant dense<0.000000e+00> : vector<8x16xf32>
    %16 = tpu.matmul %1, %15, %cst_15 {dimension_numbers = #tpu.dot_dimension_numbers<[1], [0], [0], [1], [0, 0, 1, 1], [], []>} : vector<8x16xbf16>, vector<16x16xbf16>, vector<8x16xf32> -> vector<8x16xf32>
    %17 = vector.broadcast %2 : vector<1x16xf32> to vector<8x16xf32>
    %18 = arith.addf %16, %17 : vector<8x16xf32>
    %cst_16 = arith.constant 0.000000e+00 : f32
    %19 = vector.broadcast %cst_16 : f32 to vector<8x16xf32>
    %20 = arith.maximumf %18, %19 : vector<8x16xf32>
    %21 = arith.truncf %20 : vector<8x16xf32> to vector<8x16xbf16>
    %c0_17 = arith.constant 0 : index
    %c1_18 = arith.constant 1 : index
    %c0_19 = arith.constant 0 : index
    %c0_20 = arith.constant 0 : index
    %22 = vector.load %arg5[%c0_17, %c1_18, %c0_19, %c0_20] : memref<1x2x8x16xbf16, #tpu.memory_space<vmem>>, vector<1x1x8x16xbf16>
    %23 = vector.shape_cast %22 : vector<1x1x8x16xbf16> to vector<8x16xbf16>
    %24 = vector.shape_cast %21 : vector<8x16xbf16> to vector<1x1x8x16xbf16>
    tpu.vector_store %arg5[%c0_17, %c1_18, %c0_19, %c0_20], %24 {strides = array<i32>} : memref<1x2x8x16xbf16, #tpu.memory_space<vmem>>, vector<1x1x8x16xbf16>,
    return
  }
  func.func @transform_0(%arg0: i32, %arg1: i32) -> (i32, i32, i32, i32) {
    %c0_i32 = arith.constant 0 : i32
    %c0_i32_0 = arith.constant 0 : i32
    %c0_i32_1 = arith.constant 0 : i32
    return %arg0, %arg1, %c0_i32, %c0_i32_0 : i32, i32, i32, i32
  }
  func.func @transform_1(%arg0: i32, %arg1: i32) -> (i32, i32, i32) {
    %c0_i32 = arith.constant 0 : i32
    %c0_i32_0 = arith.constant 0 : i32
    %c0_i32_1 = arith.constant 0 : i32
    %c0_i32_2 = arith.constant 0 : i32
    return %c0_i32, %c0_i32_0, %c0_i32_1 : i32, i32, i32
  }
  func.func @transform_2(%arg0: i32, %arg1: i32) -> (i32, i32) {
    %c0_i32 = arith.constant 0 : i32
    %c0_i32_0 = arith.constant 0 : i32
    %c0_i32_1 = arith.constant 0 : i32
    return %c0_i32, %c0_i32_0 : i32, i32
  }
  func.func @transform_3(%arg0: i32, %arg1: i32) -> (i32, i32, i32, i32) {
    %c0_i32 = arith.constant 0 : i32
    %c0_i32_0 = arith.constant 0 : i32
    %c0_i32_1 = arith.constant 0 : i32
    return %arg0, %arg1, %c0_i32, %c0_i32_0 : i32, i32, i32, i32
  }
}

module attributes {stable_mosaic.version = 11 : i64} {
  func.func @_conv3x3_row_kernel(%arg0: i32, %arg1: i32, %arg2: memref<1x1x18x8xbf16, #tpu.memory_space<vmem>>, %arg3: memref<1x1x18x8xbf16, #tpu.memory_space<vmem>>, %arg4: memref<1x1x18x8xbf16, #tpu.memory_space<vmem>>, %arg5: memref<9x8x8xbf16, #tpu.memory_space<vmem>>, %arg6: memref<1x8xf32, #tpu.memory_space<vmem>>, %arg7: memref<1x1x16x8xbf16, #tpu.memory_space<vmem>>) attributes {dimension_semantics = [#tpu.dimension_semantics<parallel>, #tpu.dimension_semantics<parallel>], iteration_bounds = array<i64: 2, 16>, scalar_prefetch = 0 : i64, scratch_operands = 0 : i64, tpu.core_type = #tpu.core_type<tc>, window_params = [{transform_indices = @transform_0, window_bounds = array<i64: 1, 1, 18, 8>}, {transform_indices = @transform_1, window_bounds = array<i64: 1, 1, 18, 8>}, {transform_indices = @transform_2, window_bounds = array<i64: 1, 1, 18, 8>}, {pipeline_mode = #tpu.pipeline_mode<synchronous>, transform_indices = @transform_3, window_bounds = array<i64: 9, 8, 8>}, {pipeline_mode = #tpu.pipeline_mode<synchronous>, transform_indices = @transform_4, window_bounds = array<i64: 1, 8>}, {transform_indices = @transform_5, window_bounds = array<i64: 1, 1, 16, 8>}]} {
    %cst = arith.constant 0.000000e+00 : f32
    %0 = vector.broadcast %cst : f32 to vector<16x8xf32>
    %c0 = arith.constant 0 : index
    %c0_0 = arith.constant 0 : index
    %c0_1 = arith.constant 0 : index
    %c0_2 = arith.constant 0 : index
    %1 = vector.load %arg2[%c0, %c0_0, %c0_1, %c0_2] : memref<1x1x18x8xbf16, #tpu.memory_space<vmem>>, vector<1x1x16x8xbf16>
    %2 = vector.shape_cast %1 : vector<1x1x16x8xbf16> to vector<16x8xbf16>
    %c0_3 = arith.constant 0 : index
    %c0_4 = arith.constant 0 : index
    %c0_5 = arith.constant 0 : index
    %3 = vector.load %arg5[%c0_3, %c0_4, %c0_5] : memref<9x8x8xbf16, #tpu.memory_space<vmem>>, vector<1x8x8xbf16>
    %4 = vector.shape_cast %3 : vector<1x8x8xbf16> to vector<8x8xbf16>
    %cst_6 = arith.constant dense<0.000000e+00> : vector<16x8xf32>
    %5 = tpu.matmul %2, %4, %cst_6 {dimension_numbers = #tpu.dot_dimension_numbers<[1], [0], [0], [1], [0, 0, 1, 1], [], []>} : vector<16x8xbf16>, vector<8x8xbf16>, vector<16x8xf32> -> vector<16x8xf32>
    %6 = arith.addf %0, %5 : vector<16x8xf32>
    %c0_7 = arith.constant 0 : index
    %c0_8 = arith.constant 0 : index
    %c1 = arith.constant 1 : index
    %c0_9 = arith.constant 0 : index
    %7 = vector.load %arg2[%c0_7, %c0_8, %c1, %c0_9] : memref<1x1x18x8xbf16, #tpu.memory_space<vmem>>, vector<1x1x16x8xbf16>
    %8 = vector.shape_cast %7 : vector<1x1x16x8xbf16> to vector<16x8xbf16>
    %c1_10 = arith.constant 1 : index
    %c0_11 = arith.constant 0 : index
    %c0_12 = arith.constant 0 : index
    %9 = vector.load %arg5[%c1_10, %c0_11, %c0_12] : memref<9x8x8xbf16, #tpu.memory_space<vmem>>, vector<1x8x8xbf16>
    %10 = vector.shape_cast %9 : vector<1x8x8xbf16> to vector<8x8xbf16>
    %cst_13 = arith.constant dense<0.000000e+00> : vector<16x8xf32>
    %11 = tpu.matmul %8, %10, %cst_13 {dimension_numbers = #tpu.dot_dimension_numbers<[1], [0], [0], [1], [0, 0, 1, 1], [], []>} : vector<16x8xbf16>, vector<8x8xbf16>, vector<16x8xf32> -> vector<16x8xf32>
    %12 = arith.addf %6, %11 : vector<16x8xf32>
    %c0_14 = arith.constant 0 : index
    %c0_15 = arith.constant 0 : index
    %c2 = arith.constant 2 : index
    %c0_16 = arith.constant 0 : index
    %13 = vector.load %arg2[%c0_14, %c0_15, %c2, %c0_16] : memref<1x1x18x8xbf16, #tpu.memory_space<vmem>>, vector<1x1x16x8xbf16>
    %14 = vector.shape_cast %13 : vector<1x1x16x8xbf16> to vector<16x8xbf16>
    %c2_17 = arith.constant 2 : index
    %c0_18 = arith.constant 0 : index
    %c0_19 = arith.constant 0 : index
    %15 = vector.load %arg5[%c2_17, %c0_18, %c0_19] : memref<9x8x8xbf16, #tpu.memory_space<vmem>>, vector<1x8x8xbf16>
    %16 = vector.shape_cast %15 : vector<1x8x8xbf16> to vector<8x8xbf16>
    %cst_20 = arith.constant dense<0.000000e+00> : vector<16x8xf32>
    %17 = tpu.matmul %14, %16, %cst_20 {dimension_numbers = #tpu.dot_dimension_numbers<[1], [0], [0], [1], [0, 0, 1, 1], [], []>} : vector<16x8xbf16>, vector<8x8xbf16>, vector<16x8xf32> -> vector<16x8xf32>
    %18 = arith.addf %12, %17 : vector<16x8xf32>
    %c0_21 = arith.constant 0 : index
    %c0_22 = arith.constant 0 : index
    %c0_23 = arith.constant 0 : index
    %c0_24 = arith.constant 0 : index
    %19 = vector.load %arg3[%c0_21, %c0_22, %c0_23, %c0_24] : memref<1x1x18x8xbf16, #tpu.memory_space<vmem>>, vector<1x1x16x8xbf16>
    %20 = vector.shape_cast %19 : vector<1x1x16x8xbf16> to vector<16x8xbf16>
    %c3 = arith.constant 3 : index
    %c0_25 = arith.constant 0 : index
    %c0_26 = arith.constant 0 : index
    %21 = vector.load %arg5[%c3, %c0_25, %c0_26] : memref<9x8x8xbf16, #tpu.memory_space<vmem>>, vector<1x8x8xbf16>
    %22 = vector.shape_cast %21 : vector<1x8x8xbf16> to vector<8x8xbf16>
    %cst_27 = arith.constant dense<0.000000e+00> : vector<16x8xf32>
    %23 = tpu.matmul %20, %22, %cst_27 {dimension_numbers = #tpu.dot_dimension_numbers<[1], [0], [0], [1], [0, 0, 1, 1], [], []>} : vector<16x8xbf16>, vector<8x8xbf16>, vector<16x8xf32> -> vector<16x8xf32>
    %24 = arith.addf %18, %23 : vector<16x8xf32>
    %c0_28 = arith.constant 0 : index
    %c0_29 = arith.constant 0 : index
    %c1_30 = arith.constant 1 : index
    %c0_31 = arith.constant 0 : index
    %25 = vector.load %arg3[%c0_28, %c0_29, %c1_30, %c0_31] : memref<1x1x18x8xbf16, #tpu.memory_space<vmem>>, vector<1x1x16x8xbf16>
    %26 = vector.shape_cast %25 : vector<1x1x16x8xbf16> to vector<16x8xbf16>
    %c4 = arith.constant 4 : index
    %c0_32 = arith.constant 0 : index
    %c0_33 = arith.constant 0 : index
    %27 = vector.load %arg5[%c4, %c0_32, %c0_33] : memref<9x8x8xbf16, #tpu.memory_space<vmem>>, vector<1x8x8xbf16>
    %28 = vector.shape_cast %27 : vector<1x8x8xbf16> to vector<8x8xbf16>
    %cst_34 = arith.constant dense<0.000000e+00> : vector<16x8xf32>
    %29 = tpu.matmul %26, %28, %cst_34 {dimension_numbers = #tpu.dot_dimension_numbers<[1], [0], [0], [1], [0, 0, 1, 1], [], []>} : vector<16x8xbf16>, vector<8x8xbf16>, vector<16x8xf32> -> vector<16x8xf32>
    %30 = arith.addf %24, %29 : vector<16x8xf32>
    %c0_35 = arith.constant 0 : index
    %c0_36 = arith.constant 0 : index
    %c2_37 = arith.constant 2 : index
    %c0_38 = arith.constant 0 : index
    %31 = vector.load %arg3[%c0_35, %c0_36, %c2_37, %c0_38] : memref<1x1x18x8xbf16, #tpu.memory_space<vmem>>, vector<1x1x16x8xbf16>
    %32 = vector.shape_cast %31 : vector<1x1x16x8xbf16> to vector<16x8xbf16>
    %c5 = arith.constant 5 : index
    %c0_39 = arith.constant 0 : index
    %c0_40 = arith.constant 0 : index
    %33 = vector.load %arg5[%c5, %c0_39, %c0_40] : memref<9x8x8xbf16, #tpu.memory_space<vmem>>, vector<1x8x8xbf16>
    %34 = vector.shape_cast %33 : vector<1x8x8xbf16> to vector<8x8xbf16>
    %cst_41 = arith.constant dense<0.000000e+00> : vector<16x8xf32>
    %35 = tpu.matmul %32, %34, %cst_41 {dimension_numbers = #tpu.dot_dimension_numbers<[1], [0], [0], [1], [0, 0, 1, 1], [], []>} : vector<16x8xbf16>, vector<8x8xbf16>, vector<16x8xf32> -> vector<16x8xf32>
    %36 = arith.addf %30, %35 : vector<16x8xf32>
    %c0_42 = arith.constant 0 : index
    %c0_43 = arith.constant 0 : index
    %c0_44 = arith.constant 0 : index
    %c0_45 = arith.constant 0 : index
    %37 = vector.load %arg4[%c0_42, %c0_43, %c0_44, %c0_45] : memref<1x1x18x8xbf16, #tpu.memory_space<vmem>>, vector<1x1x16x8xbf16>
    %38 = vector.shape_cast %37 : vector<1x1x16x8xbf16> to vector<16x8xbf16>
    %c6 = arith.constant 6 : index
    %c0_46 = arith.constant 0 : index
    %c0_47 = arith.constant 0 : index
    %39 = vector.load %arg5[%c6, %c0_46, %c0_47] : memref<9x8x8xbf16, #tpu.memory_space<vmem>>, vector<1x8x8xbf16>
    %40 = vector.shape_cast %39 : vector<1x8x8xbf16> to vector<8x8xbf16>
    %cst_48 = arith.constant dense<0.000000e+00> : vector<16x8xf32>
    %41 = tpu.matmul %38, %40, %cst_48 {dimension_numbers = #tpu.dot_dimension_numbers<[1], [0], [0], [1], [0, 0, 1, 1], [], []>} : vector<16x8xbf16>, vector<8x8xbf16>, vector<16x8xf32> -> vector<16x8xf32>
    %42 = arith.addf %36, %41 : vector<16x8xf32>
    %c0_49 = arith.constant 0 : index
    %c0_50 = arith.constant 0 : index
    %c1_51 = arith.constant 1 : index
    %c0_52 = arith.constant 0 : index
    %43 = vector.load %arg4[%c0_49, %c0_50, %c1_51, %c0_52] : memref<1x1x18x8xbf16, #tpu.memory_space<vmem>>, vector<1x1x16x8xbf16>
    %44 = vector.shape_cast %43 : vector<1x1x16x8xbf16> to vector<16x8xbf16>
    %c7 = arith.constant 7 : index
    %c0_53 = arith.constant 0 : index
    %c0_54 = arith.constant 0 : index
    %45 = vector.load %arg5[%c7, %c0_53, %c0_54] : memref<9x8x8xbf16, #tpu.memory_space<vmem>>, vector<1x8x8xbf16>
    %46 = vector.shape_cast %45 : vector<1x8x8xbf16> to vector<8x8xbf16>
    %cst_55 = arith.constant dense<0.000000e+00> : vector<16x8xf32>
    %47 = tpu.matmul %44, %46, %cst_55 {dimension_numbers = #tpu.dot_dimension_numbers<[1], [0], [0], [1], [0, 0, 1, 1], [], []>} : vector<16x8xbf16>, vector<8x8xbf16>, vector<16x8xf32> -> vector<16x8xf32>
    %48 = arith.addf %42, %47 : vector<16x8xf32>
    %c0_56 = arith.constant 0 : index
    %c0_57 = arith.constant 0 : index
    %c2_58 = arith.constant 2 : index
    %c0_59 = arith.constant 0 : index
    %49 = vector.load %arg4[%c0_56, %c0_57, %c2_58, %c0_59] : memref<1x1x18x8xbf16, #tpu.memory_space<vmem>>, vector<1x1x16x8xbf16>
    %50 = vector.shape_cast %49 : vector<1x1x16x8xbf16> to vector<16x8xbf16>
    %c8 = arith.constant 8 : index
    %c0_60 = arith.constant 0 : index
    %c0_61 = arith.constant 0 : index
    %51 = vector.load %arg5[%c8, %c0_60, %c0_61] : memref<9x8x8xbf16, #tpu.memory_space<vmem>>, vector<1x8x8xbf16>
    %52 = vector.shape_cast %51 : vector<1x8x8xbf16> to vector<8x8xbf16>
    %cst_62 = arith.constant dense<0.000000e+00> : vector<16x8xf32>
    %53 = tpu.matmul %50, %52, %cst_62 {dimension_numbers = #tpu.dot_dimension_numbers<[1], [0], [0], [1], [0, 0, 1, 1], [], []>} : vector<16x8xbf16>, vector<8x8xbf16>, vector<16x8xf32> -> vector<16x8xf32>
    %54 = arith.addf %48, %53 : vector<16x8xf32>
    %c0_63 = arith.constant 0 : index
    %c0_64 = arith.constant 0 : index
    %55 = vector.load %arg6[%c0_63, %c0_64] : memref<1x8xf32, #tpu.memory_space<vmem>>, vector<1x8xf32>
    %56 = vector.broadcast %55 : vector<1x8xf32> to vector<16x8xf32>
    %57 = arith.addf %54, %56 : vector<16x8xf32>
    %cst_65 = arith.constant 0.000000e+00 : f32
    %58 = vector.broadcast %cst_65 : f32 to vector<16x8xf32>
    %59 = arith.maximumf %57, %58 : vector<16x8xf32>
    %60 = arith.truncf %59 : vector<16x8xf32> to vector<16x8xbf16>
    %c0_66 = arith.constant 0 : index
    %c0_67 = arith.constant 0 : index
    %c0_68 = arith.constant 0 : index
    %c0_69 = arith.constant 0 : index
    %61 = vector.load %arg7[%c0_66, %c0_67, %c0_68, %c0_69] : memref<1x1x16x8xbf16, #tpu.memory_space<vmem>>, vector<1x1x16x8xbf16>
    %62 = vector.shape_cast %61 : vector<1x1x16x8xbf16> to vector<16x8xbf16>
    %63 = vector.shape_cast %60 : vector<16x8xbf16> to vector<1x1x16x8xbf16>
    tpu.vector_store %arg7[%c0_66, %c0_67, %c0_68, %c0_69], %63 {strides = array<i32>} : memref<1x1x16x8xbf16, #tpu.memory_space<vmem>>, vector<1x1x16x8xbf16>,
    return
  }
  func.func @transform_0(%arg0: i32, %arg1: i32) -> (i32, i32, i32, i32) {
    %c0_i32 = arith.constant 0 : i32
    %0 = arith.addi %arg1, %c0_i32 : i32
    %c0_i32_0 = arith.constant 0 : i32
    %c0_i32_1 = arith.constant 0 : i32
    %c0_i32_2 = arith.constant 0 : i32
    return %arg0, %0, %c0_i32_0, %c0_i32_1 : i32, i32, i32, i32
  }
  func.func @transform_1(%arg0: i32, %arg1: i32) -> (i32, i32, i32, i32) {
    %c1_i32 = arith.constant 1 : i32
    %0 = arith.addi %arg1, %c1_i32 : i32
    %c0_i32 = arith.constant 0 : i32
    %c0_i32_0 = arith.constant 0 : i32
    %c0_i32_1 = arith.constant 0 : i32
    return %arg0, %0, %c0_i32, %c0_i32_0 : i32, i32, i32, i32
  }
  func.func @transform_2(%arg0: i32, %arg1: i32) -> (i32, i32, i32, i32) {
    %c2_i32 = arith.constant 2 : i32
    %0 = arith.addi %arg1, %c2_i32 : i32
    %c0_i32 = arith.constant 0 : i32
    %c0_i32_0 = arith.constant 0 : i32
    %c0_i32_1 = arith.constant 0 : i32
    return %arg0, %0, %c0_i32, %c0_i32_0 : i32, i32, i32, i32
  }
  func.func @transform_3(%arg0: i32, %arg1: i32) -> (i32, i32, i32) {
    %c0_i32 = arith.constant 0 : i32
    %c0_i32_0 = arith.constant 0 : i32
    %c0_i32_1 = arith.constant 0 : i32
    %c0_i32_2 = arith.constant 0 : i32
    return %c0_i32, %c0_i32_0, %c0_i32_1 : i32, i32, i32
  }
  func.func @transform_4(%arg0: i32, %arg1: i32) -> (i32, i32) {
    %c0_i32 = arith.constant 0 : i32
    %c0_i32_0 = arith.constant 0 : i32
    %c0_i32_1 = arith.constant 0 : i32
    return %c0_i32, %c0_i32_0 : i32, i32
  }
  func.func @transform_5(%arg0: i32, %arg1: i32) -> (i32, i32, i32, i32) {
    %c0_i32 = arith.constant 0 : i32
    %c0_i32_0 = arith.constant 0 : i32
    %c0_i32_1 = arith.constant 0 : i32
    return %arg0, %arg1, %c0_i32, %c0_i32_0 : i32, i32, i32, i32
  }
}

module attributes {stable_mosaic.version = 11 : i64} {
  func.func @_deconv2x2_row_kernel(%arg0: i32, %arg1: i32, %arg2: memref<1x1x16x8xbf16, #tpu.memory_space<vmem>>, %arg3: memref<2x8x16xbf16, #tpu.memory_space<vmem>>, %arg4: memref<1x16xf32, #tpu.memory_space<vmem>>, %arg5: memref<1x2x16x16xbf16, #tpu.memory_space<vmem>>) attributes {dimension_semantics = [#tpu.dimension_semantics<parallel>, #tpu.dimension_semantics<parallel>], iteration_bounds = array<i64: 2, 16>, scalar_prefetch = 0 : i64, scratch_operands = 0 : i64, tpu.core_type = #tpu.core_type<tc>, window_params = [{transform_indices = @transform_0, window_bounds = array<i64: 1, 1, 16, 8>}, {pipeline_mode = #tpu.pipeline_mode<synchronous>, transform_indices = @transform_1, window_bounds = array<i64: 2, 8, 16>}, {pipeline_mode = #tpu.pipeline_mode<synchronous>, transform_indices = @transform_2, window_bounds = array<i64: 1, 16>}, {transform_indices = @transform_3, window_bounds = array<i64: 1, 2, 16, 16>}]} {
    %c0 = arith.constant 0 : index
    %c0_0 = arith.constant 0 : index
    %c0_1 = arith.constant 0 : index
    %c0_2 = arith.constant 0 : index
    %0 = vector.load %arg2[%c0, %c0_0, %c0_1, %c0_2] : memref<1x1x16x8xbf16, #tpu.memory_space<vmem>>, vector<1x1x16x8xbf16>
    %1 = vector.shape_cast %0 : vector<1x1x16x8xbf16> to vector<16x8xbf16>
    %c0_3 = arith.constant 0 : index
    %c0_4 = arith.constant 0 : index
    %2 = vector.load %arg4[%c0_3, %c0_4] : memref<1x16xf32, #tpu.memory_space<vmem>>, vector<1x16xf32>
    %c0_5 = arith.constant 0 : index
    %c0_6 = arith.constant 0 : index
    %c0_7 = arith.constant 0 : index
    %3 = vector.load %arg3[%c0_5, %c0_6, %c0_7] : memref<2x8x16xbf16, #tpu.memory_space<vmem>>, vector<1x8x16xbf16>
    %4 = vector.shape_cast %3 : vector<1x8x16xbf16> to vector<8x16xbf16>
    %cst = arith.constant dense<0.000000e+00> : vector<16x16xf32>
    %5 = tpu.matmul %1, %4, %cst {dimension_numbers = #tpu.dot_dimension_numbers<[1], [0], [0], [1], [0, 0, 1, 1], [], []>} : vector<16x8xbf16>, vector<8x16xbf16>, vector<16x16xf32> -> vector<16x16xf32>
    %6 = vector.broadcast %2 : vector<1x16xf32> to vector<16x16xf32>
    %7 = arith.addf %5, %6 : vector<16x16xf32>
    %cst_8 = arith.constant 0.000000e+00 : f32
    %8 = vector.broadcast %cst_8 : f32 to vector<16x16xf32>
    %9 = arith.maximumf %7, %8 : vector<16x16xf32>
    %10 = arith.truncf %9 : vector<16x16xf32> to vector<16x16xbf16>
    %c0_9 = arith.constant 0 : index
    %c0_10 = arith.constant 0 : index
    %c0_11 = arith.constant 0 : index
    %c0_12 = arith.constant 0 : index
    %11 = vector.load %arg5[%c0_9, %c0_10, %c0_11, %c0_12] : memref<1x2x16x16xbf16, #tpu.memory_space<vmem>>, vector<1x1x16x16xbf16>
    %12 = vector.shape_cast %11 : vector<1x1x16x16xbf16> to vector<16x16xbf16>
    %13 = vector.shape_cast %10 : vector<16x16xbf16> to vector<1x1x16x16xbf16>
    tpu.vector_store %arg5[%c0_9, %c0_10, %c0_11, %c0_12], %13 {strides = array<i32>} : memref<1x2x16x16xbf16, #tpu.memory_space<vmem>>, vector<1x1x16x16xbf16>,
    %c1 = arith.constant 1 : index
    %c0_13 = arith.constant 0 : index
    %c0_14 = arith.constant 0 : index
    %14 = vector.load %arg3[%c1, %c0_13, %c0_14] : memref<2x8x16xbf16, #tpu.memory_space<vmem>>, vector<1x8x16xbf16>
    %15 = vector.shape_cast %14 : vector<1x8x16xbf16> to vector<8x16xbf16>
    %cst_15 = arith.constant dense<0.000000e+00> : vector<16x16xf32>
    %16 = tpu.matmul %1, %15, %cst_15 {dimension_numbers = #tpu.dot_dimension_numbers<[1], [0], [0], [1], [0, 0, 1, 1], [], []>} : vector<16x8xbf16>, vector<8x16xbf16>, vector<16x16xf32> -> vector<16x16xf32>
    %17 = vector.broadcast %2 : vector<1x16xf32> to vector<16x16xf32>
    %18 = arith.addf %16, %17 : vector<16x16xf32>
    %cst_16 = arith.constant 0.000000e+00 : f32
    %19 = vector.broadcast %cst_16 : f32 to vector<16x16xf32>
    %20 = arith.maximumf %18, %19 : vector<16x16xf32>
    %21 = arith.truncf %20 : vector<16x16xf32> to vector<16x16xbf16>
    %c0_17 = arith.constant 0 : index
    %c1_18 = arith.constant 1 : index
    %c0_19 = arith.constant 0 : index
    %c0_20 = arith.constant 0 : index
    %22 = vector.load %arg5[%c0_17, %c1_18, %c0_19, %c0_20] : memref<1x2x16x16xbf16, #tpu.memory_space<vmem>>, vector<1x1x16x16xbf16>
    %23 = vector.shape_cast %22 : vector<1x1x16x16xbf16> to vector<16x16xbf16>
    %24 = vector.shape_cast %21 : vector<16x16xbf16> to vector<1x1x16x16xbf16>
    tpu.vector_store %arg5[%c0_17, %c1_18, %c0_19, %c0_20], %24 {strides = array<i32>} : memref<1x2x16x16xbf16, #tpu.memory_space<vmem>>, vector<1x1x16x16xbf16>,
    return
  }
  func.func @transform_0(%arg0: i32, %arg1: i32) -> (i32, i32, i32, i32) {
    %c0_i32 = arith.constant 0 : i32
    %c0_i32_0 = arith.constant 0 : i32
    %c0_i32_1 = arith.constant 0 : i32
    return %arg0, %arg1, %c0_i32, %c0_i32_0 : i32, i32, i32, i32
  }
  func.func @transform_1(%arg0: i32, %arg1: i32) -> (i32, i32, i32) {
    %c0_i32 = arith.constant 0 : i32
    %c0_i32_0 = arith.constant 0 : i32
    %c0_i32_1 = arith.constant 0 : i32
    %c0_i32_2 = arith.constant 0 : i32
    return %c0_i32, %c0_i32_0, %c0_i32_1 : i32, i32, i32
  }
  func.func @transform_2(%arg0: i32, %arg1: i32) -> (i32, i32) {
    %c0_i32 = arith.constant 0 : i32
    %c0_i32_0 = arith.constant 0 : i32
    %c0_i32_1 = arith.constant 0 : i32
    return %c0_i32, %c0_i32_0 : i32, i32
  }
  func.func @transform_3(%arg0: i32, %arg1: i32) -> (i32, i32, i32, i32) {
    %c0_i32 = arith.constant 0 : i32
    %c0_i32_0 = arith.constant 0 : i32
    %c0_i32_1 = arith.constant 0 : i32
    return %arg0, %arg1, %c0_i32, %c0_i32_0 : i32, i32, i32, i32
  }
}

module attributes {stable_mosaic.version = 11 : i64} {
  func.func @_conv3x3_row_kernel(%arg0: i32, %arg1: i32, %arg2: memref<1x1x34x8xbf16, #tpu.memory_space<vmem>>, %arg3: memref<1x1x34x8xbf16, #tpu.memory_space<vmem>>, %arg4: memref<1x1x34x8xbf16, #tpu.memory_space<vmem>>, %arg5: memref<9x8x8xbf16, #tpu.memory_space<vmem>>, %arg6: memref<1x8xf32, #tpu.memory_space<vmem>>, %arg7: memref<1x1x32x8xbf16, #tpu.memory_space<vmem>>) attributes {dimension_semantics = [#tpu.dimension_semantics<parallel>, #tpu.dimension_semantics<parallel>], iteration_bounds = array<i64: 2, 32>, scalar_prefetch = 0 : i64, scratch_operands = 0 : i64, tpu.core_type = #tpu.core_type<tc>, window_params = [{transform_indices = @transform_0, window_bounds = array<i64: 1, 1, 34, 8>}, {transform_indices = @transform_1, window_bounds = array<i64: 1, 1, 34, 8>}, {transform_indices = @transform_2, window_bounds = array<i64: 1, 1, 34, 8>}, {pipeline_mode = #tpu.pipeline_mode<synchronous>, transform_indices = @transform_3, window_bounds = array<i64: 9, 8, 8>}, {pipeline_mode = #tpu.pipeline_mode<synchronous>, transform_indices = @transform_4, window_bounds = array<i64: 1, 8>}, {transform_indices = @transform_5, window_bounds = array<i64: 1, 1, 32, 8>}]} {
    %cst = arith.constant 0.000000e+00 : f32
    %0 = vector.broadcast %cst : f32 to vector<32x8xf32>
    %c0 = arith.constant 0 : index
    %c0_0 = arith.constant 0 : index
    %c0_1 = arith.constant 0 : index
    %c0_2 = arith.constant 0 : index
    %1 = vector.load %arg2[%c0, %c0_0, %c0_1, %c0_2] : memref<1x1x34x8xbf16, #tpu.memory_space<vmem>>, vector<1x1x32x8xbf16>
    %2 = vector.shape_cast %1 : vector<1x1x32x8xbf16> to vector<32x8xbf16>
    %c0_3 = arith.constant 0 : index
    %c0_4 = arith.constant 0 : index
    %c0_5 = arith.constant 0 : index
    %3 = vector.load %arg5[%c0_3, %c0_4, %c0_5] : memref<9x8x8xbf16, #tpu.memory_space<vmem>>, vector<1x8x8xbf16>
    %4 = vector.shape_cast %3 : vector<1x8x8xbf16> to vector<8x8xbf16>
    %cst_6 = arith.constant dense<0.000000e+00> : vector<32x8xf32>
    %5 = tpu.matmul %2, %4, %cst_6 {dimension_numbers = #tpu.dot_dimension_numbers<[1], [0], [0], [1], [0, 0, 1, 1], [], []>} : vector<32x8xbf16>, vector<8x8xbf16>, vector<32x8xf32> -> vector<32x8xf32>
    %6 = arith.addf %0, %5 : vector<32x8xf32>
    %c0_7 = arith.constant 0 : index
    %c0_8 = arith.constant 0 : index
    %c1 = arith.constant 1 : index
    %c0_9 = arith.constant 0 : index
    %7 = vector.load %arg2[%c0_7, %c0_8, %c1, %c0_9] : memref<1x1x34x8xbf16, #tpu.memory_space<vmem>>, vector<1x1x32x8xbf16>
    %8 = vector.shape_cast %7 : vector<1x1x32x8xbf16> to vector<32x8xbf16>
    %c1_10 = arith.constant 1 : index
    %c0_11 = arith.constant 0 : index
    %c0_12 = arith.constant 0 : index
    %9 = vector.load %arg5[%c1_10, %c0_11, %c0_12] : memref<9x8x8xbf16, #tpu.memory_space<vmem>>, vector<1x8x8xbf16>
    %10 = vector.shape_cast %9 : vector<1x8x8xbf16> to vector<8x8xbf16>
    %cst_13 = arith.constant dense<0.000000e+00> : vector<32x8xf32>
    %11 = tpu.matmul %8, %10, %cst_13 {dimension_numbers = #tpu.dot_dimension_numbers<[1], [0], [0], [1], [0, 0, 1, 1], [], []>} : vector<32x8xbf16>, vector<8x8xbf16>, vector<32x8xf32> -> vector<32x8xf32>
    %12 = arith.addf %6, %11 : vector<32x8xf32>
    %c0_14 = arith.constant 0 : index
    %c0_15 = arith.constant 0 : index
    %c2 = arith.constant 2 : index
    %c0_16 = arith.constant 0 : index
    %13 = vector.load %arg2[%c0_14, %c0_15, %c2, %c0_16] : memref<1x1x34x8xbf16, #tpu.memory_space<vmem>>, vector<1x1x32x8xbf16>
    %14 = vector.shape_cast %13 : vector<1x1x32x8xbf16> to vector<32x8xbf16>
    %c2_17 = arith.constant 2 : index
    %c0_18 = arith.constant 0 : index
    %c0_19 = arith.constant 0 : index
    %15 = vector.load %arg5[%c2_17, %c0_18, %c0_19] : memref<9x8x8xbf16, #tpu.memory_space<vmem>>, vector<1x8x8xbf16>
    %16 = vector.shape_cast %15 : vector<1x8x8xbf16> to vector<8x8xbf16>
    %cst_20 = arith.constant dense<0.000000e+00> : vector<32x8xf32>
    %17 = tpu.matmul %14, %16, %cst_20 {dimension_numbers = #tpu.dot_dimension_numbers<[1], [0], [0], [1], [0, 0, 1, 1], [], []>} : vector<32x8xbf16>, vector<8x8xbf16>, vector<32x8xf32> -> vector<32x8xf32>
    %18 = arith.addf %12, %17 : vector<32x8xf32>
    %c0_21 = arith.constant 0 : index
    %c0_22 = arith.constant 0 : index
    %c0_23 = arith.constant 0 : index
    %c0_24 = arith.constant 0 : index
    %19 = vector.load %arg3[%c0_21, %c0_22, %c0_23, %c0_24] : memref<1x1x34x8xbf16, #tpu.memory_space<vmem>>, vector<1x1x32x8xbf16>
    %20 = vector.shape_cast %19 : vector<1x1x32x8xbf16> to vector<32x8xbf16>
    %c3 = arith.constant 3 : index
    %c0_25 = arith.constant 0 : index
    %c0_26 = arith.constant 0 : index
    %21 = vector.load %arg5[%c3, %c0_25, %c0_26] : memref<9x8x8xbf16, #tpu.memory_space<vmem>>, vector<1x8x8xbf16>
    %22 = vector.shape_cast %21 : vector<1x8x8xbf16> to vector<8x8xbf16>
    %cst_27 = arith.constant dense<0.000000e+00> : vector<32x8xf32>
    %23 = tpu.matmul %20, %22, %cst_27 {dimension_numbers = #tpu.dot_dimension_numbers<[1], [0], [0], [1], [0, 0, 1, 1], [], []>} : vector<32x8xbf16>, vector<8x8xbf16>, vector<32x8xf32> -> vector<32x8xf32>
    %24 = arith.addf %18, %23 : vector<32x8xf32>
    %c0_28 = arith.constant 0 : index
    %c0_29 = arith.constant 0 : index
    %c1_30 = arith.constant 1 : index
    %c0_31 = arith.constant 0 : index
    %25 = vector.load %arg3[%c0_28, %c0_29, %c1_30, %c0_31] : memref<1x1x34x8xbf16, #tpu.memory_space<vmem>>, vector<1x1x32x8xbf16>
    %26 = vector.shape_cast %25 : vector<1x1x32x8xbf16> to vector<32x8xbf16>
    %c4 = arith.constant 4 : index
    %c0_32 = arith.constant 0 : index
    %c0_33 = arith.constant 0 : index
    %27 = vector.load %arg5[%c4, %c0_32, %c0_33] : memref<9x8x8xbf16, #tpu.memory_space<vmem>>, vector<1x8x8xbf16>
    %28 = vector.shape_cast %27 : vector<1x8x8xbf16> to vector<8x8xbf16>
    %cst_34 = arith.constant dense<0.000000e+00> : vector<32x8xf32>
    %29 = tpu.matmul %26, %28, %cst_34 {dimension_numbers = #tpu.dot_dimension_numbers<[1], [0], [0], [1], [0, 0, 1, 1], [], []>} : vector<32x8xbf16>, vector<8x8xbf16>, vector<32x8xf32> -> vector<32x8xf32>
    %30 = arith.addf %24, %29 : vector<32x8xf32>
    %c0_35 = arith.constant 0 : index
    %c0_36 = arith.constant 0 : index
    %c2_37 = arith.constant 2 : index
    %c0_38 = arith.constant 0 : index
    %31 = vector.load %arg3[%c0_35, %c0_36, %c2_37, %c0_38] : memref<1x1x34x8xbf16, #tpu.memory_space<vmem>>, vector<1x1x32x8xbf16>
    %32 = vector.shape_cast %31 : vector<1x1x32x8xbf16> to vector<32x8xbf16>
    %c5 = arith.constant 5 : index
    %c0_39 = arith.constant 0 : index
    %c0_40 = arith.constant 0 : index
    %33 = vector.load %arg5[%c5, %c0_39, %c0_40] : memref<9x8x8xbf16, #tpu.memory_space<vmem>>, vector<1x8x8xbf16>
    %34 = vector.shape_cast %33 : vector<1x8x8xbf16> to vector<8x8xbf16>
    %cst_41 = arith.constant dense<0.000000e+00> : vector<32x8xf32>
    %35 = tpu.matmul %32, %34, %cst_41 {dimension_numbers = #tpu.dot_dimension_numbers<[1], [0], [0], [1], [0, 0, 1, 1], [], []>} : vector<32x8xbf16>, vector<8x8xbf16>, vector<32x8xf32> -> vector<32x8xf32>
    %36 = arith.addf %30, %35 : vector<32x8xf32>
    %c0_42 = arith.constant 0 : index
    %c0_43 = arith.constant 0 : index
    %c0_44 = arith.constant 0 : index
    %c0_45 = arith.constant 0 : index
    %37 = vector.load %arg4[%c0_42, %c0_43, %c0_44, %c0_45] : memref<1x1x34x8xbf16, #tpu.memory_space<vmem>>, vector<1x1x32x8xbf16>
    %38 = vector.shape_cast %37 : vector<1x1x32x8xbf16> to vector<32x8xbf16>
    %c6 = arith.constant 6 : index
    %c0_46 = arith.constant 0 : index
    %c0_47 = arith.constant 0 : index
    %39 = vector.load %arg5[%c6, %c0_46, %c0_47] : memref<9x8x8xbf16, #tpu.memory_space<vmem>>, vector<1x8x8xbf16>
    %40 = vector.shape_cast %39 : vector<1x8x8xbf16> to vector<8x8xbf16>
    %cst_48 = arith.constant dense<0.000000e+00> : vector<32x8xf32>
    %41 = tpu.matmul %38, %40, %cst_48 {dimension_numbers = #tpu.dot_dimension_numbers<[1], [0], [0], [1], [0, 0, 1, 1], [], []>} : vector<32x8xbf16>, vector<8x8xbf16>, vector<32x8xf32> -> vector<32x8xf32>
    %42 = arith.addf %36, %41 : vector<32x8xf32>
    %c0_49 = arith.constant 0 : index
    %c0_50 = arith.constant 0 : index
    %c1_51 = arith.constant 1 : index
    %c0_52 = arith.constant 0 : index
    %43 = vector.load %arg4[%c0_49, %c0_50, %c1_51, %c0_52] : memref<1x1x34x8xbf16, #tpu.memory_space<vmem>>, vector<1x1x32x8xbf16>
    %44 = vector.shape_cast %43 : vector<1x1x32x8xbf16> to vector<32x8xbf16>
    %c7 = arith.constant 7 : index
    %c0_53 = arith.constant 0 : index
    %c0_54 = arith.constant 0 : index
    %45 = vector.load %arg5[%c7, %c0_53, %c0_54] : memref<9x8x8xbf16, #tpu.memory_space<vmem>>, vector<1x8x8xbf16>
    %46 = vector.shape_cast %45 : vector<1x8x8xbf16> to vector<8x8xbf16>
    %cst_55 = arith.constant dense<0.000000e+00> : vector<32x8xf32>
    %47 = tpu.matmul %44, %46, %cst_55 {dimension_numbers = #tpu.dot_dimension_numbers<[1], [0], [0], [1], [0, 0, 1, 1], [], []>} : vector<32x8xbf16>, vector<8x8xbf16>, vector<32x8xf32> -> vector<32x8xf32>
    %48 = arith.addf %42, %47 : vector<32x8xf32>
    %c0_56 = arith.constant 0 : index
    %c0_57 = arith.constant 0 : index
    %c2_58 = arith.constant 2 : index
    %c0_59 = arith.constant 0 : index
    %49 = vector.load %arg4[%c0_56, %c0_57, %c2_58, %c0_59] : memref<1x1x34x8xbf16, #tpu.memory_space<vmem>>, vector<1x1x32x8xbf16>
    %50 = vector.shape_cast %49 : vector<1x1x32x8xbf16> to vector<32x8xbf16>
    %c8 = arith.constant 8 : index
    %c0_60 = arith.constant 0 : index
    %c0_61 = arith.constant 0 : index
    %51 = vector.load %arg5[%c8, %c0_60, %c0_61] : memref<9x8x8xbf16, #tpu.memory_space<vmem>>, vector<1x8x8xbf16>
    %52 = vector.shape_cast %51 : vector<1x8x8xbf16> to vector<8x8xbf16>
    %cst_62 = arith.constant dense<0.000000e+00> : vector<32x8xf32>
    %53 = tpu.matmul %50, %52, %cst_62 {dimension_numbers = #tpu.dot_dimension_numbers<[1], [0], [0], [1], [0, 0, 1, 1], [], []>} : vector<32x8xbf16>, vector<8x8xbf16>, vector<32x8xf32> -> vector<32x8xf32>
    %54 = arith.addf %48, %53 : vector<32x8xf32>
    %c0_63 = arith.constant 0 : index
    %c0_64 = arith.constant 0 : index
    %55 = vector.load %arg6[%c0_63, %c0_64] : memref<1x8xf32, #tpu.memory_space<vmem>>, vector<1x8xf32>
    %56 = vector.broadcast %55 : vector<1x8xf32> to vector<32x8xf32>
    %57 = arith.addf %54, %56 : vector<32x8xf32>
    %cst_65 = arith.constant 0.000000e+00 : f32
    %58 = vector.broadcast %cst_65 : f32 to vector<32x8xf32>
    %59 = arith.maximumf %57, %58 : vector<32x8xf32>
    %60 = arith.truncf %59 : vector<32x8xf32> to vector<32x8xbf16>
    %c0_66 = arith.constant 0 : index
    %c0_67 = arith.constant 0 : index
    %c0_68 = arith.constant 0 : index
    %c0_69 = arith.constant 0 : index
    %61 = vector.load %arg7[%c0_66, %c0_67, %c0_68, %c0_69] : memref<1x1x32x8xbf16, #tpu.memory_space<vmem>>, vector<1x1x32x8xbf16>
    %62 = vector.shape_cast %61 : vector<1x1x32x8xbf16> to vector<32x8xbf16>
    %63 = vector.shape_cast %60 : vector<32x8xbf16> to vector<1x1x32x8xbf16>
    tpu.vector_store %arg7[%c0_66, %c0_67, %c0_68, %c0_69], %63 {strides = array<i32>} : memref<1x1x32x8xbf16, #tpu.memory_space<vmem>>, vector<1x1x32x8xbf16>,
    return
  }
  func.func @transform_0(%arg0: i32, %arg1: i32) -> (i32, i32, i32, i32) {
    %c0_i32 = arith.constant 0 : i32
    %0 = arith.addi %arg1, %c0_i32 : i32
    %c0_i32_0 = arith.constant 0 : i32
    %c0_i32_1 = arith.constant 0 : i32
    %c0_i32_2 = arith.constant 0 : i32
    return %arg0, %0, %c0_i32_0, %c0_i32_1 : i32, i32, i32, i32
  }
  func.func @transform_1(%arg0: i32, %arg1: i32) -> (i32, i32, i32, i32) {
    %c1_i32 = arith.constant 1 : i32
    %0 = arith.addi %arg1, %c1_i32 : i32
    %c0_i32 = arith.constant 0 : i32
    %c0_i32_0 = arith.constant 0 : i32
    %c0_i32_1 = arith.constant 0 : i32
    return %arg0, %0, %c0_i32, %c0_i32_0 : i32, i32, i32, i32
  }
  func.func @transform_2(%arg0: i32, %arg1: i32) -> (i32, i32, i32, i32) {
    %c2_i32 = arith.constant 2 : i32
    %0 = arith.addi %arg1, %c2_i32 : i32
    %c0_i32 = arith.constant 0 : i32
    %c0_i32_0 = arith.constant 0 : i32
    %c0_i32_1 = arith.constant 0 : i32
    return %arg0, %0, %c0_i32, %c0_i32_0 : i32, i32, i32, i32
  }
  func.func @transform_3(%arg0: i32, %arg1: i32) -> (i32, i32, i32) {
    %c0_i32 = arith.constant 0 : i32
    %c0_i32_0 = arith.constant 0 : i32
    %c0_i32_1 = arith.constant 0 : i32
    %c0_i32_2 = arith.constant 0 : i32
    return %c0_i32, %c0_i32_0, %c0_i32_1 : i32, i32, i32
  }
  func.func @transform_4(%arg0: i32, %arg1: i32) -> (i32, i32) {
    %c0_i32 = arith.constant 0 : i32
    %c0_i32_0 = arith.constant 0 : i32
    %c0_i32_1 = arith.constant 0 : i32
    return %c0_i32, %c0_i32_0 : i32, i32
  }
  func.func @transform_5(%arg0: i32, %arg1: i32) -> (i32, i32, i32, i32) {
    %c0_i32 = arith.constant 0 : i32
    %c0_i32_0 = arith.constant 0 : i32
    %c0_i32_1 = arith.constant 0 : i32
    return %arg0, %arg1, %c0_i32, %c0_i32_0 : i32, i32, i32, i32
  }
}

module attributes {stable_mosaic.version = 11 : i64} {
  func.func @_deconv2x2_row_kernel(%arg0: i32, %arg1: i32, %arg2: memref<1x1x32x8xbf16, #tpu.memory_space<vmem>>, %arg3: memref<2x8x8xbf16, #tpu.memory_space<vmem>>, %arg4: memref<1x8xf32, #tpu.memory_space<vmem>>, %arg5: memref<1x2x32x8xbf16, #tpu.memory_space<vmem>>) attributes {dimension_semantics = [#tpu.dimension_semantics<parallel>, #tpu.dimension_semantics<parallel>], iteration_bounds = array<i64: 2, 32>, scalar_prefetch = 0 : i64, scratch_operands = 0 : i64, tpu.core_type = #tpu.core_type<tc>, window_params = [{transform_indices = @transform_0, window_bounds = array<i64: 1, 1, 32, 8>}, {pipeline_mode = #tpu.pipeline_mode<synchronous>, transform_indices = @transform_1, window_bounds = array<i64: 2, 8, 8>}, {pipeline_mode = #tpu.pipeline_mode<synchronous>, transform_indices = @transform_2, window_bounds = array<i64: 1, 8>}, {transform_indices = @transform_3, window_bounds = array<i64: 1, 2, 32, 8>}]} {
    %c0 = arith.constant 0 : index
    %c0_0 = arith.constant 0 : index
    %c0_1 = arith.constant 0 : index
    %c0_2 = arith.constant 0 : index
    %0 = vector.load %arg2[%c0, %c0_0, %c0_1, %c0_2] : memref<1x1x32x8xbf16, #tpu.memory_space<vmem>>, vector<1x1x32x8xbf16>
    %1 = vector.shape_cast %0 : vector<1x1x32x8xbf16> to vector<32x8xbf16>
    %c0_3 = arith.constant 0 : index
    %c0_4 = arith.constant 0 : index
    %2 = vector.load %arg4[%c0_3, %c0_4] : memref<1x8xf32, #tpu.memory_space<vmem>>, vector<1x8xf32>
    %c0_5 = arith.constant 0 : index
    %c0_6 = arith.constant 0 : index
    %c0_7 = arith.constant 0 : index
    %3 = vector.load %arg3[%c0_5, %c0_6, %c0_7] : memref<2x8x8xbf16, #tpu.memory_space<vmem>>, vector<1x8x8xbf16>
    %4 = vector.shape_cast %3 : vector<1x8x8xbf16> to vector<8x8xbf16>
    %cst = arith.constant dense<0.000000e+00> : vector<32x8xf32>
    %5 = tpu.matmul %1, %4, %cst {dimension_numbers = #tpu.dot_dimension_numbers<[1], [0], [0], [1], [0, 0, 1, 1], [], []>} : vector<32x8xbf16>, vector<8x8xbf16>, vector<32x8xf32> -> vector<32x8xf32>
    %6 = vector.broadcast %2 : vector<1x8xf32> to vector<32x8xf32>
    %7 = arith.addf %5, %6 : vector<32x8xf32>
    %cst_8 = arith.constant 0.000000e+00 : f32
    %8 = vector.broadcast %cst_8 : f32 to vector<32x8xf32>
    %9 = arith.maximumf %7, %8 : vector<32x8xf32>
    %10 = arith.truncf %9 : vector<32x8xf32> to vector<32x8xbf16>
    %c0_9 = arith.constant 0 : index
    %c0_10 = arith.constant 0 : index
    %c0_11 = arith.constant 0 : index
    %c0_12 = arith.constant 0 : index
    %11 = vector.load %arg5[%c0_9, %c0_10, %c0_11, %c0_12] : memref<1x2x32x8xbf16, #tpu.memory_space<vmem>>, vector<1x1x32x8xbf16>
    %12 = vector.shape_cast %11 : vector<1x1x32x8xbf16> to vector<32x8xbf16>
    %13 = vector.shape_cast %10 : vector<32x8xbf16> to vector<1x1x32x8xbf16>
    tpu.vector_store %arg5[%c0_9, %c0_10, %c0_11, %c0_12], %13 {strides = array<i32>} : memref<1x2x32x8xbf16, #tpu.memory_space<vmem>>, vector<1x1x32x8xbf16>,
    %c1 = arith.constant 1 : index
    %c0_13 = arith.constant 0 : index
    %c0_14 = arith.constant 0 : index
    %14 = vector.load %arg3[%c1, %c0_13, %c0_14] : memref<2x8x8xbf16, #tpu.memory_space<vmem>>, vector<1x8x8xbf16>
    %15 = vector.shape_cast %14 : vector<1x8x8xbf16> to vector<8x8xbf16>
    %cst_15 = arith.constant dense<0.000000e+00> : vector<32x8xf32>
    %16 = tpu.matmul %1, %15, %cst_15 {dimension_numbers = #tpu.dot_dimension_numbers<[1], [0], [0], [1], [0, 0, 1, 1], [], []>} : vector<32x8xbf16>, vector<8x8xbf16>, vector<32x8xf32> -> vector<32x8xf32>
    %17 = vector.broadcast %2 : vector<1x8xf32> to vector<32x8xf32>
    %18 = arith.addf %16, %17 : vector<32x8xf32>
    %cst_16 = arith.constant 0.000000e+00 : f32
    %19 = vector.broadcast %cst_16 : f32 to vector<32x8xf32>
    %20 = arith.maximumf %18, %19 : vector<32x8xf32>
    %21 = arith.truncf %20 : vector<32x8xf32> to vector<32x8xbf16>
    %c0_17 = arith.constant 0 : index
    %c1_18 = arith.constant 1 : index
    %c0_19 = arith.constant 0 : index
    %c0_20 = arith.constant 0 : index
    %22 = vector.load %arg5[%c0_17, %c1_18, %c0_19, %c0_20] : memref<1x2x32x8xbf16, #tpu.memory_space<vmem>>, vector<1x1x32x8xbf16>
    %23 = vector.shape_cast %22 : vector<1x1x32x8xbf16> to vector<32x8xbf16>
    %24 = vector.shape_cast %21 : vector<32x8xbf16> to vector<1x1x32x8xbf16>
    tpu.vector_store %arg5[%c0_17, %c1_18, %c0_19, %c0_20], %24 {strides = array<i32>} : memref<1x2x32x8xbf16, #tpu.memory_space<vmem>>, vector<1x1x32x8xbf16>,
    return
  }
  func.func @transform_0(%arg0: i32, %arg1: i32) -> (i32, i32, i32, i32) {
    %c0_i32 = arith.constant 0 : i32
    %c0_i32_0 = arith.constant 0 : i32
    %c0_i32_1 = arith.constant 0 : i32
    return %arg0, %arg1, %c0_i32, %c0_i32_0 : i32, i32, i32, i32
  }
  func.func @transform_1(%arg0: i32, %arg1: i32) -> (i32, i32, i32) {
    %c0_i32 = arith.constant 0 : i32
    %c0_i32_0 = arith.constant 0 : i32
    %c0_i32_1 = arith.constant 0 : i32
    %c0_i32_2 = arith.constant 0 : i32
    return %c0_i32, %c0_i32_0, %c0_i32_1 : i32, i32, i32
  }
  func.func @transform_2(%arg0: i32, %arg1: i32) -> (i32, i32) {
    %c0_i32 = arith.constant 0 : i32
    %c0_i32_0 = arith.constant 0 : i32
    %c0_i32_1 = arith.constant 0 : i32
    return %c0_i32, %c0_i32_0 : i32, i32
  }
  func.func @transform_3(%arg0: i32, %arg1: i32) -> (i32, i32, i32, i32) {
    %c0_i32 = arith.constant 0 : i32
    %c0_i32_0 = arith.constant 0 : i32
    %c0_i32_1 = arith.constant 0 : i32
    return %arg0, %arg1, %c0_i32, %c0_i32_0 : i32, i32, i32, i32
  }
}

module attributes {stable_mosaic.version = 11 : i64} {
  func.func @_conv3x3_row_kernel(%arg0: i32, %arg1: i32, %arg2: memref<1x1x66x4xbf16, #tpu.memory_space<vmem>>, %arg3: memref<1x1x66x4xbf16, #tpu.memory_space<vmem>>, %arg4: memref<1x1x66x4xbf16, #tpu.memory_space<vmem>>, %arg5: memref<9x4x4xbf16, #tpu.memory_space<vmem>>, %arg6: memref<1x4xf32, #tpu.memory_space<vmem>>, %arg7: memref<1x1x64x4xbf16, #tpu.memory_space<vmem>>) attributes {dimension_semantics = [#tpu.dimension_semantics<parallel>, #tpu.dimension_semantics<parallel>], iteration_bounds = array<i64: 2, 64>, scalar_prefetch = 0 : i64, scratch_operands = 0 : i64, tpu.core_type = #tpu.core_type<tc>, window_params = [{transform_indices = @transform_0, window_bounds = array<i64: 1, 1, 66, 4>}, {transform_indices = @transform_1, window_bounds = array<i64: 1, 1, 66, 4>}, {transform_indices = @transform_2, window_bounds = array<i64: 1, 1, 66, 4>}, {pipeline_mode = #tpu.pipeline_mode<synchronous>, transform_indices = @transform_3, window_bounds = array<i64: 9, 4, 4>}, {pipeline_mode = #tpu.pipeline_mode<synchronous>, transform_indices = @transform_4, window_bounds = array<i64: 1, 4>}, {transform_indices = @transform_5, window_bounds = array<i64: 1, 1, 64, 4>}]} {
    %cst = arith.constant 0.000000e+00 : f32
    %0 = vector.broadcast %cst : f32 to vector<64x4xf32>
    %c0 = arith.constant 0 : index
    %c0_0 = arith.constant 0 : index
    %c0_1 = arith.constant 0 : index
    %c0_2 = arith.constant 0 : index
    %1 = vector.load %arg2[%c0, %c0_0, %c0_1, %c0_2] : memref<1x1x66x4xbf16, #tpu.memory_space<vmem>>, vector<1x1x64x4xbf16>
    %2 = vector.shape_cast %1 : vector<1x1x64x4xbf16> to vector<64x4xbf16>
    %c0_3 = arith.constant 0 : index
    %c0_4 = arith.constant 0 : index
    %c0_5 = arith.constant 0 : index
    %3 = vector.load %arg5[%c0_3, %c0_4, %c0_5] : memref<9x4x4xbf16, #tpu.memory_space<vmem>>, vector<1x4x4xbf16>
    %4 = vector.shape_cast %3 : vector<1x4x4xbf16> to vector<4x4xbf16>
    %cst_6 = arith.constant dense<0.000000e+00> : vector<64x4xf32>
    %5 = tpu.matmul %2, %4, %cst_6 {dimension_numbers = #tpu.dot_dimension_numbers<[1], [0], [0], [1], [0, 0, 1, 1], [], []>} : vector<64x4xbf16>, vector<4x4xbf16>, vector<64x4xf32> -> vector<64x4xf32>
    %6 = arith.addf %0, %5 : vector<64x4xf32>
    %c0_7 = arith.constant 0 : index
    %c0_8 = arith.constant 0 : index
    %c1 = arith.constant 1 : index
    %c0_9 = arith.constant 0 : index
    %7 = vector.load %arg2[%c0_7, %c0_8, %c1, %c0_9] : memref<1x1x66x4xbf16, #tpu.memory_space<vmem>>, vector<1x1x64x4xbf16>
    %8 = vector.shape_cast %7 : vector<1x1x64x4xbf16> to vector<64x4xbf16>
    %c1_10 = arith.constant 1 : index
    %c0_11 = arith.constant 0 : index
    %c0_12 = arith.constant 0 : index
    %9 = vector.load %arg5[%c1_10, %c0_11, %c0_12] : memref<9x4x4xbf16, #tpu.memory_space<vmem>>, vector<1x4x4xbf16>
    %10 = vector.shape_cast %9 : vector<1x4x4xbf16> to vector<4x4xbf16>
    %cst_13 = arith.constant dense<0.000000e+00> : vector<64x4xf32>
    %11 = tpu.matmul %8, %10, %cst_13 {dimension_numbers = #tpu.dot_dimension_numbers<[1], [0], [0], [1], [0, 0, 1, 1], [], []>} : vector<64x4xbf16>, vector<4x4xbf16>, vector<64x4xf32> -> vector<64x4xf32>
    %12 = arith.addf %6, %11 : vector<64x4xf32>
    %c0_14 = arith.constant 0 : index
    %c0_15 = arith.constant 0 : index
    %c2 = arith.constant 2 : index
    %c0_16 = arith.constant 0 : index
    %13 = vector.load %arg2[%c0_14, %c0_15, %c2, %c0_16] : memref<1x1x66x4xbf16, #tpu.memory_space<vmem>>, vector<1x1x64x4xbf16>
    %14 = vector.shape_cast %13 : vector<1x1x64x4xbf16> to vector<64x4xbf16>
    %c2_17 = arith.constant 2 : index
    %c0_18 = arith.constant 0 : index
    %c0_19 = arith.constant 0 : index
    %15 = vector.load %arg5[%c2_17, %c0_18, %c0_19] : memref<9x4x4xbf16, #tpu.memory_space<vmem>>, vector<1x4x4xbf16>
    %16 = vector.shape_cast %15 : vector<1x4x4xbf16> to vector<4x4xbf16>
    %cst_20 = arith.constant dense<0.000000e+00> : vector<64x4xf32>
    %17 = tpu.matmul %14, %16, %cst_20 {dimension_numbers = #tpu.dot_dimension_numbers<[1], [0], [0], [1], [0, 0, 1, 1], [], []>} : vector<64x4xbf16>, vector<4x4xbf16>, vector<64x4xf32> -> vector<64x4xf32>
    %18 = arith.addf %12, %17 : vector<64x4xf32>
    %c0_21 = arith.constant 0 : index
    %c0_22 = arith.constant 0 : index
    %c0_23 = arith.constant 0 : index
    %c0_24 = arith.constant 0 : index
    %19 = vector.load %arg3[%c0_21, %c0_22, %c0_23, %c0_24] : memref<1x1x66x4xbf16, #tpu.memory_space<vmem>>, vector<1x1x64x4xbf16>
    %20 = vector.shape_cast %19 : vector<1x1x64x4xbf16> to vector<64x4xbf16>
    %c3 = arith.constant 3 : index
    %c0_25 = arith.constant 0 : index
    %c0_26 = arith.constant 0 : index
    %21 = vector.load %arg5[%c3, %c0_25, %c0_26] : memref<9x4x4xbf16, #tpu.memory_space<vmem>>, vector<1x4x4xbf16>
    %22 = vector.shape_cast %21 : vector<1x4x4xbf16> to vector<4x4xbf16>
    %cst_27 = arith.constant dense<0.000000e+00> : vector<64x4xf32>
    %23 = tpu.matmul %20, %22, %cst_27 {dimension_numbers = #tpu.dot_dimension_numbers<[1], [0], [0], [1], [0, 0, 1, 1], [], []>} : vector<64x4xbf16>, vector<4x4xbf16>, vector<64x4xf32> -> vector<64x4xf32>
    %24 = arith.addf %18, %23 : vector<64x4xf32>
    %c0_28 = arith.constant 0 : index
    %c0_29 = arith.constant 0 : index
    %c1_30 = arith.constant 1 : index
    %c0_31 = arith.constant 0 : index
    %25 = vector.load %arg3[%c0_28, %c0_29, %c1_30, %c0_31] : memref<1x1x66x4xbf16, #tpu.memory_space<vmem>>, vector<1x1x64x4xbf16>
    %26 = vector.shape_cast %25 : vector<1x1x64x4xbf16> to vector<64x4xbf16>
    %c4 = arith.constant 4 : index
    %c0_32 = arith.constant 0 : index
    %c0_33 = arith.constant 0 : index
    %27 = vector.load %arg5[%c4, %c0_32, %c0_33] : memref<9x4x4xbf16, #tpu.memory_space<vmem>>, vector<1x4x4xbf16>
    %28 = vector.shape_cast %27 : vector<1x4x4xbf16> to vector<4x4xbf16>
    %cst_34 = arith.constant dense<0.000000e+00> : vector<64x4xf32>
    %29 = tpu.matmul %26, %28, %cst_34 {dimension_numbers = #tpu.dot_dimension_numbers<[1], [0], [0], [1], [0, 0, 1, 1], [], []>} : vector<64x4xbf16>, vector<4x4xbf16>, vector<64x4xf32> -> vector<64x4xf32>
    %30 = arith.addf %24, %29 : vector<64x4xf32>
    %c0_35 = arith.constant 0 : index
    %c0_36 = arith.constant 0 : index
    %c2_37 = arith.constant 2 : index
    %c0_38 = arith.constant 0 : index
    %31 = vector.load %arg3[%c0_35, %c0_36, %c2_37, %c0_38] : memref<1x1x66x4xbf16, #tpu.memory_space<vmem>>, vector<1x1x64x4xbf16>
    %32 = vector.shape_cast %31 : vector<1x1x64x4xbf16> to vector<64x4xbf16>
    %c5 = arith.constant 5 : index
    %c0_39 = arith.constant 0 : index
    %c0_40 = arith.constant 0 : index
    %33 = vector.load %arg5[%c5, %c0_39, %c0_40] : memref<9x4x4xbf16, #tpu.memory_space<vmem>>, vector<1x4x4xbf16>
    %34 = vector.shape_cast %33 : vector<1x4x4xbf16> to vector<4x4xbf16>
    %cst_41 = arith.constant dense<0.000000e+00> : vector<64x4xf32>
    %35 = tpu.matmul %32, %34, %cst_41 {dimension_numbers = #tpu.dot_dimension_numbers<[1], [0], [0], [1], [0, 0, 1, 1], [], []>} : vector<64x4xbf16>, vector<4x4xbf16>, vector<64x4xf32> -> vector<64x4xf32>
    %36 = arith.addf %30, %35 : vector<64x4xf32>
    %c0_42 = arith.constant 0 : index
    %c0_43 = arith.constant 0 : index
    %c0_44 = arith.constant 0 : index
    %c0_45 = arith.constant 0 : index
    %37 = vector.load %arg4[%c0_42, %c0_43, %c0_44, %c0_45] : memref<1x1x66x4xbf16, #tpu.memory_space<vmem>>, vector<1x1x64x4xbf16>
    %38 = vector.shape_cast %37 : vector<1x1x64x4xbf16> to vector<64x4xbf16>
    %c6 = arith.constant 6 : index
    %c0_46 = arith.constant 0 : index
    %c0_47 = arith.constant 0 : index
    %39 = vector.load %arg5[%c6, %c0_46, %c0_47] : memref<9x4x4xbf16, #tpu.memory_space<vmem>>, vector<1x4x4xbf16>
    %40 = vector.shape_cast %39 : vector<1x4x4xbf16> to vector<4x4xbf16>
    %cst_48 = arith.constant dense<0.000000e+00> : vector<64x4xf32>
    %41 = tpu.matmul %38, %40, %cst_48 {dimension_numbers = #tpu.dot_dimension_numbers<[1], [0], [0], [1], [0, 0, 1, 1], [], []>} : vector<64x4xbf16>, vector<4x4xbf16>, vector<64x4xf32> -> vector<64x4xf32>
    %42 = arith.addf %36, %41 : vector<64x4xf32>
    %c0_49 = arith.constant 0 : index
    %c0_50 = arith.constant 0 : index
    %c1_51 = arith.constant 1 : index
    %c0_52 = arith.constant 0 : index
    %43 = vector.load %arg4[%c0_49, %c0_50, %c1_51, %c0_52] : memref<1x1x66x4xbf16, #tpu.memory_space<vmem>>, vector<1x1x64x4xbf16>
    %44 = vector.shape_cast %43 : vector<1x1x64x4xbf16> to vector<64x4xbf16>
    %c7 = arith.constant 7 : index
    %c0_53 = arith.constant 0 : index
    %c0_54 = arith.constant 0 : index
    %45 = vector.load %arg5[%c7, %c0_53, %c0_54] : memref<9x4x4xbf16, #tpu.memory_space<vmem>>, vector<1x4x4xbf16>
    %46 = vector.shape_cast %45 : vector<1x4x4xbf16> to vector<4x4xbf16>
    %cst_55 = arith.constant dense<0.000000e+00> : vector<64x4xf32>
    %47 = tpu.matmul %44, %46, %cst_55 {dimension_numbers = #tpu.dot_dimension_numbers<[1], [0], [0], [1], [0, 0, 1, 1], [], []>} : vector<64x4xbf16>, vector<4x4xbf16>, vector<64x4xf32> -> vector<64x4xf32>
    %48 = arith.addf %42, %47 : vector<64x4xf32>
    %c0_56 = arith.constant 0 : index
    %c0_57 = arith.constant 0 : index
    %c2_58 = arith.constant 2 : index
    %c0_59 = arith.constant 0 : index
    %49 = vector.load %arg4[%c0_56, %c0_57, %c2_58, %c0_59] : memref<1x1x66x4xbf16, #tpu.memory_space<vmem>>, vector<1x1x64x4xbf16>
    %50 = vector.shape_cast %49 : vector<1x1x64x4xbf16> to vector<64x4xbf16>
    %c8 = arith.constant 8 : index
    %c0_60 = arith.constant 0 : index
    %c0_61 = arith.constant 0 : index
    %51 = vector.load %arg5[%c8, %c0_60, %c0_61] : memref<9x4x4xbf16, #tpu.memory_space<vmem>>, vector<1x4x4xbf16>
    %52 = vector.shape_cast %51 : vector<1x4x4xbf16> to vector<4x4xbf16>
    %cst_62 = arith.constant dense<0.000000e+00> : vector<64x4xf32>
    %53 = tpu.matmul %50, %52, %cst_62 {dimension_numbers = #tpu.dot_dimension_numbers<[1], [0], [0], [1], [0, 0, 1, 1], [], []>} : vector<64x4xbf16>, vector<4x4xbf16>, vector<64x4xf32> -> vector<64x4xf32>
    %54 = arith.addf %48, %53 : vector<64x4xf32>
    %c0_63 = arith.constant 0 : index
    %c0_64 = arith.constant 0 : index
    %55 = vector.load %arg6[%c0_63, %c0_64] : memref<1x4xf32, #tpu.memory_space<vmem>>, vector<1x4xf32>
    %56 = vector.broadcast %55 : vector<1x4xf32> to vector<64x4xf32>
    %57 = arith.addf %54, %56 : vector<64x4xf32>
    %cst_65 = arith.constant 0.000000e+00 : f32
    %58 = vector.broadcast %cst_65 : f32 to vector<64x4xf32>
    %59 = arith.maximumf %57, %58 : vector<64x4xf32>
    %60 = arith.truncf %59 : vector<64x4xf32> to vector<64x4xbf16>
    %c0_66 = arith.constant 0 : index
    %c0_67 = arith.constant 0 : index
    %c0_68 = arith.constant 0 : index
    %c0_69 = arith.constant 0 : index
    %61 = vector.load %arg7[%c0_66, %c0_67, %c0_68, %c0_69] : memref<1x1x64x4xbf16, #tpu.memory_space<vmem>>, vector<1x1x64x4xbf16>
    %62 = vector.shape_cast %61 : vector<1x1x64x4xbf16> to vector<64x4xbf16>
    %63 = vector.shape_cast %60 : vector<64x4xbf16> to vector<1x1x64x4xbf16>
    tpu.vector_store %arg7[%c0_66, %c0_67, %c0_68, %c0_69], %63 {strides = array<i32>} : memref<1x1x64x4xbf16, #tpu.memory_space<vmem>>, vector<1x1x64x4xbf16>,
    return
  }
  func.func @transform_0(%arg0: i32, %arg1: i32) -> (i32, i32, i32, i32) {
    %c0_i32 = arith.constant 0 : i32
    %0 = arith.addi %arg1, %c0_i32 : i32
    %c0_i32_0 = arith.constant 0 : i32
    %c0_i32_1 = arith.constant 0 : i32
    %c0_i32_2 = arith.constant 0 : i32
    return %arg0, %0, %c0_i32_0, %c0_i32_1 : i32, i32, i32, i32
  }
  func.func @transform_1(%arg0: i32, %arg1: i32) -> (i32, i32, i32, i32) {
    %c1_i32 = arith.constant 1 : i32
    %0 = arith.addi %arg1, %c1_i32 : i32
    %c0_i32 = arith.constant 0 : i32
    %c0_i32_0 = arith.constant 0 : i32
    %c0_i32_1 = arith.constant 0 : i32
    return %arg0, %0, %c0_i32, %c0_i32_0 : i32, i32, i32, i32
  }
  func.func @transform_2(%arg0: i32, %arg1: i32) -> (i32, i32, i32, i32) {
    %c2_i32 = arith.constant 2 : i32
    %0 = arith.addi %arg1, %c2_i32 : i32
    %c0_i32 = arith.constant 0 : i32
    %c0_i32_0 = arith.constant 0 : i32
    %c0_i32_1 = arith.constant 0 : i32
    return %arg0, %0, %c0_i32, %c0_i32_0 : i32, i32, i32, i32
  }
  func.func @transform_3(%arg0: i32, %arg1: i32) -> (i32, i32, i32) {
    %c0_i32 = arith.constant 0 : i32
    %c0_i32_0 = arith.constant 0 : i32
    %c0_i32_1 = arith.constant 0 : i32
    %c0_i32_2 = arith.constant 0 : i32
    return %c0_i32, %c0_i32_0, %c0_i32_1 : i32, i32, i32
  }
  func.func @transform_4(%arg0: i32, %arg1: i32) -> (i32, i32) {
    %c0_i32 = arith.constant 0 : i32
    %c0_i32_0 = arith.constant 0 : i32
    %c0_i32_1 = arith.constant 0 : i32
    return %c0_i32, %c0_i32_0 : i32, i32
  }
  func.func @transform_5(%arg0: i32, %arg1: i32) -> (i32, i32, i32, i32) {
    %c0_i32 = arith.constant 0 : i32
    %c0_i32_0 = arith.constant 0 : i32
    %c0_i32_1 = arith.constant 0 : i32
    return %arg0, %arg1, %c0_i32, %c0_i32_0 : i32, i32, i32, i32
  }
}

module attributes {stable_mosaic.version = 11 : i64} {
  func.func @_deconv2x2_row_kernel(%arg0: i32, %arg1: i32, %arg2: memref<1x1x64x4xbf16, #tpu.memory_space<vmem>>, %arg3: memref<2x4x4xbf16, #tpu.memory_space<vmem>>, %arg4: memref<1x4xf32, #tpu.memory_space<vmem>>, %arg5: memref<1x2x64x4xbf16, #tpu.memory_space<vmem>>) attributes {dimension_semantics = [#tpu.dimension_semantics<parallel>, #tpu.dimension_semantics<parallel>], iteration_bounds = array<i64: 2, 64>, scalar_prefetch = 0 : i64, scratch_operands = 0 : i64, tpu.core_type = #tpu.core_type<tc>, window_params = [{transform_indices = @transform_0, window_bounds = array<i64: 1, 1, 64, 4>}, {pipeline_mode = #tpu.pipeline_mode<synchronous>, transform_indices = @transform_1, window_bounds = array<i64: 2, 4, 4>}, {pipeline_mode = #tpu.pipeline_mode<synchronous>, transform_indices = @transform_2, window_bounds = array<i64: 1, 4>}, {transform_indices = @transform_3, window_bounds = array<i64: 1, 2, 64, 4>}]} {
    %c0 = arith.constant 0 : index
    %c0_0 = arith.constant 0 : index
    %c0_1 = arith.constant 0 : index
    %c0_2 = arith.constant 0 : index
    %0 = vector.load %arg2[%c0, %c0_0, %c0_1, %c0_2] : memref<1x1x64x4xbf16, #tpu.memory_space<vmem>>, vector<1x1x64x4xbf16>
    %1 = vector.shape_cast %0 : vector<1x1x64x4xbf16> to vector<64x4xbf16>
    %c0_3 = arith.constant 0 : index
    %c0_4 = arith.constant 0 : index
    %2 = vector.load %arg4[%c0_3, %c0_4] : memref<1x4xf32, #tpu.memory_space<vmem>>, vector<1x4xf32>
    %c0_5 = arith.constant 0 : index
    %c0_6 = arith.constant 0 : index
    %c0_7 = arith.constant 0 : index
    %3 = vector.load %arg3[%c0_5, %c0_6, %c0_7] : memref<2x4x4xbf16, #tpu.memory_space<vmem>>, vector<1x4x4xbf16>
    %4 = vector.shape_cast %3 : vector<1x4x4xbf16> to vector<4x4xbf16>
    %cst = arith.constant dense<0.000000e+00> : vector<64x4xf32>
    %5 = tpu.matmul %1, %4, %cst {dimension_numbers = #tpu.dot_dimension_numbers<[1], [0], [0], [1], [0, 0, 1, 1], [], []>} : vector<64x4xbf16>, vector<4x4xbf16>, vector<64x4xf32> -> vector<64x4xf32>
    %6 = vector.broadcast %2 : vector<1x4xf32> to vector<64x4xf32>
    %7 = arith.addf %5, %6 : vector<64x4xf32>
    %cst_8 = arith.constant 0.000000e+00 : f32
    %8 = vector.broadcast %cst_8 : f32 to vector<64x4xf32>
    %9 = arith.maximumf %7, %8 : vector<64x4xf32>
    %10 = arith.truncf %9 : vector<64x4xf32> to vector<64x4xbf16>
    %c0_9 = arith.constant 0 : index
    %c0_10 = arith.constant 0 : index
    %c0_11 = arith.constant 0 : index
    %c0_12 = arith.constant 0 : index
    %11 = vector.load %arg5[%c0_9, %c0_10, %c0_11, %c0_12] : memref<1x2x64x4xbf16, #tpu.memory_space<vmem>>, vector<1x1x64x4xbf16>
    %12 = vector.shape_cast %11 : vector<1x1x64x4xbf16> to vector<64x4xbf16>
    %13 = vector.shape_cast %10 : vector<64x4xbf16> to vector<1x1x64x4xbf16>
    tpu.vector_store %arg5[%c0_9, %c0_10, %c0_11, %c0_12], %13 {strides = array<i32>} : memref<1x2x64x4xbf16, #tpu.memory_space<vmem>>, vector<1x1x64x4xbf16>,
    %c1 = arith.constant 1 : index
    %c0_13 = arith.constant 0 : index
    %c0_14 = arith.constant 0 : index
    %14 = vector.load %arg3[%c1, %c0_13, %c0_14] : memref<2x4x4xbf16, #tpu.memory_space<vmem>>, vector<1x4x4xbf16>
    %15 = vector.shape_cast %14 : vector<1x4x4xbf16> to vector<4x4xbf16>
    %cst_15 = arith.constant dense<0.000000e+00> : vector<64x4xf32>
    %16 = tpu.matmul %1, %15, %cst_15 {dimension_numbers = #tpu.dot_dimension_numbers<[1], [0], [0], [1], [0, 0, 1, 1], [], []>} : vector<64x4xbf16>, vector<4x4xbf16>, vector<64x4xf32> -> vector<64x4xf32>
    %17 = vector.broadcast %2 : vector<1x4xf32> to vector<64x4xf32>
    %18 = arith.addf %16, %17 : vector<64x4xf32>
    %cst_16 = arith.constant 0.000000e+00 : f32
    %19 = vector.broadcast %cst_16 : f32 to vector<64x4xf32>
    %20 = arith.maximumf %18, %19 : vector<64x4xf32>
    %21 = arith.truncf %20 : vector<64x4xf32> to vector<64x4xbf16>
    %c0_17 = arith.constant 0 : index
    %c1_18 = arith.constant 1 : index
    %c0_19 = arith.constant 0 : index
    %c0_20 = arith.constant 0 : index
    %22 = vector.load %arg5[%c0_17, %c1_18, %c0_19, %c0_20] : memref<1x2x64x4xbf16, #tpu.memory_space<vmem>>, vector<1x1x64x4xbf16>
    %23 = vector.shape_cast %22 : vector<1x1x64x4xbf16> to vector<64x4xbf16>
    %24 = vector.shape_cast %21 : vector<64x4xbf16> to vector<1x1x64x4xbf16>
    tpu.vector_store %arg5[%c0_17, %c1_18, %c0_19, %c0_20], %24 {strides = array<i32>} : memref<1x2x64x4xbf16, #tpu.memory_space<vmem>>, vector<1x1x64x4xbf16>,
    return
  }
  func.func @transform_0(%arg0: i32, %arg1: i32) -> (i32, i32, i32, i32) {
    %c0_i32 = arith.constant 0 : i32
    %c0_i32_0 = arith.constant 0 : i32
    %c0_i32_1 = arith.constant 0 : i32
    return %arg0, %arg1, %c0_i32, %c0_i32_0 : i32, i32, i32, i32
  }
  func.func @transform_1(%arg0: i32, %arg1: i32) -> (i32, i32, i32) {
    %c0_i32 = arith.constant 0 : i32
    %c0_i32_0 = arith.constant 0 : i32
    %c0_i32_1 = arith.constant 0 : i32
    %c0_i32_2 = arith.constant 0 : i32
    return %c0_i32, %c0_i32_0, %c0_i32_1 : i32, i32, i32
  }
  func.func @transform_2(%arg0: i32, %arg1: i32) -> (i32, i32) {
    %c0_i32 = arith.constant 0 : i32
    %c0_i32_0 = arith.constant 0 : i32
    %c0_i32_1 = arith.constant 0 : i32
    return %c0_i32, %c0_i32_0 : i32, i32
  }
  func.func @transform_3(%arg0: i32, %arg1: i32) -> (i32, i32, i32, i32) {
    %c0_i32 = arith.constant 0 : i32
    %c0_i32_0 = arith.constant 0 : i32
    %c0_i32_1 = arith.constant 0 : i32
    return %arg0, %arg1, %c0_i32, %c0_i32_0 : i32, i32, i32, i32
  }
}

module attributes {stable_mosaic.version = 11 : i64} {
  func.func @_conv3x3_row_kernel(%arg0: i32, %arg1: i32, %arg2: memref<1x1x130x2xbf16, #tpu.memory_space<vmem>>, %arg3: memref<1x1x130x2xbf16, #tpu.memory_space<vmem>>, %arg4: memref<1x1x130x2xbf16, #tpu.memory_space<vmem>>, %arg5: memref<9x2x2xbf16, #tpu.memory_space<vmem>>, %arg6: memref<1x2xf32, #tpu.memory_space<vmem>>, %arg7: memref<1x1x128x2xbf16, #tpu.memory_space<vmem>>) attributes {dimension_semantics = [#tpu.dimension_semantics<parallel>, #tpu.dimension_semantics<parallel>], iteration_bounds = array<i64: 2, 128>, scalar_prefetch = 0 : i64, scratch_operands = 0 : i64, tpu.core_type = #tpu.core_type<tc>, window_params = [{transform_indices = @transform_0, window_bounds = array<i64: 1, 1, 130, 2>}, {transform_indices = @transform_1, window_bounds = array<i64: 1, 1, 130, 2>}, {transform_indices = @transform_2, window_bounds = array<i64: 1, 1, 130, 2>}, {pipeline_mode = #tpu.pipeline_mode<synchronous>, transform_indices = @transform_3, window_bounds = array<i64: 9, 2, 2>}, {pipeline_mode = #tpu.pipeline_mode<synchronous>, transform_indices = @transform_4, window_bounds = array<i64: 1, 2>}, {transform_indices = @transform_5, window_bounds = array<i64: 1, 1, 128, 2>}]} {
    %cst = arith.constant 0.000000e+00 : f32
    %0 = vector.broadcast %cst : f32 to vector<128x2xf32>
    %c0 = arith.constant 0 : index
    %c0_0 = arith.constant 0 : index
    %c0_1 = arith.constant 0 : index
    %c0_2 = arith.constant 0 : index
    %1 = vector.load %arg2[%c0, %c0_0, %c0_1, %c0_2] : memref<1x1x130x2xbf16, #tpu.memory_space<vmem>>, vector<1x1x128x2xbf16>
    %2 = vector.shape_cast %1 : vector<1x1x128x2xbf16> to vector<128x2xbf16>
    %c0_3 = arith.constant 0 : index
    %c0_4 = arith.constant 0 : index
    %c0_5 = arith.constant 0 : index
    %3 = vector.load %arg5[%c0_3, %c0_4, %c0_5] : memref<9x2x2xbf16, #tpu.memory_space<vmem>>, vector<1x2x2xbf16>
    %4 = vector.shape_cast %3 : vector<1x2x2xbf16> to vector<2x2xbf16>
    %cst_6 = arith.constant dense<0.000000e+00> : vector<128x2xf32>
    %5 = tpu.matmul %2, %4, %cst_6 {dimension_numbers = #tpu.dot_dimension_numbers<[1], [0], [0], [1], [0, 0, 1, 1], [], []>} : vector<128x2xbf16>, vector<2x2xbf16>, vector<128x2xf32> -> vector<128x2xf32>
    %6 = arith.addf %0, %5 : vector<128x2xf32>
    %c0_7 = arith.constant 0 : index
    %c0_8 = arith.constant 0 : index
    %c1 = arith.constant 1 : index
    %c0_9 = arith.constant 0 : index
    %7 = vector.load %arg2[%c0_7, %c0_8, %c1, %c0_9] : memref<1x1x130x2xbf16, #tpu.memory_space<vmem>>, vector<1x1x128x2xbf16>
    %8 = vector.shape_cast %7 : vector<1x1x128x2xbf16> to vector<128x2xbf16>
    %c1_10 = arith.constant 1 : index
    %c0_11 = arith.constant 0 : index
    %c0_12 = arith.constant 0 : index
    %9 = vector.load %arg5[%c1_10, %c0_11, %c0_12] : memref<9x2x2xbf16, #tpu.memory_space<vmem>>, vector<1x2x2xbf16>
    %10 = vector.shape_cast %9 : vector<1x2x2xbf16> to vector<2x2xbf16>
    %cst_13 = arith.constant dense<0.000000e+00> : vector<128x2xf32>
    %11 = tpu.matmul %8, %10, %cst_13 {dimension_numbers = #tpu.dot_dimension_numbers<[1], [0], [0], [1], [0, 0, 1, 1], [], []>} : vector<128x2xbf16>, vector<2x2xbf16>, vector<128x2xf32> -> vector<128x2xf32>
    %12 = arith.addf %6, %11 : vector<128x2xf32>
    %c0_14 = arith.constant 0 : index
    %c0_15 = arith.constant 0 : index
    %c2 = arith.constant 2 : index
    %c0_16 = arith.constant 0 : index
    %13 = vector.load %arg2[%c0_14, %c0_15, %c2, %c0_16] : memref<1x1x130x2xbf16, #tpu.memory_space<vmem>>, vector<1x1x128x2xbf16>
    %14 = vector.shape_cast %13 : vector<1x1x128x2xbf16> to vector<128x2xbf16>
    %c2_17 = arith.constant 2 : index
    %c0_18 = arith.constant 0 : index
    %c0_19 = arith.constant 0 : index
    %15 = vector.load %arg5[%c2_17, %c0_18, %c0_19] : memref<9x2x2xbf16, #tpu.memory_space<vmem>>, vector<1x2x2xbf16>
    %16 = vector.shape_cast %15 : vector<1x2x2xbf16> to vector<2x2xbf16>
    %cst_20 = arith.constant dense<0.000000e+00> : vector<128x2xf32>
    %17 = tpu.matmul %14, %16, %cst_20 {dimension_numbers = #tpu.dot_dimension_numbers<[1], [0], [0], [1], [0, 0, 1, 1], [], []>} : vector<128x2xbf16>, vector<2x2xbf16>, vector<128x2xf32> -> vector<128x2xf32>
    %18 = arith.addf %12, %17 : vector<128x2xf32>
    %c0_21 = arith.constant 0 : index
    %c0_22 = arith.constant 0 : index
    %c0_23 = arith.constant 0 : index
    %c0_24 = arith.constant 0 : index
    %19 = vector.load %arg3[%c0_21, %c0_22, %c0_23, %c0_24] : memref<1x1x130x2xbf16, #tpu.memory_space<vmem>>, vector<1x1x128x2xbf16>
    %20 = vector.shape_cast %19 : vector<1x1x128x2xbf16> to vector<128x2xbf16>
    %c3 = arith.constant 3 : index
    %c0_25 = arith.constant 0 : index
    %c0_26 = arith.constant 0 : index
    %21 = vector.load %arg5[%c3, %c0_25, %c0_26] : memref<9x2x2xbf16, #tpu.memory_space<vmem>>, vector<1x2x2xbf16>
    %22 = vector.shape_cast %21 : vector<1x2x2xbf16> to vector<2x2xbf16>
    %cst_27 = arith.constant dense<0.000000e+00> : vector<128x2xf32>
    %23 = tpu.matmul %20, %22, %cst_27 {dimension_numbers = #tpu.dot_dimension_numbers<[1], [0], [0], [1], [0, 0, 1, 1], [], []>} : vector<128x2xbf16>, vector<2x2xbf16>, vector<128x2xf32> -> vector<128x2xf32>
    %24 = arith.addf %18, %23 : vector<128x2xf32>
    %c0_28 = arith.constant 0 : index
    %c0_29 = arith.constant 0 : index
    %c1_30 = arith.constant 1 : index
    %c0_31 = arith.constant 0 : index
    %25 = vector.load %arg3[%c0_28, %c0_29, %c1_30, %c0_31] : memref<1x1x130x2xbf16, #tpu.memory_space<vmem>>, vector<1x1x128x2xbf16>
    %26 = vector.shape_cast %25 : vector<1x1x128x2xbf16> to vector<128x2xbf16>
    %c4 = arith.constant 4 : index
    %c0_32 = arith.constant 0 : index
    %c0_33 = arith.constant 0 : index
    %27 = vector.load %arg5[%c4, %c0_32, %c0_33] : memref<9x2x2xbf16, #tpu.memory_space<vmem>>, vector<1x2x2xbf16>
    %28 = vector.shape_cast %27 : vector<1x2x2xbf16> to vector<2x2xbf16>
    %cst_34 = arith.constant dense<0.000000e+00> : vector<128x2xf32>
    %29 = tpu.matmul %26, %28, %cst_34 {dimension_numbers = #tpu.dot_dimension_numbers<[1], [0], [0], [1], [0, 0, 1, 1], [], []>} : vector<128x2xbf16>, vector<2x2xbf16>, vector<128x2xf32> -> vector<128x2xf32>
    %30 = arith.addf %24, %29 : vector<128x2xf32>
    %c0_35 = arith.constant 0 : index
    %c0_36 = arith.constant 0 : index
    %c2_37 = arith.constant 2 : index
    %c0_38 = arith.constant 0 : index
    %31 = vector.load %arg3[%c0_35, %c0_36, %c2_37, %c0_38] : memref<1x1x130x2xbf16, #tpu.memory_space<vmem>>, vector<1x1x128x2xbf16>
    %32 = vector.shape_cast %31 : vector<1x1x128x2xbf16> to vector<128x2xbf16>
    %c5 = arith.constant 5 : index
    %c0_39 = arith.constant 0 : index
    %c0_40 = arith.constant 0 : index
    %33 = vector.load %arg5[%c5, %c0_39, %c0_40] : memref<9x2x2xbf16, #tpu.memory_space<vmem>>, vector<1x2x2xbf16>
    %34 = vector.shape_cast %33 : vector<1x2x2xbf16> to vector<2x2xbf16>
    %cst_41 = arith.constant dense<0.000000e+00> : vector<128x2xf32>
    %35 = tpu.matmul %32, %34, %cst_41 {dimension_numbers = #tpu.dot_dimension_numbers<[1], [0], [0], [1], [0, 0, 1, 1], [], []>} : vector<128x2xbf16>, vector<2x2xbf16>, vector<128x2xf32> -> vector<128x2xf32>
    %36 = arith.addf %30, %35 : vector<128x2xf32>
    %c0_42 = arith.constant 0 : index
    %c0_43 = arith.constant 0 : index
    %c0_44 = arith.constant 0 : index
    %c0_45 = arith.constant 0 : index
    %37 = vector.load %arg4[%c0_42, %c0_43, %c0_44, %c0_45] : memref<1x1x130x2xbf16, #tpu.memory_space<vmem>>, vector<1x1x128x2xbf16>
    %38 = vector.shape_cast %37 : vector<1x1x128x2xbf16> to vector<128x2xbf16>
    %c6 = arith.constant 6 : index
    %c0_46 = arith.constant 0 : index
    %c0_47 = arith.constant 0 : index
    %39 = vector.load %arg5[%c6, %c0_46, %c0_47] : memref<9x2x2xbf16, #tpu.memory_space<vmem>>, vector<1x2x2xbf16>
    %40 = vector.shape_cast %39 : vector<1x2x2xbf16> to vector<2x2xbf16>
    %cst_48 = arith.constant dense<0.000000e+00> : vector<128x2xf32>
    %41 = tpu.matmul %38, %40, %cst_48 {dimension_numbers = #tpu.dot_dimension_numbers<[1], [0], [0], [1], [0, 0, 1, 1], [], []>} : vector<128x2xbf16>, vector<2x2xbf16>, vector<128x2xf32> -> vector<128x2xf32>
    %42 = arith.addf %36, %41 : vector<128x2xf32>
    %c0_49 = arith.constant 0 : index
    %c0_50 = arith.constant 0 : index
    %c1_51 = arith.constant 1 : index
    %c0_52 = arith.constant 0 : index
    %43 = vector.load %arg4[%c0_49, %c0_50, %c1_51, %c0_52] : memref<1x1x130x2xbf16, #tpu.memory_space<vmem>>, vector<1x1x128x2xbf16>
    %44 = vector.shape_cast %43 : vector<1x1x128x2xbf16> to vector<128x2xbf16>
    %c7 = arith.constant 7 : index
    %c0_53 = arith.constant 0 : index
    %c0_54 = arith.constant 0 : index
    %45 = vector.load %arg5[%c7, %c0_53, %c0_54] : memref<9x2x2xbf16, #tpu.memory_space<vmem>>, vector<1x2x2xbf16>
    %46 = vector.shape_cast %45 : vector<1x2x2xbf16> to vector<2x2xbf16>
    %cst_55 = arith.constant dense<0.000000e+00> : vector<128x2xf32>
    %47 = tpu.matmul %44, %46, %cst_55 {dimension_numbers = #tpu.dot_dimension_numbers<[1], [0], [0], [1], [0, 0, 1, 1], [], []>} : vector<128x2xbf16>, vector<2x2xbf16>, vector<128x2xf32> -> vector<128x2xf32>
    %48 = arith.addf %42, %47 : vector<128x2xf32>
    %c0_56 = arith.constant 0 : index
    %c0_57 = arith.constant 0 : index
    %c2_58 = arith.constant 2 : index
    %c0_59 = arith.constant 0 : index
    %49 = vector.load %arg4[%c0_56, %c0_57, %c2_58, %c0_59] : memref<1x1x130x2xbf16, #tpu.memory_space<vmem>>, vector<1x1x128x2xbf16>
    %50 = vector.shape_cast %49 : vector<1x1x128x2xbf16> to vector<128x2xbf16>
    %c8 = arith.constant 8 : index
    %c0_60 = arith.constant 0 : index
    %c0_61 = arith.constant 0 : index
    %51 = vector.load %arg5[%c8, %c0_60, %c0_61] : memref<9x2x2xbf16, #tpu.memory_space<vmem>>, vector<1x2x2xbf16>
    %52 = vector.shape_cast %51 : vector<1x2x2xbf16> to vector<2x2xbf16>
    %cst_62 = arith.constant dense<0.000000e+00> : vector<128x2xf32>
    %53 = tpu.matmul %50, %52, %cst_62 {dimension_numbers = #tpu.dot_dimension_numbers<[1], [0], [0], [1], [0, 0, 1, 1], [], []>} : vector<128x2xbf16>, vector<2x2xbf16>, vector<128x2xf32> -> vector<128x2xf32>
    %54 = arith.addf %48, %53 : vector<128x2xf32>
    %c0_63 = arith.constant 0 : index
    %c0_64 = arith.constant 0 : index
    %55 = vector.load %arg6[%c0_63, %c0_64] : memref<1x2xf32, #tpu.memory_space<vmem>>, vector<1x2xf32>
    %56 = vector.broadcast %55 : vector<1x2xf32> to vector<128x2xf32>
    %57 = arith.addf %54, %56 : vector<128x2xf32>
    %cst_65 = arith.constant 0.000000e+00 : f32
    %58 = vector.broadcast %cst_65 : f32 to vector<128x2xf32>
    %59 = arith.maximumf %57, %58 : vector<128x2xf32>
    %60 = arith.truncf %59 : vector<128x2xf32> to vector<128x2xbf16>
    %c0_66 = arith.constant 0 : index
    %c0_67 = arith.constant 0 : index
    %c0_68 = arith.constant 0 : index
    %c0_69 = arith.constant 0 : index
    %61 = vector.load %arg7[%c0_66, %c0_67, %c0_68, %c0_69] : memref<1x1x128x2xbf16, #tpu.memory_space<vmem>>, vector<1x1x128x2xbf16>
    %62 = vector.shape_cast %61 : vector<1x1x128x2xbf16> to vector<128x2xbf16>
    %63 = vector.shape_cast %60 : vector<128x2xbf16> to vector<1x1x128x2xbf16>
    tpu.vector_store %arg7[%c0_66, %c0_67, %c0_68, %c0_69], %63 {strides = array<i32>} : memref<1x1x128x2xbf16, #tpu.memory_space<vmem>>, vector<1x1x128x2xbf16>,
    return
  }
  func.func @transform_0(%arg0: i32, %arg1: i32) -> (i32, i32, i32, i32) {
    %c0_i32 = arith.constant 0 : i32
    %0 = arith.addi %arg1, %c0_i32 : i32
    %c0_i32_0 = arith.constant 0 : i32
    %c0_i32_1 = arith.constant 0 : i32
    %c0_i32_2 = arith.constant 0 : i32
    return %arg0, %0, %c0_i32_0, %c0_i32_1 : i32, i32, i32, i32
  }
  func.func @transform_1(%arg0: i32, %arg1: i32) -> (i32, i32, i32, i32) {
    %c1_i32 = arith.constant 1 : i32
    %0 = arith.addi %arg1, %c1_i32 : i32
    %c0_i32 = arith.constant 0 : i32
    %c0_i32_0 = arith.constant 0 : i32
    %c0_i32_1 = arith.constant 0 : i32
    return %arg0, %0, %c0_i32, %c0_i32_0 : i32, i32, i32, i32
  }
  func.func @transform_2(%arg0: i32, %arg1: i32) -> (i32, i32, i32, i32) {
    %c2_i32 = arith.constant 2 : i32
    %0 = arith.addi %arg1, %c2_i32 : i32
    %c0_i32 = arith.constant 0 : i32
    %c0_i32_0 = arith.constant 0 : i32
    %c0_i32_1 = arith.constant 0 : i32
    return %arg0, %0, %c0_i32, %c0_i32_0 : i32, i32, i32, i32
  }
  func.func @transform_3(%arg0: i32, %arg1: i32) -> (i32, i32, i32) {
    %c0_i32 = arith.constant 0 : i32
    %c0_i32_0 = arith.constant 0 : i32
    %c0_i32_1 = arith.constant 0 : i32
    %c0_i32_2 = arith.constant 0 : i32
    return %c0_i32, %c0_i32_0, %c0_i32_1 : i32, i32, i32
  }
  func.func @transform_4(%arg0: i32, %arg1: i32) -> (i32, i32) {
    %c0_i32 = arith.constant 0 : i32
    %c0_i32_0 = arith.constant 0 : i32
    %c0_i32_1 = arith.constant 0 : i32
    return %c0_i32, %c0_i32_0 : i32, i32
  }
  func.func @transform_5(%arg0: i32, %arg1: i32) -> (i32, i32, i32, i32) {
    %c0_i32 = arith.constant 0 : i32
    %c0_i32_0 = arith.constant 0 : i32
    %c0_i32_1 = arith.constant 0 : i32
    return %arg0, %arg1, %c0_i32, %c0_i32_0 : i32, i32, i32, i32
  }
}

module attributes {stable_mosaic.version = 11 : i64} {
  func.func @_conv3x3_row_kernel(%arg0: i32, %arg1: i32, %arg2: memref<1x1x130x2xbf16, #tpu.memory_space<vmem>>, %arg3: memref<1x1x130x2xbf16, #tpu.memory_space<vmem>>, %arg4: memref<1x1x130x2xbf16, #tpu.memory_space<vmem>>, %arg5: memref<9x2x1xbf16, #tpu.memory_space<vmem>>, %arg6: memref<1x1xf32, #tpu.memory_space<vmem>>, %arg7: memref<1x1x128x1xf32, #tpu.memory_space<vmem>>) attributes {dimension_semantics = [#tpu.dimension_semantics<parallel>, #tpu.dimension_semantics<parallel>], iteration_bounds = array<i64: 2, 128>, scalar_prefetch = 0 : i64, scratch_operands = 0 : i64, tpu.core_type = #tpu.core_type<tc>, window_params = [{transform_indices = @transform_0, window_bounds = array<i64: 1, 1, 130, 2>}, {transform_indices = @transform_1, window_bounds = array<i64: 1, 1, 130, 2>}, {transform_indices = @transform_2, window_bounds = array<i64: 1, 1, 130, 2>}, {pipeline_mode = #tpu.pipeline_mode<synchronous>, transform_indices = @transform_3, window_bounds = array<i64: 9, 2, 1>}, {pipeline_mode = #tpu.pipeline_mode<synchronous>, transform_indices = @transform_4, window_bounds = array<i64: 1, 1>}, {transform_indices = @transform_5, window_bounds = array<i64: 1, 1, 128, 1>}]} {
    %cst = arith.constant 0.000000e+00 : f32
    %0 = vector.broadcast %cst : f32 to vector<128x1xf32>
    %c0 = arith.constant 0 : index
    %c0_0 = arith.constant 0 : index
    %c0_1 = arith.constant 0 : index
    %c0_2 = arith.constant 0 : index
    %1 = vector.load %arg2[%c0, %c0_0, %c0_1, %c0_2] : memref<1x1x130x2xbf16, #tpu.memory_space<vmem>>, vector<1x1x128x2xbf16>
    %2 = vector.shape_cast %1 : vector<1x1x128x2xbf16> to vector<128x2xbf16>
    %c0_3 = arith.constant 0 : index
    %c0_4 = arith.constant 0 : index
    %c0_5 = arith.constant 0 : index
    %3 = vector.load %arg5[%c0_3, %c0_4, %c0_5] : memref<9x2x1xbf16, #tpu.memory_space<vmem>>, vector<1x2x1xbf16>
    %4 = vector.shape_cast %3 : vector<1x2x1xbf16> to vector<2x1xbf16>
    %cst_6 = arith.constant dense<0.000000e+00> : vector<128x1xf32>
    %5 = tpu.matmul %2, %4, %cst_6 {dimension_numbers = #tpu.dot_dimension_numbers<[1], [0], [0], [1], [0, 0, 1, 1], [], []>} : vector<128x2xbf16>, vector<2x1xbf16>, vector<128x1xf32> -> vector<128x1xf32>
    %6 = arith.addf %0, %5 : vector<128x1xf32>
    %c0_7 = arith.constant 0 : index
    %c0_8 = arith.constant 0 : index
    %c1 = arith.constant 1 : index
    %c0_9 = arith.constant 0 : index
    %7 = vector.load %arg2[%c0_7, %c0_8, %c1, %c0_9] : memref<1x1x130x2xbf16, #tpu.memory_space<vmem>>, vector<1x1x128x2xbf16>
    %8 = vector.shape_cast %7 : vector<1x1x128x2xbf16> to vector<128x2xbf16>
    %c1_10 = arith.constant 1 : index
    %c0_11 = arith.constant 0 : index
    %c0_12 = arith.constant 0 : index
    %9 = vector.load %arg5[%c1_10, %c0_11, %c0_12] : memref<9x2x1xbf16, #tpu.memory_space<vmem>>, vector<1x2x1xbf16>
    %10 = vector.shape_cast %9 : vector<1x2x1xbf16> to vector<2x1xbf16>
    %cst_13 = arith.constant dense<0.000000e+00> : vector<128x1xf32>
    %11 = tpu.matmul %8, %10, %cst_13 {dimension_numbers = #tpu.dot_dimension_numbers<[1], [0], [0], [1], [0, 0, 1, 1], [], []>} : vector<128x2xbf16>, vector<2x1xbf16>, vector<128x1xf32> -> vector<128x1xf32>
    %12 = arith.addf %6, %11 : vector<128x1xf32>
    %c0_14 = arith.constant 0 : index
    %c0_15 = arith.constant 0 : index
    %c2 = arith.constant 2 : index
    %c0_16 = arith.constant 0 : index
    %13 = vector.load %arg2[%c0_14, %c0_15, %c2, %c0_16] : memref<1x1x130x2xbf16, #tpu.memory_space<vmem>>, vector<1x1x128x2xbf16>
    %14 = vector.shape_cast %13 : vector<1x1x128x2xbf16> to vector<128x2xbf16>
    %c2_17 = arith.constant 2 : index
    %c0_18 = arith.constant 0 : index
    %c0_19 = arith.constant 0 : index
    %15 = vector.load %arg5[%c2_17, %c0_18, %c0_19] : memref<9x2x1xbf16, #tpu.memory_space<vmem>>, vector<1x2x1xbf16>
    %16 = vector.shape_cast %15 : vector<1x2x1xbf16> to vector<2x1xbf16>
    %cst_20 = arith.constant dense<0.000000e+00> : vector<128x1xf32>
    %17 = tpu.matmul %14, %16, %cst_20 {dimension_numbers = #tpu.dot_dimension_numbers<[1], [0], [0], [1], [0, 0, 1, 1], [], []>} : vector<128x2xbf16>, vector<2x1xbf16>, vector<128x1xf32> -> vector<128x1xf32>
    %18 = arith.addf %12, %17 : vector<128x1xf32>
    %c0_21 = arith.constant 0 : index
    %c0_22 = arith.constant 0 : index
    %c0_23 = arith.constant 0 : index
    %c0_24 = arith.constant 0 : index
    %19 = vector.load %arg3[%c0_21, %c0_22, %c0_23, %c0_24] : memref<1x1x130x2xbf16, #tpu.memory_space<vmem>>, vector<1x1x128x2xbf16>
    %20 = vector.shape_cast %19 : vector<1x1x128x2xbf16> to vector<128x2xbf16>
    %c3 = arith.constant 3 : index
    %c0_25 = arith.constant 0 : index
    %c0_26 = arith.constant 0 : index
    %21 = vector.load %arg5[%c3, %c0_25, %c0_26] : memref<9x2x1xbf16, #tpu.memory_space<vmem>>, vector<1x2x1xbf16>
    %22 = vector.shape_cast %21 : vector<1x2x1xbf16> to vector<2x1xbf16>
    %cst_27 = arith.constant dense<0.000000e+00> : vector<128x1xf32>
    %23 = tpu.matmul %20, %22, %cst_27 {dimension_numbers = #tpu.dot_dimension_numbers<[1], [0], [0], [1], [0, 0, 1, 1], [], []>} : vector<128x2xbf16>, vector<2x1xbf16>, vector<128x1xf32> -> vector<128x1xf32>
    %24 = arith.addf %18, %23 : vector<128x1xf32>
    %c0_28 = arith.constant 0 : index
    %c0_29 = arith.constant 0 : index
    %c1_30 = arith.constant 1 : index
    %c0_31 = arith.constant 0 : index
    %25 = vector.load %arg3[%c0_28, %c0_29, %c1_30, %c0_31] : memref<1x1x130x2xbf16, #tpu.memory_space<vmem>>, vector<1x1x128x2xbf16>
    %26 = vector.shape_cast %25 : vector<1x1x128x2xbf16> to vector<128x2xbf16>
    %c4 = arith.constant 4 : index
    %c0_32 = arith.constant 0 : index
    %c0_33 = arith.constant 0 : index
    %27 = vector.load %arg5[%c4, %c0_32, %c0_33] : memref<9x2x1xbf16, #tpu.memory_space<vmem>>, vector<1x2x1xbf16>
    %28 = vector.shape_cast %27 : vector<1x2x1xbf16> to vector<2x1xbf16>
    %cst_34 = arith.constant dense<0.000000e+00> : vector<128x1xf32>
    %29 = tpu.matmul %26, %28, %cst_34 {dimension_numbers = #tpu.dot_dimension_numbers<[1], [0], [0], [1], [0, 0, 1, 1], [], []>} : vector<128x2xbf16>, vector<2x1xbf16>, vector<128x1xf32> -> vector<128x1xf32>
    %30 = arith.addf %24, %29 : vector<128x1xf32>
    %c0_35 = arith.constant 0 : index
    %c0_36 = arith.constant 0 : index
    %c2_37 = arith.constant 2 : index
    %c0_38 = arith.constant 0 : index
    %31 = vector.load %arg3[%c0_35, %c0_36, %c2_37, %c0_38] : memref<1x1x130x2xbf16, #tpu.memory_space<vmem>>, vector<1x1x128x2xbf16>
    %32 = vector.shape_cast %31 : vector<1x1x128x2xbf16> to vector<128x2xbf16>
    %c5 = arith.constant 5 : index
    %c0_39 = arith.constant 0 : index
    %c0_40 = arith.constant 0 : index
    %33 = vector.load %arg5[%c5, %c0_39, %c0_40] : memref<9x2x1xbf16, #tpu.memory_space<vmem>>, vector<1x2x1xbf16>
    %34 = vector.shape_cast %33 : vector<1x2x1xbf16> to vector<2x1xbf16>
    %cst_41 = arith.constant dense<0.000000e+00> : vector<128x1xf32>
    %35 = tpu.matmul %32, %34, %cst_41 {dimension_numbers = #tpu.dot_dimension_numbers<[1], [0], [0], [1], [0, 0, 1, 1], [], []>} : vector<128x2xbf16>, vector<2x1xbf16>, vector<128x1xf32> -> vector<128x1xf32>
    %36 = arith.addf %30, %35 : vector<128x1xf32>
    %c0_42 = arith.constant 0 : index
    %c0_43 = arith.constant 0 : index
    %c0_44 = arith.constant 0 : index
    %c0_45 = arith.constant 0 : index
    %37 = vector.load %arg4[%c0_42, %c0_43, %c0_44, %c0_45] : memref<1x1x130x2xbf16, #tpu.memory_space<vmem>>, vector<1x1x128x2xbf16>
    %38 = vector.shape_cast %37 : vector<1x1x128x2xbf16> to vector<128x2xbf16>
    %c6 = arith.constant 6 : index
    %c0_46 = arith.constant 0 : index
    %c0_47 = arith.constant 0 : index
    %39 = vector.load %arg5[%c6, %c0_46, %c0_47] : memref<9x2x1xbf16, #tpu.memory_space<vmem>>, vector<1x2x1xbf16>
    %40 = vector.shape_cast %39 : vector<1x2x1xbf16> to vector<2x1xbf16>
    %cst_48 = arith.constant dense<0.000000e+00> : vector<128x1xf32>
    %41 = tpu.matmul %38, %40, %cst_48 {dimension_numbers = #tpu.dot_dimension_numbers<[1], [0], [0], [1], [0, 0, 1, 1], [], []>} : vector<128x2xbf16>, vector<2x1xbf16>, vector<128x1xf32> -> vector<128x1xf32>
    %42 = arith.addf %36, %41 : vector<128x1xf32>
    %c0_49 = arith.constant 0 : index
    %c0_50 = arith.constant 0 : index
    %c1_51 = arith.constant 1 : index
    %c0_52 = arith.constant 0 : index
    %43 = vector.load %arg4[%c0_49, %c0_50, %c1_51, %c0_52] : memref<1x1x130x2xbf16, #tpu.memory_space<vmem>>, vector<1x1x128x2xbf16>
    %44 = vector.shape_cast %43 : vector<1x1x128x2xbf16> to vector<128x2xbf16>
    %c7 = arith.constant 7 : index
    %c0_53 = arith.constant 0 : index
    %c0_54 = arith.constant 0 : index
    %45 = vector.load %arg5[%c7, %c0_53, %c0_54] : memref<9x2x1xbf16, #tpu.memory_space<vmem>>, vector<1x2x1xbf16>
    %46 = vector.shape_cast %45 : vector<1x2x1xbf16> to vector<2x1xbf16>
    %cst_55 = arith.constant dense<0.000000e+00> : vector<128x1xf32>
    %47 = tpu.matmul %44, %46, %cst_55 {dimension_numbers = #tpu.dot_dimension_numbers<[1], [0], [0], [1], [0, 0, 1, 1], [], []>} : vector<128x2xbf16>, vector<2x1xbf16>, vector<128x1xf32> -> vector<128x1xf32>
    %48 = arith.addf %42, %47 : vector<128x1xf32>
    %c0_56 = arith.constant 0 : index
    %c0_57 = arith.constant 0 : index
    %c2_58 = arith.constant 2 : index
    %c0_59 = arith.constant 0 : index
    %49 = vector.load %arg4[%c0_56, %c0_57, %c2_58, %c0_59] : memref<1x1x130x2xbf16, #tpu.memory_space<vmem>>, vector<1x1x128x2xbf16>
    %50 = vector.shape_cast %49 : vector<1x1x128x2xbf16> to vector<128x2xbf16>
    %c8 = arith.constant 8 : index
    %c0_60 = arith.constant 0 : index
    %c0_61 = arith.constant 0 : index
    %51 = vector.load %arg5[%c8, %c0_60, %c0_61] : memref<9x2x1xbf16, #tpu.memory_space<vmem>>, vector<1x2x1xbf16>
    %52 = vector.shape_cast %51 : vector<1x2x1xbf16> to vector<2x1xbf16>
    %cst_62 = arith.constant dense<0.000000e+00> : vector<128x1xf32>
    %53 = tpu.matmul %50, %52, %cst_62 {dimension_numbers = #tpu.dot_dimension_numbers<[1], [0], [0], [1], [0, 0, 1, 1], [], []>} : vector<128x2xbf16>, vector<2x1xbf16>, vector<128x1xf32> -> vector<128x1xf32>
    %54 = arith.addf %48, %53 : vector<128x1xf32>
    %c0_63 = arith.constant 0 : index
    %c0_64 = arith.constant 0 : index
    %55 = vector.load %arg6[%c0_63, %c0_64] : memref<1x1xf32, #tpu.memory_space<vmem>>, vector<1x1xf32>
    %56 = vector.broadcast %55 : vector<1x1xf32> to vector<128x1xf32>
    %57 = arith.addf %54, %56 : vector<128x1xf32>
    %c0_65 = arith.constant 0 : index
    %c0_66 = arith.constant 0 : index
    %c0_67 = arith.constant 0 : index
    %c0_68 = arith.constant 0 : index
    %58 = vector.load %arg7[%c0_65, %c0_66, %c0_67, %c0_68] : memref<1x1x128x1xf32, #tpu.memory_space<vmem>>, vector<1x1x128x1xf32>
    %59 = vector.shape_cast %58 : vector<1x1x128x1xf32> to vector<128x1xf32>
    %60 = vector.shape_cast %57 : vector<128x1xf32> to vector<1x1x128x1xf32>
    tpu.vector_store %arg7[%c0_65, %c0_66, %c0_67, %c0_68], %60 {strides = array<i32>} : memref<1x1x128x1xf32, #tpu.memory_space<vmem>>, vector<1x1x128x1xf32>,
    return
  }
  func.func @transform_0(%arg0: i32, %arg1: i32) -> (i32, i32, i32, i32) {
    %c0_i32 = arith.constant 0 : i32
    %0 = arith.addi %arg1, %c0_i32 : i32
    %c0_i32_0 = arith.constant 0 : i32
    %c0_i32_1 = arith.constant 0 : i32
    %c0_i32_2 = arith.constant 0 : i32
    return %arg0, %0, %c0_i32_0, %c0_i32_1 : i32, i32, i32, i32
  }
  func.func @transform_1(%arg0: i32, %arg1: i32) -> (i32, i32, i32, i32) {
    %c1_i32 = arith.constant 1 : i32
    %0 = arith.addi %arg1, %c1_i32 : i32
    %c0_i32 = arith.constant 0 : i32
    %c0_i32_0 = arith.constant 0 : i32
    %c0_i32_1 = arith.constant 0 : i32
    return %arg0, %0, %c0_i32, %c0_i32_0 : i32, i32, i32, i32
  }
  func.func @transform_2(%arg0: i32, %arg1: i32) -> (i32, i32, i32, i32) {
    %c2_i32 = arith.constant 2 : i32
    %0 = arith.addi %arg1, %c2_i32 : i32
    %c0_i32 = arith.constant 0 : i32
    %c0_i32_0 = arith.constant 0 : i32
    %c0_i32_1 = arith.constant 0 : i32
    return %arg0, %0, %c0_i32, %c0_i32_0 : i32, i32, i32, i32
  }
  func.func @transform_3(%arg0: i32, %arg1: i32) -> (i32, i32, i32) {
    %c0_i32 = arith.constant 0 : i32
    %c0_i32_0 = arith.constant 0 : i32
    %c0_i32_1 = arith.constant 0 : i32
    %c0_i32_2 = arith.constant 0 : i32
    return %c0_i32, %c0_i32_0, %c0_i32_1 : i32, i32, i32
  }
  func.func @transform_4(%arg0: i32, %arg1: i32) -> (i32, i32) {
    %c0_i32 = arith.constant 0 : i32
    %c0_i32_0 = arith.constant 0 : i32
    %c0_i32_1 = arith.constant 0 : i32
    return %c0_i32, %c0_i32_0 : i32, i32
  }
  func.func @transform_5(%arg0: i32, %arg1: i32) -> (i32, i32, i32, i32) {
    %c0_i32 = arith.constant 0 : i32
    %c0_i32_0 = arith.constant 0 : i32
    %c0_i32_1 = arith.constant 0 : i32
    return %arg0, %arg1, %c0_i32, %c0_i32_0 : i32, i32, i32, i32
  }
}

</mosaic_0001>

<llo_original>
// kernel: decoder_forward.11
$region0: #{decoder_forward.11}
  #allocation0 [shape = 'u32[]', space=smem, size = 0x4, offset = 0x4, fixed_abs, tag = 'smem constant byte address 0x4 - core index']
  #allocation1 [shape = 'u32[72,128]{1,0:T(1,128)}', space=vmem, size = 0x9000, scoped, tag = 'internal scratch']
  %s0 = inlined_call_operand.vmem [shape: bf16[2,4,4,16], index: 0, kind: input, shape index: {}]
  %s1 = inlined_call_operand.hbm [shape: bf16[2,16,32], index: 1, kind: input, shape index: {}]
  %s2 = inlined_call_operand.hbm [shape: f32[1,32], index: 2, kind: input, shape index: {}]
  %s3 = inlined_call_operand.vmem [shape: bf16[2,8,4,32], index: 3, kind: output, shape index: {}]
  %s4 = sld [smem:[#allocation0]]
  $region53: #{decoder_forward.11} parent=0
    _
  %s6 = ssub.s32 1, %s4
  %s7 = scalar_select 0, %s6, %s4
  $region1: #{decoder_forward.11} parent=0
    #allocation2 [shape = 'u8[8192]{0}', space=vmem, size = 0x2000, scoped, tag = 'input window, operand 1, single buffered']
    #allocation3 [shape = 's32[2]{0}', space=sflag, size = 0x8, scoped, tag = 'scoped memory for decoder_forward.11']
    #allocation4 [shape = 'u8[512]{0}', space=vmem, size = 0x400, scoped, tag = 'input window, operand 2, single buffered']
    #allocation5 [shape = 's32[1]{0}', space=sflag, size = 0x4, scoped, tag = 'scoped memory for decoder_forward.11']
    %8 = vsyncpa [#allocation3], 0
    %9 = vsyncpa [#allocation5], 0
    loop: start=0, step=1, limit=10
    $region2: #{decoder_forward.11} parent=1 // loop_pre_header
      _
    $region3: #{decoder_forward.11} parent=1 // loop_header
      %s11 = sphi 0, %s15
      %p12 = scmp.ge.s32.totalorder %s11, 10
      %s18 = sphi 0, %s30
      %s19 = sphi 0, %s26
      %s20 = sphi 0, %s18
      %s21 = sphi 0, %s19
      %s22 = sphi 0, %s20
      %s23 = sphi 0, %s21
      %s35 = sphi 0, %s37
      %s38 = sphi 0, %s35
      %s39 = sphi 0, %s38
      %s55 = sphi 0, %s39
      %s59 = sphi 0, %s59
      %s61 = sphi 0, %s59
      %s62 = sphi 0, %s61
      %s76 = sphi 0, %s62
      %s80 = sphi 0, %s80
      %s82 = sphi 0, %s80
      %s83 = sphi 0, %s82
      %s97 = sphi 0, %s83
      %s105 = sphi 0, %s107
      %s108 = sphi 0, %s105
      %s109 = sphi 0, %s108
      %s125 = sphi 0, %s109
    $region4: #{decoder_forward.11} parent=1 // loop_header_branch
      %14 = sbr.rel (%p12) target = $region8
    $region5: #{decoder_forward.11} parent=1 // loop_body
      %s16 = ssub.s32 %s11, 1
      %s17 = ssub.s32 %s11, 2
      %s24 = sadd.s32 1, %s19
      %p25 = scmp.ge.s32.totalorder %s24, 4
      %s26 = scalar_select %p25, 0, %s24
      %s27 = sadd.s32 1, %s18
      %s28 = scalar_select %p25, %s27, %s18
      %p29 = scmp.ge.s32.totalorder %s28, 2
      %s30 = scalar_select %p29, 0, %s28
      %s31 = ssub.s32 %s18, %s30
      %s32 = ssub.s32 %s19, %s26
      %s33 = sor.u32 %s31, %s32
      %p34 = scmp.eq.s32.totalorder %s33, 0
      %s36 = sadd.s32 %s35, 1
      %s37 = scalar_select %p34, %s35, %s36
      %p40 = pneg %p34
      %p41 = scmp.eq.s32.totalorder %s11, 7
      %p42 = por %p40, %p41
      %p43 = scmp.ne.s32.totalorder %s35, %s38
      %p44 = scmp.eq.s32.totalorder %s11, 0
      %p45 = por %p43, %p44
      %p46 = scmp.ne.s32.totalorder %s35, %s38
      %p47 = scmp.eq.s32.totalorder %s16, 7
      %p48 = por %p46, %p47
      %p49 = scmp.ne.s32.totalorder %s38, %s39
      %p50 = scmp.eq.s32.totalorder %s16, 0
      %p51 = por %p49, %p50
      %p52 = scmp.ne.s32.totalorder %s38, %s39
      %p53 = scmp.eq.s32.totalorder %s17, 7
      %p54 = por %p52, %p53
      %p56 = scmp.ne.s32.totalorder %s39, %s55
      %p57 = scmp.eq.s32.totalorder %s17, 0
      %p58 = por %p56, %p57
      %s60 = sadd.s32 %s59, 1
      %p63 = scmp.eq.s32.totalorder %s11, 7
      %p64 = scmp.ne.s32.totalorder %s59, %s61
      %p65 = scmp.eq.s32.totalorder %s11, 0
      %p66 = por %p64, %p65
      %p67 = scmp.ne.s32.totalorder %s59, %s61
      %p68 = scmp.eq.s32.totalorder %s16, 7
      %p69 = por %p67, %p68
      %p70 = scmp.ne.s32.totalorder %s61, %s62
      %p71 = scmp.eq.s32.totalorder %s16, 0
      %p72 = por %p70, %p71
      %p73 = scmp.ne.s32.totalorder %s61, %s62
      %p74 = scmp.eq.s32.totalorder %s17, 7
      %p75 = por %p73, %p74
      %p77 = scmp.ne.s32.totalorder %s62, %s76
      %p78 = scmp.eq.s32.totalorder %s17, 0
      %p79 = por %p77, %p78
      %s81 = sadd.s32 %s80, 1
      %p84 = scmp.eq.s32.totalorder %s11, 7
      %p85 = scmp.ne.s32.totalorder %s80, %s82
      %p86 = scmp.eq.s32.totalorder %s11, 0
      %p87 = por %p85, %p86
      %p88 = scmp.ne.s32.totalorder %s80, %s82
      %p89 = scmp.eq.s32.totalorder %s16, 7
      %p90 = por %p88, %p89
      %p91 = scmp.ne.s32.totalorder %s82, %s83
      %p92 = scmp.eq.s32.totalorder %s16, 0
      %p93 = por %p91, %p92
      %p94 = scmp.ne.s32.totalorder %s82, %s83
      %p95 = scmp.eq.s32.totalorder %s17, 7
      %p96 = por %p94, %p95
      %p98 = scmp.ne.s32.totalorder %s83, %s97
      %p99 = scmp.eq.s32.totalorder %s17, 0
      %p100 = por %p98, %p99
      %s101 = ssub.s32 %s18, %s30
      %s102 = ssub.s32 %s19, %s26
      %s103 = sor.u32 %s101, %s102
      %p104 = scmp.eq.s32.totalorder %s103, 0
      %s106 = sadd.s32 %s105, 1
      %s107 = scalar_select %p104, %s105, %s106
      %p110 = pneg %p104
      %p111 = scmp.eq.s32.totalorder %s11, 7
      %p112 = por %p110, %p111
      %p113 = scmp.ne.s32.totalorder %s105, %s108
      %p114 = scmp.eq.s32.totalorder %s11, 0
      %p115 = por %p113, %p114
      %p116 = scmp.ne.s32.totalorder %s105, %s108
      %p117 = scmp.eq.s32.totalorder %s16, 7
      %p118 = por %p116, %p117
      %p119 = scmp.ne.s32.totalorder %s108, %s109
      %p120 = scmp.eq.s32.totalorder %s16, 0
      %p121 = por %p119, %p120
      %p122 = scmp.ne.s32.totalorder %s108, %s109
      %p123 = scmp.eq.s32.totalorder %s17, 7
      %p124 = por %p122, %p123
      %p126 = scmp.ne.s32.totalorder %s109, %s125
      %p127 = scmp.eq.s32.totalorder %s17, 0
      %p128 = por %p126, %p127
      %p129 = scmp.le.s32.totalorder 1, %s11
      %p130 = scmp.lt.s32.totalorder %s11, 9
      %p131 = pnand %p129, %p130
      %p132 = pneg %p131
      // Predicated region
      $region9: #{decoder_forward.11} parent=5 // pred_check
        _
      $region10: #{decoder_forward.11} parent=5 // pred_check_branch
        %134 = sbr.rel (%p131) target = $region12
      $region11: #{decoder_forward.11} parent=5 // pred_region
        %s135 = ssub.s32 %s11, 1
        // Predicated region
        $region13: #{decoder_forward.11} parent=11 // pred_check
          %p136 = pneg %p72
        $region14: #{decoder_forward.11} parent=11 // pred_check_branch
          %138 = sbr.rel (%p136) target = $region16
        $region15: #{decoder_forward.11} parent=11 // pred_region
          %140 = vsyncadd [#allocation3], 0
          %s141 = sshll.u32 %s1, 4
          %s142 = int_to_ptr.hbm [resolvable:$true] %s141
          %s143 = sshll.u32 [#allocation2], 4
          %s144 = int_to_ptr.vmem [resolvable:$true] %s143
          %149 = dma.hbm_to_vmem [thread:$0]  %s142, 256, %s144, [#allocation3], 64, 64, 4
        $region16: #{decoder_forward.11} parent=11 // pred_fallthru
          _
        // Predicated region
        $region17: #{decoder_forward.11} parent=11 // pred_check
          %p150 = pneg %p93
        $region18: #{decoder_forward.11} parent=11 // pred_check_branch
          %152 = sbr.rel (%p150) target = $region20
        $region19: #{decoder_forward.11} parent=11 // pred_region
          %154 = vsyncadd [#allocation5], 0
          %s156 = sshll.u32 %s2, 4
          %s157 = int_to_ptr.hbm [resolvable:$true] %s156
          %s158 = sshll.u32 [#allocation4], 4
          %s159 = int_to_ptr.vmem [resolvable:$true] %s158
          %161 = dma.hbm_to_vmem [thread:$0]  %s157, 16, %s159, [#allocation5]
        $region20: #{decoder_forward.11} parent=11 // pred_fallthru
          _
      $region12: #{decoder_forward.11} parent=5 // pred_fallthru
        _
      %p162 = scmp.lt.s32.totalorder %s11, 8
      // Predicated region
      $region21: #{decoder_forward.11} parent=5 // pred_check
        %p163 = pneg %p162
      $region22: #{decoder_forward.11} parent=5 // pred_check_branch
        %165 = sbr.rel (%p163) target = $region24
      $region23: #{decoder_forward.11} parent=5 // pred_region
        // Predicated region
        $region25: #{decoder_forward.11} parent=23 // pred_check
          %p166 = pneg %p45
        $region26: #{decoder_forward.11} parent=23 // pred_check_branch
          %168 = sbr.rel (%p166) target = $region28
        $region27: #{decoder_forward.11} parent=23 // pred_region
          %p169 = scmp.lt.s32.totalorder %s18, 1
          %s170 = scalar_select %p169, %s18, 1
          %p171 = scmp.lt.s32.totalorder %s19, 3
          %s172 = scalar_select %p171, %s19, 3
          %s173 = smul.addr %s170, 4
          %s174 = sadd.s32 %s172, %s173
          %s175 = smul.addr %s174, 2
          %s176 = scalar_lea.vmem %s0, %s175
        $region28: #{decoder_forward.11} parent=23 // pred_fallthru
          _
      $region24: #{decoder_forward.11} parent=5 // pred_fallthru
        _
      %p177 = scmp.le.s32.totalorder 1, %s11
      %p178 = scmp.lt.s32.totalorder %s11, 9
      %p179 = pnand %p177, %p178
      %p180 = pneg %p179
      // Predicated region
      $region29: #{decoder_forward.11} parent=5 // pred_check
        _
      $region30: #{decoder_forward.11} parent=5 // pred_check_branch
        %182 = sbr.rel (%p179) target = $region32
      $region31: #{decoder_forward.11} parent=5 // pred_region
        %s183 = ssub.s32 %s11, 1
        // Predicated region
        $region33: #{decoder_forward.11} parent=31 // pred_check
          %p184 = pneg %p72
        $region34: #{decoder_forward.11} parent=31 // pred_check_branch
          %186 = sbr.rel (%p184) target = $region36
        $region35: #{decoder_forward.11} parent=31 // pred_region
          %188 = dma.done [#allocation3], 256
        $region36: #{decoder_forward.11} parent=31 // pred_fallthru
          _
        // Predicated region
        $region37: #{decoder_forward.11} parent=31 // pred_check
          %p189 = pneg %p93
        $region38: #{decoder_forward.11} parent=31 // pred_check_branch
          %191 = sbr.rel (%p189) target = $region40
        $region39: #{decoder_forward.11} parent=31 // pred_region
          %193 = dma.done [#allocation5], 16
        $region40: #{decoder_forward.11} parent=31 // pred_fallthru
          _
        %p194 = scmp.lt.s32.totalorder %s20, 1
        %s195 = scalar_select %p194, %s20, 1
        %p196 = scmp.lt.s32.totalorder %s21, 3
        %s197 = scalar_select %p196, %s21, 3
        %s198 = smul.addr %s195, 4
        %s199 = sadd.s32 %s197, %s198
        %s200 = smul.addr %s199, 2
        %s201 = scalar_lea.vmem %s0, %s200
        %p202 = pneg %p51
        %p203 = pneg %p48
        %p204 = pneg %p72
        %p205 = pneg %p69
        %p206 = pneg %p93
        %p207 = pneg %p90
        %p208 = pneg %p121
        %p209 = pneg %p118
        %s210 = smul.u32 2, %s21
        %p211 = scmp.lt.s32.totalorder %s20, 1
        %s212 = scalar_select %p211, %s20, 1
        %p213 = scmp.lt.s32.totalorder %s210, 7
        %s214 = scalar_select %p213, %s210, 7
        %s215 = smul.addr %s212, 8
        %s216 = sadd.s32 %s214, %s215
        %s217 = smul.addr %s216, 2
        %s218 = scalar_lea.vmem %s3, %s217
        %p219 = scmp.lt.s32.totalorder %s20, 1
        %s220 = scalar_select %p219, %s20, 1
        %p221 = scmp.lt.s32.totalorder %s21, 3
        %s222 = scalar_select %p221, %s21, 3
        %s223 = smul.addr %s220, 4
        %s224 = sadd.s32 %s222, %s223
        %s225 = smul.addr %s224, 2
        %s226 = scalar_lea.vmem %s0, %s225
        %s227 = smul.u32 2, %s21
        %p228 = scmp.lt.s32.totalorder %s20, 1
        %s229 = scalar_select %p228, %s20, 1
        %p230 = scmp.lt.s32.totalorder %s227, 7
        %s231 = scalar_select %p230, %s227, 7
        %s232 = smul.addr %s229, 8
        %s233 = sadd.s32 %s231, %s232
        %s234 = smul.addr %s233, 2
        %s235 = scalar_lea.vmem %s3, %s234
        %s236 = smul.u32 2, %s21
        %v238 = vld [vmem:[%s226] sm:$0x3]
        %v239 = vld [vmem:[#allocation4] sm:$0x1]
        %v240 = vld [vmem:[#allocation2] sm:$0xf]
        %v241 = vld [vmem:[#allocation2 + $0x4] sm:$0xf]
        %v243 = vperm.slane %v239, 0
        %v247 = vunpack.c.l.b16 %v240
        %v248 = vunpack.c.l.b16 %v241
        %v249 = vpack.c.b16 %v248, %v247
        %vm251 = vcmask 130048
        %v253 = vsel %vm251, %v238, 0
        %255 = vmatpush.bf16.msra.mxu0 0
        %256 = vmatpush.bf16.msra.mxu0 0
        %257 = vmatpush.bf16.msra.mxu0 0
        %258 = vmatpush.bf16.msra.mxu0 0
        %259 = vmatpush.bf16.msra.mxu0 0
        %260 = vmatpush.bf16.msra.mxu0 0
        %261 = vmatpush.bf16.msra.mxu0 0
        %262 = vmatpush.bf16.msra.mxu0 %v249
        %263 = vmatmul.bf16.gmra.mxu0 %v253
        %v264 = vpop.f32.mrf.mxu0
        %v265 = vadd.f32 %v243, %v264
        %v266 = vpop.f32.mrf.mxu0
        %267 = vdwg.mxu0
        %v268 = vmax.f32 %v265, 0.0
        %v269 = vpack.c.bf16 %v268, %v268
        %vm270 = vcmask 254976
        %271 = vst.msk [vmem:[%s235] sm:$0x3] %vm270, %v269
        %s272 = scalar_lea.vmem [#allocation2], 8
        %v273 = vld [vmem:[%s272] sm:$0xf]
        %v274 = vld [vmem:[%s272 + $0x4] sm:$0xf]
        %v277 = vunpack.c.l.b16 %v273
        %v278 = vunpack.c.l.b16 %v274
        %v279 = vpack.c.b16 %v278, %v277
        %281 = vmatpush.bf16.msra.mxu0 0
        %282 = vmatpush.bf16.msra.mxu0 0
        %283 = vmatpush.bf16.msra.mxu0 0
        %284 = vmatpush.bf16.msra.mxu0 0
        %285 = vmatpush.bf16.msra.mxu0 0
        %286 = vmatpush.bf16.msra.mxu0 0
        %287 = vmatpush.bf16.msra.mxu0 0
        %288 = vmatpush.bf16.msra.mxu0 %v279
        %289 = vmatmul.bf16.gmra.mxu0 %v253
        %v290 = vpop.f32.mrf.mxu0
        %v291 = vadd.f32 %v243, %v290
        %v292 = vpop.f32.mrf.mxu0
        %293 = vdwg.mxu0
        %v294 = vmax.f32 %v291, 0.0
        %v295 = vpack.c.bf16 %v294, %v294
        %s296 = scalar_lea.vmem %s235, 2
        %297 = vst.msk [vmem:[%s296] sm:$0x3] %vm270, %v295
        %s298 = smul.u32 2, %s21
        %p299 = scmp.lt.s32.totalorder %s20, 1
        %s300 = scalar_select %p299, %s20, 1
        %p301 = scmp.lt.s32.totalorder %s298, 7
        %s302 = scalar_select %p301, %s298, 7
        %s303 = smul.addr %s300, 8
        %s304 = sadd.s32 %s302, %s303
        %s305 = smul.addr %s304, 2
        %s306 = scalar_lea.vmem %s3, %s305
        // Predicated region
        $region41: #{decoder_forward.11} parent=31 // pred_check
          %p307 = pneg %p118
        $region42: #{decoder_forward.11} parent=31 // pred_check_branch
          %309 = sbr.rel (%p307) target = $region44
        $region43: #{decoder_forward.11} parent=31 // pred_region
          %s310 = smul.u32 2, %s21
        $region44: #{decoder_forward.11} parent=31 // pred_fallthru
          _
      $region32: #{decoder_forward.11} parent=5 // pred_fallthru
        _
      %p311 = scmp.le.s32.totalorder 2, %s11
      // Predicated region
      $region45: #{decoder_forward.11} parent=5 // pred_check
        %p312 = pneg %p311
      $region46: #{decoder_forward.11} parent=5 // pred_check_branch
        %314 = sbr.rel (%p312) target = $region48
      $region47: #{decoder_forward.11} parent=5 // pred_region
        %s315 = ssub.s32 %s11, 2
        // Predicated region
        $region49: #{decoder_forward.11} parent=47 // pred_check
          %p316 = pneg %p124
        $region50: #{decoder_forward.11} parent=47 // pred_check_branch
          %318 = sbr.rel (%p316) target = $region52
        $region51: #{decoder_forward.11} parent=47 // pred_region
          %s319 = smul.u32 2, %s23
          %p320 = scmp.lt.s32.totalorder %s22, 1
          %s321 = scalar_select %p320, %s22, 1
          %p322 = scmp.lt.s32.totalorder %s319, 7
          %s323 = scalar_select %p322, %s319, 7
          %s324 = smul.addr %s321, 8
          %s325 = sadd.s32 %s323, %s324
          %s326 = smul.addr %s325, 2
          %s327 = scalar_lea.vmem %s3, %s326
        $region52: #{decoder_forward.11} parent=47 // pred_fallthru
          _
      $region48: #{decoder_forward.11} parent=5 // pred_fallthru
        _
    $region6: #{decoder_forward.11} parent=1 // loop_footer
      %s15 = sadd.s32 1, %s11
    $region7: #{decoder_forward.11} parent=1 // loop_footer_branch
      %10 = sbr.rel target = $region3
    $region8: #{decoder_forward.11} parent=1 // loop_exit
      _
    %328 = vsyncpa [#allocation3], 1
    %s329 = scalar_lea.sflag [#allocation3], 1
    %330 = vsyncpa %s329, 1
    %331 = vsyncpa [#allocation5], 1

// kernel: decoder_forward.13
$region0: #{decoder_forward.13}
  #allocation0 [shape = 'u32[]', space=smem, size = 0x4, offset = 0x4, fixed_abs, tag = 'smem constant byte address 0x4 - core index']
  #allocation1 [shape = 'u32[72,128]{1,0:T(1,128)}', space=vmem, size = 0x9000, scoped, tag = 'internal scratch']
  %s0 = inlined_call_operand.vmem [shape: bf16[2,8,8,16], index: 0, kind: input, shape index: {}]
  %s1 = inlined_call_operand.hbm [shape: bf16[2,16,16], index: 1, kind: input, shape index: {}]
  %s2 = inlined_call_operand.hbm [shape: f32[1,16], index: 2, kind: input, shape index: {}]
  %s3 = inlined_call_operand.vmem [shape: bf16[2,16,8,16], index: 3, kind: output, shape index: {}]
  %s4 = sld [smem:[#allocation0]]
  $region53: #{decoder_forward.13} parent=0
    _
  %s6 = ssub.s32 1, %s4
  %s7 = scalar_select 0, %s6, %s4
  $region1: #{decoder_forward.13} parent=0
    #allocation2 [shape = 'u8[8192]{0}', space=vmem, size = 0x2000, scoped, tag = 'input window, operand 1, single buffered']
    #allocation3 [shape = 's32[2]{0}', space=sflag, size = 0x8, scoped, tag = 'scoped memory for decoder_forward.13']
    #allocation4 [shape = 'u8[512]{0}', space=vmem, size = 0x400, scoped, tag = 'input window, operand 2, single buffered']
    #allocation5 [shape = 's32[1]{0}', space=sflag, size = 0x4, scoped, tag = 'scoped memory for decoder_forward.13']
    %8 = vsyncpa [#allocation3], 0
    %9 = vsyncpa [#allocation5], 0
    loop: start=0, step=1, limit=18
    $region2: #{decoder_forward.13} parent=1 // loop_pre_header
      _
    $region3: #{decoder_forward.13} parent=1 // loop_header
      %s11 = sphi 0, %s15
      %p12 = scmp.ge.s32.totalorder %s11, 18
      %s18 = sphi 0, %s30
      %s19 = sphi 0, %s26
      %s20 = sphi 0, %s18
      %s21 = sphi 0, %s19
      %s22 = sphi 0, %s20
      %s23 = sphi 0, %s21
      %s35 = sphi 0, %s37
      %s38 = sphi 0, %s35
      %s39 = sphi 0, %s38
      %s55 = sphi 0, %s39
      %s59 = sphi 0, %s59
      %s61 = sphi 0, %s59
      %s62 = sphi 0, %s61
      %s76 = sphi 0, %s62
      %s80 = sphi 0, %s80
      %s82 = sphi 0, %s80
      %s83 = sphi 0, %s82
      %s97 = sphi 0, %s83
      %s105 = sphi 0, %s107
      %s108 = sphi 0, %s105
      %s109 = sphi 0, %s108
      %s125 = sphi 0, %s109
    $region4: #{decoder_forward.13} parent=1 // loop_header_branch
      %14 = sbr.rel (%p12) target = $region8
    $region5: #{decoder_forward.13} parent=1 // loop_body
      %s16 = ssub.s32 %s11, 1
      %s17 = ssub.s32 %s11, 2
      %s24 = sadd.s32 1, %s19
      %p25 = scmp.ge.s32.totalorder %s24, 8
      %s26 = scalar_select %p25, 0, %s24
      %s27 = sadd.s32 1, %s18
      %s28 = scalar_select %p25, %s27, %s18
      %p29 = scmp.ge.s32.totalorder %s28, 2
      %s30 = scalar_select %p29, 0, %s28
      %s31 = ssub.s32 %s18, %s30
      %s32 = ssub.s32 %s19, %s26
      %s33 = sor.u32 %s31, %s32
      %p34 = scmp.eq.s32.totalorder %s33, 0
      %s36 = sadd.s32 %s35, 1
      %s37 = scalar_select %p34, %s35, %s36
      %p40 = pneg %p34
      %p41 = scmp.eq.s32.totalorder %s11, 15
      %p42 = por %p40, %p41
      %p43 = scmp.ne.s32.totalorder %s35, %s38
      %p44 = scmp.eq.s32.totalorder %s11, 0
      %p45 = por %p43, %p44
      %p46 = scmp.ne.s32.totalorder %s35, %s38
      %p47 = scmp.eq.s32.totalorder %s16, 15
      %p48 = por %p46, %p47
      %p49 = scmp.ne.s32.totalorder %s38, %s39
      %p50 = scmp.eq.s32.totalorder %s16, 0
      %p51 = por %p49, %p50
      %p52 = scmp.ne.s32.totalorder %s38, %s39
      %p53 = scmp.eq.s32.totalorder %s17, 15
      %p54 = por %p52, %p53
      %p56 = scmp.ne.s32.totalorder %s39, %s55
      %p57 = scmp.eq.s32.totalorder %s17, 0
      %p58 = por %p56, %p57
      %s60 = sadd.s32 %s59, 1
      %p63 = scmp.eq.s32.totalorder %s11, 15
      %p64 = scmp.ne.s32.totalorder %s59, %s61
      %p65 = scmp.eq.s32.totalorder %s11, 0
      %p66 = por %p64, %p65
      %p67 = scmp.ne.s32.totalorder %s59, %s61
      %p68 = scmp.eq.s32.totalorder %s16, 15
      %p69 = por %p67, %p68
      %p70 = scmp.ne.s32.totalorder %s61, %s62
      %p71 = scmp.eq.s32.totalorder %s16, 0
      %p72 = por %p70, %p71
      %p73 = scmp.ne.s32.totalorder %s61, %s62
      %p74 = scmp.eq.s32.totalorder %s17, 15
      %p75 = por %p73, %p74
      %p77 = scmp.ne.s32.totalorder %s62, %s76
      %p78 = scmp.eq.s32.totalorder %s17, 0
      %p79 = por %p77, %p78
      %s81 = sadd.s32 %s80, 1
      %p84 = scmp.eq.s32.totalorder %s11, 15
      %p85 = scmp.ne.s32.totalorder %s80, %s82
      %p86 = scmp.eq.s32.totalorder %s11, 0
      %p87 = por %p85, %p86
      %p88 = scmp.ne.s32.totalorder %s80, %s82
      %p89 = scmp.eq.s32.totalorder %s16, 15
      %p90 = por %p88, %p89
      %p91 = scmp.ne.s32.totalorder %s82, %s83
      %p92 = scmp.eq.s32.totalorder %s16, 0
      %p93 = por %p91, %p92
      %p94 = scmp.ne.s32.totalorder %s82, %s83
      %p95 = scmp.eq.s32.totalorder %s17, 15
      %p96 = por %p94, %p95
      %p98 = scmp.ne.s32.totalorder %s83, %s97
      %p99 = scmp.eq.s32.totalorder %s17, 0
      %p100 = por %p98, %p99
      %s101 = ssub.s32 %s18, %s30
      %s102 = ssub.s32 %s19, %s26
      %s103 = sor.u32 %s101, %s102
      %p104 = scmp.eq.s32.totalorder %s103, 0
      %s106 = sadd.s32 %s105, 1
      %s107 = scalar_select %p104, %s105, %s106
      %p110 = pneg %p104
      %p111 = scmp.eq.s32.totalorder %s11, 15
      %p112 = por %p110, %p111
      %p113 = scmp.ne.s32.totalorder %s105, %s108
      %p114 = scmp.eq.s32.totalorder %s11, 0
      %p115 = por %p113, %p114
      %p116 = scmp.ne.s32.totalorder %s105, %s108
      %p117 = scmp.eq.s32.totalorder %s16, 15
      %p118 = por %p116, %p117
      %p119 = scmp.ne.s32.totalorder %s108, %s109
      %p120 = scmp.eq.s32.totalorder %s16, 0
      %p121 = por %p119, %p120
      %p122 = scmp.ne.s32.totalorder %s108, %s109
      %p123 = scmp.eq.s32.totalorder %s17, 15
      %p124 = por %p122, %p123
      %p126 = scmp.ne.s32.totalorder %s109, %s125
      %p127 = scmp.eq.s32.totalorder %s17, 0
      %p128 = por %p126, %p127
      %p129 = scmp.le.s32.totalorder 1, %s11
      %p130 = scmp.lt.s32.totalorder %s11, 17
      %p131 = pnand %p129, %p130
      %p132 = pneg %p131
      // Predicated region
      $region9: #{decoder_forward.13} parent=5 // pred_check
        _
      $region10: #{decoder_forward.13} parent=5 // pred_check_branch
        %134 = sbr.rel (%p131) target = $region12
      $region11: #{decoder_forward.13} parent=5 // pred_region
        %s135 = ssub.s32 %s11, 1
        // Predicated region
        $region13: #{decoder_forward.13} parent=11 // pred_check
          %p136 = pneg %p72
        $region14: #{decoder_forward.13} parent=11 // pred_check_branch
          %138 = sbr.rel (%p136) target = $region16
        $region15: #{decoder_forward.13} parent=11 // pred_region
          %140 = vsyncadd [#allocation3], 0
          %s141 = sshll.u32 %s1, 4
          %s142 = int_to_ptr.hbm [resolvable:$true] %s141
          %s143 = sshll.u32 [#allocation2], 4
          %s144 = int_to_ptr.vmem [resolvable:$true] %s143
          %149 = dma.hbm_to_vmem [thread:$0]  %s142, 256, %s144, [#allocation3], 64, 64, 4
        $region16: #{decoder_forward.13} parent=11 // pred_fallthru
          _
        // Predicated region
        $region17: #{decoder_forward.13} parent=11 // pred_check
          %p150 = pneg %p93
        $region18: #{decoder_forward.13} parent=11 // pred_check_branch
          %152 = sbr.rel (%p150) target = $region20
        $region19: #{decoder_forward.13} parent=11 // pred_region
          %154 = vsyncadd [#allocation5], 0
          %s156 = sshll.u32 %s2, 4
          %s157 = int_to_ptr.hbm [resolvable:$true] %s156
          %s158 = sshll.u32 [#allocation4], 4
          %s159 = int_to_ptr.vmem [resolvable:$true] %s158
          %161 = dma.hbm_to_vmem [thread:$0]  %s157, 16, %s159, [#allocation5]
        $region20: #{decoder_forward.13} parent=11 // pred_fallthru
          _
      $region12: #{decoder_forward.13} parent=5 // pred_fallthru
        _
      %p162 = scmp.lt.s32.totalorder %s11, 16
      // Predicated region
      $region21: #{decoder_forward.13} parent=5 // pred_check
        %p163 = pneg %p162
      $region22: #{decoder_forward.13} parent=5 // pred_check_branch
        %165 = sbr.rel (%p163) target = $region24
      $region23: #{decoder_forward.13} parent=5 // pred_region
        // Predicated region
        $region25: #{decoder_forward.13} parent=23 // pred_check
          %p166 = pneg %p45
        $region26: #{decoder_forward.13} parent=23 // pred_check_branch
          %168 = sbr.rel (%p166) target = $region28
        $region27: #{decoder_forward.13} parent=23 // pred_region
          %p169 = scmp.lt.s32.totalorder %s18, 1
          %s170 = scalar_select %p169, %s18, 1
          %p171 = scmp.lt.s32.totalorder %s19, 7
          %s172 = scalar_select %p171, %s19, 7
          %s173 = smul.addr %s170, 8
          %s174 = sadd.s32 %s172, %s173
          %s175 = smul.addr %s174, 4
          %s176 = scalar_lea.vmem %s0, %s175
        $region28: #{decoder_forward.13} parent=23 // pred_fallthru
          _
      $region24: #{decoder_forward.13} parent=5 // pred_fallthru
        _
      %p177 = scmp.le.s32.totalorder 1, %s11
      %p178 = scmp.lt.s32.totalorder %s11, 17
      %p179 = pnand %p177, %p178
      %p180 = pneg %p179
      // Predicated region
      $region29: #{decoder_forward.13} parent=5 // pred_check
        _
      $region30: #{decoder_forward.13} parent=5 // pred_check_branch
        %182 = sbr.rel (%p179) target = $region32
      $region31: #{decoder_forward.13} parent=5 // pred_region
        %s183 = ssub.s32 %s11, 1
        // Predicated region
        $region33: #{decoder_forward.13} parent=31 // pred_check
          %p184 = pneg %p72
        $region34: #{decoder_forward.13} parent=31 // pred_check_branch
          %186 = sbr.rel (%p184) target = $region36
        $region35: #{decoder_forward.13} parent=31 // pred_region
          %188 = dma.done [#allocation3], 256
        $region36: #{decoder_forward.13} parent=31 // pred_fallthru
          _
        // Predicated region
        $region37: #{decoder_forward.13} parent=31 // pred_check
          %p189 = pneg %p93
        $region38: #{decoder_forward.13} parent=31 // pred_check_branch
          %191 = sbr.rel (%p189) target = $region40
        $region39: #{decoder_forward.13} parent=31 // pred_region
          %193 = dma.done [#allocation5], 16
        $region40: #{decoder_forward.13} parent=31 // pred_fallthru
          _
        %p194 = scmp.lt.s32.totalorder %s20, 1
        %s195 = scalar_select %p194, %s20, 1
        %p196 = scmp.lt.s32.totalorder %s21, 7
        %s197 = scalar_select %p196, %s21, 7
        %s198 = smul.addr %s195, 8
        %s199 = sadd.s32 %s197, %s198
        %s200 = smul.addr %s199, 4
        %s201 = scalar_lea.vmem %s0, %s200
        %p202 = pneg %p51
        %p203 = pneg %p48
        %p204 = pneg %p72
        %p205 = pneg %p69
        %p206 = pneg %p93
        %p207 = pneg %p90
        %p208 = pneg %p121
        %p209 = pneg %p118
        %s210 = smul.u32 2, %s21
        %p211 = scmp.lt.s32.totalorder %s20, 1
        %s212 = scalar_select %p211, %s20, 1
        %p213 = scmp.lt.s32.totalorder %s210, 15
        %s214 = scalar_select %p213, %s210, 15
        %s215 = smul.addr %s212, 16
        %s216 = sadd.s32 %s214, %s215
        %s217 = smul.addr %s216, 4
        %s218 = scalar_lea.vmem %s3, %s217
        %p219 = scmp.lt.s32.totalorder %s20, 1
        %s220 = scalar_select %p219, %s20, 1
        %p221 = scmp.lt.s32.totalorder %s21, 7
        %s222 = scalar_select %p221, %s21, 7
        %s223 = smul.addr %s220, 8
        %s224 = sadd.s32 %s222, %s223
        %s225 = smul.addr %s224, 4
        %s226 = scalar_lea.vmem %s0, %s225
        %s227 = smul.u32 2, %s21
        %p228 = scmp.lt.s32.totalorder %s20, 1
        %s229 = scalar_select %p228, %s20, 1
        %p230 = scmp.lt.s32.totalorder %s227, 15
        %s231 = scalar_select %p230, %s227, 15
        %s232 = smul.addr %s229, 16
        %s233 = sadd.s32 %s231, %s232
        %s234 = smul.addr %s233, 4
        %s235 = scalar_lea.vmem %s3, %s234
        %s236 = smul.u32 2, %s21
        %v238 = vld [vmem:[%s226] sm:$0xf]
        %v239 = vld [vmem:[#allocation4] sm:$0x1]
        %v240 = vld [vmem:[#allocation2] sm:$0xf]
        %v241 = vld [vmem:[#allocation2 + $0x4] sm:$0xf]
        %v243 = vperm.slane %v239, 0
        %v247 = vunpack.c.l.b16 %v240
        %v248 = vunpack.c.l.b16 %v241
        %v249 = vpack.c.b16 %v248, %v247
        %vm251 = vcmask 130048
        %v253 = vsel %vm251, %v238, 0
        %255 = vmatpush.bf16.msra.mxu0 0
        %256 = vmatpush.bf16.msra.mxu0 0
        %257 = vmatpush.bf16.msra.mxu0 0
        %258 = vmatpush.bf16.msra.mxu0 0
        %259 = vmatpush.bf16.msra.mxu0 0
        %260 = vmatpush.bf16.msra.mxu0 0
        %261 = vmatpush.bf16.msra.mxu0 0
        %262 = vmatpush.bf16.msra.mxu0 %v249
        %263 = vmatmul.bf16.gmra.mxu0 %v253
        %v264 = vpop.f32.mrf.mxu0
        %v265 = vadd.f32 %v243, %v264
        %v266 = vpop.f32.mrf.mxu0
        %267 = vdwg.mxu0
        %v268 = vmax.f32 %v265, 0.0
        %v269 = vpack.c.bf16 %v268, %v268
        %vm270 = vcmask 125952
        %271 = vst.msk [vmem:[%s235] sm:$0xf] %vm270, %v269
        %s272 = scalar_lea.vmem [#allocation2], 8
        %v273 = vld [vmem:[%s272] sm:$0xf]
        %v274 = vld [vmem:[%s272 + $0x4] sm:$0xf]
        %v277 = vunpack.c.l.b16 %v273
        %v278 = vunpack.c.l.b16 %v274
        %v279 = vpack.c.b16 %v278, %v277
        %281 = vmatpush.bf16.msra.mxu0 0
        %282 = vmatpush.bf16.msra.mxu0 0
        %283 = vmatpush.bf16.msra.mxu0 0
        %284 = vmatpush.bf16.msra.mxu0 0
        %285 = vmatpush.bf16.msra.mxu0 0
        %286 = vmatpush.bf16.msra.mxu0 0
        %287 = vmatpush.bf16.msra.mxu0 0
        %288 = vmatpush.bf16.msra.mxu0 %v279
        %289 = vmatmul.bf16.gmra.mxu0 %v253
        %v290 = vpop.f32.mrf.mxu0
        %v291 = vadd.f32 %v243, %v290
        %v292 = vpop.f32.mrf.mxu0
        %293 = vdwg.mxu0
        %v294 = vmax.f32 %v291, 0.0
        %v295 = vpack.c.bf16 %v294, %v294
        %s296 = scalar_lea.vmem %s235, 4
        %297 = vst.msk [vmem:[%s296] sm:$0xf] %vm270, %v295
        %s298 = smul.u32 2, %s21
        %p299 = scmp.lt.s32.totalorder %s20, 1
        %s300 = scalar_select %p299, %s20, 1
        %p301 = scmp.lt.s32.totalorder %s298, 15
        %s302 = scalar_select %p301, %s298, 15
        %s303 = smul.addr %s300, 16
        %s304 = sadd.s32 %s302, %s303
        %s305 = smul.addr %s304, 4
        %s306 = scalar_lea.vmem %s3, %s305
        // Predicated region
        $region41: #{decoder_forward.13} parent=31 // pred_check
          %p307 = pneg %p118
        $region42: #{decoder_forward.13} parent=31 // pred_check_branch
          %309 = sbr.rel (%p307) target = $region44
        $region43: #{decoder_forward.13} parent=31 // pred_region
          %s310 = smul.u32 2, %s21
        $region44: #{decoder_forward.13} parent=31 // pred_fallthru
          _
      $region32: #{decoder_forward.13} parent=5 // pred_fallthru
        _
      %p311 = scmp.le.s32.totalorder 2, %s11
      // Predicated region
      $region45: #{decoder_forward.13} parent=5 // pred_check
        %p312 = pneg %p311
      $region46: #{decoder_forward.13} parent=5 // pred_check_branch
        %314 = sbr.rel (%p312) target = $region48
      $region47: #{decoder_forward.13} parent=5 // pred_region
        %s315 = ssub.s32 %s11, 2
        // Predicated region
        $region49: #{decoder_forward.13} parent=47 // pred_check
          %p316 = pneg %p124
        $region50: #{decoder_forward.13} parent=47 // pred_check_branch
          %318 = sbr.rel (%p316) target = $region52
        $region51: #{decoder_forward.13} parent=47 // pred_region
          %s319 = smul.u32 2, %s23
          %p320 = scmp.lt.s32.totalorder %s22, 1
          %s321 = scalar_select %p320, %s22, 1
          %p322 = scmp.lt.s32.totalorder %s319, 15
          %s323 = scalar_select %p322, %s319, 15
          %s324 = smul.addr %s321, 16
          %s325 = sadd.s32 %s323, %s324
          %s326 = smul.addr %s325, 4
          %s327 = scalar_lea.vmem %s3, %s326
        $region52: #{decoder_forward.13} parent=47 // pred_fallthru
          _
      $region48: #{decoder_forward.13} parent=5 // pred_fallthru
        _
    $region6: #{decoder_forward.13} parent=1 // loop_footer
      %s15 = sadd.s32 1, %s11
    $region7: #{decoder_forward.13} parent=1 // loop_footer_branch
      %10 = sbr.rel target = $region3
    $region8: #{decoder_forward.13} parent=1 // loop_exit
      _
    %328 = vsyncpa [#allocation3], 1
    %s329 = scalar_lea.sflag [#allocation3], 1
    %330 = vsyncpa %s329, 1
    %331 = vsyncpa [#allocation5], 1

// kernel: decoder_forward.12
$region0: #{decoder_forward.12}
  #allocation0 [shape = 'u32[]', space=smem, size = 0x4, offset = 0x4, fixed_abs, tag = 'smem constant byte address 0x4 - core index']
  #allocation1 [shape = 'u32[72,128]{1,0:T(1,128)}', space=vmem, size = 0x9000, scoped, tag = 'internal scratch']
  %s0 = inlined_call_operand.vmem [shape: bf16[2,10,10,16], index: 0, kind: input, shape index: {}, may-alias: {0,1,2}]
  %s1 = inlined_call_operand.vmem [shape: bf16[2,10,10,16], index: 1, kind: input, shape index: {}, may-alias: {0,1,2}]
  %s2 = inlined_call_operand.vmem [shape: bf16[2,10,10,16], index: 2, kind: input, shape index: {}, may-alias: {0,1,2}]
  %s3 = inlined_call_operand.hbm [shape: bf16[9,16,16], index: 3, kind: input, shape index: {}]
  %s4 = inlined_call_operand.hbm [shape: f32[1,16], index: 4, kind: input, shape index: {}]
  %s5 = inlined_call_operand.vmem [shape: bf16[2,8,8,16], index: 5, kind: output, shape index: {}]
  %s6 = sld [smem:[#allocation0]]
  $region61: #{decoder_forward.12} parent=0
    _
  %s8 = ssub.s32 1, %s6
  %s9 = scalar_select 0, %s8, %s6
  $region1: #{decoder_forward.12} parent=0
    #allocation2 [shape = 'u8[36864]{0}', space=vmem, size = 0x9000, scoped, tag = 'input window, operand 3, single buffered']
    #allocation3 [shape = 's32[2]{0}', space=sflag, size = 0x8, scoped, tag = 'scoped memory for decoder_forward.12']
    #allocation4 [shape = 'u8[512]{0}', space=vmem, size = 0x400, scoped, tag = 'input window, operand 4, single buffered']
    #allocation5 [shape = 's32[1]{0}', space=sflag, size = 0x4, scoped, tag = 'scoped memory for decoder_forward.12']
    %10 = vsyncpa [#allocation3], 0
    %11 = vsyncpa [#allocation5], 0
    loop: start=0, step=1, limit=18
    $region2: #{decoder_forward.12} parent=1 // loop_pre_header
      _
    $region3: #{decoder_forward.12} parent=1 // loop_header
      %s13 = sphi 0, %s17
      %p14 = scmp.ge.s32.totalorder %s13, 18
      %s20 = sphi 0, %s32
      %s21 = sphi 0, %s28
      %s22 = sphi 0, %s20
      %s23 = sphi 0, %s21
      %s24 = sphi 0, %s22
      %s25 = sphi 0, %s23
      %s37 = sphi 0, %s39
      %s40 = sphi 0, %s37
      %s41 = sphi 0, %s40
      %s57 = sphi 0, %s41
      %s67 = sphi 0, %s69
      %s70 = sphi 0, %s67
      %s71 = sphi 0, %s70
      %s87 = sphi 0, %s71
      %s97 = sphi 0, %s99
      %s100 = sphi 0, %s97
      %s101 = sphi 0, %s100
      %s117 = sphi 0, %s101
      %s121 = sphi 0, %s121
      %s123 = sphi 0, %s121
      %s124 = sphi 0, %s123
      %s138 = sphi 0, %s124
      %s142 = sphi 0, %s142
      %s144 = sphi 0, %s142
      %s145 = sphi 0, %s144
      %s159 = sphi 0, %s145
      %s167 = sphi 0, %s169
      %s170 = sphi 0, %s167
      %s171 = sphi 0, %s170
      %s187 = sphi 0, %s171
    $region4: #{decoder_forward.12} parent=1 // loop_header_branch
      %16 = sbr.rel (%p14) target = $region8
    $region5: #{decoder_forward.12} parent=1 // loop_body
      %s18 = ssub.s32 %s13, 1
      %s19 = ssub.s32 %s13, 2
      %s26 = sadd.s32 1, %s21
      %p27 = scmp.ge.s32.totalorder %s26, 8
      %s28 = scalar_select %p27, 0, %s26
      %s29 = sadd.s32 1, %s20
      %s30 = scalar_select %p27, %s29, %s20
      %p31 = scmp.ge.s32.totalorder %s30, 2
      %s32 = scalar_select %p31, 0, %s30
      %s33 = ssub.s32 %s20, %s32
      %s34 = ssub.s32 %s21, %s28
      %s35 = sor.u32 %s33, %s34
      %p36 = scmp.eq.s32.totalorder %s35, 0
      %s38 = sadd.s32 %s37, 1
      %s39 = scalar_select %p36, %s37, %s38
      %p42 = pneg %p36
      %p43 = scmp.eq.s32.totalorder %s13, 15
      %p44 = por %p42, %p43
      %p45 = scmp.ne.s32.totalorder %s37, %s40
      %p46 = scmp.eq.s32.totalorder %s13, 0
      %p47 = por %p45, %p46
      %p48 = scmp.ne.s32.totalorder %s37, %s40
      %p49 = scmp.eq.s32.totalorder %s18, 15
      %p50 = por %p48, %p49
      %p51 = scmp.ne.s32.totalorder %s40, %s41
      %p52 = scmp.eq.s32.totalorder %s18, 0
      %p53 = por %p51, %p52
      %p54 = scmp.ne.s32.totalorder %s40, %s41
      %p55 = scmp.eq.s32.totalorder %s19, 15
      %p56 = por %p54, %p55
      %p58 = scmp.ne.s32.totalorder %s41, %s57
      %p59 = scmp.eq.s32.totalorder %s19, 0
      %p60 = por %p58, %p59
      %s61 = sadd.s32 %s21, 1
      %s62 = sadd.s32 %s28, 1
      %s63 = ssub.s32 %s20, %s32
      %s64 = ssub.s32 %s61, %s62
      %s65 = sor.u32 %s63, %s64
      %p66 = scmp.eq.s32.totalorder %s65, 0
      %s68 = sadd.s32 %s67, 1
      %s69 = scalar_select %p66, %s67, %s68
      %p72 = pneg %p66
      %p73 = scmp.eq.s32.totalorder %s13, 15
      %p74 = por %p72, %p73
      %p75 = scmp.ne.s32.totalorder %s67, %s70
      %p76 = scmp.eq.s32.totalorder %s13, 0
      %p77 = por %p75, %p76
      %p78 = scmp.ne.s32.totalorder %s67, %s70
      %p79 = scmp.eq.s32.totalorder %s18, 15
      %p80 = por %p78, %p79
      %p81 = scmp.ne.s32.totalorder %s70, %s71
      %p82 = scmp.eq.s32.totalorder %s18, 0
      %p83 = por %p81, %p82
      %p84 = scmp.ne.s32.totalorder %s70, %s71
      %p85 = scmp.eq.s32.totalorder %s19, 15
      %p86 = por %p84, %p85
      %p88 = scmp.ne.s32.totalorder %s71, %s87
      %p89 = scmp.eq.s32.totalorder %s19, 0
      %p90 = por %p88, %p89
      %s91 = sadd.s32 %s21, 2
      %s92 = sadd.s32 %s28, 2
      %s93 = ssub.s32 %s20, %s32
      %s94 = ssub.s32 %s91, %s92
      %s95 = sor.u32 %s93, %s94
      %p96 = scmp.eq.s32.totalorder %s95, 0
      %s98 = sadd.s32 %s97, 1
      %s99 = scalar_select %p96, %s97, %s98
      %p102 = pneg %p96
      %p103 = scmp.eq.s32.totalorder %s13, 15
      %p104 = por %p102, %p103
      %p105 = scmp.ne.s32.totalorder %s97, %s100
      %p106 = scmp.eq.s32.totalorder %s13, 0
      %p107 = por %p105, %p106
      %p108 = scmp.ne.s32.totalorder %s97, %s100
      %p109 = scmp.eq.s32.totalorder %s18, 15
      %p110 = por %p108, %p109
      %p111 = scmp.ne.s32.totalorder %s100, %s101
      %p112 = scmp.eq.s32.totalorder %s18, 0
      %p113 = por %p111, %p112
      %p114 = scmp.ne.s32.totalorder %s100, %s101
      %p115 = scmp.eq.s32.totalorder %s19, 15
      %p116 = por %p114, %p115
      %p118 = scmp.ne.s32.totalorder %s101, %s117
      %p119 = scmp.eq.s32.totalorder %s19, 0
      %p120 = por %p118, %p119
      %s122 = sadd.s32 %s121, 1
      %p125 = scmp.eq.s32.totalorder %s13, 15
      %p126 = scmp.ne.s32.totalorder %s121, %s123
      %p127 = scmp.eq.s32.totalorder %s13, 0
      %p128 = por %p126, %p127
      %p129 = scmp.ne.s32.totalorder %s121, %s123
      %p130 = scmp.eq.s32.totalorder %s18, 15
      %p131 = por %p129, %p130
      %p132 = scmp.ne.s32.totalorder %s123, %s124
      %p133 = scmp.eq.s32.totalorder %s18, 0
      %p134 = por %p132, %p133
      %p135 = scmp.ne.s32.totalorder %s123, %s124
      %p136 = scmp.eq.s32.totalorder %s19, 15
      %p137 = por %p135, %p136
      %p139 = scmp.ne.s32.totalorder %s124, %s138
      %p140 = scmp.eq.s32.totalorder %s19, 0
      %p141 = por %p139, %p140
      %s143 = sadd.s32 %s142, 1
      %p146 = scmp.eq.s32.totalorder %s13, 15
      %p147 = scmp.ne.s32.totalorder %s142, %s144
      %p148 = scmp.eq.s32.totalorder %s13, 0
      %p149 = por %p147, %p148
      %p150 = scmp.ne.s32.totalorder %s142, %s144
      %p151 = scmp.eq.s32.totalorder %s18, 15
      %p152 = por %p150, %p151
      %p153 = scmp.ne.s32.totalorder %s144, %s145
      %p154 = scmp.eq.s32.totalorder %s18, 0
      %p155 = por %p153, %p154
      %p156 = scmp.ne.s32.totalorder %s144, %s145
      %p157 = scmp.eq.s32.totalorder %s19, 15
      %p158 = por %p156, %p157
      %p160 = scmp.ne.s32.totalorder %s145, %s159
      %p161 = scmp.eq.s32.totalorder %s19, 0
      %p162 = por %p160, %p161
      %s163 = ssub.s32 %s20, %s32
      %s164 = ssub.s32 %s21, %s28
      %s165 = sor.u32 %s163, %s164
      %p166 = scmp.eq.s32.totalorder %s165, 0
      %s168 = sadd.s32 %s167, 1
      %s169 = scalar_select %p166, %s167, %s168
      %p172 = pneg %p166
      %p173 = scmp.eq.s32.totalorder %s13, 15
      %p174 = por %p172, %p173
      %p175 = scmp.ne.s32.totalorder %s167, %s170
      %p176 = scmp.eq.s32.totalorder %s13, 0
      %p177 = por %p175, %p176
      %p178 = scmp.ne.s32.totalorder %s167, %s170
      %p179 = scmp.eq.s32.totalorder %s18, 15
      %p180 = por %p178, %p179
      %p181 = scmp.ne.s32.totalorder %s170, %s171
      %p182 = scmp.eq.s32.totalorder %s18, 0
      %p183 = por %p181, %p182
      %p184 = scmp.ne.s32.totalorder %s170, %s171
      %p185 = scmp.eq.s32.totalorder %s19, 15
      %p186 = por %p184, %p185
      %p188 = scmp.ne.s32.totalorder %s171, %s187
      %p189 = scmp.eq.s32.totalorder %s19, 0
      %p190 = por %p188, %p189
      %p191 = scmp.le.s32.totalorder 1, %s13
      %p192 = scmp.lt.s32.totalorder %s13, 17
      %p193 = pnand %p191, %p192
      %p194 = pneg %p193
      // Predicated region
      $region9: #{decoder_forward.12} parent=5 // pred_check
        _
      $region10: #{decoder_forward.12} parent=5 // pred_check_branch
        %196 = sbr.rel (%p193) target = $region12
      $region11: #{decoder_forward.12} parent=5 // pred_region
        %s197 = ssub.s32 %s13, 1
        // Predicated region
        $region13: #{decoder_forward.12} parent=11 // pred_check
          %p198 = pneg %p134
        $region14: #{decoder_forward.12} parent=11 // pred_check_branch
          %200 = sbr.rel (%p198) target = $region16
        $region15: #{decoder_forward.12} parent=11 // pred_region
          %202 = vsyncadd [#allocation3], 0
          %s203 = sshll.u32 %s3, 4
          %s204 = int_to_ptr.hbm [resolvable:$true] %s203
          %s205 = sshll.u32 [#allocation2], 4
          %s206 = int_to_ptr.vmem [resolvable:$true] %s205
          %211 = dma.hbm_to_vmem [thread:$0]  %s204, 1152, %s206, [#allocation3], 64, 64, 4
        $region16: #{decoder_forward.12} parent=11 // pred_fallthru
          _
        // Predicated region
        $region17: #{decoder_forward.12} parent=11 // pred_check
          %p212 = pneg %p155
        $region18: #{decoder_forward.12} parent=11 // pred_check_branch
          %214 = sbr.rel (%p212) target = $region20
        $region19: #{decoder_forward.12} parent=11 // pred_region
          %216 = vsyncadd [#allocation5], 0
          %s218 = sshll.u32 %s4, 4
          %s219 = int_to_ptr.hbm [resolvable:$true] %s218
          %s220 = sshll.u32 [#allocation4], 4
          %s221 = int_to_ptr.vmem [resolvable:$true] %s220
          %223 = dma.hbm_to_vmem [thread:$0]  %s219, 16, %s221, [#allocation5]
        $region20: #{decoder_forward.12} parent=11 // pred_fallthru
          _
      $region12: #{decoder_forward.12} parent=5 // pred_fallthru
        _
      %p224 = scmp.lt.s32.totalorder %s13, 16
      // Predicated region
      $region21: #{decoder_forward.12} parent=5 // pred_check
        %p225 = pneg %p224
      $region22: #{decoder_forward.12} parent=5 // pred_check_branch
        %227 = sbr.rel (%p225) target = $region24
      $region23: #{decoder_forward.12} parent=5 // pred_region
        // Predicated region
        $region25: #{decoder_forward.12} parent=23 // pred_check
          %p228 = pneg %p47
        $region26: #{decoder_forward.12} parent=23 // pred_check_branch
          %230 = sbr.rel (%p228) target = $region28
        $region27: #{decoder_forward.12} parent=23 // pred_region
          %p231 = scmp.lt.s32.totalorder %s20, 1
          %s232 = scalar_select %p231, %s20, 1
          %p233 = scmp.lt.s32.totalorder %s21, 9
          %s234 = scalar_select %p233, %s21, 9
          %s235 = smul.addr %s234, 2
          %s236 = smul.addr %s232, 20
          %s237 = sadd.s32 %s235, %s236
          %s238 = smul.addr %s237, 4
          %s239 = scalar_lea.vmem %s0, %s238
        $region28: #{decoder_forward.12} parent=23 // pred_fallthru
          _
        // Predicated region
        $region29: #{decoder_forward.12} parent=23 // pred_check
          %p240 = pneg %p77
        $region30: #{decoder_forward.12} parent=23 // pred_check_branch
          %242 = sbr.rel (%p240) target = $region32
        $region31: #{decoder_forward.12} parent=23 // pred_region
          %s243 = sadd.s32 %s21, 1
          %p244 = scmp.lt.s32.totalorder %s20, 1
          %s245 = scalar_select %p244, %s20, 1
          %p246 = scmp.lt.s32.totalorder %s243, 9
          %s247 = scalar_select %p246, %s243, 9
          %s248 = smul.addr %s247, 2
          %s249 = smul.addr %s245, 20
          %s250 = sadd.s32 %s248, %s249
          %s251 = smul.addr %s250, 4
          %s252 = scalar_lea.vmem %s1, %s251
          %s253 = sadd.s32 %s21, 1
        $region32: #{decoder_forward.12} parent=23 // pred_fallthru
          _
        // Predicated region
        $region33: #{decoder_forward.12} parent=23 // pred_check
          %p254 = pneg %p107
        $region34: #{decoder_forward.12} parent=23 // pred_check_branch
          %256 = sbr.rel (%p254) target = $region36
        $region35: #{decoder_forward.12} parent=23 // pred_region
          %s257 = sadd.s32 %s21, 2
          %p258 = scmp.lt.s32.totalorder %s20, 1
          %s259 = scalar_select %p258, %s20, 1
          %p260 = scmp.lt.s32.totalorder %s257, 9
          %s261 = scalar_select %p260, %s257, 9
          %s262 = smul.addr %s261, 2
          %s263 = smul.addr %s259, 20
          %s264 = sadd.s32 %s262, %s263
          %s265 = smul.addr %s264, 4
          %s266 = scalar_lea.vmem %s2, %s265
          %s267 = sadd.s32 %s21, 2
        $region36: #{decoder_forward.12} parent=23 // pred_fallthru
          _
      $region24: #{decoder_forward.12} parent=5 // pred_fallthru
        _
      %p268 = scmp.le.s32.totalorder 1, %s13
      %p269 = scmp.lt.s32.totalorder %s13, 17
      %p270 = pnand %p268, %p269
      %p271 = pneg %p270
      // Predicated region
      $region37: #{decoder_forward.12} parent=5 // pred_check
        _
      $region38: #{decoder_forward.12} parent=5 // pred_check_branch
        %273 = sbr.rel (%p270) target = $region40
      $region39: #{decoder_forward.12} parent=5 // pred_region
        %s274 = ssub.s32 %s13, 1
        // Predicated region
        $region41: #{decoder_forward.12} parent=39 // pred_check
          %p275 = pneg %p134
        $region42: #{decoder_forward.12} parent=39 // pred_check_branch
          %277 = sbr.rel (%p275) target = $region44
        $region43: #{decoder_forward.12} parent=39 // pred_region
          %279 = dma.done [#allocation3], 1152
        $region44: #{decoder_forward.12} parent=39 // pred_fallthru
          _
        // Predicated region
        $region45: #{decoder_forward.12} parent=39 // pred_check
          %p280 = pneg %p155
        $region46: #{decoder_forward.12} parent=39 // pred_check_branch
          %282 = sbr.rel (%p280) target = $region48
        $region47: #{decoder_forward.12} parent=39 // pred_region
          %284 = dma.done [#allocation5], 16
        $region48: #{decoder_forward.12} parent=39 // pred_fallthru
          _
        %p285 = scmp.lt.s32.totalorder %s22, 1
        %s286 = scalar_select %p285, %s22, 1
        %p287 = scmp.lt.s32.totalorder %s23, 9
        %s288 = scalar_select %p287, %s23, 9
        %s289 = smul.addr %s288, 2
        %s290 = smul.addr %s286, 20
        %s291 = sadd.s32 %s289, %s290
        %s292 = smul.addr %s291, 4
        %s293 = scalar_lea.vmem %s0, %s292
        %p294 = pneg %p53
        %p295 = pneg %p50
        %s296 = sadd.s32 %s23, 1
        %p297 = scmp.lt.s32.totalorder %s22, 1
        %s298 = scalar_select %p297, %s22, 1
        %p299 = scmp.lt.s32.totalorder %s296, 9
        %s300 = scalar_select %p299, %s296, 9
        %s301 = smul.addr %s300, 2
        %s302 = smul.addr %s298, 20
        %s303 = sadd.s32 %s301, %s302
        %s304 = smul.addr %s303, 4
        %s305 = scalar_lea.vmem %s1, %s304
        %p306 = pneg %p83
        %p307 = pneg %p80
        %s308 = sadd.s32 %s23, 2
        %p309 = scmp.lt.s32.totalorder %s22, 1
        %s310 = scalar_select %p309, %s22, 1
        %p311 = scmp.lt.s32.totalorder %s308, 9
        %s312 = scalar_select %p311, %s308, 9
        %s313 = smul.addr %s312, 2
        %s314 = smul.addr %s310, 20
        %s315 = sadd.s32 %s313, %s314
        %s316 = smul.addr %s315, 4
        %s317 = scalar_lea.vmem %s2, %s316
        %p318 = pneg %p113
        %p319 = pneg %p110
        %p320 = pneg %p134
        %p321 = pneg %p131
        %p322 = pneg %p155
        %p323 = pneg %p152
        %p324 = pneg %p183
        %p325 = pneg %p180
        %p326 = scmp.lt.s32.totalorder %s22, 1
        %s327 = scalar_select %p326, %s22, 1
        %p328 = scmp.lt.s32.totalorder %s23, 7
        %s329 = scalar_select %p328, %s23, 7
        %s330 = smul.addr %s327, 8
        %s331 = sadd.s32 %s329, %s330
        %s332 = smul.addr %s331, 4
        %s333 = scalar_lea.vmem %s5, %s332
        %p334 = scmp.lt.s32.totalorder %s22, 1
        %s335 = scalar_select %p334, %s22, 1
        %p336 = scmp.lt.s32.totalorder %s23, 9
        %s337 = scalar_select %p336, %s23, 9
        %s338 = smul.addr %s337, 2
        %s339 = smul.addr %s335, 20
        %s340 = sadd.s32 %s338, %s339
        %s341 = smul.addr %s340, 4
        %s342 = scalar_lea.vmem %s0, %s341
        %s343 = sadd.s32 %s23, 1
        %p344 = scmp.lt.s32.totalorder %s22, 1
        %s345 = scalar_select %p344, %s22, 1
        %p346 = scmp.lt.s32.totalorder %s343, 9
        %s347 = scalar_select %p346, %s343, 9
        %s348 = smul.addr %s347, 2
        %s349 = smul.addr %s345, 20
        %s350 = sadd.s32 %s348, %s349
        %s351 = smul.addr %s350, 4
        %s352 = scalar_lea.vmem %s1, %s351
        %s353 = sadd.s32 %s23, 1
        %s354 = sadd.s32 %s23, 2
        %p355 = scmp.lt.s32.totalorder %s22, 1
        %s356 = scalar_select %p355, %s22, 1
        %p357 = scmp.lt.s32.totalorder %s354, 9
        %s358 = scalar_select %p357, %s354, 9
        %s359 = smul.addr %s358, 2
        %s360 = smul.addr %s356, 20
        %s361 = sadd.s32 %s359, %s360
        %s362 = smul.addr %s361, 4
        %s363 = scalar_lea.vmem %s2, %s362
        %s364 = sadd.s32 %s23, 2
        %p365 = scmp.lt.s32.totalorder %s22, 1
        %s366 = scalar_select %p365, %s22, 1
        %p367 = scmp.lt.s32.totalorder %s23, 7
        %s368 = scalar_select %p367, %s23, 7
        %s369 = smul.addr %s366, 8
        %s370 = sadd.s32 %s368, %s369
        %s371 = smul.addr %s370, 4
        %s372 = scalar_lea.vmem %s5, %s371
        %v374 = vld [vmem:[%s342] sm:$0xf]
        %v375 = vld [vmem:[#allocation2] sm:$0xf]
        %v376 = vld [vmem:[#allocation2 + $0x4] sm:$0xf]
        %v377 = vld [vmem:[%s342 + $0x4] sm:$0x1]
        %s378 = scalar_lea.vmem [#allocation2], 8
        %v379 = vld [vmem:[%s378] sm:$0xf]
        %v380 = vld [vmem:[%s378 + $0x4] sm:$0xf]
        %v383 = vunpack.c.l.b16 %v374
        %v384 = vunpack.c.l.b16 %v377
        %v385 = vpack.c.b16 %v384, %v383
        %v387 = vshrl.u32 %v385, 16
        %v389 = vshll.u32 %v385, 16
        %v391 = vrot.slane %v389, 1
        %v392 = vor.u32 %v387, %v391
        %v395 = vunpack.c.l.b16 %v379
        %v396 = vunpack.c.l.b16 %v380
        %v397 = vpack.c.b16 %v396, %v395
        %vm399 = vcmask 130048
        %v401 = vsel %vm399, %v392, 0
        %403 = vmatpush.bf16.msra.mxu0 0
        %404 = vmatpush.bf16.msra.mxu0 0
        %405 = vmatpush.bf16.msra.mxu0 0
        %406 = vmatpush.bf16.msra.mxu0 0
        %407 = vmatpush.bf16.msra.mxu0 0
        %408 = vmatpush.bf16.msra.mxu0 0
        %409 = vmatpush.bf16.msra.mxu0 0
        %410 = vmatpush.bf16.msra.mxu0 %v397
        %411 = vmatmul.bf16.gmra.mxu0 %v401
        %v412 = vpop.f32.mrf.mxu0
        %v413 = vadd.f32 0.0, %v412
        %v414 = vpop.f32.mrf.mxu0
        %415 = vdwg.mxu0
        %v418 = vunpack.c.l.b16 %v375
        %v419 = vunpack.c.l.b16 %v376
        %v420 = vpack.c.b16 %v419, %v418
        %v423 = vsel %vm399, %v374, 0
        %425 = vmatpush.bf16.msra.mxu0 0
        %426 = vmatpush.bf16.msra.mxu0 0
        %427 = vmatpush.bf16.msra.mxu0 0
        %428 = vmatpush.bf16.msra.mxu0 0
        %429 = vmatpush.bf16.msra.mxu0 0
        %430 = vmatpush.bf16.msra.mxu0 0
        %431 = vmatpush.bf16.msra.mxu0 0
        %432 = vmatpush.bf16.msra.mxu0 %v420
        %433 = vmatmul.bf16.gmra.mxu0 %v423
        %v434 = vpop.f32.mrf.mxu0
        %v435 = vadd.f32 %v413, %v434
        %v436 = vpop.f32.mrf.mxu0
        %437 = vdwg.mxu0
        %v438 = vld [vmem:[%s342] sm:$0xe]
        %s439 = scalar_lea.vmem [#allocation2], 16
        %v440 = vld [vmem:[%s439] sm:$0xf]
        %v441 = vld [vmem:[%s439 + $0x4] sm:$0xf]
        %v443 = vunpack.c.l.b16 %v438
        %v444 = vpack.c.b16 %v384, %v443
        %v445 = vrot.slane %v444, 1
        %v448 = vunpack.c.l.b16 %v440
        %v449 = vunpack.c.l.b16 %v441
        %v450 = vpack.c.b16 %v449, %v448
        %v453 = vsel %vm399, %v445, 0
        %455 = vmatpush.bf16.msra.mxu0 0
        %456 = vmatpush.bf16.msra.mxu0 0
        %457 = vmatpush.bf16.msra.mxu0 0
        %458 = vmatpush.bf16.msra.mxu0 0
        %459 = vmatpush.bf16.msra.mxu0 0
        %460 = vmatpush.bf16.msra.mxu0 0
        %461 = vmatpush.bf16.msra.mxu0 0
        %462 = vmatpush.bf16.msra.mxu0 %v450
        %463 = vmatmul.bf16.gmra.mxu0 %v453
        %v464 = vpop.f32.mrf.mxu0
        %v465 = vadd.f32 0.0, %v464
        %v466 = vpop.f32.mrf.mxu0
        %467 = vdwg.mxu0
        %v468 = vadd.f32 %v435, %v465
        %v469 = vld [vmem:[%s352] sm:$0xf]
        %s470 = scalar_lea.vmem [#allocation2], 24
        %v471 = vld [vmem:[%s470] sm:$0xf]
        %v472 = vld [vmem:[%s470 + $0x4] sm:$0xf]
        %v475 = vunpack.c.l.b16 %v471
        %v476 = vunpack.c.l.b16 %v472
        %v477 = vpack.c.b16 %v476, %v475
        %v480 = vsel %vm399, %v469, 0
        %482 = vmatpush.bf16.msra.mxu0 0
        %483 = vmatpush.bf16.msra.mxu0 0
        %484 = vmatpush.bf16.msra.mxu0 0
        %485 = vmatpush.bf16.msra.mxu0 0
        %486 = vmatpush.bf16.msra.mxu0 0
        %487 = vmatpush.bf16.msra.mxu0 0
        %488 = vmatpush.bf16.msra.mxu0 0
        %489 = vmatpush.bf16.msra.mxu0 %v477
        %490 = vmatmul.bf16.gmra.mxu0 %v480
        %v491 = vpop.f32.mrf.mxu0
        %v492 = vadd.f32 0.0, %v491
        %v493 = vpop.f32.mrf.mxu0
        %494 = vdwg.mxu0
        %v495 = vadd.f32 %v468, %v492
        %v496 = vld [vmem:[%s352] sm:$0xf]
        %v497 = vld [vmem:[%s352 + $0x4] sm:$0x1]
        %s498 = scalar_lea.vmem [#allocation2], 32
        %v499 = vld [vmem:[%s498] sm:$0xf]
        %v500 = vld [vmem:[%s498 + $0x4] sm:$0xf]
        %v503 = vunpack.c.l.b16 %v496
        %v504 = vunpack.c.l.b16 %v497
        %v505 = vpack.c.b16 %v504, %v503
        %v507 = vshrl.u32 %v505, 16
        %v509 = vshll.u32 %v505, 16
        %v511 = vrot.slane %v509, 1
        %v512 = vor.u32 %v507, %v511
        %v515 = vunpack.c.l.b16 %v499
        %v516 = vunpack.c.l.b16 %v500
        %v517 = vpack.c.b16 %v516, %v515
        %v520 = vsel %vm399, %v512, 0
        %522 = vmatpush.bf16.msra.mxu0 0
        %523 = vmatpush.bf16.msra.mxu0 0
        %524 = vmatpush.bf16.msra.mxu0 0
        %525 = vmatpush.bf16.msra.mxu0 0
        %526 = vmatpush.bf16.msra.mxu0 0
        %527 = vmatpush.bf16.msra.mxu0 0
        %528 = vmatpush.bf16.msra.mxu0 0
        %529 = vmatpush.bf16.msra.mxu0 %v517
        %530 = vmatmul.bf16.gmra.mxu0 %v520
        %v531 = vpop.f32.mrf.mxu0
        %v532 = vadd.f32 0.0, %v531
        %v533 = vpop.f32.mrf.mxu0
        %534 = vdwg.mxu0
        %v535 = vadd.f32 %v495, %v532
        %v536 = vld [vmem:[%s352] sm:$0xe]
        %s537 = scalar_lea.vmem [#allocation2], 40
        %v538 = vld [vmem:[%s537] sm:$0xf]
        %v539 = vld [vmem:[%s537 + $0x4] sm:$0xf]
        %v541 = vunpack.c.l.b16 %v536
        %v542 = vpack.c.b16 %v504, %v541
        %v543 = vrot.slane %v542, 1
        %v546 = vunpack.c.l.b16 %v538
        %v547 = vunpack.c.l.b16 %v539
        %v548 = vpack.c.b16 %v547, %v546
        %v551 = vsel %vm399, %v543, 0
        %553 = vmatpush.bf16.msra.mxu0 0
        %554 = vmatpush.bf16.msra.mxu0 0
        %555 = vmatpush.bf16.msra.mxu0 0
        %556 = vmatpush.bf16.msra.mxu0 0
        %557 = vmatpush.bf16.msra.mxu0 0
        %558 = vmatpush.bf16.msra.mxu0 0
        %559 = vmatpush.bf16.msra.mxu0 0
        %560 = vmatpush.bf16.msra.mxu0 %v548
        %561 = vmatmul.bf16.gmra.mxu0 %v551
        %v562 = vpop.f32.mrf.mxu0
        %v563 = vadd.f32 0.0, %v562
        %v564 = vpop.f32.mrf.mxu0
        %565 = vdwg.mxu0
        %v566 = vadd.f32 %v535, %v563
        %v567 = vld [vmem:[%s363] sm:$0xf]
        %s568 = scalar_lea.vmem [#allocation2], 48
        %v569 = vld [vmem:[%s568] sm:$0xf]
        %v570 = vld [vmem:[%s568 + $0x4] sm:$0xf]
        %v573 = vunpack.c.l.b16 %v569
        %v574 = vunpack.c.l.b16 %v570
        %v575 = vpack.c.b16 %v574, %v573
        %v578 = vsel %vm399, %v567, 0
        %580 = vmatpush.bf16.msra.mxu0 0
        %581 = vmatpush.bf16.msra.mxu0 0
        %582 = vmatpush.bf16.msra.mxu0 0
        %583 = vmatpush.bf16.msra.mxu0 0
        %584 = vmatpush.bf16.msra.mxu0 0
        %585 = vmatpush.bf16.msra.mxu0 0
        %586 = vmatpush.bf16.msra.mxu0 0
        %587 = vmatpush.bf16.msra.mxu0 %v575
        %588 = vmatmul.bf16.gmra.mxu0 %v578
        %v589 = vpop.f32.mrf.mxu0
        %v590 = vadd.f32 0.0, %v589
        %v591 = vpop.f32.mrf.mxu0
        %592 = vdwg.mxu0
        %v593 = vadd.f32 %v566, %v590
        %v594 = vld [vmem:[%s363] sm:$0xf]
        %v595 = vld [vmem:[%s363 + $0x4] sm:$0x1]
        %s596 = scalar_lea.vmem [#allocation2], 56
        %v597 = vld [vmem:[%s596] sm:$0xf]
        %v598 = vld [vmem:[%s596 + $0x4] sm:$0xf]
        %v601 = vunpack.c.l.b16 %v594
        %v602 = vunpack.c.l.b16 %v595
        %v603 = vpack.c.b16 %v602, %v601
        %v605 = vshrl.u32 %v603, 16
        %v607 = vshll.u32 %v603, 16
        %v609 = vrot.slane %v607, 1
        %v610 = vor.u32 %v605, %v609
        %v613 = vunpack.c.l.b16 %v597
        %v614 = vunpack.c.l.b16 %v598
        %v615 = vpack.c.b16 %v614, %v613
        %v618 = vsel %vm399, %v610, 0
        %620 = vmatpush.bf16.msra.mxu0 0
        %621 = vmatpush.bf16.msra.mxu0 0
        %622 = vmatpush.bf16.msra.mxu0 0
        %623 = vmatpush.bf16.msra.mxu0 0
        %624 = vmatpush.bf16.msra.mxu0 0
        %625 = vmatpush.bf16.msra.mxu0 0
        %626 = vmatpush.bf16.msra.mxu0 0
        %627 = vmatpush.bf16.msra.mxu0 %v615
        %628 = vmatmul.bf16.gmra.mxu0 %v618
        %v629 = vpop.f32.mrf.mxu0
        %v630 = vadd.f32 0.0, %v629
        %v631 = vpop.f32.mrf.mxu0
        %632 = vdwg.mxu0
        %v633 = vadd.f32 %v593, %v630
        %v634 = vld [vmem:[%s363] sm:$0xe]
        %s635 = scalar_lea.vmem [#allocation2], 64
        %v636 = vld [vmem:[%s635] sm:$0xf]
        %v637 = vld [vmem:[%s635 + $0x4] sm:$0xf]
        %v639 = vunpack.c.l.b16 %v634
        %v640 = vpack.c.b16 %v602, %v639
        %v641 = vrot.slane %v640, 1
        %v644 = vunpack.c.l.b16 %v636
        %v645 = vunpack.c.l.b16 %v637
        %v646 = vpack.c.b16 %v645, %v644
        %v649 = vsel %vm399, %v641, 0
        %651 = vmatpush.bf16.msra.mxu0 0
        %652 = vmatpush.bf16.msra.mxu0 0
        %653 = vmatpush.bf16.msra.mxu0 0
        %654 = vmatpush.bf16.msra.mxu0 0
        %655 = vmatpush.bf16.msra.mxu0 0
        %656 = vmatpush.bf16.msra.mxu0 0
        %657 = vmatpush.bf16.msra.mxu0 0
        %658 = vmatpush.bf16.msra.mxu0 %v646
        %659 = vmatmul.bf16.gmra.mxu0 %v649
        %v660 = vpop.f32.mrf.mxu0
        %v661 = vadd.f32 0.0, %v660
        %v662 = vpop.f32.mrf.mxu0
        %663 = vdwg.mxu0
        %v664 = vadd.f32 %v633, %v661
        %v665 = vld [vmem:[#allocation4] sm:$0x1]
        %v667 = vperm.slane %v665, 0
        %v669 = vadd.f32 %v664, %v667
        %v670 = vmax.f32 %v669, 0.0
        %v671 = vpack.c.bf16 %v670, %v670
        %vm672 = vcmask 125952
        %673 = vst.msk [vmem:[%s372] sm:$0xf] %vm672, %v671
        %p674 = scmp.lt.s32.totalorder %s22, 1
        %s675 = scalar_select %p674, %s22, 1
        %p676 = scmp.lt.s32.totalorder %s23, 7
        %s677 = scalar_select %p676, %s23, 7
        %s678 = smul.addr %s675, 8
        %s679 = sadd.s32 %s677, %s678
        %s680 = smul.addr %s679, 4
        %s681 = scalar_lea.vmem %s5, %s680
        // Predicated region
        $region49: #{decoder_forward.12} parent=39 // pred_check
          %p682 = pneg %p180
        $region50: #{decoder_forward.12} parent=39 // pred_check_branch
          %684 = sbr.rel (%p682) target = $region52
        $region51: #{decoder_forward.12} parent=39 // pred_region
          _
        $region52: #{decoder_forward.12} parent=39 // pred_fallthru
          _
      $region40: #{decoder_forward.12} parent=5 // pred_fallthru
        _
      %p685 = scmp.le.s32.totalorder 2, %s13
      // Predicated region
      $region53: #{decoder_forward.12} parent=5 // pred_check
        %p686 = pneg %p685
      $region54: #{decoder_forward.12} parent=5 // pred_check_branch
        %688 = sbr.rel (%p686) target = $region56
      $region55: #{decoder_forward.12} parent=5 // pred_region
        %s689 = ssub.s32 %s13, 2
        // Predicated region
        $region57: #{decoder_forward.12} parent=55 // pred_check
          %p690 = pneg %p186
        $region58: #{decoder_forward.12} parent=55 // pred_check_branch
          %692 = sbr.rel (%p690) target = $region60
        $region59: #{decoder_forward.12} parent=55 // pred_region
          %p693 = scmp.lt.s32.totalorder %s24, 1
          %s694 = scalar_select %p693, %s24, 1
          %p695 = scmp.lt.s32.totalorder %s25, 7
          %s696 = scalar_select %p695, %s25, 7
          %s697 = smul.addr %s694, 8
          %s698 = sadd.s32 %s696, %s697
          %s699 = smul.addr %s698, 4
          %s700 = scalar_lea.vmem %s5, %s699
        $region60: #{decoder_forward.12} parent=55 // pred_fallthru
          _
      $region56: #{decoder_forward.12} parent=5 // pred_fallthru
        _
    $region6: #{decoder_forward.12} parent=1 // loop_footer
      %s17 = sadd.s32 1, %s13
    $region7: #{decoder_forward.12} parent=1 // loop_footer_branch
      %12 = sbr.rel target = $region3
    $region8: #{decoder_forward.12} parent=1 // loop_exit
      _
    %701 = vsyncpa [#allocation3], 1
    %s702 = scalar_lea.sflag [#allocation3], 1
    %703 = vsyncpa %s702, 1
    %704 = vsyncpa [#allocation5], 1

// kernel: decoder_forward.15
$region0: #{decoder_forward.15}
  #allocation0 [shape = 'u32[]', space=smem, size = 0x4, offset = 0x4, fixed_abs, tag = 'smem constant byte address 0x4 - core index']
  #allocation1 [shape = 'u32[72,128]{1,0:T(1,128)}', space=vmem, size = 0x9000, scoped, tag = 'internal scratch']
  %s0 = inlined_call_operand.vmem [shape: bf16[2,16,16,8], index: 0, kind: input, shape index: {}]
  %s1 = inlined_call_operand.hbm [shape: bf16[2,8,16], index: 1, kind: input, shape index: {}]
  %s2 = inlined_call_operand.hbm [shape: f32[1,16], index: 2, kind: input, shape index: {}]
  %s3 = inlined_call_operand.vmem [shape: bf16[2,32,16,16], index: 3, kind: output, shape index: {}]
  %s4 = sld [smem:[#allocation0]]
  $region53: #{decoder_forward.15} parent=0
    _
  %s6 = ssub.s32 1, %s4
  %s7 = scalar_select 0, %s6, %s4
  $region1: #{decoder_forward.15} parent=0
    #allocation2 [shape = 'u8[4096]{0}', space=vmem, size = 0x1000, scoped, tag = 'input window, operand 1, single buffered']
    #allocation3 [shape = 's32[2]{0}', space=sflag, size = 0x8, scoped, tag = 'scoped memory for decoder_forward.15']
    #allocation4 [shape = 'u8[512]{0}', space=vmem, size = 0x400, scoped, tag = 'input window, operand 2, single buffered']
    #allocation5 [shape = 's32[1]{0}', space=sflag, size = 0x4, scoped, tag = 'scoped memory for decoder_forward.15']
    %8 = vsyncpa [#allocation3], 0
    %9 = vsyncpa [#allocation5], 0
    loop: start=0, step=1, limit=34
    $region2: #{decoder_forward.15} parent=1 // loop_pre_header
      _
    $region3: #{decoder_forward.15} parent=1 // loop_header
      %s11 = sphi 0, %s15
      %p12 = scmp.ge.s32.totalorder %s11, 34
      %s18 = sphi 0, %s30
      %s19 = sphi 0, %s26
      %s20 = sphi 0, %s18
      %s21 = sphi 0, %s19
      %s22 = sphi 0, %s20
      %s23 = sphi 0, %s21
      %s35 = sphi 0, %s37
      %s38 = sphi 0, %s35
      %s39 = sphi 0, %s38
      %s55 = sphi 0, %s39
      %s59 = sphi 0, %s59
      %s61 = sphi 0, %s59
      %s62 = sphi 0, %s61
      %s76 = sphi 0, %s62
      %s80 = sphi 0, %s80
      %s82 = sphi 0, %s80
      %s83 = sphi 0, %s82
      %s97 = sphi 0, %s83
      %s105 = sphi 0, %s107
      %s108 = sphi 0, %s105
      %s109 = sphi 0, %s108
      %s125 = sphi 0, %s109
    $region4: #{decoder_forward.15} parent=1 // loop_header_branch
      %14 = sbr.rel (%p12) target = $region8
    $region5: #{decoder_forward.15} parent=1 // loop_body
      %s16 = ssub.s32 %s11, 1
      %s17 = ssub.s32 %s11, 2
      %s24 = sadd.s32 1, %s19
      %p25 = scmp.ge.s32.totalorder %s24, 16
      %s26 = scalar_select %p25, 0, %s24
      %s27 = sadd.s32 1, %s18
      %s28 = scalar_select %p25, %s27, %s18
      %p29 = scmp.ge.s32.totalorder %s28, 2
      %s30 = scalar_select %p29, 0, %s28
      %s31 = ssub.s32 %s18, %s30
      %s32 = ssub.s32 %s19, %s26
      %s33 = sor.u32 %s31, %s32
      %p34 = scmp.eq.s32.totalorder %s33, 0
      %s36 = sadd.s32 %s35, 1
      %s37 = scalar_select %p34, %s35, %s36
      %p40 = pneg %p34
      %p41 = scmp.eq.s32.totalorder %s11, 31
      %p42 = por %p40, %p41
      %p43 = scmp.ne.s32.totalorder %s35, %s38
      %p44 = scmp.eq.s32.totalorder %s11, 0
      %p45 = por %p43, %p44
      %p46 = scmp.ne.s32.totalorder %s35, %s38
      %p47 = scmp.eq.s32.totalorder %s16, 31
      %p48 = por %p46, %p47
      %p49 = scmp.ne.s32.totalorder %s38, %s39
      %p50 = scmp.eq.s32.totalorder %s16, 0
      %p51 = por %p49, %p50
      %p52 = scmp.ne.s32.totalorder %s38, %s39
      %p53 = scmp.eq.s32.totalorder %s17, 31
      %p54 = por %p52, %p53
      %p56 = scmp.ne.s32.totalorder %s39, %s55
      %p57 = scmp.eq.s32.totalorder %s17, 0
      %p58 = por %p56, %p57
      %s60 = sadd.s32 %s59, 1
      %p63 = scmp.eq.s32.totalorder %s11, 31
      %p64 = scmp.ne.s32.totalorder %s59, %s61
      %p65 = scmp.eq.s32.totalorder %s11, 0
      %p66 = por %p64, %p65
      %p67 = scmp.ne.s32.totalorder %s59, %s61
      %p68 = scmp.eq.s32.totalorder %s16, 31
      %p69 = por %p67, %p68
      %p70 = scmp.ne.s32.totalorder %s61, %s62
      %p71 = scmp.eq.s32.totalorder %s16, 0
      %p72 = por %p70, %p71
      %p73 = scmp.ne.s32.totalorder %s61, %s62
      %p74 = scmp.eq.s32.totalorder %s17, 31
      %p75 = por %p73, %p74
      %p77 = scmp.ne.s32.totalorder %s62, %s76
      %p78 = scmp.eq.s32.totalorder %s17, 0
      %p79 = por %p77, %p78
      %s81 = sadd.s32 %s80, 1
      %p84 = scmp.eq.s32.totalorder %s11, 31
      %p85 = scmp.ne.s32.totalorder %s80, %s82
      %p86 = scmp.eq.s32.totalorder %s11, 0
      %p87 = por %p85, %p86
      %p88 = scmp.ne.s32.totalorder %s80, %s82
      %p89 = scmp.eq.s32.totalorder %s16, 31
      %p90 = por %p88, %p89
      %p91 = scmp.ne.s32.totalorder %s82, %s83
      %p92 = scmp.eq.s32.totalorder %s16, 0
      %p93 = por %p91, %p92
      %p94 = scmp.ne.s32.totalorder %s82, %s83
      %p95 = scmp.eq.s32.totalorder %s17, 31
      %p96 = por %p94, %p95
      %p98 = scmp.ne.s32.totalorder %s83, %s97
      %p99 = scmp.eq.s32.totalorder %s17, 0
      %p100 = por %p98, %p99
      %s101 = ssub.s32 %s18, %s30
      %s102 = ssub.s32 %s19, %s26
      %s103 = sor.u32 %s101, %s102
      %p104 = scmp.eq.s32.totalorder %s103, 0
      %s106 = sadd.s32 %s105, 1
      %s107 = scalar_select %p104, %s105, %s106
      %p110 = pneg %p104
      %p111 = scmp.eq.s32.totalorder %s11, 31
      %p112 = por %p110, %p111
      %p113 = scmp.ne.s32.totalorder %s105, %s108
      %p114 = scmp.eq.s32.totalorder %s11, 0
      %p115 = por %p113, %p114
      %p116 = scmp.ne.s32.totalorder %s105, %s108
      %p117 = scmp.eq.s32.totalorder %s16, 31
      %p118 = por %p116, %p117
      %p119 = scmp.ne.s32.totalorder %s108, %s109
      %p120 = scmp.eq.s32.totalorder %s16, 0
      %p121 = por %p119, %p120
      %p122 = scmp.ne.s32.totalorder %s108, %s109
      %p123 = scmp.eq.s32.totalorder %s17, 31
      %p124 = por %p122, %p123
      %p126 = scmp.ne.s32.totalorder %s109, %s125
      %p127 = scmp.eq.s32.totalorder %s17, 0
      %p128 = por %p126, %p127
      %p129 = scmp.le.s32.totalorder 1, %s11
      %p130 = scmp.lt.s32.totalorder %s11, 33
      %p131 = pnand %p129, %p130
      %p132 = pneg %p131
      // Predicated region
      $region9: #{decoder_forward.15} parent=5 // pred_check
        _
      $region10: #{decoder_forward.15} parent=5 // pred_check_branch
        %134 = sbr.rel (%p131) target = $region12
      $region11: #{decoder_forward.15} parent=5 // pred_region
        %s135 = ssub.s32 %s11, 1
        // Predicated region
        $region13: #{decoder_forward.15} parent=11 // pred_check
          %p136 = pneg %p72
        $region14: #{decoder_forward.15} parent=11 // pred_check_branch
          %138 = sbr.rel (%p136) target = $region16
        $region15: #{decoder_forward.15} parent=11 // pred_region
          %140 = vsyncadd [#allocation3], 0
          %s141 = sshll.u32 %s1, 4
          %s142 = int_to_ptr.hbm [resolvable:$true] %s141
          %s143 = sshll.u32 [#allocation2], 4
          %s144 = int_to_ptr.vmem [resolvable:$true] %s143
          %149 = dma.hbm_to_vmem [thread:$0]  %s142, 128, %s144, [#allocation3], 64, 64, 4
        $region16: #{decoder_forward.15} parent=11 // pred_fallthru
          _
        // Predicated region
        $region17: #{decoder_forward.15} parent=11 // pred_check
          %p150 = pneg %p93
        $region18: #{decoder_forward.15} parent=11 // pred_check_branch
          %152 = sbr.rel (%p150) target = $region20
        $region19: #{decoder_forward.15} parent=11 // pred_region
          %154 = vsyncadd [#allocation5], 0
          %s156 = sshll.u32 %s2, 4
          %s157 = int_to_ptr.hbm [resolvable:$true] %s156
          %s158 = sshll.u32 [#allocation4], 4
          %s159 = int_to_ptr.vmem [resolvable:$true] %s158
          %161 = dma.hbm_to_vmem [thread:$0]  %s157, 16, %s159, [#allocation5]
        $region20: #{decoder_forward.15} parent=11 // pred_fallthru
          _
      $region12: #{decoder_forward.15} parent=5 // pred_fallthru
        _
      %p162 = scmp.lt.s32.totalorder %s11, 32
      // Predicated region
      $region21: #{decoder_forward.15} parent=5 // pred_check
        %p163 = pneg %p162
      $region22: #{decoder_forward.15} parent=5 // pred_check_branch
        %165 = sbr.rel (%p163) target = $region24
      $region23: #{decoder_forward.15} parent=5 // pred_region
        // Predicated region
        $region25: #{decoder_forward.15} parent=23 // pred_check
          %p166 = pneg %p45
        $region26: #{decoder_forward.15} parent=23 // pred_check_branch
          %168 = sbr.rel (%p166) target = $region28
        $region27: #{decoder_forward.15} parent=23 // pred_region
          %p169 = scmp.lt.s32.totalorder %s18, 1
          %s170 = scalar_select %p169, %s18, 1
          %p171 = scmp.lt.s32.totalorder %s19, 15
          %s172 = scalar_select %p171, %s19, 15
          %s173 = smul.addr %s172, 2
          %s174 = smul.addr %s170, 32
          %s175 = sadd.s32 %s173, %s174
          %s176 = smul.addr %s175, 4
          %s177 = scalar_lea.vmem %s0, %s176
        $region28: #{decoder_forward.15} parent=23 // pred_fallthru
          _
      $region24: #{decoder_forward.15} parent=5 // pred_fallthru
        _
      %p178 = scmp.le.s32.totalorder 1, %s11
      %p179 = scmp.lt.s32.totalorder %s11, 33
      %p180 = pnand %p178, %p179
      %p181 = pneg %p180
      // Predicated region
      $region29: #{decoder_forward.15} parent=5 // pred_check
        _
      $region30: #{decoder_forward.15} parent=5 // pred_check_branch
        %183 = sbr.rel (%p180) target = $region32
      $region31: #{decoder_forward.15} parent=5 // pred_region
        %s184 = ssub.s32 %s11, 1
        // Predicated region
        $region33: #{decoder_forward.15} parent=31 // pred_check
          %p185 = pneg %p72
        $region34: #{decoder_forward.15} parent=31 // pred_check_branch
          %187 = sbr.rel (%p185) target = $region36
        $region35: #{decoder_forward.15} parent=31 // pred_region
          %189 = dma.done [#allocation3], 128
        $region36: #{decoder_forward.15} parent=31 // pred_fallthru
          _
        // Predicated region
        $region37: #{decoder_forward.15} parent=31 // pred_check
          %p190 = pneg %p93
        $region38: #{decoder_forward.15} parent=31 // pred_check_branch
          %192 = sbr.rel (%p190) target = $region40
        $region39: #{decoder_forward.15} parent=31 // pred_region
          %194 = dma.done [#allocation5], 16
        $region40: #{decoder_forward.15} parent=31 // pred_fallthru
          _
        %p195 = scmp.lt.s32.totalorder %s20, 1
        %s196 = scalar_select %p195, %s20, 1
        %p197 = scmp.lt.s32.totalorder %s21, 15
        %s198 = scalar_select %p197, %s21, 15
        %s199 = smul.addr %s198, 2
        %s200 = smul.addr %s196, 32
        %s201 = sadd.s32 %s199, %s200
        %s202 = smul.addr %s201, 4
        %s203 = scalar_lea.vmem %s0, %s202
        %p204 = pneg %p51
        %p205 = pneg %p48
        %p206 = pneg %p72
        %p207 = pneg %p69
        %p208 = pneg %p93
        %p209 = pneg %p90
        %p210 = pneg %p121
        %p211 = pneg %p118
        %s212 = smul.u32 2, %s21
        %p213 = scmp.lt.s32.totalorder %s20, 1
        %s214 = scalar_select %p213, %s20, 1
        %p215 = scmp.lt.s32.totalorder %s212, 31
        %s216 = scalar_select %p215, %s212, 31
        %s217 = smul.addr %s216, 2
        %s218 = smul.addr %s214, 64
        %s219 = sadd.s32 %s217, %s218
        %s220 = smul.addr %s219, 4
        %s221 = scalar_lea.vmem %s3, %s220
        %p222 = scmp.lt.s32.totalorder %s20, 1
        %s223 = scalar_select %p222, %s20, 1
        %p224 = scmp.lt.s32.totalorder %s21, 15
        %s225 = scalar_select %p224, %s21, 15
        %s226 = smul.addr %s225, 2
        %s227 = smul.addr %s223, 32
        %s228 = sadd.s32 %s226, %s227
        %s229 = smul.addr %s228, 4
        %s230 = scalar_lea.vmem %s0, %s229
        %s231 = smul.u32 2, %s21
        %p232 = scmp.lt.s32.totalorder %s20, 1
        %s233 = scalar_select %p232, %s20, 1
        %p234 = scmp.lt.s32.totalorder %s231, 31
        %s235 = scalar_select %p234, %s231, 31
        %s236 = smul.addr %s235, 2
        %s237 = smul.addr %s233, 64
        %s238 = sadd.s32 %s236, %s237
        %s239 = smul.addr %s238, 4
        %s240 = scalar_lea.vmem %s3, %s239
        %s241 = smul.u32 2, %s21
        %v243 = vld [vmem:[%s230] sm:$0xf]
        %v244 = vld [vmem:[%s230 + $0x4] sm:$0xf]
        %v245 = vld [vmem:[#allocation4] sm:$0x1]
        %v246 = vld [vmem:[#allocation2] sm:$0xf]
        %v248 = vperm.slane %v245, 0
        %v252 = vunpack.c.l.b16 %v243
        %v253 = vunpack.c.l.b16 %v244
        %v254 = vpack.c.b16 %v253, %v252
        %vm255 = vcmask 64512
        %v257 = vsel %vm255, %v254, 0
        %vm259 = vcmask 1043456
        %v261 = vsel %vm259, %v246, 0
        %263 = vmatpush.bf16.msra.mxu0 0
        %264 = vmatpush.bf16.msra.mxu0 0
        %265 = vmatpush.bf16.msra.mxu0 0
        %266 = vmatpush.bf16.msra.mxu0 0
        %267 = vmatpush.bf16.msra.mxu0 0
        %268 = vmatpush.bf16.msra.mxu0 0
        %269 = vmatpush.bf16.msra.mxu0 0
        %270 = vmatpush.bf16.msra.mxu0 %v261
        %271 = vmatmul.bf16.gmra.mxu0 %v257
        %v272 = vpop.f32.mrf.mxu0
        %v273 = vadd.f32 %v248, %v272
        %v274 = vpop.f32.mrf.mxu0
        %v275 = vadd.f32 %v248, %v274
        %276 = vdwg.mxu0
        %v277 = vmax.f32 %v273, 0.0
        %v278 = vmax.f32 %v275, 0.0
        %v279 = vpack.c.bf16 %v277, %v277
        %v280 = vpack.c.bf16 %v278, %v278
        %vm281 = vcmask 125952
        %282 = vst.msk [vmem:[%s240] sm:$0xf] %vm281, %v279
        %283 = vst.msk [vmem:[%s240 + $0x4] sm:$0xf] %vm281, %v280
        %s284 = scalar_lea.vmem [#allocation2], 4
        %v285 = vld [vmem:[%s284] sm:$0xf]
        %v287 = vsel %vm259, %v285, 0
        %289 = vmatpush.bf16.msra.mxu0 0
        %290 = vmatpush.bf16.msra.mxu0 0
        %291 = vmatpush.bf16.msra.mxu0 0
        %292 = vmatpush.bf16.msra.mxu0 0
        %293 = vmatpush.bf16.msra.mxu0 0
        %294 = vmatpush.bf16.msra.mxu0 0
        %295 = vmatpush.bf16.msra.mxu0 0
        %296 = vmatpush.bf16.msra.mxu0 %v287
        %297 = vmatmul.bf16.gmra.mxu0 %v257
        %v298 = vpop.f32.mrf.mxu0
        %v299 = vadd.f32 %v248, %v298
        %v300 = vpop.f32.mrf.mxu0
        %v301 = vadd.f32 %v248, %v300
        %302 = vdwg.mxu0
        %v303 = vmax.f32 %v299, 0.0
        %v304 = vmax.f32 %v301, 0.0
        %v305 = vpack.c.bf16 %v303, %v303
        %v306 = vpack.c.bf16 %v304, %v304
        %s307 = scalar_lea.vmem %s240, 8
        %308 = vst.msk [vmem:[%s307] sm:$0xf] %vm281, %v305
        %309 = vst.msk [vmem:[%s307 + $0x4] sm:$0xf] %vm281, %v306
        %s310 = smul.u32 2, %s21
        %p311 = scmp.lt.s32.totalorder %s20, 1
        %s312 = scalar_select %p311, %s20, 1
        %p313 = scmp.lt.s32.totalorder %s310, 31
        %s314 = scalar_select %p313, %s310, 31
        %s315 = smul.addr %s314, 2
        %s316 = smul.addr %s312, 64
        %s317 = sadd.s32 %s315, %s316
        %s318 = smul.addr %s317, 4
        %s319 = scalar_lea.vmem %s3, %s318
        // Predicated region
        $region41: #{decoder_forward.15} parent=31 // pred_check
          %p320 = pneg %p118
        $region42: #{decoder_forward.15} parent=31 // pred_check_branch
          %322 = sbr.rel (%p320) target = $region44
        $region43: #{decoder_forward.15} parent=31 // pred_region
          %s323 = smul.u32 2, %s21
        $region44: #{decoder_forward.15} parent=31 // pred_fallthru
          _
      $region32: #{decoder_forward.15} parent=5 // pred_fallthru
        _
      %p324 = scmp.le.s32.totalorder 2, %s11
      // Predicated region
      $region45: #{decoder_forward.15} parent=5 // pred_check
        %p325 = pneg %p324
      $region46: #{decoder_forward.15} parent=5 // pred_check_branch
        %327 = sbr.rel (%p325) target = $region48
      $region47: #{decoder_forward.15} parent=5 // pred_region
        %s328 = ssub.s32 %s11, 2
        // Predicated region
        $region49: #{decoder_forward.15} parent=47 // pred_check
          %p329 = pneg %p124
        $region50: #{decoder_forward.15} parent=47 // pred_check_branch
          %331 = sbr.rel (%p329) target = $region52
        $region51: #{decoder_forward.15} parent=47 // pred_region
          %s332 = smul.u32 2, %s23
          %p333 = scmp.lt.s32.totalorder %s22, 1
          %s334 = scalar_select %p333, %s22, 1
          %p335 = scmp.lt.s32.totalorder %s332, 31
          %s336 = scalar_select %p335, %s332, 31
          %s337 = smul.addr %s336, 2
          %s338 = smul.addr %s334, 64
          %s339 = sadd.s32 %s337, %s338
          %s340 = smul.addr %s339, 4
          %s341 = scalar_lea.vmem %s3, %s340
        $region52: #{decoder_forward.15} parent=47 // pred_fallthru
          _
      $region48: #{decoder_forward.15} parent=5 // pred_fallthru
        _
    $region6: #{decoder_forward.15} parent=1 // loop_footer
      %s15 = sadd.s32 1, %s11
    $region7: #{decoder_forward.15} parent=1 // loop_footer_branch
      %10 = sbr.rel target = $region3
    $region8: #{decoder_forward.15} parent=1 // loop_exit
      _
    %342 = vsyncpa [#allocation3], 1
    %s343 = scalar_lea.sflag [#allocation3], 1
    %344 = vsyncpa %s343, 1
    %345 = vsyncpa [#allocation5], 1

// kernel: decoder_forward.14
$region0: #{decoder_forward.14}
  #allocation0 [shape = 'u32[]', space=smem, size = 0x4, offset = 0x4, fixed_abs, tag = 'smem constant byte address 0x4 - core index']
  #allocation1 [shape = 'u32[72,128]{1,0:T(1,128)}', space=vmem, size = 0x9000, scoped, tag = 'internal scratch']
  %s0 = inlined_call_operand.vmem [shape: bf16[2,18,18,8], index: 0, kind: input, shape index: {}, may-alias: {0,1,2}]
  %s1 = inlined_call_operand.vmem [shape: bf16[2,18,18,8], index: 1, kind: input, shape index: {}, may-alias: {0,1,2}]
  %s2 = inlined_call_operand.vmem [shape: bf16[2,18,18,8], index: 2, kind: input, shape index: {}, may-alias: {0,1,2}]
  %s3 = inlined_call_operand.vmem [shape: bf16[9,8,8], index: 3, kind: input, shape index: {}]
  %s4 = inlined_call_operand.hbm [shape: f32[1,8], index: 4, kind: input, shape index: {}]
  %s5 = inlined_call_operand.vmem [shape: bf16[2,16,16,8], index: 5, kind: output, shape index: {}]
  %s6 = sld [smem:[#allocation0]]
  $region57: #{decoder_forward.14} parent=0
    _
  %s8 = ssub.s32 1, %s6
  %s9 = scalar_select 0, %s8, %s6
  $region1: #{decoder_forward.14} parent=0
    #allocation2 [shape = 'u8[512]{0}', space=vmem, size = 0x400, scoped, tag = 'input window, operand 4, single buffered']
    #allocation3 [shape = 's32[2]{0}', space=sflag, size = 0x8, scoped, tag = 'scoped memory for decoder_forward.14']
    %10 = vsyncpa [#allocation3], 0
    loop: start=0, step=1, limit=34
    $region2: #{decoder_forward.14} parent=1 // loop_pre_header
      _
    $region3: #{decoder_forward.14} parent=1 // loop_header
      %s12 = sphi 0, %s16
      %p13 = scmp.ge.s32.totalorder %s12, 34
      %s19 = sphi 0, %s31
      %s20 = sphi 0, %s27
      %s21 = sphi 0, %s19
      %s22 = sphi 0, %s20
      %s23 = sphi 0, %s21
      %s24 = sphi 0, %s22
      %s36 = sphi 0, %s38
      %s39 = sphi 0, %s36
      %s40 = sphi 0, %s39
      %s56 = sphi 0, %s40
      %s66 = sphi 0, %s68
      %s69 = sphi 0, %s66
      %s70 = sphi 0, %s69
      %s86 = sphi 0, %s70
      %s96 = sphi 0, %s98
      %s99 = sphi 0, %s96
      %s100 = sphi 0, %s99
      %s116 = sphi 0, %s100
      %s120 = sphi 0, %s120
      %s122 = sphi 0, %s120
      %s123 = sphi 0, %s122
      %s137 = sphi 0, %s123
      %s141 = sphi 0, %s141
      %s143 = sphi 0, %s141
      %s144 = sphi 0, %s143
      %s158 = sphi 0, %s144
      %s166 = sphi 0, %s168
      %s169 = sphi 0, %s166
      %s170 = sphi 0, %s169
      %s186 = sphi 0, %s170
    $region4: #{decoder_forward.14} parent=1 // loop_header_branch
      %15 = sbr.rel (%p13) target = $region8
    $region5: #{decoder_forward.14} parent=1 // loop_body
      %s17 = ssub.s32 %s12, 1
      %s18 = ssub.s32 %s12, 2
      %s25 = sadd.s32 1, %s20
      %p26 = scmp.ge.s32.totalorder %s25, 16
      %s27 = scalar_select %p26, 0, %s25
      %s28 = sadd.s32 1, %s19
      %s29 = scalar_select %p26, %s28, %s19
      %p30 = scmp.ge.s32.totalorder %s29, 2
      %s31 = scalar_select %p30, 0, %s29
      %s32 = ssub.s32 %s19, %s31
      %s33 = ssub.s32 %s20, %s27
      %s34 = sor.u32 %s32, %s33
      %p35 = scmp.eq.s32.totalorder %s34, 0
      %s37 = sadd.s32 %s36, 1
      %s38 = scalar_select %p35, %s36, %s37
      %p41 = pneg %p35
      %p42 = scmp.eq.s32.totalorder %s12, 31
      %p43 = por %p41, %p42
      %p44 = scmp.ne.s32.totalorder %s36, %s39
      %p45 = scmp.eq.s32.totalorder %s12, 0
      %p46 = por %p44, %p45
      %p47 = scmp.ne.s32.totalorder %s36, %s39
      %p48 = scmp.eq.s32.totalorder %s17, 31
      %p49 = por %p47, %p48
      %p50 = scmp.ne.s32.totalorder %s39, %s40
      %p51 = scmp.eq.s32.totalorder %s17, 0
      %p52 = por %p50, %p51
      %p53 = scmp.ne.s32.totalorder %s39, %s40
      %p54 = scmp.eq.s32.totalorder %s18, 31
      %p55 = por %p53, %p54
      %p57 = scmp.ne.s32.totalorder %s40, %s56
      %p58 = scmp.eq.s32.totalorder %s18, 0
      %p59 = por %p57, %p58
      %s60 = sadd.s32 %s20, 1
      %s61 = sadd.s32 %s27, 1
      %s62 = ssub.s32 %s19, %s31
      %s63 = ssub.s32 %s60, %s61
      %s64 = sor.u32 %s62, %s63
      %p65 = scmp.eq.s32.totalorder %s64, 0
      %s67 = sadd.s32 %s66, 1
      %s68 = scalar_select %p65, %s66, %s67
      %p71 = pneg %p65
      %p72 = scmp.eq.s32.totalorder %s12, 31
      %p73 = por %p71, %p72
      %p74 = scmp.ne.s32.totalorder %s66, %s69
      %p75 = scmp.eq.s32.totalorder %s12, 0
      %p76 = por %p74, %p75
      %p77 = scmp.ne.s32.totalorder %s66, %s69
      %p78 = scmp.eq.s32.totalorder %s17, 31
      %p79 = por %p77, %p78
      %p80 = scmp.ne.s32.totalorder %s69, %s70
      %p81 = scmp.eq.s32.totalorder %s17, 0
      %p82 = por %p80, %p81
      %p83 = scmp.ne.s32.totalorder %s69, %s70
      %p84 = scmp.eq.s32.totalorder %s18, 31
      %p85 = por %p83, %p84
      %p87 = scmp.ne.s32.totalorder %s70, %s86
      %p88 = scmp.eq.s32.totalorder %s18, 0
      %p89 = por %p87, %p88
      %s90 = sadd.s32 %s20, 2
      %s91 = sadd.s32 %s27, 2
      %s92 = ssub.s32 %s19, %s31
      %s93 = ssub.s32 %s90, %s91
      %s94 = sor.u32 %s92, %s93
      %p95 = scmp.eq.s32.totalorder %s94, 0
      %s97 = sadd.s32 %s96, 1
      %s98 = scalar_select %p95, %s96, %s97
      %p101 = pneg %p95
      %p102 = scmp.eq.s32.totalorder %s12, 31
      %p103 = por %p101, %p102
      %p104 = scmp.ne.s32.totalorder %s96, %s99
      %p105 = scmp.eq.s32.totalorder %s12, 0
      %p106 = por %p104, %p105
      %p107 = scmp.ne.s32.totalorder %s96, %s99
      %p108 = scmp.eq.s32.totalorder %s17, 31
      %p109 = por %p107, %p108
      %p110 = scmp.ne.s32.totalorder %s99, %s100
      %p111 = scmp.eq.s32.totalorder %s17, 0
      %p112 = por %p110, %p111
      %p113 = scmp.ne.s32.totalorder %s99, %s100
      %p114 = scmp.eq.s32.totalorder %s18, 31
      %p115 = por %p113, %p114
      %p117 = scmp.ne.s32.totalorder %s100, %s116
      %p118 = scmp.eq.s32.totalorder %s18, 0
      %p119 = por %p117, %p118
      %s121 = sadd.s32 %s120, 1
      %p124 = scmp.eq.s32.totalorder %s12, 31
      %p125 = scmp.ne.s32.totalorder %s120, %s122
      %p126 = scmp.eq.s32.totalorder %s12, 0
      %p127 = por %p125, %p126
      %p128 = scmp.ne.s32.totalorder %s120, %s122
      %p129 = scmp.eq.s32.totalorder %s17, 31
      %p130 = por %p128, %p129
      %p131 = scmp.ne.s32.totalorder %s122, %s123
      %p132 = scmp.eq.s32.totalorder %s17, 0
      %p133 = por %p131, %p132
      %p134 = scmp.ne.s32.totalorder %s122, %s123
      %p135 = scmp.eq.s32.totalorder %s18, 31
      %p136 = por %p134, %p135
      %p138 = scmp.ne.s32.totalorder %s123, %s137
      %p139 = scmp.eq.s32.totalorder %s18, 0
      %p140 = por %p138, %p139
      %s142 = sadd.s32 %s141, 1
      %p145 = scmp.eq.s32.totalorder %s12, 31
      %p146 = scmp.ne.s32.totalorder %s141, %s143
      %p147 = scmp.eq.s32.totalorder %s12, 0
      %p148 = por %p146, %p147
      %p149 = scmp.ne.s32.totalorder %s141, %s143
      %p150 = scmp.eq.s32.totalorder %s17, 31
      %p151 = por %p149, %p150
      %p152 = scmp.ne.s32.totalorder %s143, %s144
      %p153 = scmp.eq.s32.totalorder %s17, 0
      %p154 = por %p152, %p153
      %p155 = scmp.ne.s32.totalorder %s143, %s144
      %p156 = scmp.eq.s32.totalorder %s18, 31
      %p157 = por %p155, %p156
      %p159 = scmp.ne.s32.totalorder %s144, %s158
      %p160 = scmp.eq.s32.totalorder %s18, 0
      %p161 = por %p159, %p160
      %s162 = ssub.s32 %s19, %s31
      %s163 = ssub.s32 %s20, %s27
      %s164 = sor.u32 %s162, %s163
      %p165 = scmp.eq.s32.totalorder %s164, 0
      %s167 = sadd.s32 %s166, 1
      %s168 = scalar_select %p165, %s166, %s167
      %p171 = pneg %p165
      %p172 = scmp.eq.s32.totalorder %s12, 31
      %p173 = por %p171, %p172
      %p174 = scmp.ne.s32.totalorder %s166, %s169
      %p175 = scmp.eq.s32.totalorder %s12, 0
      %p176 = por %p174, %p175
      %p177 = scmp.ne.s32.totalorder %s166, %s169
      %p178 = scmp.eq.s32.totalorder %s17, 31
      %p179 = por %p177, %p178
      %p180 = scmp.ne.s32.totalorder %s169, %s170
      %p181 = scmp.eq.s32.totalorder %s17, 0
      %p182 = por %p180, %p181
      %p183 = scmp.ne.s32.totalorder %s169, %s170
      %p184 = scmp.eq.s32.totalorder %s18, 31
      %p185 = por %p183, %p184
      %p187 = scmp.ne.s32.totalorder %s170, %s186
      %p188 = scmp.eq.s32.totalorder %s18, 0
      %p189 = por %p187, %p188
      %p190 = scmp.le.s32.totalorder 1, %s12
      %p191 = scmp.lt.s32.totalorder %s12, 33
      %p192 = pnand %p190, %p191
      %p193 = pneg %p192
      // Predicated region
      $region9: #{decoder_forward.14} parent=5 // pred_check
        _
      $region10: #{decoder_forward.14} parent=5 // pred_check_branch
        %195 = sbr.rel (%p192) target = $region12
      $region11: #{decoder_forward.14} parent=5 // pred_region
        %s196 = ssub.s32 %s12, 1
        // Predicated region
        $region13: #{decoder_forward.14} parent=11 // pred_check
          %p197 = pneg %p133
        $region14: #{decoder_forward.14} parent=11 // pred_check_branch
          %199 = sbr.rel (%p197) target = $region16
        $region15: #{decoder_forward.14} parent=11 // pred_region
          _
        $region16: #{decoder_forward.14} parent=11 // pred_fallthru
          _
        // Predicated region
        $region17: #{decoder_forward.14} parent=11 // pred_check
          %p200 = pneg %p154
        $region18: #{decoder_forward.14} parent=11 // pred_check_branch
          %202 = sbr.rel (%p200) target = $region20
        $region19: #{decoder_forward.14} parent=11 // pred_region
          %204 = vsyncadd [#allocation3], 0
          %s206 = sshll.u32 %s4, 4
          %s207 = int_to_ptr.hbm [resolvable:$true] %s206
          %s208 = sshll.u32 [#allocation2], 4
          %s209 = int_to_ptr.vmem [resolvable:$true] %s208
          %211 = dma.hbm_to_vmem [thread:$0]  %s207, 16, %s209, [#allocation3]
        $region20: #{decoder_forward.14} parent=11 // pred_fallthru
          _
      $region12: #{decoder_forward.14} parent=5 // pred_fallthru
        _
      %p212 = scmp.lt.s32.totalorder %s12, 32
      // Predicated region
      $region21: #{decoder_forward.14} parent=5 // pred_check
        %p213 = pneg %p212
      $region22: #{decoder_forward.14} parent=5 // pred_check_branch
        %215 = sbr.rel (%p213) target = $region24
      $region23: #{decoder_forward.14} parent=5 // pred_region
        // Predicated region
        $region25: #{decoder_forward.14} parent=23 // pred_check
          %p216 = pneg %p46
        $region26: #{decoder_forward.14} parent=23 // pred_check_branch
          %218 = sbr.rel (%p216) target = $region28
        $region27: #{decoder_forward.14} parent=23 // pred_region
          %p219 = scmp.lt.s32.totalorder %s19, 1
          %s220 = scalar_select %p219, %s19, 1
          %p221 = scmp.lt.s32.totalorder %s20, 17
          %s222 = scalar_select %p221, %s20, 17
          %s223 = smul.addr %s222, 3
          %s224 = smul.addr %s220, 54
          %s225 = sadd.s32 %s223, %s224
          %s226 = smul.addr %s225, 4
          %s227 = scalar_lea.vmem %s0, %s226
        $region28: #{decoder_forward.14} parent=23 // pred_fallthru
          _
        // Predicated region
        $region29: #{decoder_forward.14} parent=23 // pred_check
          %p228 = pneg %p76
        $region30: #{decoder_forward.14} parent=23 // pred_check_branch
          %230 = sbr.rel (%p228) target = $region32
        $region31: #{decoder_forward.14} parent=23 // pred_region
          %s231 = sadd.s32 %s20, 1
          %p232 = scmp.lt.s32.totalorder %s19, 1
          %s233 = scalar_select %p232, %s19, 1
          %p234 = scmp.lt.s32.totalorder %s231, 17
          %s235 = scalar_select %p234, %s231, 17
          %s236 = smul.addr %s235, 3
          %s237 = smul.addr %s233, 54
          %s238 = sadd.s32 %s236, %s237
          %s239 = smul.addr %s238, 4
          %s240 = scalar_lea.vmem %s1, %s239
          %s241 = sadd.s32 %s20, 1
        $region32: #{decoder_forward.14} parent=23 // pred_fallthru
          _
        // Predicated region
        $region33: #{decoder_forward.14} parent=23 // pred_check
          %p242 = pneg %p106
        $region34: #{decoder_forward.14} parent=23 // pred_check_branch
          %244 = sbr.rel (%p242) target = $region36
        $region35: #{decoder_forward.14} parent=23 // pred_region
          %s245 = sadd.s32 %s20, 2
          %p246 = scmp.lt.s32.totalorder %s19, 1
          %s247 = scalar_select %p246, %s19, 1
          %p248 = scmp.lt.s32.totalorder %s245, 17
          %s249 = scalar_select %p248, %s245, 17
          %s250 = smul.addr %s249, 3
          %s251 = smul.addr %s247, 54
          %s252 = sadd.s32 %s250, %s251
          %s253 = smul.addr %s252, 4
          %s254 = scalar_lea.vmem %s2, %s253
          %s255 = sadd.s32 %s20, 2
        $region36: #{decoder_forward.14} parent=23 // pred_fallthru
          _
      $region24: #{decoder_forward.14} parent=5 // pred_fallthru
        _
      %p256 = scmp.le.s32.totalorder 1, %s12
      %p257 = scmp.lt.s32.totalorder %s12, 33
      %p258 = pnand %p256, %p257
      %p259 = pneg %p258
      // Predicated region
      $region37: #{decoder_forward.14} parent=5 // pred_check
        _
      $region38: #{decoder_forward.14} parent=5 // pred_check_branch
        %261 = sbr.rel (%p258) target = $region40
      $region39: #{decoder_forward.14} parent=5 // pred_region
        %s262 = ssub.s32 %s12, 1
        // Predicated region
        $region41: #{decoder_forward.14} parent=39 // pred_check
          %p263 = pneg %p154
        $region42: #{decoder_forward.14} parent=39 // pred_check_branch
          %265 = sbr.rel (%p263) target = $region44
        $region43: #{decoder_forward.14} parent=39 // pred_region
          %267 = dma.done [#allocation3], 16
        $region44: #{decoder_forward.14} parent=39 // pred_fallthru
          _
        %p268 = scmp.lt.s32.totalorder %s21, 1
        %s269 = scalar_select %p268, %s21, 1
        %p270 = scmp.lt.s32.totalorder %s22, 17
        %s271 = scalar_select %p270, %s22, 17
        %s272 = smul.addr %s271, 3
        %s273 = smul.addr %s269, 54
        %s274 = sadd.s32 %s272, %s273
        %s275 = smul.addr %s274, 4
        %s276 = scalar_lea.vmem %s0, %s275
        %p277 = pneg %p52
        %p278 = pneg %p49
        %s279 = sadd.s32 %s22, 1
        %p280 = scmp.lt.s32.totalorder %s21, 1
        %s281 = scalar_select %p280, %s21, 1
        %p282 = scmp.lt.s32.totalorder %s279, 17
        %s283 = scalar_select %p282, %s279, 17
        %s284 = smul.addr %s283, 3
        %s285 = smul.addr %s281, 54
        %s286 = sadd.s32 %s284, %s285
        %s287 = smul.addr %s286, 4
        %s288 = scalar_lea.vmem %s1, %s287
        %p289 = pneg %p82
        %p290 = pneg %p79
        %s291 = sadd.s32 %s22, 2
        %p292 = scmp.lt.s32.totalorder %s21, 1
        %s293 = scalar_select %p292, %s21, 1
        %p294 = scmp.lt.s32.totalorder %s291, 17
        %s295 = scalar_select %p294, %s291, 17
        %s296 = smul.addr %s295, 3
        %s297 = smul.addr %s293, 54
        %s298 = sadd.s32 %s296, %s297
        %s299 = smul.addr %s298, 4
        %s300 = scalar_lea.vmem %s2, %s299
        %p301 = pneg %p112
        %p302 = pneg %p109
        %p303 = pneg %p133
        %p304 = pneg %p130
        %p305 = pneg %p154
        %p306 = pneg %p151
        %p307 = pneg %p182
        %p308 = pneg %p179
        %p309 = scmp.lt.s32.totalorder %s21, 1
        %s310 = scalar_select %p309, %s21, 1
        %p311 = scmp.lt.s32.totalorder %s22, 15
        %s312 = scalar_select %p311, %s22, 15
        %s313 = smul.addr %s312, 2
        %s314 = smul.addr %s310, 32
        %s315 = sadd.s32 %s313, %s314
        %s316 = smul.addr %s315, 4
        %s317 = scalar_lea.vmem %s5, %s316
        %p318 = scmp.lt.s32.totalorder %s21, 1
        %s319 = scalar_select %p318, %s21, 1
        %p320 = scmp.lt.s32.totalorder %s22, 17
        %s321 = scalar_select %p320, %s22, 17
        %s322 = smul.addr %s321, 3
        %s323 = smul.addr %s319, 54
        %s324 = sadd.s32 %s322, %s323
        %s325 = smul.addr %s324, 4
        %s326 = scalar_lea.vmem %s0, %s325
        %s327 = sadd.s32 %s22, 1
        %p328 = scmp.lt.s32.totalorder %s21, 1
        %s329 = scalar_select %p328, %s21, 1
        %p330 = scmp.lt.s32.totalorder %s327, 17
        %s331 = scalar_select %p330, %s327, 17
        %s332 = smul.addr %s331, 3
        %s333 = smul.addr %s329, 54
        %s334 = sadd.s32 %s332, %s333
        %s335 = smul.addr %s334, 4
        %s336 = scalar_lea.vmem %s1, %s335
        %s337 = sadd.s32 %s22, 1
        %s338 = sadd.s32 %s22, 2
        %p339 = scmp.lt.s32.totalorder %s21, 1
        %s340 = scalar_select %p339, %s21, 1
        %p341 = scmp.lt.s32.totalorder %s338, 17
        %s342 = scalar_select %p341, %s338, 17
        %s343 = smul.addr %s342, 3
        %s344 = smul.addr %s340, 54
        %s345 = sadd.s32 %s343, %s344
        %s346 = smul.addr %s345, 4
        %s347 = scalar_lea.vmem %s2, %s346
        %s348 = sadd.s32 %s22, 2
        %p349 = scmp.lt.s32.totalorder %s21, 1
        %s350 = scalar_select %p349, %s21, 1
        %p351 = scmp.lt.s32.totalorder %s22, 15
        %s352 = scalar_select %p351, %s22, 15
        %s353 = smul.addr %s352, 2
        %s354 = smul.addr %s350, 32
        %s355 = sadd.s32 %s353, %s354
        %s356 = smul.addr %s355, 4
        %s357 = scalar_lea.vmem %s5, %s356
        %v359 = vld [vmem:[%s326] sm:$0xf]
        %v360 = vld [vmem:[%s326 + $0x4] sm:$0xf]
        %v361 = vld [vmem:[%s3] sm:$0xf]
        %v362 = vld [vmem:[%s326 + $0x8] sm:$0x1]
        %s363 = scalar_lea.vmem %s3, 4
        %v364 = vld [vmem:[%s363] sm:$0xf]
        %v368 = vunpack.c.l.b16 %v359
        %v369 = vunpack.c.l.b16 %v360
        %v370 = vunpack.c.l.b16 %v362
        %v371 = vpack.c.b16 %v369, %v368
        %v372 = vpack.c.b16 %v370, %v370
        %vm373 = vsmask.f32 7424
        %v375 = vshrl.u32 %v371, 16
        %v377 = vshll.u32 %v371, 16
        %v379 = vrot.slane %v377, 1
        %v380 = vor.u32 %v375, %v379
        %v382 = vshll.u32 %v372, 16
        %v384 = vrot.slane %v382, 1
        %v385 = vsel %vm373, %v380, %v384
        %vm386 = vcmask 64512
        %v388 = vsel %vm386, %v385, 0
        %vm390 = vcmask 1043456
        %v392 = vsel %vm390, %v364, 0
        %394 = vmatpush.bf16.msra.mxu0 0
        %395 = vmatpush.bf16.msra.mxu0 0
        %396 = vmatpush.bf16.msra.mxu0 0
        %397 = vmatpush.bf16.msra.mxu0 0
        %398 = vmatpush.bf16.msra.mxu0 0
        %399 = vmatpush.bf16.msra.mxu0 0
        %400 = vmatpush.bf16.msra.mxu0 0
        %401 = vmatpush.bf16.msra.mxu0 %v392
        %402 = vmatmul.bf16.gmra.mxu0 %v388
        %v403 = vpop.f32.mrf.mxu0
        %v404 = vadd.f32 0.0, %v403
        %v405 = vpop.f32.mrf.mxu0
        %v406 = vadd.f32 0.0, %v405
        %407 = vdwg.mxu0
        %v408 = vsel %vm386, %v371, 0
        %v411 = vsel %vm390, %v361, 0
        %413 = vmatpush.bf16.msra.mxu0 0
        %414 = vmatpush.bf16.msra.mxu0 0
        %415 = vmatpush.bf16.msra.mxu0 0
        %416 = vmatpush.bf16.msra.mxu0 0
        %417 = vmatpush.bf16.msra.mxu0 0
        %418 = vmatpush.bf16.msra.mxu0 0
        %419 = vmatpush.bf16.msra.mxu0 0
        %420 = vmatpush.bf16.msra.mxu0 %v411
        %421 = vmatmul.bf16.gmra.mxu0 %v408
        %v422 = vpop.f32.mrf.mxu0
        %v423 = vadd.f32 %v404, %v422
        %v424 = vpop.f32.mrf.mxu0
        %v425 = vadd.f32 %v406, %v424
        %426 = vdwg.mxu0
        %v427 = vld [vmem:[%s326] sm:$0xe]
        %s428 = scalar_lea.vmem %s3, 8
        %v429 = vld [vmem:[%s428] sm:$0xf]
        %v431 = vunpack.c.l.b16 %v427
        %v432 = vpack.c.b16 %v369, %v431
        %vm433 = vcmask 1046528
        %v434 = vrot.slane %v432, 1
        %v435 = vrot.slane %v372, 1
        %v436 = vsel %vm433, %v434, %v435
        %v438 = vsel %vm386, %v436, 0
        %v441 = vsel %vm390, %v429, 0
        %443 = vmatpush.bf16.msra.mxu0 0
        %444 = vmatpush.bf16.msra.mxu0 0
        %445 = vmatpush.bf16.msra.mxu0 0
        %446 = vmatpush.bf16.msra.mxu0 0
        %447 = vmatpush.bf16.msra.mxu0 0
        %448 = vmatpush.bf16.msra.mxu0 0
        %449 = vmatpush.bf16.msra.mxu0 0
        %450 = vmatpush.bf16.msra.mxu0 %v441
        %451 = vmatmul.bf16.gmra.mxu0 %v438
        %v452 = vpop.f32.mrf.mxu0
        %v453 = vadd.f32 0.0, %v452
        %v454 = vpop.f32.mrf.mxu0
        %v455 = vadd.f32 0.0, %v454
        %456 = vdwg.mxu0
        %v457 = vadd.f32 %v423, %v453
        %v458 = vadd.f32 %v425, %v455
        %v459 = vld [vmem:[%s336] sm:$0xf]
        %v460 = vld [vmem:[%s336 + $0x4] sm:$0xf]
        %s461 = scalar_lea.vmem %s3, 12
        %v462 = vld [vmem:[%s461] sm:$0xf]
        %v465 = vunpack.c.l.b16 %v459
        %v466 = vunpack.c.l.b16 %v460
        %v467 = vpack.c.b16 %v466, %v465
        %v469 = vsel %vm386, %v467, 0
        %v472 = vsel %vm390, %v462, 0
        %474 = vmatpush.bf16.msra.mxu0 0
        %475 = vmatpush.bf16.msra.mxu0 0
        %476 = vmatpush.bf16.msra.mxu0 0
        %477 = vmatpush.bf16.msra.mxu0 0
        %478 = vmatpush.bf16.msra.mxu0 0
        %479 = vmatpush.bf16.msra.mxu0 0
        %480 = vmatpush.bf16.msra.mxu0 0
        %481 = vmatpush.bf16.msra.mxu0 %v472
        %482 = vmatmul.bf16.gmra.mxu0 %v469
        %v483 = vpop.f32.mrf.mxu0
        %v484 = vadd.f32 0.0, %v483
        %v485 = vpop.f32.mrf.mxu0
        %v486 = vadd.f32 0.0, %v485
        %487 = vdwg.mxu0
        %v488 = vadd.f32 %v457, %v484
        %v489 = vadd.f32 %v458, %v486
        %v490 = vld [vmem:[%s336] sm:$0xf]
        %v491 = vld [vmem:[%s336 + $0x4] sm:$0xf]
        %v492 = vld [vmem:[%s336 + $0x8] sm:$0x1]
        %s493 = scalar_lea.vmem %s3, 16
        %v494 = vld [vmem:[%s493] sm:$0xf]
        %v498 = vunpack.c.l.b16 %v490
        %v499 = vunpack.c.l.b16 %v491
        %v500 = vunpack.c.l.b16 %v492
        %v501 = vpack.c.b16 %v499, %v498
        %v502 = vpack.c.b16 %v500, %v500
        %v504 = vshrl.u32 %v501, 16
        %v506 = vshll.u32 %v501, 16
        %v508 = vrot.slane %v506, 1
        %v509 = vor.u32 %v504, %v508
        %v511 = vshll.u32 %v502, 16
        %v513 = vrot.slane %v511, 1
        %v514 = vsel %vm373, %v509, %v513
        %v516 = vsel %vm386, %v514, 0
        %v519 = vsel %vm390, %v494, 0
        %521 = vmatpush.bf16.msra.mxu0 0
        %522 = vmatpush.bf16.msra.mxu0 0
        %523 = vmatpush.bf16.msra.mxu0 0
        %524 = vmatpush.bf16.msra.mxu0 0
        %525 = vmatpush.bf16.msra.mxu0 0
        %526 = vmatpush.bf16.msra.mxu0 0
        %527 = vmatpush.bf16.msra.mxu0 0
        %528 = vmatpush.bf16.msra.mxu0 %v519
        %529 = vmatmul.bf16.gmra.mxu0 %v516
        %v530 = vpop.f32.mrf.mxu0
        %v531 = vadd.f32 0.0, %v530
        %v532 = vpop.f32.mrf.mxu0
        %v533 = vadd.f32 0.0, %v532
        %534 = vdwg.mxu0
        %v535 = vadd.f32 %v488, %v531
        %v536 = vadd.f32 %v489, %v533
        %v537 = vld [vmem:[%s336] sm:$0xe]
        %s538 = scalar_lea.vmem %s3, 20
        %v539 = vld [vmem:[%s538] sm:$0xf]
        %v541 = vunpack.c.l.b16 %v537
        %v542 = vpack.c.b16 %v499, %v541
        %v543 = vrot.slane %v542, 1
        %v544 = vrot.slane %v502, 1
        %v545 = vsel %vm433, %v543, %v544
        %v547 = vsel %vm386, %v545, 0
        %v550 = vsel %vm390, %v539, 0
        %552 = vmatpush.bf16.msra.mxu0 0
        %553 = vmatpush.bf16.msra.mxu0 0
        %554 = vmatpush.bf16.msra.mxu0 0
        %555 = vmatpush.bf16.msra.mxu0 0
        %556 = vmatpush.bf16.msra.mxu0 0
        %557 = vmatpush.bf16.msra.mxu0 0
        %558 = vmatpush.bf16.msra.mxu0 0
        %559 = vmatpush.bf16.msra.mxu0 %v550
        %560 = vmatmul.bf16.gmra.mxu0 %v547
        %v561 = vpop.f32.mrf.mxu0
        %v562 = vadd.f32 0.0, %v561
        %v563 = vpop.f32.mrf.mxu0
        %v564 = vadd.f32 0.0, %v563
        %565 = vdwg.mxu0
        %v566 = vadd.f32 %v535, %v562
        %v567 = vadd.f32 %v536, %v564
        %v568 = vld [vmem:[%s347] sm:$0xf]
        %v569 = vld [vmem:[%s347 + $0x4] sm:$0xf]
        %s570 = scalar_lea.vmem %s3, 24
        %v571 = vld [vmem:[%s570] sm:$0xf]
        %v574 = vunpack.c.l.b16 %v568
        %v575 = vunpack.c.l.b16 %v569
        %v576 = vpack.c.b16 %v575, %v574
        %v578 = vsel %vm386, %v576, 0
        %v581 = vsel %vm390, %v571, 0
        %583 = vmatpush.bf16.msra.mxu0 0
        %584 = vmatpush.bf16.msra.mxu0 0
        %585 = vmatpush.bf16.msra.mxu0 0
        %586 = vmatpush.bf16.msra.mxu0 0
        %587 = vmatpush.bf16.msra.mxu0 0
        %588 = vmatpush.bf16.msra.mxu0 0
        %589 = vmatpush.bf16.msra.mxu0 0
        %590 = vmatpush.bf16.msra.mxu0 %v581
        %591 = vmatmul.bf16.gmra.mxu0 %v578
        %v592 = vpop.f32.mrf.mxu0
        %v593 = vadd.f32 0.0, %v592
        %v594 = vpop.f32.mrf.mxu0
        %v595 = vadd.f32 0.0, %v594
        %596 = vdwg.mxu0
        %v597 = vadd.f32 %v566, %v593
        %v598 = vadd.f32 %v567, %v595
        %v599 = vld [vmem:[%s347] sm:$0xf]
        %v600 = vld [vmem:[%s347 + $0x4] sm:$0xf]
        %v601 = vld [vmem:[%s347 + $0x8] sm:$0x1]
        %s602 = scalar_lea.vmem %s3, 28
        %v603 = vld [vmem:[%s602] sm:$0xf]
        %v607 = vunpack.c.l.b16 %v599
        %v608 = vunpack.c.l.b16 %v600
        %v609 = vunpack.c.l.b16 %v601
        %v610 = vpack.c.b16 %v608, %v607
        %v611 = vpack.c.b16 %v609, %v609
        %v613 = vshrl.u32 %v610, 16
        %v615 = vshll.u32 %v610, 16
        %v617 = vrot.slane %v615, 1
        %v618 = vor.u32 %v613, %v617
        %v620 = vshll.u32 %v611, 16
        %v622 = vrot.slane %v620, 1
        %v623 = vsel %vm373, %v618, %v622
        %v625 = vsel %vm386, %v623, 0
        %v628 = vsel %vm390, %v603, 0
        %630 = vmatpush.bf16.msra.mxu0 0
        %631 = vmatpush.bf16.msra.mxu0 0
        %632 = vmatpush.bf16.msra.mxu0 0
        %633 = vmatpush.bf16.msra.mxu0 0
        %634 = vmatpush.bf16.msra.mxu0 0
        %635 = vmatpush.bf16.msra.mxu0 0
        %636 = vmatpush.bf16.msra.mxu0 0
        %637 = vmatpush.bf16.msra.mxu0 %v628
        %638 = vmatmul.bf16.gmra.mxu0 %v625
        %v639 = vpop.f32.mrf.mxu0
        %v640 = vadd.f32 0.0, %v639
        %v641 = vpop.f32.mrf.mxu0
        %v642 = vadd.f32 0.0, %v641
        %643 = vdwg.mxu0
        %v644 = vadd.f32 %v597, %v640
        %v645 = vadd.f32 %v598, %v642
        %v646 = vld [vmem:[%s347] sm:$0xe]
        %s647 = scalar_lea.vmem %s3, 32
        %v648 = vld [vmem:[%s647] sm:$0xf]
        %v650 = vunpack.c.l.b16 %v646
        %v651 = vpack.c.b16 %v608, %v650
        %v652 = vrot.slane %v651, 1
        %v653 = vrot.slane %v611, 1
        %v654 = vsel %vm433, %v652, %v653
        %v656 = vsel %vm386, %v654, 0
        %v659 = vsel %vm390, %v648, 0
        %661 = vmatpush.bf16.msra.mxu0 0
        %662 = vmatpush.bf16.msra.mxu0 0
        %663 = vmatpush.bf16.msra.mxu0 0
        %664 = vmatpush.bf16.msra.mxu0 0
        %665 = vmatpush.bf16.msra.mxu0 0
        %666 = vmatpush.bf16.msra.mxu0 0
        %667 = vmatpush.bf16.msra.mxu0 0
        %668 = vmatpush.bf16.msra.mxu0 %v659
        %669 = vmatmul.bf16.gmra.mxu0 %v656
        %v670 = vpop.f32.mrf.mxu0
        %v671 = vadd.f32 0.0, %v670
        %v672 = vpop.f32.mrf.mxu0
        %v673 = vadd.f32 0.0, %v672
        %674 = vdwg.mxu0
        %v675 = vadd.f32 %v644, %v671
        %v676 = vadd.f32 %v645, %v673
        %v677 = vld [vmem:[#allocation2] sm:$0x1]
        %v679 = vperm.slane %v677, 0
        %v681 = vadd.f32 %v675, %v679
        %v682 = vadd.f32 %v676, %v679
        %v683 = vmax.f32 %v681, 0.0
        %v684 = vmax.f32 %v682, 0.0
        %v685 = vpack.c.bf16 %v683, %v683
        %v686 = vpack.c.bf16 %v684, %v684
        %vm687 = vcmask 60416
        %688 = vst.msk [vmem:[%s357] sm:$0xf] %vm687, %v685
        %689 = vst.msk [vmem:[%s357 + $0x4] sm:$0xf] %vm687, %v686
        %p690 = scmp.lt.s32.totalorder %s21, 1
        %s691 = scalar_select %p690, %s21, 1
        %p692 = scmp.lt.s32.totalorder %s22, 15
        %s693 = scalar_select %p692, %s22, 15
        %s694 = smul.addr %s693, 2
        %s695 = smul.addr %s691, 32
        %s696 = sadd.s32 %s694, %s695
        %s697 = smul.addr %s696, 4
        %s698 = scalar_lea.vmem %s5, %s697
        // Predicated region
        $region45: #{decoder_forward.14} parent=39 // pred_check
          %p699 = pneg %p179
        $region46: #{decoder_forward.14} parent=39 // pred_check_branch
          %701 = sbr.rel (%p699) target = $region48
        $region47: #{decoder_forward.14} parent=39 // pred_region
          _
        $region48: #{decoder_forward.14} parent=39 // pred_fallthru
          _
      $region40: #{decoder_forward.14} parent=5 // pred_fallthru
        _
      %p702 = scmp.le.s32.totalorder 2, %s12
      // Predicated region
      $region49: #{decoder_forward.14} parent=5 // pred_check
        %p703 = pneg %p702
      $region50: #{decoder_forward.14} parent=5 // pred_check_branch
        %705 = sbr.rel (%p703) target = $region52
      $region51: #{decoder_forward.14} parent=5 // pred_region
        %s706 = ssub.s32 %s12, 2
        // Predicated region
        $region53: #{decoder_forward.14} parent=51 // pred_check
          %p707 = pneg %p185
        $region54: #{decoder_forward.14} parent=51 // pred_check_branch
          %709 = sbr.rel (%p707) target = $region56
        $region55: #{decoder_forward.14} parent=51 // pred_region
          %p710 = scmp.lt.s32.totalorder %s23, 1
          %s711 = scalar_select %p710, %s23, 1
          %p712 = scmp.lt.s32.totalorder %s24, 15
          %s713 = scalar_select %p712, %s24, 15
          %s714 = smul.addr %s713, 2
          %s715 = smul.addr %s711, 32
          %s716 = sadd.s32 %s714, %s715
          %s717 = smul.addr %s716, 4
          %s718 = scalar_lea.vmem %s5, %s717
        $region56: #{decoder_forward.14} parent=51 // pred_fallthru
          _
      $region52: #{decoder_forward.14} parent=5 // pred_fallthru
        _
    $region6: #{decoder_forward.14} parent=1 // loop_footer
      %s16 = sadd.s32 1, %s12
    $region7: #{decoder_forward.14} parent=1 // loop_footer_branch
      %11 = sbr.rel target = $region3
    $region8: #{decoder_forward.14} parent=1 // loop_exit
      _
    %719 = vsyncpa [#allocation3], 1
    %s720 = scalar_lea.sflag [#allocation3], 1
    %721 = vsyncpa %s720, 1

// kernel: decoder_forward.16
$region0: #{decoder_forward.16}
  #allocation0 [shape = 'u32[]', space=smem, size = 0x4, offset = 0x4, fixed_abs, tag = 'smem constant byte address 0x4 - core index']
  #allocation1 [shape = 'u32[72,128]{1,0:T(1,128)}', space=vmem, size = 0x9000, scoped, tag = 'internal scratch']
  %s0 = inlined_call_operand.vmem [shape: bf16[2,34,34,8], index: 0, kind: input, shape index: {}, may-alias: {0,1,2}]
  %s1 = inlined_call_operand.vmem [shape: bf16[2,34,34,8], index: 1, kind: input, shape index: {}, may-alias: {0,1,2}]
  %s2 = inlined_call_operand.vmem [shape: bf16[2,34,34,8], index: 2, kind: input, shape index: {}, may-alias: {0,1,2}]
  %s3 = inlined_call_operand.vmem [shape: bf16[9,8,8], index: 3, kind: input, shape index: {}]
  %s4 = inlined_call_operand.hbm [shape: f32[1,8], index: 4, kind: input, shape index: {}]
  %s5 = inlined_call_operand.vmem [shape: bf16[2,32,32,8], index: 5, kind: output, shape index: {}]
  %s6 = sld [smem:[#allocation0]]
  $region57: #{decoder_forward.16} parent=0
    _
  %s8 = ssub.s32 1, %s6
  %s9 = scalar_select 0, %s8, %s6
  $region1: #{decoder_forward.16} parent=0
    #allocation2 [shape = 'u8[512]{0}', space=vmem, size = 0x400, scoped, tag = 'input window, operand 4, single buffered']
    #allocation3 [shape = 's32[2]{0}', space=sflag, size = 0x8, scoped, tag = 'scoped memory for decoder_forward.16']
    %10 = vsyncpa [#allocation3], 0
    loop: start=0, step=1, limit=66
    $region2: #{decoder_forward.16} parent=1 // loop_pre_header
      _
    $region3: #{decoder_forward.16} parent=1 // loop_header
      %s12 = sphi 0, %s16
      %p13 = scmp.ge.s32.totalorder %s12, 66
      %s19 = sphi 0, %s31
      %s20 = sphi 0, %s27
      %s21 = sphi 0, %s19
      %s22 = sphi 0, %s20
      %s23 = sphi 0, %s21
      %s24 = sphi 0, %s22
      %s36 = sphi 0, %s38
      %s39 = sphi 0, %s36
      %s40 = sphi 0, %s39
      %s56 = sphi 0, %s40
      %s66 = sphi 0, %s68
      %s69 = sphi 0, %s66
      %s70 = sphi 0, %s69
      %s86 = sphi 0, %s70
      %s96 = sphi 0, %s98
      %s99 = sphi 0, %s96
      %s100 = sphi 0, %s99
      %s116 = sphi 0, %s100
      %s120 = sphi 0, %s120
      %s122 = sphi 0, %s120
      %s123 = sphi 0, %s122
      %s137 = sphi 0, %s123
      %s141 = sphi 0, %s141
      %s143 = sphi 0, %s141
      %s144 = sphi 0, %s143
      %s158 = sphi 0, %s144
      %s166 = sphi 0, %s168
      %s169 = sphi 0, %s166
      %s170 = sphi 0, %s169
      %s186 = sphi 0, %s170
    $region4: #{decoder_forward.16} parent=1 // loop_header_branch
      %15 = sbr.rel (%p13) target = $region8
    $region5: #{decoder_forward.16} parent=1 // loop_body
      %s17 = ssub.s32 %s12, 1
      %s18 = ssub.s32 %s12, 2
      %s25 = sadd.s32 1, %s20
      %p26 = scmp.ge.s32.totalorder %s25, 32
      %s27 = scalar_select %p26, 0, %s25
      %s28 = sadd.s32 1, %s19
      %s29 = scalar_select %p26, %s28, %s19
      %p30 = scmp.ge.s32.totalorder %s29, 2
      %s31 = scalar_select %p30, 0, %s29
      %s32 = ssub.s32 %s19, %s31
      %s33 = ssub.s32 %s20, %s27
      %s34 = sor.u32 %s32, %s33
      %p35 = scmp.eq.s32.totalorder %s34, 0
      %s37 = sadd.s32 %s36, 1
      %s38 = scalar_select %p35, %s36, %s37
      %p41 = pneg %p35
      %p42 = scmp.eq.s32.totalorder %s12, 63
      %p43 = por %p41, %p42
      %p44 = scmp.ne.s32.totalorder %s36, %s39
      %p45 = scmp.eq.s32.totalorder %s12, 0
      %p46 = por %p44, %p45
      %p47 = scmp.ne.s32.totalorder %s36, %s39
      %p48 = scmp.eq.s32.totalorder %s17, 63
      %p49 = por %p47, %p48
      %p50 = scmp.ne.s32.totalorder %s39, %s40
      %p51 = scmp.eq.s32.totalorder %s17, 0
      %p52 = por %p50, %p51
      %p53 = scmp.ne.s32.totalorder %s39, %s40
      %p54 = scmp.eq.s32.totalorder %s18, 63
      %p55 = por %p53, %p54
      %p57 = scmp.ne.s32.totalorder %s40, %s56
      %p58 = scmp.eq.s32.totalorder %s18, 0
      %p59 = por %p57, %p58
      %s60 = sadd.s32 %s20, 1
      %s61 = sadd.s32 %s27, 1
      %s62 = ssub.s32 %s19, %s31
      %s63 = ssub.s32 %s60, %s61
      %s64 = sor.u32 %s62, %s63
      %p65 = scmp.eq.s32.totalorder %s64, 0
      %s67 = sadd.s32 %s66, 1
      %s68 = scalar_select %p65, %s66, %s67
      %p71 = pneg %p65
      %p72 = scmp.eq.s32.totalorder %s12, 63
      %p73 = por %p71, %p72
      %p74 = scmp.ne.s32.totalorder %s66, %s69
      %p75 = scmp.eq.s32.totalorder %s12, 0
      %p76 = por %p74, %p75
      %p77 = scmp.ne.s32.totalorder %s66, %s69
      %p78 = scmp.eq.s32.totalorder %s17, 63
      %p79 = por %p77, %p78
      %p80 = scmp.ne.s32.totalorder %s69, %s70
      %p81 = scmp.eq.s32.totalorder %s17, 0
      %p82 = por %p80, %p81
      %p83 = scmp.ne.s32.totalorder %s69, %s70
      %p84 = scmp.eq.s32.totalorder %s18, 63
      %p85 = por %p83, %p84
      %p87 = scmp.ne.s32.totalorder %s70, %s86
      %p88 = scmp.eq.s32.totalorder %s18, 0
      %p89 = por %p87, %p88
      %s90 = sadd.s32 %s20, 2
      %s91 = sadd.s32 %s27, 2
      %s92 = ssub.s32 %s19, %s31
      %s93 = ssub.s32 %s90, %s91
      %s94 = sor.u32 %s92, %s93
      %p95 = scmp.eq.s32.totalorder %s94, 0
      %s97 = sadd.s32 %s96, 1
      %s98 = scalar_select %p95, %s96, %s97
      %p101 = pneg %p95
      %p102 = scmp.eq.s32.totalorder %s12, 63
      %p103 = por %p101, %p102
      %p104 = scmp.ne.s32.totalorder %s96, %s99
      %p105 = scmp.eq.s32.totalorder %s12, 0
      %p106 = por %p104, %p105
      %p107 = scmp.ne.s32.totalorder %s96, %s99
      %p108 = scmp.eq.s32.totalorder %s17, 63
      %p109 = por %p107, %p108
      %p110 = scmp.ne.s32.totalorder %s99, %s100
      %p111 = scmp.eq.s32.totalorder %s17, 0
      %p112 = por %p110, %p111
      %p113 = scmp.ne.s32.totalorder %s99, %s100
      %p114 = scmp.eq.s32.totalorder %s18, 63
      %p115 = por %p113, %p114
      %p117 = scmp.ne.s32.totalorder %s100, %s116
      %p118 = scmp.eq.s32.totalorder %s18, 0
      %p119 = por %p117, %p118
      %s121 = sadd.s32 %s120, 1
      %p124 = scmp.eq.s32.totalorder %s12, 63
      %p125 = scmp.ne.s32.totalorder %s120, %s122
      %p126 = scmp.eq.s32.totalorder %s12, 0
      %p127 = por %p125, %p126
      %p128 = scmp.ne.s32.totalorder %s120, %s122
      %p129 = scmp.eq.s32.totalorder %s17, 63
      %p130 = por %p128, %p129
      %p131 = scmp.ne.s32.totalorder %s122, %s123
      %p132 = scmp.eq.s32.totalorder %s17, 0
      %p133 = por %p131, %p132
      %p134 = scmp.ne.s32.totalorder %s122, %s123
      %p135 = scmp.eq.s32.totalorder %s18, 63
      %p136 = por %p134, %p135
      %p138 = scmp.ne.s32.totalorder %s123, %s137
      %p139 = scmp.eq.s32.totalorder %s18, 0
      %p140 = por %p138, %p139
      %s142 = sadd.s32 %s141, 1
      %p145 = scmp.eq.s32.totalorder %s12, 63
      %p146 = scmp.ne.s32.totalorder %s141, %s143
      %p147 = scmp.eq.s32.totalorder %s12, 0
      %p148 = por %p146, %p147
      %p149 = scmp.ne.s32.totalorder %s141, %s143
      %p150 = scmp.eq.s32.totalorder %s17, 63
      %p151 = por %p149, %p150
      %p152 = scmp.ne.s32.totalorder %s143, %s144
      %p153 = scmp.eq.s32.totalorder %s17, 0
      %p154 = por %p152, %p153
      %p155 = scmp.ne.s32.totalorder %s143, %s144
      %p156 = scmp.eq.s32.totalorder %s18, 63
      %p157 = por %p155, %p156
      %p159 = scmp.ne.s32.totalorder %s144, %s158
      %p160 = scmp.eq.s32.totalorder %s18, 0
      %p161 = por %p159, %p160
      %s162 = ssub.s32 %s19, %s31
      %s163 = ssub.s32 %s20, %s27
      %s164 = sor.u32 %s162, %s163
      %p165 = scmp.eq.s32.totalorder %s164, 0
      %s167 = sadd.s32 %s166, 1
      %s168 = scalar_select %p165, %s166, %s167
      %p171 = pneg %p165
      %p172 = scmp.eq.s32.totalorder %s12, 63
      %p173 = por %p171, %p172
      %p174 = scmp.ne.s32.totalorder %s166, %s169
      %p175 = scmp.eq.s32.totalorder %s12, 0
      %p176 = por %p174, %p175
      %p177 = scmp.ne.s32.totalorder %s166, %s169
      %p178 = scmp.eq.s32.totalorder %s17, 63
      %p179 = por %p177, %p178
      %p180 = scmp.ne.s32.totalorder %s169, %s170
      %p181 = scmp.eq.s32.totalorder %s17, 0
      %p182 = por %p180, %p181
      %p183 = scmp.ne.s32.totalorder %s169, %s170
      %p184 = scmp.eq.s32.totalorder %s18, 63
      %p185 = por %p183, %p184
      %p187 = scmp.ne.s32.totalorder %s170, %s186
      %p188 = scmp.eq.s32.totalorder %s18, 0
      %p189 = por %p187, %p188
      %p190 = scmp.le.s32.totalorder 1, %s12
      %p191 = scmp.lt.s32.totalorder %s12, 65
      %p192 = pnand %p190, %p191
      %p193 = pneg %p192
      // Predicated region
      $region9: #{decoder_forward.16} parent=5 // pred_check
        _
      $region10: #{decoder_forward.16} parent=5 // pred_check_branch
        %195 = sbr.rel (%p192) target = $region12
      $region11: #{decoder_forward.16} parent=5 // pred_region
        %s196 = ssub.s32 %s12, 1
        // Predicated region
        $region13: #{decoder_forward.16} parent=11 // pred_check
          %p197 = pneg %p133
        $region14: #{decoder_forward.16} parent=11 // pred_check_branch
          %199 = sbr.rel (%p197) target = $region16
        $region15: #{decoder_forward.16} parent=11 // pred_region
          _
        $region16: #{decoder_forward.16} parent=11 // pred_fallthru
          _
        // Predicated region
        $region17: #{decoder_forward.16} parent=11 // pred_check
          %p200 = pneg %p154
        $region18: #{decoder_forward.16} parent=11 // pred_check_branch
          %202 = sbr.rel (%p200) target = $region20
        $region19: #{decoder_forward.16} parent=11 // pred_region
          %204 = vsyncadd [#allocation3], 0
          %s206 = sshll.u32 %s4, 4
          %s207 = int_to_ptr.hbm [resolvable:$true] %s206
          %s208 = sshll.u32 [#allocation2], 4
          %s209 = int_to_ptr.vmem [resolvable:$true] %s208
          %211 = dma.hbm_to_vmem [thread:$0]  %s207, 16, %s209, [#allocation3]
        $region20: #{decoder_forward.16} parent=11 // pred_fallthru
          _
      $region12: #{decoder_forward.16} parent=5 // pred_fallthru
        _
      %p212 = scmp.lt.s32.totalorder %s12, 64
      // Predicated region
      $region21: #{decoder_forward.16} parent=5 // pred_check
        %p213 = pneg %p212
      $region22: #{decoder_forward.16} parent=5 // pred_check_branch
        %215 = sbr.rel (%p213) target = $region24
      $region23: #{decoder_forward.16} parent=5 // pred_region
        // Predicated region
        $region25: #{decoder_forward.16} parent=23 // pred_check
          %p216 = pneg %p46
        $region26: #{decoder_forward.16} parent=23 // pred_check_branch
          %218 = sbr.rel (%p216) target = $region28
        $region27: #{decoder_forward.16} parent=23 // pred_region
          %p219 = scmp.lt.s32.totalorder %s19, 1
          %s220 = scalar_select %p219, %s19, 1
          %p221 = scmp.lt.s32.totalorder %s20, 33
          %s222 = scalar_select %p221, %s20, 33
          %s223 = smul.addr %s222, 5
          %s224 = smul.addr %s220, 170
          %s225 = sadd.s32 %s223, %s224
          %s226 = smul.addr %s225, 4
          %s227 = scalar_lea.vmem %s0, %s226
        $region28: #{decoder_forward.16} parent=23 // pred_fallthru
          _
        // Predicated region
        $region29: #{decoder_forward.16} parent=23 // pred_check
          %p228 = pneg %p76
        $region30: #{decoder_forward.16} parent=23 // pred_check_branch
          %230 = sbr.rel (%p228) target = $region32
        $region31: #{decoder_forward.16} parent=23 // pred_region
          %s231 = sadd.s32 %s20, 1
          %p232 = scmp.lt.s32.totalorder %s19, 1
          %s233 = scalar_select %p232, %s19, 1
          %p234 = scmp.lt.s32.totalorder %s231, 33
          %s235 = scalar_select %p234, %s231, 33
          %s236 = smul.addr %s235, 5
          %s237 = smul.addr %s233, 170
          %s238 = sadd.s32 %s236, %s237
          %s239 = smul.addr %s238, 4
          %s240 = scalar_lea.vmem %s1, %s239
          %s241 = sadd.s32 %s20, 1
        $region32: #{decoder_forward.16} parent=23 // pred_fallthru
          _
        // Predicated region
        $region33: #{decoder_forward.16} parent=23 // pred_check
          %p242 = pneg %p106
        $region34: #{decoder_forward.16} parent=23 // pred_check_branch
          %244 = sbr.rel (%p242) target = $region36
        $region35: #{decoder_forward.16} parent=23 // pred_region
          %s245 = sadd.s32 %s20, 2
          %p246 = scmp.lt.s32.totalorder %s19, 1
          %s247 = scalar_select %p246, %s19, 1
          %p248 = scmp.lt.s32.totalorder %s245, 33
          %s249 = scalar_select %p248, %s245, 33
          %s250 = smul.addr %s249, 5
          %s251 = smul.addr %s247, 170
          %s252 = sadd.s32 %s250, %s251
          %s253 = smul.addr %s252, 4
          %s254 = scalar_lea.vmem %s2, %s253
          %s255 = sadd.s32 %s20, 2
        $region36: #{decoder_forward.16} parent=23 // pred_fallthru
          _
      $region24: #{decoder_forward.16} parent=5 // pred_fallthru
        _
      %p256 = scmp.le.s32.totalorder 1, %s12
      %p257 = scmp.lt.s32.totalorder %s12, 65
      %p258 = pnand %p256, %p257
      %p259 = pneg %p258
      // Predicated region
      $region37: #{decoder_forward.16} parent=5 // pred_check
        _
      $region38: #{decoder_forward.16} parent=5 // pred_check_branch
        %261 = sbr.rel (%p258) target = $region40
      $region39: #{decoder_forward.16} parent=5 // pred_region
        %s262 = ssub.s32 %s12, 1
        // Predicated region
        $region41: #{decoder_forward.16} parent=39 // pred_check
          %p263 = pneg %p154
        $region42: #{decoder_forward.16} parent=39 // pred_check_branch
          %265 = sbr.rel (%p263) target = $region44
        $region43: #{decoder_forward.16} parent=39 // pred_region
          %267 = dma.done [#allocation3], 16
        $region44: #{decoder_forward.16} parent=39 // pred_fallthru
          _
        %p268 = scmp.lt.s32.totalorder %s21, 1
        %s269 = scalar_select %p268, %s21, 1
        %p270 = scmp.lt.s32.totalorder %s22, 33
        %s271 = scalar_select %p270, %s22, 33
        %s272 = smul.addr %s271, 5
        %s273 = smul.addr %s269, 170
        %s274 = sadd.s32 %s272, %s273
        %s275 = smul.addr %s274, 4
        %s276 = scalar_lea.vmem %s0, %s275
        %p277 = pneg %p52
        %p278 = pneg %p49
        %s279 = sadd.s32 %s22, 1
        %p280 = scmp.lt.s32.totalorder %s21, 1
        %s281 = scalar_select %p280, %s21, 1
        %p282 = scmp.lt.s32.totalorder %s279, 33
        %s283 = scalar_select %p282, %s279, 33
        %s284 = smul.addr %s283, 5
        %s285 = smul.addr %s281, 170
        %s286 = sadd.s32 %s284, %s285
        %s287 = smul.addr %s286, 4
        %s288 = scalar_lea.vmem %s1, %s287
        %p289 = pneg %p82
        %p290 = pneg %p79
        %s291 = sadd.s32 %s22, 2
        %p292 = scmp.lt.s32.totalorder %s21, 1
        %s293 = scalar_select %p292, %s21, 1
        %p294 = scmp.lt.s32.totalorder %s291, 33
        %s295 = scalar_select %p294, %s291, 33
        %s296 = smul.addr %s295, 5
        %s297 = smul.addr %s293, 170
        %s298 = sadd.s32 %s296, %s297
        %s299 = smul.addr %s298, 4
        %s300 = scalar_lea.vmem %s2, %s299
        %p301 = pneg %p112
        %p302 = pneg %p109
        %p303 = pneg %p133
        %p304 = pneg %p130
        %p305 = pneg %p154
        %p306 = pneg %p151
        %p307 = pneg %p182
        %p308 = pneg %p179
        %p309 = scmp.lt.s32.totalorder %s21, 1
        %s310 = scalar_select %p309, %s21, 1
        %p311 = scmp.lt.s32.totalorder %s22, 31
        %s312 = scalar_select %p311, %s22, 31
        %s313 = smul.addr %s312, 4
        %s314 = smul.addr %s310, 128
        %s315 = sadd.s32 %s313, %s314
        %s316 = smul.addr %s315, 4
        %s317 = scalar_lea.vmem %s5, %s316
        %p318 = scmp.lt.s32.totalorder %s21, 1
        %s319 = scalar_select %p318, %s21, 1
        %p320 = scmp.lt.s32.totalorder %s22, 33
        %s321 = scalar_select %p320, %s22, 33
        %s322 = smul.addr %s321, 5
        %s323 = smul.addr %s319, 170
        %s324 = sadd.s32 %s322, %s323
        %s325 = smul.addr %s324, 4
        %s326 = scalar_lea.vmem %s0, %s325
        %s327 = sadd.s32 %s22, 1
        %p328 = scmp.lt.s32.totalorder %s21, 1
        %s329 = scalar_select %p328, %s21, 1
        %p330 = scmp.lt.s32.totalorder %s327, 33
        %s331 = scalar_select %p330, %s327, 33
        %s332 = smul.addr %s331, 5
        %s333 = smul.addr %s329, 170
        %s334 = sadd.s32 %s332, %s333
        %s335 = smul.addr %s334, 4
        %s336 = scalar_lea.vmem %s1, %s335
        %s337 = sadd.s32 %s22, 1
        %s338 = sadd.s32 %s22, 2
        %p339 = scmp.lt.s32.totalorder %s21, 1
        %s340 = scalar_select %p339, %s21, 1
        %p341 = scmp.lt.s32.totalorder %s338, 33
        %s342 = scalar_select %p341, %s338, 33
        %s343 = smul.addr %s342, 5
        %s344 = smul.addr %s340, 170
        %s345 = sadd.s32 %s343, %s344
        %s346 = smul.addr %s345, 4
        %s347 = scalar_lea.vmem %s2, %s346
        %s348 = sadd.s32 %s22, 2
        %p349 = scmp.lt.s32.totalorder %s21, 1
        %s350 = scalar_select %p349, %s21, 1
        %p351 = scmp.lt.s32.totalorder %s22, 31
        %s352 = scalar_select %p351, %s22, 31
        %s353 = smul.addr %s352, 4
        %s354 = smul.addr %s350, 128
        %s355 = sadd.s32 %s353, %s354
        %s356 = smul.addr %s355, 4
        %s357 = scalar_lea.vmem %s5, %s356
        %v359 = vld [vmem:[%s326] sm:$0xf]
        %v360 = vld [vmem:[%s326 + $0x4] sm:$0xf]
        %v361 = vld [vmem:[%s326 + $0x8] sm:$0xf]
        %v362 = vld [vmem:[%s326 + $0xc] sm:$0xf]
        %v363 = vld [vmem:[%s3] sm:$0xf]
        %v364 = vld [vmem:[%s326 + $0x10] sm:$0x1]
        %s365 = scalar_lea.vmem %s3, 4
        %v366 = vld [vmem:[%s365] sm:$0xf]
        %v372 = vunpack.c.l.b16 %v359
        %v373 = vunpack.c.l.b16 %v360
        %v374 = vunpack.c.l.b16 %v361
        %v375 = vunpack.c.l.b16 %v362
        %v376 = vunpack.c.l.b16 %v364
        %v377 = vpack.c.b16 %v373, %v372
        %v378 = vpack.c.b16 %v375, %v374
        %v379 = vpack.c.b16 %v376, %v376
        %vm380 = vsmask.f32 7424
        %v382 = vshrl.u32 %v377, 16
        %v384 = vshll.u32 %v377, 16
        %v386 = vrot.slane %v384, 1
        %v387 = vor.u32 %v382, %v386
        %v389 = vshll.u32 %v378, 16
        %v391 = vrot.slane %v389, 1
        %v392 = vsel %vm380, %v387, %v391
        %v393 = vshrl.u32 %v378, 16
        %v395 = vor.u32 %v393, %v391
        %v397 = vshll.u32 %v379, 16
        %v399 = vrot.slane %v397, 1
        %v400 = vsel %vm380, %v395, %v399
        %vm401 = vcmask 64512
        %v403 = vsel %vm401, %v392, 0
        %v406 = vsel %vm401, %v400, 0
        %vm408 = vcmask 1043456
        %v410 = vsel %vm408, %v366, 0
        %412 = vmatpush.bf16.msra.mxu0 0
        %413 = vmatpush.bf16.msra.mxu0 0
        %414 = vmatpush.bf16.msra.mxu0 0
        %415 = vmatpush.bf16.msra.mxu0 0
        %416 = vmatpush.bf16.msra.mxu0 0
        %417 = vmatpush.bf16.msra.mxu0 0
        %418 = vmatpush.bf16.msra.mxu0 0
        %419 = vmatpush.bf16.msra.mxu0 %v410
        %420 = vmatmul.bf16.gmra.mxu0 %v403
        %v421 = vpop.f32.mrf.mxu0
        %v422 = vadd.f32 0.0, %v421
        %v423 = vpop.f32.mrf.mxu0
        %v424 = vadd.f32 0.0, %v423
        %425 = vmatmul.bf16.gmra.mxu0 %v406
        %v426 = vpop.f32.mrf.mxu0
        %v427 = vadd.f32 0.0, %v426
        %v428 = vpop.f32.mrf.mxu0
        %v429 = vadd.f32 0.0, %v428
        %430 = vdwg.mxu0
        %v431 = vsel %vm401, %v377, 0
        %v433 = vsel %vm401, %v378, 0
        %v436 = vsel %vm408, %v363, 0
        %438 = vmatpush.bf16.msra.mxu0 0
        %439 = vmatpush.bf16.msra.mxu0 0
        %440 = vmatpush.bf16.msra.mxu0 0
        %441 = vmatpush.bf16.msra.mxu0 0
        %442 = vmatpush.bf16.msra.mxu0 0
        %443 = vmatpush.bf16.msra.mxu0 0
        %444 = vmatpush.bf16.msra.mxu0 0
        %445 = vmatpush.bf16.msra.mxu0 %v436
        %446 = vmatmul.bf16.gmra.mxu0 %v431
        %v447 = vpop.f32.mrf.mxu0
        %v448 = vadd.f32 %v422, %v447
        %v449 = vpop.f32.mrf.mxu0
        %v450 = vadd.f32 %v424, %v449
        %451 = vmatmul.bf16.gmra.mxu0 %v433
        %v452 = vpop.f32.mrf.mxu0
        %v453 = vadd.f32 %v427, %v452
        %v454 = vpop.f32.mrf.mxu0
        %v455 = vadd.f32 %v429, %v454
        %456 = vdwg.mxu0
        %v457 = vld [vmem:[%s326] sm:$0xe]
        %s458 = scalar_lea.vmem %s3, 8
        %v459 = vld [vmem:[%s458] sm:$0xf]
        %v461 = vunpack.c.l.b16 %v457
        %v462 = vpack.c.b16 %v373, %v461
        %vm463 = vcmask 1046528
        %v464 = vrot.slane %v462, 1
        %v465 = vrot.slane %v378, 1
        %v466 = vsel %vm463, %v464, %v465
        %v467 = vrot.slane %v379, 1
        %v468 = vsel %vm463, %v465, %v467
        %v470 = vsel %vm401, %v466, 0
        %v473 = vsel %vm401, %v468, 0
        %v476 = vsel %vm408, %v459, 0
        %478 = vmatpush.bf16.msra.mxu0 0
        %479 = vmatpush.bf16.msra.mxu0 0
        %480 = vmatpush.bf16.msra.mxu0 0
        %481 = vmatpush.bf16.msra.mxu0 0
        %482 = vmatpush.bf16.msra.mxu0 0
        %483 = vmatpush.bf16.msra.mxu0 0
        %484 = vmatpush.bf16.msra.mxu0 0
        %485 = vmatpush.bf16.msra.mxu0 %v476
        %486 = vmatmul.bf16.gmra.mxu0 %v470
        %v487 = vpop.f32.mrf.mxu0
        %v488 = vadd.f32 0.0, %v487
        %v489 = vpop.f32.mrf.mxu0
        %v490 = vadd.f32 0.0, %v489
        %491 = vmatmul.bf16.gmra.mxu0 %v473
        %v492 = vpop.f32.mrf.mxu0
        %v493 = vadd.f32 0.0, %v492
        %v494 = vpop.f32.mrf.mxu0
        %v495 = vadd.f32 0.0, %v494
        %496 = vdwg.mxu0
        %v497 = vadd.f32 %v448, %v488
        %v498 = vadd.f32 %v450, %v490
        %v499 = vadd.f32 %v453, %v493
        %v500 = vadd.f32 %v455, %v495
        %v501 = vld [vmem:[%s336] sm:$0xf]
        %v502 = vld [vmem:[%s336 + $0x4] sm:$0xf]
        %v503 = vld [vmem:[%s336 + $0x8] sm:$0xf]
        %v504 = vld [vmem:[%s336 + $0xc] sm:$0xf]
        %s505 = scalar_lea.vmem %s3, 12
        %v506 = vld [vmem:[%s505] sm:$0xf]
        %v511 = vunpack.c.l.b16 %v501
        %v512 = vunpack.c.l.b16 %v502
        %v513 = vunpack.c.l.b16 %v503
        %v514 = vunpack.c.l.b16 %v504
        %v515 = vpack.c.b16 %v512, %v511
        %v516 = vpack.c.b16 %v514, %v513
        %v518 = vsel %vm401, %v515, 0
        %v521 = vsel %vm401, %v516, 0
        %v524 = vsel %vm408, %v506, 0
        %526 = vmatpush.bf16.msra.mxu0 0
        %527 = vmatpush.bf16.msra.mxu0 0
        %528 = vmatpush.bf16.msra.mxu0 0
        %529 = vmatpush.bf16.msra.mxu0 0
        %530 = vmatpush.bf16.msra.mxu0 0
        %531 = vmatpush.bf16.msra.mxu0 0
        %532 = vmatpush.bf16.msra.mxu0 0
        %533 = vmatpush.bf16.msra.mxu0 %v524
        %534 = vmatmul.bf16.gmra.mxu0 %v518
        %v535 = vpop.f32.mrf.mxu0
        %v536 = vadd.f32 0.0, %v535
        %v537 = vpop.f32.mrf.mxu0
        %v538 = vadd.f32 0.0, %v537
        %539 = vmatmul.bf16.gmra.mxu0 %v521
        %v540 = vpop.f32.mrf.mxu0
        %v541 = vadd.f32 0.0, %v540
        %v542 = vpop.f32.mrf.mxu0
        %v543 = vadd.f32 0.0, %v542
        %544 = vdwg.mxu0
        %v545 = vadd.f32 %v497, %v536
        %v546 = vadd.f32 %v498, %v538
        %v547 = vadd.f32 %v499, %v541
        %v548 = vadd.f32 %v500, %v543
        %v549 = vld [vmem:[%s336] sm:$0xf]
        %v550 = vld [vmem:[%s336 + $0x4] sm:$0xf]
        %v551 = vld [vmem:[%s336 + $0x8] sm:$0xf]
        %v552 = vld [vmem:[%s336 + $0xc] sm:$0xf]
        %v553 = vld [vmem:[%s336 + $0x10] sm:$0x1]
        %s554 = scalar_lea.vmem %s3, 16
        %v555 = vld [vmem:[%s554] sm:$0xf]
        %v561 = vunpack.c.l.b16 %v549
        %v562 = vunpack.c.l.b16 %v550
        %v563 = vunpack.c.l.b16 %v551
        %v564 = vunpack.c.l.b16 %v552
        %v565 = vunpack.c.l.b16 %v553
        %v566 = vpack.c.b16 %v562, %v561
        %v567 = vpack.c.b16 %v564, %v563
        %v568 = vpack.c.b16 %v565, %v565
        %v570 = vshrl.u32 %v566, 16
        %v572 = vshll.u32 %v566, 16
        %v574 = vrot.slane %v572, 1
        %v575 = vor.u32 %v570, %v574
        %v577 = vshll.u32 %v567, 16
        %v579 = vrot.slane %v577, 1
        %v580 = vsel %vm380, %v575, %v579
        %v581 = vshrl.u32 %v567, 16
        %v583 = vor.u32 %v581, %v579
        %v585 = vshll.u32 %v568, 16
        %v587 = vrot.slane %v585, 1
        %v588 = vsel %vm380, %v583, %v587
        %v590 = vsel %vm401, %v580, 0
        %v593 = vsel %vm401, %v588, 0
        %v596 = vsel %vm408, %v555, 0
        %598 = vmatpush.bf16.msra.mxu0 0
        %599 = vmatpush.bf16.msra.mxu0 0
        %600 = vmatpush.bf16.msra.mxu0 0
        %601 = vmatpush.bf16.msra.mxu0 0
        %602 = vmatpush.bf16.msra.mxu0 0
        %603 = vmatpush.bf16.msra.mxu0 0
        %604 = vmatpush.bf16.msra.mxu0 0
        %605 = vmatpush.bf16.msra.mxu0 %v596
        %606 = vmatmul.bf16.gmra.mxu0 %v590
        %v607 = vpop.f32.mrf.mxu0
        %v608 = vadd.f32 0.0, %v607
        %v609 = vpop.f32.mrf.mxu0
        %v610 = vadd.f32 0.0, %v609
        %611 = vmatmul.bf16.gmra.mxu0 %v593
        %v612 = vpop.f32.mrf.mxu0
        %v613 = vadd.f32 0.0, %v612
        %v614 = vpop.f32.mrf.mxu0
        %v615 = vadd.f32 0.0, %v614
        %616 = vdwg.mxu0
        %v617 = vadd.f32 %v545, %v608
        %v618 = vadd.f32 %v546, %v610
        %v619 = vadd.f32 %v547, %v613
        %v620 = vadd.f32 %v548, %v615
        %v621 = vld [vmem:[%s336] sm:$0xe]
        %s622 = scalar_lea.vmem %s3, 20
        %v623 = vld [vmem:[%s622] sm:$0xf]
        %v625 = vunpack.c.l.b16 %v621
        %v626 = vpack.c.b16 %v562, %v625
        %v627 = vrot.slane %v626, 1
        %v628 = vrot.slane %v567, 1
        %v629 = vsel %vm463, %v627, %v628
        %v630 = vrot.slane %v568, 1
        %v631 = vsel %vm463, %v628, %v630
        %v633 = vsel %vm401, %v629, 0
        %v636 = vsel %vm401, %v631, 0
        %v639 = vsel %vm408, %v623, 0
        %641 = vmatpush.bf16.msra.mxu0 0
        %642 = vmatpush.bf16.msra.mxu0 0
        %643 = vmatpush.bf16.msra.mxu0 0
        %644 = vmatpush.bf16.msra.mxu0 0
        %645 = vmatpush.bf16.msra.mxu0 0
        %646 = vmatpush.bf16.msra.mxu0 0
        %647 = vmatpush.bf16.msra.mxu0 0
        %648 = vmatpush.bf16.msra.mxu0 %v639
        %649 = vmatmul.bf16.gmra.mxu0 %v633
        %v650 = vpop.f32.mrf.mxu0
        %v651 = vadd.f32 0.0, %v650
        %v652 = vpop.f32.mrf.mxu0
        %v653 = vadd.f32 0.0, %v652
        %654 = vmatmul.bf16.gmra.mxu0 %v636
        %v655 = vpop.f32.mrf.mxu0
        %v656 = vadd.f32 0.0, %v655
        %v657 = vpop.f32.mrf.mxu0
        %v658 = vadd.f32 0.0, %v657
        %659 = vdwg.mxu0
        %v660 = vadd.f32 %v617, %v651
        %v661 = vadd.f32 %v618, %v653
        %v662 = vadd.f32 %v619, %v656
        %v663 = vadd.f32 %v620, %v658
        %v664 = vld [vmem:[%s347] sm:$0xf]
        %v665 = vld [vmem:[%s347 + $0x4] sm:$0xf]
        %v666 = vld [vmem:[%s347 + $0x8] sm:$0xf]
        %v667 = vld [vmem:[%s347 + $0xc] sm:$0xf]
        %s668 = scalar_lea.vmem %s3, 24
        %v669 = vld [vmem:[%s668] sm:$0xf]
        %v674 = vunpack.c.l.b16 %v664
        %v675 = vunpack.c.l.b16 %v665
        %v676 = vunpack.c.l.b16 %v666
        %v677 = vunpack.c.l.b16 %v667
        %v678 = vpack.c.b16 %v675, %v674
        %v679 = vpack.c.b16 %v677, %v676
        %v681 = vsel %vm401, %v678, 0
        %v684 = vsel %vm401, %v679, 0
        %v687 = vsel %vm408, %v669, 0
        %689 = vmatpush.bf16.msra.mxu0 0
        %690 = vmatpush.bf16.msra.mxu0 0
        %691 = vmatpush.bf16.msra.mxu0 0
        %692 = vmatpush.bf16.msra.mxu0 0
        %693 = vmatpush.bf16.msra.mxu0 0
        %694 = vmatpush.bf16.msra.mxu0 0
        %695 = vmatpush.bf16.msra.mxu0 0
        %696 = vmatpush.bf16.msra.mxu0 %v687
        %697 = vmatmul.bf16.gmra.mxu0 %v681
        %v698 = vpop.f32.mrf.mxu0
        %v699 = vadd.f32 0.0, %v698
        %v700 = vpop.f32.mrf.mxu0
        %v701 = vadd.f32 0.0, %v700
        %702 = vmatmul.bf16.gmra.mxu0 %v684
        %v703 = vpop.f32.mrf.mxu0
        %v704 = vadd.f32 0.0, %v703
        %v705 = vpop.f32.mrf.mxu0
        %v706 = vadd.f32 0.0, %v705
        %707 = vdwg.mxu0
        %v708 = vadd.f32 %v660, %v699
        %v709 = vadd.f32 %v661, %v701
        %v710 = vadd.f32 %v662, %v704
        %v711 = vadd.f32 %v663, %v706
        %v712 = vld [vmem:[%s347] sm:$0xf]
        %v713 = vld [vmem:[%s347 + $0x4] sm:$0xf]
        %v714 = vld [vmem:[%s347 + $0x8] sm:$0xf]
        %v715 = vld [vmem:[%s347 + $0xc] sm:$0xf]
        %v716 = vld [vmem:[%s347 + $0x10] sm:$0x1]
        %s717 = scalar_lea.vmem %s3, 28
        %v718 = vld [vmem:[%s717] sm:$0xf]
        %v724 = vunpack.c.l.b16 %v712
        %v725 = vunpack.c.l.b16 %v713
        %v726 = vunpack.c.l.b16 %v714
        %v727 = vunpack.c.l.b16 %v715
        %v728 = vunpack.c.l.b16 %v716
        %v729 = vpack.c.b16 %v725, %v724
        %v730 = vpack.c.b16 %v727, %v726
        %v731 = vpack.c.b16 %v728, %v728
        %v733 = vshrl.u32 %v729, 16
        %v735 = vshll.u32 %v729, 16
        %v737 = vrot.slane %v735, 1
        %v738 = vor.u32 %v733, %v737
        %v740 = vshll.u32 %v730, 16
        %v742 = vrot.slane %v740, 1
        %v743 = vsel %vm380, %v738, %v742
        %v744 = vshrl.u32 %v730, 16
        %v746 = vor.u32 %v744, %v742
        %v748 = vshll.u32 %v731, 16
        %v750 = vrot.slane %v748, 1
        %v751 = vsel %vm380, %v746, %v750
        %v753 = vsel %vm401, %v743, 0
        %v756 = vsel %vm401, %v751, 0
        %v759 = vsel %vm408, %v718, 0
        %761 = vmatpush.bf16.msra.mxu0 0
        %762 = vmatpush.bf16.msra.mxu0 0
        %763 = vmatpush.bf16.msra.mxu0 0
        %764 = vmatpush.bf16.msra.mxu0 0
        %765 = vmatpush.bf16.msra.mxu0 0
        %766 = vmatpush.bf16.msra.mxu0 0
        %767 = vmatpush.bf16.msra.mxu0 0
        %768 = vmatpush.bf16.msra.mxu0 %v759
        %769 = vmatmul.bf16.gmra.mxu0 %v753
        %v770 = vpop.f32.mrf.mxu0
        %v771 = vadd.f32 0.0, %v770
        %v772 = vpop.f32.mrf.mxu0
        %v773 = vadd.f32 0.0, %v772
        %774 = vmatmul.bf16.gmra.mxu0 %v756
        %v775 = vpop.f32.mrf.mxu0
        %v776 = vadd.f32 0.0, %v775
        %v777 = vpop.f32.mrf.mxu0
        %v778 = vadd.f32 0.0, %v777
        %779 = vdwg.mxu0
        %v780 = vadd.f32 %v708, %v771
        %v781 = vadd.f32 %v709, %v773
        %v782 = vadd.f32 %v710, %v776
        %v783 = vadd.f32 %v711, %v778
        %v784 = vld [vmem:[%s347] sm:$0xe]
        %s785 = scalar_lea.vmem %s3, 32
        %v786 = vld [vmem:[%s785] sm:$0xf]
        %v788 = vunpack.c.l.b16 %v784
        %v789 = vpack.c.b16 %v725, %v788
        %v790 = vrot.slane %v789, 1
        %v791 = vrot.slane %v730, 1
        %v792 = vsel %vm463, %v790, %v791
        %v793 = vrot.slane %v731, 1
        %v794 = vsel %vm463, %v791, %v793
        %v796 = vsel %vm401, %v792, 0
        %v799 = vsel %vm401, %v794, 0
        %v802 = vsel %vm408, %v786, 0
        %804 = vmatpush.bf16.msra.mxu0 0
        %805 = vmatpush.bf16.msra.mxu0 0
        %806 = vmatpush.bf16.msra.mxu0 0
        %807 = vmatpush.bf16.msra.mxu0 0
        %808 = vmatpush.bf16.msra.mxu0 0
        %809 = vmatpush.bf16.msra.mxu0 0
        %810 = vmatpush.bf16.msra.mxu0 0
        %811 = vmatpush.bf16.msra.mxu0 %v802
        %812 = vmatmul.bf16.gmra.mxu0 %v796
        %v813 = vpop.f32.mrf.mxu0
        %v814 = vadd.f32 0.0, %v813
        %v815 = vpop.f32.mrf.mxu0
        %v816 = vadd.f32 0.0, %v815
        %817 = vmatmul.bf16.gmra.mxu0 %v799
        %v818 = vpop.f32.mrf.mxu0
        %v819 = vadd.f32 0.0, %v818
        %v820 = vpop.f32.mrf.mxu0
        %v821 = vadd.f32 0.0, %v820
        %822 = vdwg.mxu0
        %v823 = vadd.f32 %v780, %v814
        %v824 = vadd.f32 %v781, %v816
        %v825 = vadd.f32 %v782, %v819
        %v826 = vadd.f32 %v783, %v821
        %v827 = vld [vmem:[#allocation2] sm:$0x1]
        %v829 = vperm.slane %v827, 0
        %v831 = vadd.f32 %v823, %v829
        %v832 = vadd.f32 %v824, %v829
        %v833 = vadd.f32 %v825, %v829
        %v834 = vadd.f32 %v826, %v829
        %v835 = vmax.f32 %v831, 0.0
        %v836 = vmax.f32 %v832, 0.0
        %v837 = vmax.f32 %v833, 0.0
        %v838 = vmax.f32 %v834, 0.0
        %v839 = vpack.c.bf16 %v835, %v835
        %v840 = vpack.c.bf16 %v836, %v836
        %v841 = vpack.c.bf16 %v837, %v837
        %v842 = vpack.c.bf16 %v838, %v838
        %vm843 = vcmask 60416
        %844 = vst.msk [vmem:[%s357] sm:$0xf] %vm843, %v839
        %845 = vst.msk [vmem:[%s357 + $0x4] sm:$0xf] %vm843, %v840
        %846 = vst.msk [vmem:[%s357 + $0x8] sm:$0xf] %vm843, %v841
        %847 = vst.msk [vmem:[%s357 + $0xc] sm:$0xf] %vm843, %v842
        %p848 = scmp.lt.s32.totalorder %s21, 1
        %s849 = scalar_select %p848, %s21, 1
        %p850 = scmp.lt.s32.totalorder %s22, 31
        %s851 = scalar_select %p850, %s22, 31
        %s852 = smul.addr %s851, 4
        %s853 = smul.addr %s849, 128
        %s854 = sadd.s32 %s852, %s853
        %s855 = smul.addr %s854, 4
        %s856 = scalar_lea.vmem %s5, %s855
        // Predicated region
        $region45: #{decoder_forward.16} parent=39 // pred_check
          %p857 = pneg %p179
        $region46: #{decoder_forward.16} parent=39 // pred_check_branch
          %859 = sbr.rel (%p857) target = $region48
        $region47: #{decoder_forward.16} parent=39 // pred_region
          _
        $region48: #{decoder_forward.16} parent=39 // pred_fallthru
          _
      $region40: #{decoder_forward.16} parent=5 // pred_fallthru
        _
      %p860 = scmp.le.s32.totalorder 2, %s12
      // Predicated region
      $region49: #{decoder_forward.16} parent=5 // pred_check
        %p861 = pneg %p860
      $region50: #{decoder_forward.16} parent=5 // pred_check_branch
        %863 = sbr.rel (%p861) target = $region52
      $region51: #{decoder_forward.16} parent=5 // pred_region
        %s864 = ssub.s32 %s12, 2
        // Predicated region
        $region53: #{decoder_forward.16} parent=51 // pred_check
          %p865 = pneg %p185
        $region54: #{decoder_forward.16} parent=51 // pred_check_branch
          %867 = sbr.rel (%p865) target = $region56
        $region55: #{decoder_forward.16} parent=51 // pred_region
          %p868 = scmp.lt.s32.totalorder %s23, 1
          %s869 = scalar_select %p868, %s23, 1
          %p870 = scmp.lt.s32.totalorder %s24, 31
          %s871 = scalar_select %p870, %s24, 31
          %s872 = smul.addr %s871, 4
          %s873 = smul.addr %s869, 128
          %s874 = sadd.s32 %s872, %s873
          %s875 = smul.addr %s874, 4
          %s876 = scalar_lea.vmem %s5, %s875
        $region56: #{decoder_forward.16} parent=51 // pred_fallthru
          _
      $region52: #{decoder_forward.16} parent=5 // pred_fallthru
        _
    $region6: #{decoder_forward.16} parent=1 // loop_footer
      %s16 = sadd.s32 1, %s12
    $region7: #{decoder_forward.16} parent=1 // loop_footer_branch
      %11 = sbr.rel target = $region3
    $region8: #{decoder_forward.16} parent=1 // loop_exit
      _
    %877 = vsyncpa [#allocation3], 1
    %s878 = scalar_lea.sflag [#allocation3], 1
    %879 = vsyncpa %s878, 1

// kernel: decoder_forward.17
$region0: #{decoder_forward.17}
  #allocation0 [shape = 'u32[]', space=smem, size = 0x4, offset = 0x4, fixed_abs, tag = 'smem constant byte address 0x4 - core index']
  #allocation1 [shape = 'u32[72,128]{1,0:T(1,128)}', space=vmem, size = 0x9000, scoped, tag = 'internal scratch']
  %s0 = inlined_call_operand.vmem [shape: bf16[2,32,32,8], index: 0, kind: input, shape index: {}]
  %s1 = inlined_call_operand.hbm [shape: bf16[2,8,8], index: 1, kind: input, shape index: {}]
  %s2 = inlined_call_operand.hbm [shape: f32[1,8], index: 2, kind: input, shape index: {}]
  %s3 = inlined_call_operand.vmem [shape: bf16[2,64,32,8], index: 3, kind: output, shape index: {}]
  %s4 = sld [smem:[#allocation0]]
  $region53: #{decoder_forward.17} parent=0
    _
  %s6 = ssub.s32 1, %s4
  %s7 = scalar_select 0, %s6, %s4
  $region1: #{decoder_forward.17} parent=0
    #allocation2 [shape = 'u8[4096]{0}', space=vmem, size = 0x1000, scoped, tag = 'input window, operand 1, single buffered']
    #allocation3 [shape = 's32[2]{0}', space=sflag, size = 0x8, scoped, tag = 'scoped memory for decoder_forward.17']
    #allocation4 [shape = 'u8[512]{0}', space=vmem, size = 0x400, scoped, tag = 'input window, operand 2, single buffered']
    #allocation5 [shape = 's32[1]{0}', space=sflag, size = 0x4, scoped, tag = 'scoped memory for decoder_forward.17']
    %8 = vsyncpa [#allocation3], 0
    %9 = vsyncpa [#allocation5], 0
    loop: start=0, step=1, limit=66
    $region2: #{decoder_forward.17} parent=1 // loop_pre_header
      _
    $region3: #{decoder_forward.17} parent=1 // loop_header
      %s11 = sphi 0, %s15
      %p12 = scmp.ge.s32.totalorder %s11, 66
      %s18 = sphi 0, %s30
      %s19 = sphi 0, %s26
      %s20 = sphi 0, %s18
      %s21 = sphi 0, %s19
      %s22 = sphi 0, %s20
      %s23 = sphi 0, %s21
      %s35 = sphi 0, %s37
      %s38 = sphi 0, %s35
      %s39 = sphi 0, %s38
      %s55 = sphi 0, %s39
      %s59 = sphi 0, %s59
      %s61 = sphi 0, %s59
      %s62 = sphi 0, %s61
      %s76 = sphi 0, %s62
      %s80 = sphi 0, %s80
      %s82 = sphi 0, %s80
      %s83 = sphi 0, %s82
      %s97 = sphi 0, %s83
      %s105 = sphi 0, %s107
      %s108 = sphi 0, %s105
      %s109 = sphi 0, %s108
      %s125 = sphi 0, %s109
    $region4: #{decoder_forward.17} parent=1 // loop_header_branch
      %14 = sbr.rel (%p12) target = $region8
    $region5: #{decoder_forward.17} parent=1 // loop_body
      %s16 = ssub.s32 %s11, 1
      %s17 = ssub.s32 %s11, 2
      %s24 = sadd.s32 1, %s19
      %p25 = scmp.ge.s32.totalorder %s24, 32
      %s26 = scalar_select %p25, 0, %s24
      %s27 = sadd.s32 1, %s18
      %s28 = scalar_select %p25, %s27, %s18
      %p29 = scmp.ge.s32.totalorder %s28, 2
      %s30 = scalar_select %p29, 0, %s28
      %s31 = ssub.s32 %s18, %s30
      %s32 = ssub.s32 %s19, %s26
      %s33 = sor.u32 %s31, %s32
      %p34 = scmp.eq.s32.totalorder %s33, 0
      %s36 = sadd.s32 %s35, 1
      %s37 = scalar_select %p34, %s35, %s36
      %p40 = pneg %p34
      %p41 = scmp.eq.s32.totalorder %s11, 63
      %p42 = por %p40, %p41
      %p43 = scmp.ne.s32.totalorder %s35, %s38
      %p44 = scmp.eq.s32.totalorder %s11, 0
      %p45 = por %p43, %p44
      %p46 = scmp.ne.s32.totalorder %s35, %s38
      %p47 = scmp.eq.s32.totalorder %s16, 63
      %p48 = por %p46, %p47
      %p49 = scmp.ne.s32.totalorder %s38, %s39
      %p50 = scmp.eq.s32.totalorder %s16, 0
      %p51 = por %p49, %p50
      %p52 = scmp.ne.s32.totalorder %s38, %s39
      %p53 = scmp.eq.s32.totalorder %s17, 63
      %p54 = por %p52, %p53
      %p56 = scmp.ne.s32.totalorder %s39, %s55
      %p57 = scmp.eq.s32.totalorder %s17, 0
      %p58 = por %p56, %p57
      %s60 = sadd.s32 %s59, 1
      %p63 = scmp.eq.s32.totalorder %s11, 63
      %p64 = scmp.ne.s32.totalorder %s59, %s61
      %p65 = scmp.eq.s32.totalorder %s11, 0
      %p66 = por %p64, %p65
      %p67 = scmp.ne.s32.totalorder %s59, %s61
      %p68 = scmp.eq.s32.totalorder %s16, 63
      %p69 = por %p67, %p68
      %p70 = scmp.ne.s32.totalorder %s61, %s62
      %p71 = scmp.eq.s32.totalorder %s16, 0
      %p72 = por %p70, %p71
      %p73 = scmp.ne.s32.totalorder %s61, %s62
      %p74 = scmp.eq.s32.totalorder %s17, 63
      %p75 = por %p73, %p74
      %p77 = scmp.ne.s32.totalorder %s62, %s76
      %p78 = scmp.eq.s32.totalorder %s17, 0
      %p79 = por %p77, %p78
      %s81 = sadd.s32 %s80, 1
      %p84 = scmp.eq.s32.totalorder %s11, 63
      %p85 = scmp.ne.s32.totalorder %s80, %s82
      %p86 = scmp.eq.s32.totalorder %s11, 0
      %p87 = por %p85, %p86
      %p88 = scmp.ne.s32.totalorder %s80, %s82
      %p89 = scmp.eq.s32.totalorder %s16, 63
      %p90 = por %p88, %p89
      %p91 = scmp.ne.s32.totalorder %s82, %s83
      %p92 = scmp.eq.s32.totalorder %s16, 0
      %p93 = por %p91, %p92
      %p94 = scmp.ne.s32.totalorder %s82, %s83
      %p95 = scmp.eq.s32.totalorder %s17, 63
      %p96 = por %p94, %p95
      %p98 = scmp.ne.s32.totalorder %s83, %s97
      %p99 = scmp.eq.s32.totalorder %s17, 0
      %p100 = por %p98, %p99
      %s101 = ssub.s32 %s18, %s30
      %s102 = ssub.s32 %s19, %s26
      %s103 = sor.u32 %s101, %s102
      %p104 = scmp.eq.s32.totalorder %s103, 0
      %s106 = sadd.s32 %s105, 1
      %s107 = scalar_select %p104, %s105, %s106
      %p110 = pneg %p104
      %p111 = scmp.eq.s32.totalorder %s11, 63
      %p112 = por %p110, %p111
      %p113 = scmp.ne.s32.totalorder %s105, %s108
      %p114 = scmp.eq.s32.totalorder %s11, 0
      %p115 = por %p113, %p114
      %p116 = scmp.ne.s32.totalorder %s105, %s108
      %p117 = scmp.eq.s32.totalorder %s16, 63
      %p118 = por %p116, %p117
      %p119 = scmp.ne.s32.totalorder %s108, %s109
      %p120 = scmp.eq.s32.totalorder %s16, 0
      %p121 = por %p119, %p120
      %p122 = scmp.ne.s32.totalorder %s108, %s109
      %p123 = scmp.eq.s32.totalorder %s17, 63
      %p124 = por %p122, %p123
      %p126 = scmp.ne.s32.totalorder %s109, %s125
      %p127 = scmp.eq.s32.totalorder %s17, 0
      %p128 = por %p126, %p127
      %p129 = scmp.le.s32.totalorder 1, %s11
      %p130 = scmp.lt.s32.totalorder %s11, 65
      %p131 = pnand %p129, %p130
      %p132 = pneg %p131
      // Predicated region
      $region9: #{decoder_forward.17} parent=5 // pred_check
        _
      $region10: #{decoder_forward.17} parent=5 // pred_check_branch
        %134 = sbr.rel (%p131) target = $region12
      $region11: #{decoder_forward.17} parent=5 // pred_region
        %s135 = ssub.s32 %s11, 1
        // Predicated region
        $region13: #{decoder_forward.17} parent=11 // pred_check
          %p136 = pneg %p72
        $region14: #{decoder_forward.17} parent=11 // pred_check_branch
          %138 = sbr.rel (%p136) target = $region16
        $region15: #{decoder_forward.17} parent=11 // pred_region
          %140 = vsyncadd [#allocation3], 0
          %s141 = sshll.u32 %s1, 4
          %s142 = int_to_ptr.hbm [resolvable:$true] %s141
          %s143 = sshll.u32 [#allocation2], 4
          %s144 = int_to_ptr.vmem [resolvable:$true] %s143
          %149 = dma.hbm_to_vmem [thread:$0]  %s142, 128, %s144, [#allocation3], 64, 64, 4
        $region16: #{decoder_forward.17} parent=11 // pred_fallthru
          _
        // Predicated region
        $region17: #{decoder_forward.17} parent=11 // pred_check
          %p150 = pneg %p93
        $region18: #{decoder_forward.17} parent=11 // pred_check_branch
          %152 = sbr.rel (%p150) target = $region20
        $region19: #{decoder_forward.17} parent=11 // pred_region
          %154 = vsyncadd [#allocation5], 0
          %s156 = sshll.u32 %s2, 4
          %s157 = int_to_ptr.hbm [resolvable:$true] %s156
          %s158 = sshll.u32 [#allocation4], 4
          %s159 = int_to_ptr.vmem [resolvable:$true] %s158
          %161 = dma.hbm_to_vmem [thread:$0]  %s157, 16, %s159, [#allocation5]
        $region20: #{decoder_forward.17} parent=11 // pred_fallthru
          _
      $region12: #{decoder_forward.17} parent=5 // pred_fallthru
        _
      %p162 = scmp.lt.s32.totalorder %s11, 64
      // Predicated region
      $region21: #{decoder_forward.17} parent=5 // pred_check
        %p163 = pneg %p162
      $region22: #{decoder_forward.17} parent=5 // pred_check_branch
        %165 = sbr.rel (%p163) target = $region24
      $region23: #{decoder_forward.17} parent=5 // pred_region
        // Predicated region
        $region25: #{decoder_forward.17} parent=23 // pred_check
          %p166 = pneg %p45
        $region26: #{decoder_forward.17} parent=23 // pred_check_branch
          %168 = sbr.rel (%p166) target = $region28
        $region27: #{decoder_forward.17} parent=23 // pred_region
          %p169 = scmp.lt.s32.totalorder %s18, 1
          %s170 = scalar_select %p169, %s18, 1
          %p171 = scmp.lt.s32.totalorder %s19, 31
          %s172 = scalar_select %p171, %s19, 31
          %s173 = smul.addr %s172, 4
          %s174 = smul.addr %s170, 128
          %s175 = sadd.s32 %s173, %s174
          %s176 = smul.addr %s175, 4
          %s177 = scalar_lea.vmem %s0, %s176
        $region28: #{decoder_forward.17} parent=23 // pred_fallthru
          _
      $region24: #{decoder_forward.17} parent=5 // pred_fallthru
        _
      %p178 = scmp.le.s32.totalorder 1, %s11
      %p179 = scmp.lt.s32.totalorder %s11, 65
      %p180 = pnand %p178, %p179
      %p181 = pneg %p180
      // Predicated region
      $region29: #{decoder_forward.17} parent=5 // pred_check
        _
      $region30: #{decoder_forward.17} parent=5 // pred_check_branch
        %183 = sbr.rel (%p180) target = $region32
      $region31: #{decoder_forward.17} parent=5 // pred_region
        %s184 = ssub.s32 %s11, 1
        // Predicated region
        $region33: #{decoder_forward.17} parent=31 // pred_check
          %p185 = pneg %p72
        $region34: #{decoder_forward.17} parent=31 // pred_check_branch
          %187 = sbr.rel (%p185) target = $region36
        $region35: #{decoder_forward.17} parent=31 // pred_region
          %189 = dma.done [#allocation3], 128
        $region36: #{decoder_forward.17} parent=31 // pred_fallthru
          _
        // Predicated region
        $region37: #{decoder_forward.17} parent=31 // pred_check
          %p190 = pneg %p93
        $region38: #{decoder_forward.17} parent=31 // pred_check_branch
          %192 = sbr.rel (%p190) target = $region40
        $region39: #{decoder_forward.17} parent=31 // pred_region
          %194 = dma.done [#allocation5], 16
        $region40: #{decoder_forward.17} parent=31 // pred_fallthru
          _
        %p195 = scmp.lt.s32.totalorder %s20, 1
        %s196 = scalar_select %p195, %s20, 1
        %p197 = scmp.lt.s32.totalorder %s21, 31
        %s198 = scalar_select %p197, %s21, 31
        %s199 = smul.addr %s198, 4
        %s200 = smul.addr %s196, 128
        %s201 = sadd.s32 %s199, %s200
        %s202 = smul.addr %s201, 4
        %s203 = scalar_lea.vmem %s0, %s202
        %p204 = pneg %p51
        %p205 = pneg %p48
        %p206 = pneg %p72
        %p207 = pneg %p69
        %p208 = pneg %p93
        %p209 = pneg %p90
        %p210 = pneg %p121
        %p211 = pneg %p118
        %s212 = smul.u32 2, %s21
        %p213 = scmp.lt.s32.totalorder %s20, 1
        %s214 = scalar_select %p213, %s20, 1
        %p215 = scmp.lt.s32.totalorder %s212, 63
        %s216 = scalar_select %p215, %s212, 63
        %s217 = smul.addr %s216, 4
        %s218 = smul.addr %s214, 256
        %s219 = sadd.s32 %s217, %s218
        %s220 = smul.addr %s219, 4
        %s221 = scalar_lea.vmem %s3, %s220
        %p222 = scmp.lt.s32.totalorder %s20, 1
        %s223 = scalar_select %p222, %s20, 1
        %p224 = scmp.lt.s32.totalorder %s21, 31
        %s225 = scalar_select %p224, %s21, 31
        %s226 = smul.addr %s225, 4
        %s227 = smul.addr %s223, 128
        %s228 = sadd.s32 %s226, %s227
        %s229 = smul.addr %s228, 4
        %s230 = scalar_lea.vmem %s0, %s229
        %s231 = smul.u32 2, %s21
        %p232 = scmp.lt.s32.totalorder %s20, 1
        %s233 = scalar_select %p232, %s20, 1
        %p234 = scmp.lt.s32.totalorder %s231, 63
        %s235 = scalar_select %p234, %s231, 63
        %s236 = smul.addr %s235, 4
        %s237 = smul.addr %s233, 256
        %s238 = sadd.s32 %s236, %s237
        %s239 = smul.addr %s238, 4
        %s240 = scalar_lea.vmem %s3, %s239
        %s241 = smul.u32 2, %s21
        %v243 = vld [vmem:[%s230] sm:$0xf]
        %v244 = vld [vmem:[%s230 + $0x4] sm:$0xf]
        %v245 = vld [vmem:[%s230 + $0x8] sm:$0xf]
        %v246 = vld [vmem:[%s230 + $0xc] sm:$0xf]
        %v247 = vld [vmem:[#allocation4] sm:$0x1]
        %v248 = vld [vmem:[#allocation2] sm:$0xf]
        %v250 = vperm.slane %v247, 0
        %v256 = vunpack.c.l.b16 %v243
        %v257 = vunpack.c.l.b16 %v244
        %v258 = vunpack.c.l.b16 %v245
        %v259 = vunpack.c.l.b16 %v246
        %v260 = vpack.c.b16 %v257, %v256
        %v261 = vpack.c.b16 %v259, %v258
        %vm262 = vcmask 64512
        %v264 = vsel %vm262, %v260, 0
        %v267 = vsel %vm262, %v261, 0
        %vm269 = vcmask 1043456
        %v271 = vsel %vm269, %v248, 0
        %273 = vmatpush.bf16.msra.mxu0 0
        %274 = vmatpush.bf16.msra.mxu0 0
        %275 = vmatpush.bf16.msra.mxu0 0
        %276 = vmatpush.bf16.msra.mxu0 0
        %277 = vmatpush.bf16.msra.mxu0 0
        %278 = vmatpush.bf16.msra.mxu0 0
        %279 = vmatpush.bf16.msra.mxu0 0
        %280 = vmatpush.bf16.msra.mxu0 %v271
        %281 = vmatmul.bf16.gmra.mxu0 %v264
        %v282 = vpop.f32.mrf.mxu0
        %v283 = vadd.f32 %v250, %v282
        %v284 = vpop.f32.mrf.mxu0
        %v285 = vadd.f32 %v250, %v284
        %286 = vmatmul.bf16.gmra.mxu0 %v267
        %v287 = vpop.f32.mrf.mxu0
        %v288 = vadd.f32 %v250, %v287
        %v289 = vpop.f32.mrf.mxu0
        %v290 = vadd.f32 %v250, %v289
        %291 = vdwg.mxu0
        %v292 = vmax.f32 %v283, 0.0
        %v293 = vmax.f32 %v285, 0.0
        %v294 = vmax.f32 %v288, 0.0
        %v295 = vmax.f32 %v290, 0.0
        %v296 = vpack.c.bf16 %v292, %v292
        %v297 = vpack.c.bf16 %v293, %v293
        %v298 = vpack.c.bf16 %v294, %v294
        %v299 = vpack.c.bf16 %v295, %v295
        %vm300 = vcmask 60416
        %301 = vst.msk [vmem:[%s240] sm:$0xf] %vm300, %v296
        %302 = vst.msk [vmem:[%s240 + $0x4] sm:$0xf] %vm300, %v297
        %303 = vst.msk [vmem:[%s240 + $0x8] sm:$0xf] %vm300, %v298
        %304 = vst.msk [vmem:[%s240 + $0xc] sm:$0xf] %vm300, %v299
        %s305 = scalar_lea.vmem [#allocation2], 4
        %v306 = vld [vmem:[%s305] sm:$0xf]
        %v308 = vsel %vm269, %v306, 0
        %310 = vmatpush.bf16.msra.mxu0 0
        %311 = vmatpush.bf16.msra.mxu0 0
        %312 = vmatpush.bf16.msra.mxu0 0
        %313 = vmatpush.bf16.msra.mxu0 0
        %314 = vmatpush.bf16.msra.mxu0 0
        %315 = vmatpush.bf16.msra.mxu0 0
        %316 = vmatpush.bf16.msra.mxu0 0
        %317 = vmatpush.bf16.msra.mxu0 %v308
        %318 = vmatmul.bf16.gmra.mxu0 %v264
        %v319 = vpop.f32.mrf.mxu0
        %v320 = vadd.f32 %v250, %v319
        %v321 = vpop.f32.mrf.mxu0
        %v322 = vadd.f32 %v250, %v321
        %323 = vmatmul.bf16.gmra.mxu0 %v267
        %v324 = vpop.f32.mrf.mxu0
        %v325 = vadd.f32 %v250, %v324
        %v326 = vpop.f32.mrf.mxu0
        %v327 = vadd.f32 %v250, %v326
        %328 = vdwg.mxu0
        %v329 = vmax.f32 %v320, 0.0
        %v330 = vmax.f32 %v322, 0.0
        %v331 = vmax.f32 %v325, 0.0
        %v332 = vmax.f32 %v327, 0.0
        %v333 = vpack.c.bf16 %v329, %v329
        %v334 = vpack.c.bf16 %v330, %v330
        %v335 = vpack.c.bf16 %v331, %v331
        %v336 = vpack.c.bf16 %v332, %v332
        %s337 = scalar_lea.vmem %s240, 16
        %338 = vst.msk [vmem:[%s337] sm:$0xf] %vm300, %v333
        %339 = vst.msk [vmem:[%s337 + $0x4] sm:$0xf] %vm300, %v334
        %340 = vst.msk [vmem:[%s337 + $0x8] sm:$0xf] %vm300, %v335
        %341 = vst.msk [vmem:[%s337 + $0xc] sm:$0xf] %vm300, %v336
        %s342 = smul.u32 2, %s21
        %p343 = scmp.lt.s32.totalorder %s20, 1
        %s344 = scalar_select %p343, %s20, 1
        %p345 = scmp.lt.s32.totalorder %s342, 63
        %s346 = scalar_select %p345, %s342, 63
        %s347 = smul.addr %s346, 4
        %s348 = smul.addr %s344, 256
        %s349 = sadd.s32 %s347, %s348
        %s350 = smul.addr %s349, 4
        %s351 = scalar_lea.vmem %s3, %s350
        // Predicated region
        $region41: #{decoder_forward.17} parent=31 // pred_check
          %p352 = pneg %p118
        $region42: #{decoder_forward.17} parent=31 // pred_check_branch
          %354 = sbr.rel (%p352) target = $region44
        $region43: #{decoder_forward.17} parent=31 // pred_region
          %s355 = smul.u32 2, %s21
        $region44: #{decoder_forward.17} parent=31 // pred_fallthru
          _
      $region32: #{decoder_forward.17} parent=5 // pred_fallthru
        _
      %p356 = scmp.le.s32.totalorder 2, %s11
      // Predicated region
      $region45: #{decoder_forward.17} parent=5 // pred_check
        %p357 = pneg %p356
      $region46: #{decoder_forward.17} parent=5 // pred_check_branch
        %359 = sbr.rel (%p357) target = $region48
      $region47: #{decoder_forward.17} parent=5 // pred_region
        %s360 = ssub.s32 %s11, 2
        // Predicated region
        $region49: #{decoder_forward.17} parent=47 // pred_check
          %p361 = pneg %p124
        $region50: #{decoder_forward.17} parent=47 // pred_check_branch
          %363 = sbr.rel (%p361) target = $region52
        $region51: #{decoder_forward.17} parent=47 // pred_region
          %s364 = smul.u32 2, %s23
          %p365 = scmp.lt.s32.totalorder %s22, 1
          %s366 = scalar_select %p365, %s22, 1
          %p367 = scmp.lt.s32.totalorder %s364, 63
          %s368 = scalar_select %p367, %s364, 63
          %s369 = smul.addr %s368, 4
          %s370 = smul.addr %s366, 256
          %s371 = sadd.s32 %s369, %s370
          %s372 = smul.addr %s371, 4
          %s373 = scalar_lea.vmem %s3, %s372
        $region52: #{decoder_forward.17} parent=47 // pred_fallthru
          _
      $region48: #{decoder_forward.17} parent=5 // pred_fallthru
        _
    $region6: #{decoder_forward.17} parent=1 // loop_footer
      %s15 = sadd.s32 1, %s11
    $region7: #{decoder_forward.17} parent=1 // loop_footer_branch
      %10 = sbr.rel target = $region3
    $region8: #{decoder_forward.17} parent=1 // loop_exit
      _
    %374 = vsyncpa [#allocation3], 1
    %s375 = scalar_lea.sflag [#allocation3], 1
    %376 = vsyncpa %s375, 1
    %377 = vsyncpa [#allocation5], 1

// kernel: decoder_forward.18
$region0: #{decoder_forward.18}
  #allocation0 [shape = 'u32[]', space=smem, size = 0x4, offset = 0x4, fixed_abs, tag = 'smem constant byte address 0x4 - core index']
  #allocation1 [shape = 'u32[72,128]{1,0:T(1,128)}', space=vmem, size = 0x9000, scoped, tag = 'internal scratch']
  %s0 = inlined_call_operand.vmem [shape: bf16[2,66,66,4], index: 0, kind: input, shape index: {}, may-alias: {0,1,2}]
  %s1 = inlined_call_operand.vmem [shape: bf16[2,66,66,4], index: 1, kind: input, shape index: {}, may-alias: {0,1,2}]
  %s2 = inlined_call_operand.vmem [shape: bf16[2,66,66,4], index: 2, kind: input, shape index: {}, may-alias: {0,1,2}]
  %s3 = inlined_call_operand.vmem [shape: bf16[9,4,4], index: 3, kind: input, shape index: {}]
  %s4 = inlined_call_operand.vmem [shape: f32[1,4], index: 4, kind: input, shape index: {}]
  %s5 = inlined_call_operand.vmem [shape: bf16[2,64,64,4], index: 5, kind: output, shape index: {}]
  %s6 = sld [smem:[#allocation0]]
  $region53: #{decoder_forward.18} parent=0
    _
  %s8 = ssub.s32 1, %s6
  %s9 = scalar_select 0, %s8, %s6
  loop: start=0, step=1, limit=130
  $region2: #{decoder_forward.18} parent=0 // loop_pre_header
    _
  $region3: #{decoder_forward.18} parent=0 // loop_header
    %s11 = sphi 0, %s15
    %p12 = scmp.ge.s32.totalorder %s11, 130
    %s18 = sphi 0, %s30
    %s19 = sphi 0, %s26
    %s20 = sphi 0, %s18
    %s21 = sphi 0, %s19
    %s22 = sphi 0, %s20
    %s23 = sphi 0, %s21
    %s35 = sphi 0, %s37
    %s38 = sphi 0, %s35
    %s39 = sphi 0, %s38
    %s55 = sphi 0, %s39
    %s65 = sphi 0, %s67
    %s68 = sphi 0, %s65
    %s69 = sphi 0, %s68
    %s85 = sphi 0, %s69
    %s95 = sphi 0, %s97
    %s98 = sphi 0, %s95
    %s99 = sphi 0, %s98
    %s115 = sphi 0, %s99
    %s119 = sphi 0, %s119
    %s121 = sphi 0, %s119
    %s122 = sphi 0, %s121
    %s136 = sphi 0, %s122
    %s140 = sphi 0, %s140
    %s142 = sphi 0, %s140
    %s143 = sphi 0, %s142
    %s157 = sphi 0, %s143
    %s165 = sphi 0, %s167
    %s168 = sphi 0, %s165
    %s169 = sphi 0, %s168
    %s185 = sphi 0, %s169
  $region4: #{decoder_forward.18} parent=0 // loop_header_branch
    %14 = sbr.rel (%p12) target = $region8
  $region5: #{decoder_forward.18} parent=0 // loop_body
    %s16 = ssub.s32 %s11, 1
    %s17 = ssub.s32 %s11, 2
    %s24 = sadd.s32 1, %s19
    %p25 = scmp.ge.s32.totalorder %s24, 64
    %s26 = scalar_select %p25, 0, %s24
    %s27 = sadd.s32 1, %s18
    %s28 = scalar_select %p25, %s27, %s18
    %p29 = scmp.ge.s32.totalorder %s28, 2
    %s30 = scalar_select %p29, 0, %s28
    %s31 = ssub.s32 %s18, %s30
    %s32 = ssub.s32 %s19, %s26
    %s33 = sor.u32 %s31, %s32
    %p34 = scmp.eq.s32.totalorder %s33, 0
    %s36 = sadd.s32 %s35, 1
    %s37 = scalar_select %p34, %s35, %s36
    %p40 = pneg %p34
    %p41 = scmp.eq.s32.totalorder %s11, 127
    %p42 = por %p40, %p41
    %p43 = scmp.ne.s32.totalorder %s35, %s38
    %p44 = scmp.eq.s32.totalorder %s11, 0
    %p45 = por %p43, %p44
    %p46 = scmp.ne.s32.totalorder %s35, %s38
    %p47 = scmp.eq.s32.totalorder %s16, 127
    %p48 = por %p46, %p47
    %p49 = scmp.ne.s32.totalorder %s38, %s39
    %p50 = scmp.eq.s32.totalorder %s16, 0
    %p51 = por %p49, %p50
    %p52 = scmp.ne.s32.totalorder %s38, %s39
    %p53 = scmp.eq.s32.totalorder %s17, 127
    %p54 = por %p52, %p53
    %p56 = scmp.ne.s32.totalorder %s39, %s55
    %p57 = scmp.eq.s32.totalorder %s17, 0
    %p58 = por %p56, %p57
    %s59 = sadd.s32 %s19, 1
    %s60 = sadd.s32 %s26, 1
    %s61 = ssub.s32 %s18, %s30
    %s62 = ssub.s32 %s59, %s60
    %s63 = sor.u32 %s61, %s62
    %p64 = scmp.eq.s32.totalorder %s63, 0
    %s66 = sadd.s32 %s65, 1
    %s67 = scalar_select %p64, %s65, %s66
    %p70 = pneg %p64
    %p71 = scmp.eq.s32.totalorder %s11, 127
    %p72 = por %p70, %p71
    %p73 = scmp.ne.s32.totalorder %s65, %s68
    %p74 = scmp.eq.s32.totalorder %s11, 0
    %p75 = por %p73, %p74
    %p76 = scmp.ne.s32.totalorder %s65, %s68
    %p77 = scmp.eq.s32.totalorder %s16, 127
    %p78 = por %p76, %p77
    %p79 = scmp.ne.s32.totalorder %s68, %s69
    %p80 = scmp.eq.s32.totalorder %s16, 0
    %p81 = por %p79, %p80
    %p82 = scmp.ne.s32.totalorder %s68, %s69
    %p83 = scmp.eq.s32.totalorder %s17, 127
    %p84 = por %p82, %p83
    %p86 = scmp.ne.s32.totalorder %s69, %s85
    %p87 = scmp.eq.s32.totalorder %s17, 0
    %p88 = por %p86, %p87
    %s89 = sadd.s32 %s19, 2
    %s90 = sadd.s32 %s26, 2
    %s91 = ssub.s32 %s18, %s30
    %s92 = ssub.s32 %s89, %s90
    %s93 = sor.u32 %s91, %s92
    %p94 = scmp.eq.s32.totalorder %s93, 0
    %s96 = sadd.s32 %s95, 1
    %s97 = scalar_select %p94, %s95, %s96
    %p100 = pneg %p94
    %p101 = scmp.eq.s32.totalorder %s11, 127
    %p102 = por %p100, %p101
    %p103 = scmp.ne.s32.totalorder %s95, %s98
    %p104 = scmp.eq.s32.totalorder %s11, 0
    %p105 = por %p103, %p104
    %p106 = scmp.ne.s32.totalorder %s95, %s98
    %p107 = scmp.eq.s32.totalorder %s16, 127
    %p108 = por %p106, %p107
    %p109 = scmp.ne.s32.totalorder %s98, %s99
    %p110 = scmp.eq.s32.totalorder %s16, 0
    %p111 = por %p109, %p110
    %p112 = scmp.ne.s32.totalorder %s98, %s99
    %p113 = scmp.eq.s32.totalorder %s17, 127
    %p114 = por %p112, %p113
    %p116 = scmp.ne.s32.totalorder %s99, %s115
    %p117 = scmp.eq.s32.totalorder %s17, 0
    %p118 = por %p116, %p117
    %s120 = sadd.s32 %s119, 1
    %p123 = scmp.eq.s32.totalorder %s11, 127
    %p124 = scmp.ne.s32.totalorder %s119, %s121
    %p125 = scmp.eq.s32.totalorder %s11, 0
    %p126 = por %p124, %p125
    %p127 = scmp.ne.s32.totalorder %s119, %s121
    %p128 = scmp.eq.s32.totalorder %s16, 127
    %p129 = por %p127, %p128
    %p130 = scmp.ne.s32.totalorder %s121, %s122
    %p131 = scmp.eq.s32.totalorder %s16, 0
    %p132 = por %p130, %p131
    %p133 = scmp.ne.s32.totalorder %s121, %s122
    %p134 = scmp.eq.s32.totalorder %s17, 127
    %p135 = por %p133, %p134
    %p137 = scmp.ne.s32.totalorder %s122, %s136
    %p138 = scmp.eq.s32.totalorder %s17, 0
    %p139 = por %p137, %p138
    %s141 = sadd.s32 %s140, 1
    %p144 = scmp.eq.s32.totalorder %s11, 127
    %p145 = scmp.ne.s32.totalorder %s140, %s142
    %p146 = scmp.eq.s32.totalorder %s11, 0
    %p147 = por %p145, %p146
    %p148 = scmp.ne.s32.totalorder %s140, %s142
    %p149 = scmp.eq.s32.totalorder %s16, 127
    %p150 = por %p148, %p149
    %p151 = scmp.ne.s32.totalorder %s142, %s143
    %p152 = scmp.eq.s32.totalorder %s16, 0
    %p153 = por %p151, %p152
    %p154 = scmp.ne.s32.totalorder %s142, %s143
    %p155 = scmp.eq.s32.totalorder %s17, 127
    %p156 = por %p154, %p155
    %p158 = scmp.ne.s32.totalorder %s143, %s157
    %p159 = scmp.eq.s32.totalorder %s17, 0
    %p160 = por %p158, %p159
    %s161 = ssub.s32 %s18, %s30
    %s162 = ssub.s32 %s19, %s26
    %s163 = sor.u32 %s161, %s162
    %p164 = scmp.eq.s32.totalorder %s163, 0
    %s166 = sadd.s32 %s165, 1
    %s167 = scalar_select %p164, %s165, %s166
    %p170 = pneg %p164
    %p171 = scmp.eq.s32.totalorder %s11, 127
    %p172 = por %p170, %p171
    %p173 = scmp.ne.s32.totalorder %s165, %s168
    %p174 = scmp.eq.s32.totalorder %s11, 0
    %p175 = por %p173, %p174
    %p176 = scmp.ne.s32.totalorder %s165, %s168
    %p177 = scmp.eq.s32.totalorder %s16, 127
    %p178 = por %p176, %p177
    %p179 = scmp.ne.s32.totalorder %s168, %s169
    %p180 = scmp.eq.s32.totalorder %s16, 0
    %p181 = por %p179, %p180
    %p182 = scmp.ne.s32.totalorder %s168, %s169
    %p183 = scmp.eq.s32.totalorder %s17, 127
    %p184 = por %p182, %p183
    %p186 = scmp.ne.s32.totalorder %s169, %s185
    %p187 = scmp.eq.s32.totalorder %s17, 0
    %p188 = por %p186, %p187
    %p189 = scmp.le.s32.totalorder 1, %s11
    %p190 = scmp.lt.s32.totalorder %s11, 129
    %p191 = pnand %p189, %p190
    %p192 = pneg %p191
    // Predicated region
    $region9: #{decoder_forward.18} parent=5 // pred_check
      _
    $region10: #{decoder_forward.18} parent=5 // pred_check_branch
      %194 = sbr.rel (%p191) target = $region12
    $region11: #{decoder_forward.18} parent=5 // pred_region
      %s195 = ssub.s32 %s11, 1
      // Predicated region
      $region13: #{decoder_forward.18} parent=11 // pred_check
        %p196 = pneg %p132
      $region14: #{decoder_forward.18} parent=11 // pred_check_branch
        %198 = sbr.rel (%p196) target = $region16
      $region15: #{decoder_forward.18} parent=11 // pred_region
        _
      $region16: #{decoder_forward.18} parent=11 // pred_fallthru
        _
      // Predicated region
      $region17: #{decoder_forward.18} parent=11 // pred_check
        %p199 = pneg %p153
      $region18: #{decoder_forward.18} parent=11 // pred_check_branch
        %201 = sbr.rel (%p199) target = $region20
      $region19: #{decoder_forward.18} parent=11 // pred_region
        _
      $region20: #{decoder_forward.18} parent=11 // pred_fallthru
        _
    $region12: #{decoder_forward.18} parent=5 // pred_fallthru
      _
    %p202 = scmp.lt.s32.totalorder %s11, 128
    // Predicated region
    $region21: #{decoder_forward.18} parent=5 // pred_check
      %p203 = pneg %p202
    $region22: #{decoder_forward.18} parent=5 // pred_check_branch
      %205 = sbr.rel (%p203) target = $region24
    $region23: #{decoder_forward.18} parent=5 // pred_region
      // Predicated region
      $region25: #{decoder_forward.18} parent=23 // pred_check
        %p206 = pneg %p45
      $region26: #{decoder_forward.18} parent=23 // pred_check_branch
        %208 = sbr.rel (%p206) target = $region28
      $region27: #{decoder_forward.18} parent=23 // pred_region
        %p209 = scmp.lt.s32.totalorder %s18, 1
        %s210 = scalar_select %p209, %s18, 1
        %p211 = scmp.lt.s32.totalorder %s19, 65
        %s212 = scalar_select %p211, %s19, 65
        %s213 = smul.addr %s212, 9
        %s214 = smul.addr %s210, 594
        %s215 = sadd.s32 %s213, %s214
        %s216 = smul.addr %s215, 4
        %s217 = scalar_lea.vmem %s0, %s216
      $region28: #{decoder_forward.18} parent=23 // pred_fallthru
        _
      // Predicated region
      $region29: #{decoder_forward.18} parent=23 // pred_check
        %p218 = pneg %p75
      $region30: #{decoder_forward.18} parent=23 // pred_check_branch
        %220 = sbr.rel (%p218) target = $region32
      $region31: #{decoder_forward.18} parent=23 // pred_region
        %s221 = sadd.s32 %s19, 1
        %p222 = scmp.lt.s32.totalorder %s18, 1
        %s223 = scalar_select %p222, %s18, 1
        %p224 = scmp.lt.s32.totalorder %s221, 65
        %s225 = scalar_select %p224, %s221, 65
        %s226 = smul.addr %s225, 9
        %s227 = smul.addr %s223, 594
        %s228 = sadd.s32 %s226, %s227
        %s229 = smul.addr %s228, 4
        %s230 = scalar_lea.vmem %s1, %s229
        %s231 = sadd.s32 %s19, 1
      $region32: #{decoder_forward.18} parent=23 // pred_fallthru
        _
      // Predicated region
      $region33: #{decoder_forward.18} parent=23 // pred_check
        %p232 = pneg %p105
      $region34: #{decoder_forward.18} parent=23 // pred_check_branch
        %234 = sbr.rel (%p232) target = $region36
      $region35: #{decoder_forward.18} parent=23 // pred_region
        %s235 = sadd.s32 %s19, 2
        %p236 = scmp.lt.s32.totalorder %s18, 1
        %s237 = scalar_select %p236, %s18, 1
        %p238 = scmp.lt.s32.totalorder %s235, 65
        %s239 = scalar_select %p238, %s235, 65
        %s240 = smul.addr %s239, 9
        %s241 = smul.addr %s237, 594
        %s242 = sadd.s32 %s240, %s241
        %s243 = smul.addr %s242, 4
        %s244 = scalar_lea.vmem %s2, %s243
        %s245 = sadd.s32 %s19, 2
      $region36: #{decoder_forward.18} parent=23 // pred_fallthru
        _
    $region24: #{decoder_forward.18} parent=5 // pred_fallthru
      _
    %p246 = scmp.le.s32.totalorder 1, %s11
    %p247 = scmp.lt.s32.totalorder %s11, 129
    %p248 = pnand %p246, %p247
    %p249 = pneg %p248
    // Predicated region
    $region37: #{decoder_forward.18} parent=5 // pred_check
      _
    $region38: #{decoder_forward.18} parent=5 // pred_check_branch
      %251 = sbr.rel (%p248) target = $region40
    $region39: #{decoder_forward.18} parent=5 // pred_region
      %s252 = ssub.s32 %s11, 1
      %p253 = scmp.lt.s32.totalorder %s20, 1
      %s254 = scalar_select %p253, %s20, 1
      %p255 = scmp.lt.s32.totalorder %s21, 65
      %s256 = scalar_select %p255, %s21, 65
      %s257 = smul.addr %s256, 9
      %s258 = smul.addr %s254, 594
      %s259 = sadd.s32 %s257, %s258
      %s260 = smul.addr %s259, 4
      %s261 = scalar_lea.vmem %s0, %s260
      %p262 = pneg %p51
      %p263 = pneg %p48
      %s264 = sadd.s32 %s21, 1
      %p265 = scmp.lt.s32.totalorder %s20, 1
      %s266 = scalar_select %p265, %s20, 1
      %p267 = scmp.lt.s32.totalorder %s264, 65
      %s268 = scalar_select %p267, %s264, 65
      %s269 = smul.addr %s268, 9
      %s270 = smul.addr %s266, 594
      %s271 = sadd.s32 %s269, %s270
      %s272 = smul.addr %s271, 4
      %s273 = scalar_lea.vmem %s1, %s272
      %p274 = pneg %p81
      %p275 = pneg %p78
      %s276 = sadd.s32 %s21, 2
      %p277 = scmp.lt.s32.totalorder %s20, 1
      %s278 = scalar_select %p277, %s20, 1
      %p279 = scmp.lt.s32.totalorder %s276, 65
      %s280 = scalar_select %p279, %s276, 65
      %s281 = smul.addr %s280, 9
      %s282 = smul.addr %s278, 594
      %s283 = sadd.s32 %s281, %s282
      %s284 = smul.addr %s283, 4
      %s285 = scalar_lea.vmem %s2, %s284
      %p286 = pneg %p111
      %p287 = pneg %p108
      %p288 = pneg %p132
      %p289 = pneg %p129
      %p290 = pneg %p153
      %p291 = pneg %p150
      %p292 = pneg %p181
      %p293 = pneg %p178
      %p294 = scmp.lt.s32.totalorder %s20, 1
      %s295 = scalar_select %p294, %s20, 1
      %p296 = scmp.lt.s32.totalorder %s21, 63
      %s297 = scalar_select %p296, %s21, 63
      %s298 = smul.addr %s297, 8
      %s299 = smul.addr %s295, 512
      %s300 = sadd.s32 %s298, %s299
      %s301 = smul.addr %s300, 4
      %s302 = scalar_lea.vmem %s5, %s301
      %p303 = scmp.lt.s32.totalorder %s20, 1
      %s304 = scalar_select %p303, %s20, 1
      %p305 = scmp.lt.s32.totalorder %s21, 65
      %s306 = scalar_select %p305, %s21, 65
      %s307 = smul.addr %s306, 9
      %s308 = smul.addr %s304, 594
      %s309 = sadd.s32 %s307, %s308
      %s310 = smul.addr %s309, 4
      %s311 = scalar_lea.vmem %s0, %s310
      %s312 = sadd.s32 %s21, 1
      %p313 = scmp.lt.s32.totalorder %s20, 1
      %s314 = scalar_select %p313, %s20, 1
      %p315 = scmp.lt.s32.totalorder %s312, 65
      %s316 = scalar_select %p315, %s312, 65
      %s317 = smul.addr %s316, 9
      %s318 = smul.addr %s314, 594
      %s319 = sadd.s32 %s317, %s318
      %s320 = smul.addr %s319, 4
      %s321 = scalar_lea.vmem %s1, %s320
      %s322 = sadd.s32 %s21, 1
      %s323 = sadd.s32 %s21, 2
      %p324 = scmp.lt.s32.totalorder %s20, 1
      %s325 = scalar_select %p324, %s20, 1
      %p326 = scmp.lt.s32.totalorder %s323, 65
      %s327 = scalar_select %p326, %s323, 65
      %s328 = smul.addr %s327, 9
      %s329 = smul.addr %s325, 594
      %s330 = sadd.s32 %s328, %s329
      %s331 = smul.addr %s330, 4
      %s332 = scalar_lea.vmem %s2, %s331
      %s333 = sadd.s32 %s21, 2
      %p334 = scmp.lt.s32.totalorder %s20, 1
      %s335 = scalar_select %p334, %s20, 1
      %p336 = scmp.lt.s32.totalorder %s21, 63
      %s337 = scalar_select %p336, %s21, 63
      %s338 = smul.addr %s337, 8
      %s339 = smul.addr %s335, 512
      %s340 = sadd.s32 %s338, %s339
      %s341 = smul.addr %s340, 4
      %s342 = scalar_lea.vmem %s5, %s341
      %v344 = vld [vmem:[%s311] sm:$0xf]
      %v345 = vld [vmem:[%s311 + $0x4] sm:$0xf]
      %v346 = vld [vmem:[%s311 + $0x8] sm:$0xf]
      %v347 = vld [vmem:[%s311 + $0xc] sm:$0xf]
      %v348 = vld [vmem:[%s311 + $0x10] sm:$0xf]
      %v349 = vld [vmem:[%s311 + $0x14] sm:$0xf]
      %v350 = vld [vmem:[%s311 + $0x18] sm:$0xf]
      %v351 = vld [vmem:[%s311 + $0x1c] sm:$0xf]
      %v352 = vld [vmem:[%s3] sm:$0x3]
      %v353 = vld [vmem:[%s311 + $0x20] sm:$0x1]
      %s354 = scalar_lea.vmem %s3, 2
      %v355 = vld [vmem:[%s354] sm:$0x3]
      %v365 = vunpack.c.l.b16 %v344
      %v366 = vunpack.c.l.b16 %v345
      %v367 = vunpack.c.l.b16 %v346
      %v368 = vunpack.c.l.b16 %v347
      %v369 = vunpack.c.l.b16 %v348
      %v370 = vunpack.c.l.b16 %v349
      %v371 = vunpack.c.l.b16 %v350
      %v372 = vunpack.c.l.b16 %v351
      %v373 = vunpack.c.l.b16 %v353
      %v374 = vpack.c.b16 %v366, %v365
      %v375 = vpack.c.b16 %v368, %v367
      %v376 = vpack.c.b16 %v370, %v369
      %v377 = vpack.c.b16 %v372, %v371
      %v378 = vpack.c.b16 %v373, %v373
      %vm379 = vsmask.f32 7424
      %v381 = vshrl.u32 %v374, 16
      %v383 = vshll.u32 %v374, 16
      %v385 = vrot.slane %v383, 1
      %v386 = vor.u32 %v381, %v385
      %v388 = vshll.u32 %v375, 16
      %v390 = vrot.slane %v388, 1
      %v391 = vsel %vm379, %v386, %v390
      %v392 = vshrl.u32 %v375, 16
      %v394 = vor.u32 %v392, %v390
      %v396 = vshll.u32 %v376, 16
      %v398 = vrot.slane %v396, 1
      %v399 = vsel %vm379, %v394, %v398
      %v400 = vshrl.u32 %v376, 16
      %v402 = vor.u32 %v400, %v398
      %v404 = vshll.u32 %v377, 16
      %v406 = vrot.slane %v404, 1
      %v407 = vsel %vm379, %v402, %v406
      %v408 = vshrl.u32 %v377, 16
      %v410 = vor.u32 %v408, %v406
      %v412 = vshll.u32 %v378, 16
      %v414 = vrot.slane %v412, 1
      %v415 = vsel %vm379, %v410, %v414
      %vm416 = vcmask 31744
      %v418 = vsel %vm416, %v391, 0
      %v421 = vsel %vm416, %v399, 0
      %v424 = vsel %vm416, %v407, 0
      %v427 = vsel %vm416, %v415, 0
      %vm429 = vcmask 1041408
      %v431 = vsel %vm429, %v355, 0
      %433 = vmatpush.bf16.msra.mxu0 0
      %434 = vmatpush.bf16.msra.mxu0 0
      %435 = vmatpush.bf16.msra.mxu0 0
      %436 = vmatpush.bf16.msra.mxu0 0
      %437 = vmatpush.bf16.msra.mxu0 0
      %438 = vmatpush.bf16.msra.mxu0 0
      %439 = vmatpush.bf16.msra.mxu0 0
      %440 = vmatpush.bf16.msra.mxu0 %v431
      %441 = vmatmul.bf16.gmra.mxu0 %v418
      %v442 = vpop.f32.mrf.mxu0
      %v443 = vadd.f32 0.0, %v442
      %v444 = vpop.f32.mrf.mxu0
      %v445 = vadd.f32 0.0, %v444
      %446 = vmatmul.bf16.gmra.mxu0 %v421
      %v447 = vpop.f32.mrf.mxu0
      %v448 = vadd.f32 0.0, %v447
      %v449 = vpop.f32.mrf.mxu0
      %v450 = vadd.f32 0.0, %v449
      %451 = vmatmul.bf16.gmra.mxu0 %v424
      %v452 = vpop.f32.mrf.mxu0
      %v453 = vadd.f32 0.0, %v452
      %v454 = vpop.f32.mrf.mxu0
      %v455 = vadd.f32 0.0, %v454
      %456 = vmatmul.bf16.gmra.mxu0 %v427
      %v457 = vpop.f32.mrf.mxu0
      %v458 = vadd.f32 0.0, %v457
      %v459 = vpop.f32.mrf.mxu0
      %v460 = vadd.f32 0.0, %v459
      %461 = vdwg.mxu0
      %v462 = vsel %vm416, %v374, 0
      %v464 = vsel %vm416, %v375, 0
      %v466 = vsel %vm416, %v376, 0
      %v468 = vsel %vm416, %v377, 0
      %v471 = vsel %vm429, %v352, 0
      %473 = vmatpush.bf16.msra.mxu0 0
      %474 = vmatpush.bf16.msra.mxu0 0
      %475 = vmatpush.bf16.msra.mxu0 0
      %476 = vmatpush.bf16.msra.mxu0 0
      %477 = vmatpush.bf16.msra.mxu0 0
      %478 = vmatpush.bf16.msra.mxu0 0
      %479 = vmatpush.bf16.msra.mxu0 0
      %480 = vmatpush.bf16.msra.mxu0 %v471
      %481 = vmatmul.bf16.gmra.mxu0 %v462
      %v482 = vpop.f32.mrf.mxu0
      %v483 = vadd.f32 %v443, %v482
      %v484 = vpop.f32.mrf.mxu0
      %v485 = vadd.f32 %v445, %v484
      %486 = vmatmul.bf16.gmra.mxu0 %v464
      %v487 = vpop.f32.mrf.mxu0
      %v488 = vadd.f32 %v448, %v487
      %v489 = vpop.f32.mrf.mxu0
      %v490 = vadd.f32 %v450, %v489
      %491 = vmatmul.bf16.gmra.mxu0 %v466
      %v492 = vpop.f32.mrf.mxu0
      %v493 = vadd.f32 %v453, %v492
      %v494 = vpop.f32.mrf.mxu0
      %v495 = vadd.f32 %v455, %v494
      %496 = vmatmul.bf16.gmra.mxu0 %v468
      %v497 = vpop.f32.mrf.mxu0
      %v498 = vadd.f32 %v458, %v497
      %v499 = vpop.f32.mrf.mxu0
      %v500 = vadd.f32 %v460, %v499
      %501 = vdwg.mxu0
      %v502 = vld [vmem:[%s311] sm:$0xe]
      %s503 = scalar_lea.vmem %s3, 4
      %v504 = vld [vmem:[%s503] sm:$0x3]
      %v506 = vunpack.c.l.b16 %v502
      %v507 = vpack.c.b16 %v366, %v506
      %vm508 = vcmask 1046528
      %v509 = vrot.slane %v507, 1
      %v510 = vrot.slane %v375, 1
      %v511 = vsel %vm508, %v509, %v510
      %v512 = vrot.slane %v376, 1
      %v513 = vsel %vm508, %v510, %v512
      %v514 = vrot.slane %v377, 1
      %v515 = vsel %vm508, %v512, %v514
      %v516 = vrot.slane %v378, 1
      %v517 = vsel %vm508, %v514, %v516
      %v519 = vsel %vm416, %v511, 0
      %v522 = vsel %vm416, %v513, 0
      %v525 = vsel %vm416, %v515, 0
      %v528 = vsel %vm416, %v517, 0
      %v531 = vsel %vm429, %v504, 0
      %533 = vmatpush.bf16.msra.mxu0 0
      %534 = vmatpush.bf16.msra.mxu0 0
      %535 = vmatpush.bf16.msra.mxu0 0
      %536 = vmatpush.bf16.msra.mxu0 0
      %537 = vmatpush.bf16.msra.mxu0 0
      %538 = vmatpush.bf16.msra.mxu0 0
      %539 = vmatpush.bf16.msra.mxu0 0
      %540 = vmatpush.bf16.msra.mxu0 %v531
      %541 = vmatmul.bf16.gmra.mxu0 %v519
      %v542 = vpop.f32.mrf.mxu0
      %v543 = vadd.f32 0.0, %v542
      %v544 = vpop.f32.mrf.mxu0
      %v545 = vadd.f32 0.0, %v544
      %546 = vmatmul.bf16.gmra.mxu0 %v522
      %v547 = vpop.f32.mrf.mxu0
      %v548 = vadd.f32 0.0, %v547
      %v549 = vpop.f32.mrf.mxu0
      %v550 = vadd.f32 0.0, %v549
      %551 = vmatmul.bf16.gmra.mxu0 %v525
      %v552 = vpop.f32.mrf.mxu0
      %v553 = vadd.f32 0.0, %v552
      %v554 = vpop.f32.mrf.mxu0
      %v555 = vadd.f32 0.0, %v554
      %556 = vmatmul.bf16.gmra.mxu0 %v528
      %v557 = vpop.f32.mrf.mxu0
      %v558 = vadd.f32 0.0, %v557
      %v559 = vpop.f32.mrf.mxu0
      %v560 = vadd.f32 0.0, %v559
      %561 = vdwg.mxu0
      %v562 = vadd.f32 %v483, %v543
      %v563 = vadd.f32 %v485, %v545
      %v564 = vadd.f32 %v488, %v548
      %v565 = vadd.f32 %v490, %v550
      %v566 = vadd.f32 %v493, %v553
      %v567 = vadd.f32 %v495, %v555
      %v568 = vadd.f32 %v498, %v558
      %v569 = vadd.f32 %v500, %v560
      %v570 = vld [vmem:[%s321] sm:$0xf]
      %v571 = vld [vmem:[%s321 + $0x4] sm:$0xf]
      %v572 = vld [vmem:[%s321 + $0x8] sm:$0xf]
      %v573 = vld [vmem:[%s321 + $0xc] sm:$0xf]
      %v574 = vld [vmem:[%s321 + $0x10] sm:$0xf]
      %v575 = vld [vmem:[%s321 + $0x14] sm:$0xf]
      %v576 = vld [vmem:[%s321 + $0x18] sm:$0xf]
      %v577 = vld [vmem:[%s321 + $0x1c] sm:$0xf]
      %s578 = scalar_lea.vmem %s3, 6
      %v579 = vld [vmem:[%s578] sm:$0x3]
      %v588 = vunpack.c.l.b16 %v570
      %v589 = vunpack.c.l.b16 %v571
      %v590 = vunpack.c.l.b16 %v572
      %v591 = vunpack.c.l.b16 %v573
      %v592 = vunpack.c.l.b16 %v574
      %v593 = vunpack.c.l.b16 %v575
      %v594 = vunpack.c.l.b16 %v576
      %v595 = vunpack.c.l.b16 %v577
      %v596 = vpack.c.b16 %v589, %v588
      %v597 = vpack.c.b16 %v591, %v590
      %v598 = vpack.c.b16 %v593, %v592
      %v599 = vpack.c.b16 %v595, %v594
      %v601 = vsel %vm416, %v596, 0
      %v604 = vsel %vm416, %v597, 0
      %v607 = vsel %vm416, %v598, 0
      %v610 = vsel %vm416, %v599, 0
      %v613 = vsel %vm429, %v579, 0
      %615 = vmatpush.bf16.msra.mxu0 0
      %616 = vmatpush.bf16.msra.mxu0 0
      %617 = vmatpush.bf16.msra.mxu0 0
      %618 = vmatpush.bf16.msra.mxu0 0
      %619 = vmatpush.bf16.msra.mxu0 0
      %620 = vmatpush.bf16.msra.mxu0 0
      %621 = vmatpush.bf16.msra.mxu0 0
      %622 = vmatpush.bf16.msra.mxu0 %v613
      %623 = vmatmul.bf16.gmra.mxu0 %v601
      %v624 = vpop.f32.mrf.mxu0
      %v625 = vadd.f32 0.0, %v624
      %v626 = vpop.f32.mrf.mxu0
      %v627 = vadd.f32 0.0, %v626
      %628 = vmatmul.bf16.gmra.mxu0 %v604
      %v629 = vpop.f32.mrf.mxu0
      %v630 = vadd.f32 0.0, %v629
      %v631 = vpop.f32.mrf.mxu0
      %v632 = vadd.f32 0.0, %v631
      %633 = vmatmul.bf16.gmra.mxu0 %v607
      %v634 = vpop.f32.mrf.mxu0
      %v635 = vadd.f32 0.0, %v634
      %v636 = vpop.f32.mrf.mxu0
      %v637 = vadd.f32 0.0, %v636
      %638 = vmatmul.bf16.gmra.mxu0 %v610
      %v639 = vpop.f32.mrf.mxu0
      %v640 = vadd.f32 0.0, %v639
      %v641 = vpop.f32.mrf.mxu0
      %v642 = vadd.f32 0.0, %v641
      %643 = vdwg.mxu0
      %v644 = vadd.f32 %v562, %v625
      %v645 = vadd.f32 %v563, %v627
      %v646 = vadd.f32 %v564, %v630
      %v647 = vadd.f32 %v565, %v632
      %v648 = vadd.f32 %v566, %v635
      %v649 = vadd.f32 %v567, %v637
      %v650 = vadd.f32 %v568, %v640
      %v651 = vadd.f32 %v569, %v642
      %v652 = vld [vmem:[%s321] sm:$0xf]
      %v653 = vld [vmem:[%s321 + $0x4] sm:$0xf]
      %v654 = vld [vmem:[%s321 + $0x8] sm:$0xf]
      %v655 = vld [vmem:[%s321 + $0xc] sm:$0xf]
      %v656 = vld [vmem:[%s321 + $0x10] sm:$0xf]
      %v657 = vld [vmem:[%s321 + $0x14] sm:$0xf]
      %v658 = vld [vmem:[%s321 + $0x18] sm:$0xf]
      %v659 = vld [vmem:[%s321 + $0x1c] sm:$0xf]
      %v660 = vld [vmem:[%s321 + $0x20] sm:$0x1]
      %s661 = scalar_lea.vmem %s3, 8
      %v662 = vld [vmem:[%s661] sm:$0x3]
      %v672 = vunpack.c.l.b16 %v652
      %v673 = vunpack.c.l.b16 %v653
      %v674 = vunpack.c.l.b16 %v654
      %v675 = vunpack.c.l.b16 %v655
      %v676 = vunpack.c.l.b16 %v656
      %v677 = vunpack.c.l.b16 %v657
      %v678 = vunpack.c.l.b16 %v658
      %v679 = vunpack.c.l.b16 %v659
      %v680 = vunpack.c.l.b16 %v660
      %v681 = vpack.c.b16 %v673, %v672
      %v682 = vpack.c.b16 %v675, %v674
      %v683 = vpack.c.b16 %v677, %v676
      %v684 = vpack.c.b16 %v679, %v678
      %v685 = vpack.c.b16 %v680, %v680
      %v687 = vshrl.u32 %v681, 16
      %v689 = vshll.u32 %v681, 16
      %v691 = vrot.slane %v689, 1
      %v692 = vor.u32 %v687, %v691
      %v694 = vshll.u32 %v682, 16
      %v696 = vrot.slane %v694, 1
      %v697 = vsel %vm379, %v692, %v696
      %v698 = vshrl.u32 %v682, 16
      %v700 = vor.u32 %v698, %v696
      %v702 = vshll.u32 %v683, 16
      %v704 = vrot.slane %v702, 1
      %v705 = vsel %vm379, %v700, %v704
      %v706 = vshrl.u32 %v683, 16
      %v708 = vor.u32 %v706, %v704
      %v710 = vshll.u32 %v684, 16
      %v712 = vrot.slane %v710, 1
      %v713 = vsel %vm379, %v708, %v712
      %v714 = vshrl.u32 %v684, 16
      %v716 = vor.u32 %v714, %v712
      %v718 = vshll.u32 %v685, 16
      %v720 = vrot.slane %v718, 1
      %v721 = vsel %vm379, %v716, %v720
      %v723 = vsel %vm416, %v697, 0
      %v726 = vsel %vm416, %v705, 0
      %v729 = vsel %vm416, %v713, 0
      %v732 = vsel %vm416, %v721, 0
      %v735 = vsel %vm429, %v662, 0
      %737 = vmatpush.bf16.msra.mxu0 0
      %738 = vmatpush.bf16.msra.mxu0 0
      %739 = vmatpush.bf16.msra.mxu0 0
      %740 = vmatpush.bf16.msra.mxu0 0
      %741 = vmatpush.bf16.msra.mxu0 0
      %742 = vmatpush.bf16.msra.mxu0 0
      %743 = vmatpush.bf16.msra.mxu0 0
      %744 = vmatpush.bf16.msra.mxu0 %v735
      %745 = vmatmul.bf16.gmra.mxu0 %v723
      %v746 = vpop.f32.mrf.mxu0
      %v747 = vadd.f32 0.0, %v746
      %v748 = vpop.f32.mrf.mxu0
      %v749 = vadd.f32 0.0, %v748
      %750 = vmatmul.bf16.gmra.mxu0 %v726
      %v751 = vpop.f32.mrf.mxu0
      %v752 = vadd.f32 0.0, %v751
      %v753 = vpop.f32.mrf.mxu0
      %v754 = vadd.f32 0.0, %v753
      %755 = vmatmul.bf16.gmra.mxu0 %v729
      %v756 = vpop.f32.mrf.mxu0
      %v757 = vadd.f32 0.0, %v756
      %v758 = vpop.f32.mrf.mxu0
      %v759 = vadd.f32 0.0, %v758
      %760 = vmatmul.bf16.gmra.mxu0 %v732
      %v761 = vpop.f32.mrf.mxu0
      %v762 = vadd.f32 0.0, %v761
      %v763 = vpop.f32.mrf.mxu0
      %v764 = vadd.f32 0.0, %v763
      %765 = vdwg.mxu0
      %v766 = vadd.f32 %v644, %v747
      %v767 = vadd.f32 %v645, %v749
      %v768 = vadd.f32 %v646, %v752
      %v769 = vadd.f32 %v647, %v754
      %v770 = vadd.f32 %v648, %v757
      %v771 = vadd.f32 %v649, %v759
      %v772 = vadd.f32 %v650, %v762
      %v773 = vadd.f32 %v651, %v764
      %v774 = vld [vmem:[%s321] sm:$0xe]
      %s775 = scalar_lea.vmem %s3, 10
      %v776 = vld [vmem:[%s775] sm:$0x3]
      %v778 = vunpack.c.l.b16 %v774
      %v779 = vpack.c.b16 %v673, %v778
      %v780 = vrot.slane %v779, 1
      %v781 = vrot.slane %v682, 1
      %v782 = vsel %vm508, %v780, %v781
      %v783 = vrot.slane %v683, 1
      %v784 = vsel %vm508, %v781, %v783
      %v785 = vrot.slane %v684, 1
      %v786 = vsel %vm508, %v783, %v785
      %v787 = vrot.slane %v685, 1
      %v788 = vsel %vm508, %v785, %v787
      %v790 = vsel %vm416, %v782, 0
      %v793 = vsel %vm416, %v784, 0
      %v796 = vsel %vm416, %v786, 0
      %v799 = vsel %vm416, %v788, 0
      %v802 = vsel %vm429, %v776, 0
      %804 = vmatpush.bf16.msra.mxu0 0
      %805 = vmatpush.bf16.msra.mxu0 0
      %806 = vmatpush.bf16.msra.mxu0 0
      %807 = vmatpush.bf16.msra.mxu0 0
      %808 = vmatpush.bf16.msra.mxu0 0
      %809 = vmatpush.bf16.msra.mxu0 0
      %810 = vmatpush.bf16.msra.mxu0 0
      %811 = vmatpush.bf16.msra.mxu0 %v802
      %812 = vmatmul.bf16.gmra.mxu0 %v790
      %v813 = vpop.f32.mrf.mxu0
      %v814 = vadd.f32 0.0, %v813
      %v815 = vpop.f32.mrf.mxu0
      %v816 = vadd.f32 0.0, %v815
      %817 = vmatmul.bf16.gmra.mxu0 %v793
      %v818 = vpop.f32.mrf.mxu0
      %v819 = vadd.f32 0.0, %v818
      %v820 = vpop.f32.mrf.mxu0
      %v821 = vadd.f32 0.0, %v820
      %822 = vmatmul.bf16.gmra.mxu0 %v796
      %v823 = vpop.f32.mrf.mxu0
      %v824 = vadd.f32 0.0, %v823
      %v825 = vpop.f32.mrf.mxu0
      %v826 = vadd.f32 0.0, %v825
      %827 = vmatmul.bf16.gmra.mxu0 %v799
      %v828 = vpop.f32.mrf.mxu0
      %v829 = vadd.f32 0.0, %v828
      %v830 = vpop.f32.mrf.mxu0
      %v831 = vadd.f32 0.0, %v830
      %832 = vdwg.mxu0
      %v833 = vadd.f32 %v766, %v814
      %v834 = vadd.f32 %v767, %v816
      %v835 = vadd.f32 %v768, %v819
      %v836 = vadd.f32 %v769, %v821
      %v837 = vadd.f32 %v770, %v824
      %v838 = vadd.f32 %v771, %v826
      %v839 = vadd.f32 %v772, %v829
      %v840 = vadd.f32 %v773, %v831
      %v841 = vld [vmem:[%s332] sm:$0xf]
      %v842 = vld [vmem:[%s332 + $0x4] sm:$0xf]
      %v843 = vld [vmem:[%s332 + $0x8] sm:$0xf]
      %v844 = vld [vmem:[%s332 + $0xc] sm:$0xf]
      %v845 = vld [vmem:[%s332 + $0x10] sm:$0xf]
      %v846 = vld [vmem:[%s332 + $0x14] sm:$0xf]
      %v847 = vld [vmem:[%s332 + $0x18] sm:$0xf]
      %v848 = vld [vmem:[%s332 + $0x1c] sm:$0xf]
      %s849 = scalar_lea.vmem %s3, 12
      %v850 = vld [vmem:[%s849] sm:$0x3]
      %v859 = vunpack.c.l.b16 %v841
      %v860 = vunpack.c.l.b16 %v842
      %v861 = vunpack.c.l.b16 %v843
      %v862 = vunpack.c.l.b16 %v844
      %v863 = vunpack.c.l.b16 %v845
      %v864 = vunpack.c.l.b16 %v846
      %v865 = vunpack.c.l.b16 %v847
      %v866 = vunpack.c.l.b16 %v848
      %v867 = vpack.c.b16 %v860, %v859
      %v868 = vpack.c.b16 %v862, %v861
      %v869 = vpack.c.b16 %v864, %v863
      %v870 = vpack.c.b16 %v866, %v865
      %v872 = vsel %vm416, %v867, 0
      %v875 = vsel %vm416, %v868, 0
      %v878 = vsel %vm416, %v869, 0
      %v881 = vsel %vm416, %v870, 0
      %v884 = vsel %vm429, %v850, 0
      %886 = vmatpush.bf16.msra.mxu0 0
      %887 = vmatpush.bf16.msra.mxu0 0
      %888 = vmatpush.bf16.msra.mxu0 0
      %889 = vmatpush.bf16.msra.mxu0 0
      %890 = vmatpush.bf16.msra.mxu0 0
      %891 = vmatpush.bf16.msra.mxu0 0
      %892 = vmatpush.bf16.msra.mxu0 0
      %893 = vmatpush.bf16.msra.mxu0 %v884
      %894 = vmatmul.bf16.gmra.mxu0 %v872
      %v895 = vpop.f32.mrf.mxu0
      %v896 = vadd.f32 0.0, %v895
      %v897 = vpop.f32.mrf.mxu0
      %v898 = vadd.f32 0.0, %v897
      %899 = vmatmul.bf16.gmra.mxu0 %v875
      %v900 = vpop.f32.mrf.mxu0
      %v901 = vadd.f32 0.0, %v900
      %v902 = vpop.f32.mrf.mxu0
      %v903 = vadd.f32 0.0, %v902
      %904 = vmatmul.bf16.gmra.mxu0 %v878
      %v905 = vpop.f32.mrf.mxu0
      %v906 = vadd.f32 0.0, %v905
      %v907 = vpop.f32.mrf.mxu0
      %v908 = vadd.f32 0.0, %v907
      %909 = vmatmul.bf16.gmra.mxu0 %v881
      %v910 = vpop.f32.mrf.mxu0
      %v911 = vadd.f32 0.0, %v910
      %v912 = vpop.f32.mrf.mxu0
      %v913 = vadd.f32 0.0, %v912
      %914 = vdwg.mxu0
      %v915 = vadd.f32 %v833, %v896
      %v916 = vadd.f32 %v834, %v898
      %v917 = vadd.f32 %v835, %v901
      %v918 = vadd.f32 %v836, %v903
      %v919 = vadd.f32 %v837, %v906
      %v920 = vadd.f32 %v838, %v908
      %v921 = vadd.f32 %v839, %v911
      %v922 = vadd.f32 %v840, %v913
      %v923 = vld [vmem:[%s332] sm:$0xf]
      %v924 = vld [vmem:[%s332 + $0x4] sm:$0xf]
      %v925 = vld [vmem:[%s332 + $0x8] sm:$0xf]
      %v926 = vld [vmem:[%s332 + $0xc] sm:$0xf]
      %v927 = vld [vmem:[%s332 + $0x10] sm:$0xf]
      %v928 = vld [vmem:[%s332 + $0x14] sm:$0xf]
      %v929 = vld [vmem:[%s332 + $0x18] sm:$0xf]
      %v930 = vld [vmem:[%s332 + $0x1c] sm:$0xf]
      %v931 = vld [vmem:[%s332 + $0x20] sm:$0x1]
      %s932 = scalar_lea.vmem %s3, 14
      %v933 = vld [vmem:[%s932] sm:$0x3]
      %v943 = vunpack.c.l.b16 %v923
      %v944 = vunpack.c.l.b16 %v924
      %v945 = vunpack.c.l.b16 %v925
      %v946 = vunpack.c.l.b16 %v926
      %v947 = vunpack.c.l.b16 %v927
      %v948 = vunpack.c.l.b16 %v928
      %v949 = vunpack.c.l.b16 %v929
      %v950 = vunpack.c.l.b16 %v930
      %v951 = vunpack.c.l.b16 %v931
      %v952 = vpack.c.b16 %v944, %v943
      %v953 = vpack.c.b16 %v946, %v945
      %v954 = vpack.c.b16 %v948, %v947
      %v955 = vpack.c.b16 %v950, %v949
      %v956 = vpack.c.b16 %v951, %v951
      %v958 = vshrl.u32 %v952, 16
      %v960 = vshll.u32 %v952, 16
      %v962 = vrot.slane %v960, 1
      %v963 = vor.u32 %v958, %v962
      %v965 = vshll.u32 %v953, 16
      %v967 = vrot.slane %v965, 1
      %v968 = vsel %vm379, %v963, %v967
      %v969 = vshrl.u32 %v953, 16
      %v971 = vor.u32 %v969, %v967
      %v973 = vshll.u32 %v954, 16
      %v975 = vrot.slane %v973, 1
      %v976 = vsel %vm379, %v971, %v975
      %v977 = vshrl.u32 %v954, 16
      %v979 = vor.u32 %v977, %v975
      %v981 = vshll.u32 %v955, 16
      %v983 = vrot.slane %v981, 1
      %v984 = vsel %vm379, %v979, %v983
      %v985 = vshrl.u32 %v955, 16
      %v987 = vor.u32 %v985, %v983
      %v989 = vshll.u32 %v956, 16
      %v991 = vrot.slane %v989, 1
      %v992 = vsel %vm379, %v987, %v991
      %v994 = vsel %vm416, %v968, 0
      %v997 = vsel %vm416, %v976, 0
      %v1000 = vsel %vm416, %v984, 0
      %v1003 = vsel %vm416, %v992, 0
      %v1006 = vsel %vm429, %v933, 0
      %1008 = vmatpush.bf16.msra.mxu0 0
      %1009 = vmatpush.bf16.msra.mxu0 0
      %1010 = vmatpush.bf16.msra.mxu0 0
      %1011 = vmatpush.bf16.msra.mxu0 0
      %1012 = vmatpush.bf16.msra.mxu0 0
      %1013 = vmatpush.bf16.msra.mxu0 0
      %1014 = vmatpush.bf16.msra.mxu0 0
      %1015 = vmatpush.bf16.msra.mxu0 %v1006
      %1016 = vmatmul.bf16.gmra.mxu0 %v994
      %v1017 = vpop.f32.mrf.mxu0
      %v1018 = vadd.f32 0.0, %v1017
      %v1019 = vpop.f32.mrf.mxu0
      %v1020 = vadd.f32 0.0, %v1019
      %1021 = vmatmul.bf16.gmra.mxu0 %v997
      %v1022 = vpop.f32.mrf.mxu0
      %v1023 = vadd.f32 0.0, %v1022
      %v1024 = vpop.f32.mrf.mxu0
      %v1025 = vadd.f32 0.0, %v1024
      %1026 = vmatmul.bf16.gmra.mxu0 %v1000
      %v1027 = vpop.f32.mrf.mxu0
      %v1028 = vadd.f32 0.0, %v1027
      %v1029 = vpop.f32.mrf.mxu0
      %v1030 = vadd.f32 0.0, %v1029
      %1031 = vmatmul.bf16.gmra.mxu0 %v1003
      %v1032 = vpop.f32.mrf.mxu0
      %v1033 = vadd.f32 0.0, %v1032
      %v1034 = vpop.f32.mrf.mxu0
      %v1035 = vadd.f32 0.0, %v1034
      %1036 = vdwg.mxu0
      %v1037 = vadd.f32 %v915, %v1018
      %v1038 = vadd.f32 %v916, %v1020
      %v1039 = vadd.f32 %v917, %v1023
      %v1040 = vadd.f32 %v918, %v1025
      %v1041 = vadd.f32 %v919, %v1028
      %v1042 = vadd.f32 %v920, %v1030
      %v1043 = vadd.f32 %v921, %v1033
      %v1044 = vadd.f32 %v922, %v1035
      %v1045 = vld [vmem:[%s332] sm:$0xe]
      %s1046 = scalar_lea.vmem %s3, 16
      %v1047 = vld [vmem:[%s1046] sm:$0x3]
      %v1049 = vunpack.c.l.b16 %v1045
      %v1050 = vpack.c.b16 %v944, %v1049
      %v1051 = vrot.slane %v1050, 1
      %v1052 = vrot.slane %v953, 1
      %v1053 = vsel %vm508, %v1051, %v1052
      %v1054 = vrot.slane %v954, 1
      %v1055 = vsel %vm508, %v1052, %v1054
      %v1056 = vrot.slane %v955, 1
      %v1057 = vsel %vm508, %v1054, %v1056
      %v1058 = vrot.slane %v956, 1
      %v1059 = vsel %vm508, %v1056, %v1058
      %v1061 = vsel %vm416, %v1053, 0
      %v1064 = vsel %vm416, %v1055, 0
      %v1067 = vsel %vm416, %v1057, 0
      %v1070 = vsel %vm416, %v1059, 0
      %v1073 = vsel %vm429, %v1047, 0
      %1075 = vmatpush.bf16.msra.mxu0 0
      %1076 = vmatpush.bf16.msra.mxu0 0
      %1077 = vmatpush.bf16.msra.mxu0 0
      %1078 = vmatpush.bf16.msra.mxu0 0
      %1079 = vmatpush.bf16.msra.mxu0 0
      %1080 = vmatpush.bf16.msra.mxu0 0
      %1081 = vmatpush.bf16.msra.mxu0 0
      %1082 = vmatpush.bf16.msra.mxu0 %v1073
      %1083 = vmatmul.bf16.gmra.mxu0 %v1061
      %v1084 = vpop.f32.mrf.mxu0
      %v1085 = vadd.f32 0.0, %v1084
      %v1086 = vpop.f32.mrf.mxu0
      %v1087 = vadd.f32 0.0, %v1086
      %1088 = vmatmul.bf16.gmra.mxu0 %v1064
      %v1089 = vpop.f32.mrf.mxu0
      %v1090 = vadd.f32 0.0, %v1089
      %v1091 = vpop.f32.mrf.mxu0
      %v1092 = vadd.f32 0.0, %v1091
      %1093 = vmatmul.bf16.gmra.mxu0 %v1067
      %v1094 = vpop.f32.mrf.mxu0
      %v1095 = vadd.f32 0.0, %v1094
      %v1096 = vpop.f32.mrf.mxu0
      %v1097 = vadd.f32 0.0, %v1096
      %1098 = vmatmul.bf16.gmra.mxu0 %v1070
      %v1099 = vpop.f32.mrf.mxu0
      %v1100 = vadd.f32 0.0, %v1099
      %v1101 = vpop.f32.mrf.mxu0
      %v1102 = vadd.f32 0.0, %v1101
      %1103 = vdwg.mxu0
      %v1104 = vadd.f32 %v1037, %v1085
      %v1105 = vadd.f32 %v1038, %v1087
      %v1106 = vadd.f32 %v1039, %v1090
      %v1107 = vadd.f32 %v1040, %v1092
      %v1108 = vadd.f32 %v1041, %v1095
      %v1109 = vadd.f32 %v1042, %v1097
      %v1110 = vadd.f32 %v1043, %v1100
      %v1111 = vadd.f32 %v1044, %v1102
      %v1112 = vld [vmem:[%s4] sm:$0x1]
      %v1114 = vperm.slane %v1112, 0
      %v1116 = vadd.f32 %v1104, %v1114
      %v1117 = vadd.f32 %v1105, %v1114
      %v1118 = vadd.f32 %v1106, %v1114
      %v1119 = vadd.f32 %v1107, %v1114
      %v1120 = vadd.f32 %v1108, %v1114
      %v1121 = vadd.f32 %v1109, %v1114
      %v1122 = vadd.f32 %v1110, %v1114
      %v1123 = vadd.f32 %v1111, %v1114
      %v1124 = vmax.f32 %v1116, 0.0
      %v1125 = vmax.f32 %v1117, 0.0
      %v1126 = vmax.f32 %v1118, 0.0
      %v1127 = vmax.f32 %v1119, 0.0
      %v1128 = vmax.f32 %v1120, 0.0
      %v1129 = vmax.f32 %v1121, 0.0
      %v1130 = vmax.f32 %v1122, 0.0
      %v1131 = vmax.f32 %v1123, 0.0
      %v1132 = vpack.c.bf16 %v1124, %v1124
      %v1133 = vpack.c.bf16 %v1125, %v1125
      %v1134 = vpack.c.bf16 %v1126, %v1126
      %v1135 = vpack.c.bf16 %v1127, %v1127
      %v1136 = vpack.c.bf16 %v1128, %v1128
      %v1137 = vpack.c.bf16 %v1129, %v1129
      %v1138 = vpack.c.bf16 %v1130, %v1130
      %v1139 = vpack.c.bf16 %v1131, %v1131
      %vm1140 = vcmask 27648
      %1141 = vst.msk [vmem:[%s342] sm:$0xf] %vm1140, %v1132
      %1142 = vst.msk [vmem:[%s342 + $0x4] sm:$0xf] %vm1140, %v1133
      %1143 = vst.msk [vmem:[%s342 + $0x8] sm:$0xf] %vm1140, %v1134
      %1144 = vst.msk [vmem:[%s342 + $0xc] sm:$0xf] %vm1140, %v1135
      %1145 = vst.msk [vmem:[%s342 + $0x10] sm:$0xf] %vm1140, %v1136
      %1146 = vst.msk [vmem:[%s342 + $0x14] sm:$0xf] %vm1140, %v1137
      %1147 = vst.msk [vmem:[%s342 + $0x18] sm:$0xf] %vm1140, %v1138
      %1148 = vst.msk [vmem:[%s342 + $0x1c] sm:$0xf] %vm1140, %v1139
      %p1149 = scmp.lt.s32.totalorder %s20, 1
      %s1150 = scalar_select %p1149, %s20, 1
      %p1151 = scmp.lt.s32.totalorder %s21, 63
      %s1152 = scalar_select %p1151, %s21, 63
      %s1153 = smul.addr %s1152, 8
      %s1154 = smul.addr %s1150, 512
      %s1155 = sadd.s32 %s1153, %s1154
      %s1156 = smul.addr %s1155, 4
      %s1157 = scalar_lea.vmem %s5, %s1156
      // Predicated region
      $region41: #{decoder_forward.18} parent=39 // pred_check
        %p1158 = pneg %p178
      $region42: #{decoder_forward.18} parent=39 // pred_check_branch
        %1160 = sbr.rel (%p1158) target = $region44
      $region43: #{decoder_forward.18} parent=39 // pred_region
        _
      $region44: #{decoder_forward.18} parent=39 // pred_fallthru
        _
    $region40: #{decoder_forward.18} parent=5 // pred_fallthru
      _
    %p1161 = scmp.le.s32.totalorder 2, %s11
    // Predicated region
    $region45: #{decoder_forward.18} parent=5 // pred_check
      %p1162 = pneg %p1161
    $region46: #{decoder_forward.18} parent=5 // pred_check_branch
      %1164 = sbr.rel (%p1162) target = $region48
    $region47: #{decoder_forward.18} parent=5 // pred_region
      %s1165 = ssub.s32 %s11, 2
      // Predicated region
      $region49: #{decoder_forward.18} parent=47 // pred_check
        %p1166 = pneg %p184
      $region50: #{decoder_forward.18} parent=47 // pred_check_branch
        %1168 = sbr.rel (%p1166) target = $region52
      $region51: #{decoder_forward.18} parent=47 // pred_region
        %p1169 = scmp.lt.s32.totalorder %s22, 1
        %s1170 = scalar_select %p1169, %s22, 1
        %p1171 = scmp.lt.s32.totalorder %s23, 63
        %s1172 = scalar_select %p1171, %s23, 63
        %s1173 = smul.addr %s1172, 8
        %s1174 = smul.addr %s1170, 512
        %s1175 = sadd.s32 %s1173, %s1174
        %s1176 = smul.addr %s1175, 4
        %s1177 = scalar_lea.vmem %s5, %s1176
      $region52: #{decoder_forward.18} parent=47 // pred_fallthru
        _
    $region48: #{decoder_forward.18} parent=5 // pred_fallthru
      _
  $region6: #{decoder_forward.18} parent=0 // loop_footer
    %s15 = sadd.s32 1, %s11
  $region7: #{decoder_forward.18} parent=0 // loop_footer_branch
    %10 = sbr.rel target = $region3
  $region8: #{decoder_forward.18} parent=0 // loop_exit
    _

// kernel: decoder_forward.19
$region0: #{decoder_forward.19}
  #allocation0 [shape = 'u32[]', space=smem, size = 0x4, offset = 0x4, fixed_abs, tag = 'smem constant byte address 0x4 - core index']
  #allocation1 [shape = 'u32[72,128]{1,0:T(1,128)}', space=vmem, size = 0x9000, scoped, tag = 'internal scratch']
  %s0 = inlined_call_operand.vmem [shape: bf16[2,64,64,4], index: 0, kind: input, shape index: {}]
  %s1 = inlined_call_operand.vmem [shape: bf16[2,4,4], index: 1, kind: input, shape index: {}]
  %s2 = inlined_call_operand.vmem [shape: f32[1,4], index: 2, kind: input, shape index: {}]
  %s3 = inlined_call_operand.vmem [shape: bf16[2,128,64,4], index: 3, kind: output, shape index: {}]
  %s4 = sld [smem:[#allocation0]]
  $region45: #{decoder_forward.19} parent=0
    _
  %s6 = ssub.s32 1, %s4
  %s7 = scalar_select 0, %s6, %s4
  loop: start=0, step=1, limit=130
  $region2: #{decoder_forward.19} parent=0 // loop_pre_header
    _
  $region3: #{decoder_forward.19} parent=0 // loop_header
    %s9 = sphi 0, %s13
    %p10 = scmp.ge.s32.totalorder %s9, 130
    %s16 = sphi 0, %s28
    %s17 = sphi 0, %s24
    %s18 = sphi 0, %s16
    %s19 = sphi 0, %s17
    %s20 = sphi 0, %s18
    %s21 = sphi 0, %s19
    %s33 = sphi 0, %s35
    %s36 = sphi 0, %s33
    %s37 = sphi 0, %s36
    %s53 = sphi 0, %s37
    %s57 = sphi 0, %s57
    %s59 = sphi 0, %s57
    %s60 = sphi 0, %s59
    %s74 = sphi 0, %s60
    %s78 = sphi 0, %s78
    %s80 = sphi 0, %s78
    %s81 = sphi 0, %s80
    %s95 = sphi 0, %s81
    %s103 = sphi 0, %s105
    %s106 = sphi 0, %s103
    %s107 = sphi 0, %s106
    %s123 = sphi 0, %s107
  $region4: #{decoder_forward.19} parent=0 // loop_header_branch
    %12 = sbr.rel (%p10) target = $region8
  $region5: #{decoder_forward.19} parent=0 // loop_body
    %s14 = ssub.s32 %s9, 1
    %s15 = ssub.s32 %s9, 2
    %s22 = sadd.s32 1, %s17
    %p23 = scmp.ge.s32.totalorder %s22, 64
    %s24 = scalar_select %p23, 0, %s22
    %s25 = sadd.s32 1, %s16
    %s26 = scalar_select %p23, %s25, %s16
    %p27 = scmp.ge.s32.totalorder %s26, 2
    %s28 = scalar_select %p27, 0, %s26
    %s29 = ssub.s32 %s16, %s28
    %s30 = ssub.s32 %s17, %s24
    %s31 = sor.u32 %s29, %s30
    %p32 = scmp.eq.s32.totalorder %s31, 0
    %s34 = sadd.s32 %s33, 1
    %s35 = scalar_select %p32, %s33, %s34
    %p38 = pneg %p32
    %p39 = scmp.eq.s32.totalorder %s9, 127
    %p40 = por %p38, %p39
    %p41 = scmp.ne.s32.totalorder %s33, %s36
    %p42 = scmp.eq.s32.totalorder %s9, 0
    %p43 = por %p41, %p42
    %p44 = scmp.ne.s32.totalorder %s33, %s36
    %p45 = scmp.eq.s32.totalorder %s14, 127
    %p46 = por %p44, %p45
    %p47 = scmp.ne.s32.totalorder %s36, %s37
    %p48 = scmp.eq.s32.totalorder %s14, 0
    %p49 = por %p47, %p48
    %p50 = scmp.ne.s32.totalorder %s36, %s37
    %p51 = scmp.eq.s32.totalorder %s15, 127
    %p52 = por %p50, %p51
    %p54 = scmp.ne.s32.totalorder %s37, %s53
    %p55 = scmp.eq.s32.totalorder %s15, 0
    %p56 = por %p54, %p55
    %s58 = sadd.s32 %s57, 1
    %p61 = scmp.eq.s32.totalorder %s9, 127
    %p62 = scmp.ne.s32.totalorder %s57, %s59
    %p63 = scmp.eq.s32.totalorder %s9, 0
    %p64 = por %p62, %p63
    %p65 = scmp.ne.s32.totalorder %s57, %s59
    %p66 = scmp.eq.s32.totalorder %s14, 127
    %p67 = por %p65, %p66
    %p68 = scmp.ne.s32.totalorder %s59, %s60
    %p69 = scmp.eq.s32.totalorder %s14, 0
    %p70 = por %p68, %p69
    %p71 = scmp.ne.s32.totalorder %s59, %s60
    %p72 = scmp.eq.s32.totalorder %s15, 127
    %p73 = por %p71, %p72
    %p75 = scmp.ne.s32.totalorder %s60, %s74
    %p76 = scmp.eq.s32.totalorder %s15, 0
    %p77 = por %p75, %p76
    %s79 = sadd.s32 %s78, 1
    %p82 = scmp.eq.s32.totalorder %s9, 127
    %p83 = scmp.ne.s32.totalorder %s78, %s80
    %p84 = scmp.eq.s32.totalorder %s9, 0
    %p85 = por %p83, %p84
    %p86 = scmp.ne.s32.totalorder %s78, %s80
    %p87 = scmp.eq.s32.totalorder %s14, 127
    %p88 = por %p86, %p87
    %p89 = scmp.ne.s32.totalorder %s80, %s81
    %p90 = scmp.eq.s32.totalorder %s14, 0
    %p91 = por %p89, %p90
    %p92 = scmp.ne.s32.totalorder %s80, %s81
    %p93 = scmp.eq.s32.totalorder %s15, 127
    %p94 = por %p92, %p93
    %p96 = scmp.ne.s32.totalorder %s81, %s95
    %p97 = scmp.eq.s32.totalorder %s15, 0
    %p98 = por %p96, %p97
    %s99 = ssub.s32 %s16, %s28
    %s100 = ssub.s32 %s17, %s24
    %s101 = sor.u32 %s99, %s100
    %p102 = scmp.eq.s32.totalorder %s101, 0
    %s104 = sadd.s32 %s103, 1
    %s105 = scalar_select %p102, %s103, %s104
    %p108 = pneg %p102
    %p109 = scmp.eq.s32.totalorder %s9, 127
    %p110 = por %p108, %p109
    %p111 = scmp.ne.s32.totalorder %s103, %s106
    %p112 = scmp.eq.s32.totalorder %s9, 0
    %p113 = por %p111, %p112
    %p114 = scmp.ne.s32.totalorder %s103, %s106
    %p115 = scmp.eq.s32.totalorder %s14, 127
    %p116 = por %p114, %p115
    %p117 = scmp.ne.s32.totalorder %s106, %s107
    %p118 = scmp.eq.s32.totalorder %s14, 0
    %p119 = por %p117, %p118
    %p120 = scmp.ne.s32.totalorder %s106, %s107
    %p121 = scmp.eq.s32.totalorder %s15, 127
    %p122 = por %p120, %p121
    %p124 = scmp.ne.s32.totalorder %s107, %s123
    %p125 = scmp.eq.s32.totalorder %s15, 0
    %p126 = por %p124, %p125
    %p127 = scmp.le.s32.totalorder 1, %s9
    %p128 = scmp.lt.s32.totalorder %s9, 129
    %p129 = pnand %p127, %p128
    %p130 = pneg %p129
    // Predicated region
    $region9: #{decoder_forward.19} parent=5 // pred_check
      _
    $region10: #{decoder_forward.19} parent=5 // pred_check_branch
      %132 = sbr.rel (%p129) target = $region12
    $region11: #{decoder_forward.19} parent=5 // pred_region
      %s133 = ssub.s32 %s9, 1
      // Predicated region
      $region13: #{decoder_forward.19} parent=11 // pred_check
        %p134 = pneg %p70
      $region14: #{decoder_forward.19} parent=11 // pred_check_branch
        %136 = sbr.rel (%p134) target = $region16
      $region15: #{decoder_forward.19} parent=11 // pred_region
        _
      $region16: #{decoder_forward.19} parent=11 // pred_fallthru
        _
      // Predicated region
      $region17: #{decoder_forward.19} parent=11 // pred_check
        %p137 = pneg %p91
      $region18: #{decoder_forward.19} parent=11 // pred_check_branch
        %139 = sbr.rel (%p137) target = $region20
      $region19: #{decoder_forward.19} parent=11 // pred_region
        _
      $region20: #{decoder_forward.19} parent=11 // pred_fallthru
        _
    $region12: #{decoder_forward.19} parent=5 // pred_fallthru
      _
    %p140 = scmp.lt.s32.totalorder %s9, 128
    // Predicated region
    $region21: #{decoder_forward.19} parent=5 // pred_check
      %p141 = pneg %p140
    $region22: #{decoder_forward.19} parent=5 // pred_check_branch
      %143 = sbr.rel (%p141) target = $region24
    $region23: #{decoder_forward.19} parent=5 // pred_region
      // Predicated region
      $region25: #{decoder_forward.19} parent=23 // pred_check
        %p144 = pneg %p43
      $region26: #{decoder_forward.19} parent=23 // pred_check_branch
        %146 = sbr.rel (%p144) target = $region28
      $region27: #{decoder_forward.19} parent=23 // pred_region
        %p147 = scmp.lt.s32.totalorder %s16, 1
        %s148 = scalar_select %p147, %s16, 1
        %p149 = scmp.lt.s32.totalorder %s17, 63
        %s150 = scalar_select %p149, %s17, 63
        %s151 = smul.addr %s150, 8
        %s152 = smul.addr %s148, 512
        %s153 = sadd.s32 %s151, %s152
        %s154 = smul.addr %s153, 4
        %s155 = scalar_lea.vmem %s0, %s154
      $region28: #{decoder_forward.19} parent=23 // pred_fallthru
        _
    $region24: #{decoder_forward.19} parent=5 // pred_fallthru
      _
    %p156 = scmp.le.s32.totalorder 1, %s9
    %p157 = scmp.lt.s32.totalorder %s9, 129
    %p158 = pnand %p156, %p157
    %p159 = pneg %p158
    // Predicated region
    $region29: #{decoder_forward.19} parent=5 // pred_check
      _
    $region30: #{decoder_forward.19} parent=5 // pred_check_branch
      %161 = sbr.rel (%p158) target = $region32
    $region31: #{decoder_forward.19} parent=5 // pred_region
      %s162 = ssub.s32 %s9, 1
      %p163 = scmp.lt.s32.totalorder %s18, 1
      %s164 = scalar_select %p163, %s18, 1
      %p165 = scmp.lt.s32.totalorder %s19, 63
      %s166 = scalar_select %p165, %s19, 63
      %s167 = smul.addr %s166, 8
      %s168 = smul.addr %s164, 512
      %s169 = sadd.s32 %s167, %s168
      %s170 = smul.addr %s169, 4
      %s171 = scalar_lea.vmem %s0, %s170
      %p172 = pneg %p49
      %p173 = pneg %p46
      %p174 = pneg %p70
      %p175 = pneg %p67
      %p176 = pneg %p91
      %p177 = pneg %p88
      %p178 = pneg %p119
      %p179 = pneg %p116
      %s180 = smul.u32 2, %s19
      %p181 = scmp.lt.s32.totalorder %s18, 1
      %s182 = scalar_select %p181, %s18, 1
      %p183 = scmp.lt.s32.totalorder %s180, 127
      %s184 = scalar_select %p183, %s180, 127
      %s185 = smul.addr %s184, 8
      %s186 = smul.addr %s182, 1024
      %s187 = sadd.s32 %s185, %s186
      %s188 = smul.addr %s187, 4
      %s189 = scalar_lea.vmem %s3, %s188
      %p190 = scmp.lt.s32.totalorder %s18, 1
      %s191 = scalar_select %p190, %s18, 1
      %p192 = scmp.lt.s32.totalorder %s19, 63
      %s193 = scalar_select %p192, %s19, 63
      %s194 = smul.addr %s193, 8
      %s195 = smul.addr %s191, 512
      %s196 = sadd.s32 %s194, %s195
      %s197 = smul.addr %s196, 4
      %s198 = scalar_lea.vmem %s0, %s197
      %s199 = smul.u32 2, %s19
      %p200 = scmp.lt.s32.totalorder %s18, 1
      %s201 = scalar_select %p200, %s18, 1
      %p202 = scmp.lt.s32.totalorder %s199, 127
      %s203 = scalar_select %p202, %s199, 127
      %s204 = smul.addr %s203, 8
      %s205 = smul.addr %s201, 1024
      %s206 = sadd.s32 %s204, %s205
      %s207 = smul.addr %s206, 4
      %s208 = scalar_lea.vmem %s3, %s207
      %s209 = smul.u32 2, %s19
      %v211 = vld [vmem:[%s198] sm:$0xf]
      %v212 = vld [vmem:[%s198 + $0x4] sm:$0xf]
      %v213 = vld [vmem:[%s198 + $0x8] sm:$0xf]
      %v214 = vld [vmem:[%s198 + $0xc] sm:$0xf]
      %v215 = vld [vmem:[%s198 + $0x10] sm:$0xf]
      %v216 = vld [vmem:[%s198 + $0x14] sm:$0xf]
      %v217 = vld [vmem:[%s198 + $0x18] sm:$0xf]
      %v218 = vld [vmem:[%s198 + $0x1c] sm:$0xf]
      %v219 = vld [vmem:[%s2] sm:$0x1]
      %v220 = vld [vmem:[%s1] sm:$0x3]
      %v222 = vperm.slane %v219, 0
      %v232 = vunpack.c.l.b16 %v211
      %v233 = vunpack.c.l.b16 %v212
      %v234 = vunpack.c.l.b16 %v213
      %v235 = vunpack.c.l.b16 %v214
      %v236 = vunpack.c.l.b16 %v215
      %v237 = vunpack.c.l.b16 %v216
      %v238 = vunpack.c.l.b16 %v217
      %v239 = vunpack.c.l.b16 %v218
      %v240 = vpack.c.b16 %v233, %v232
      %v241 = vpack.c.b16 %v235, %v234
      %v242 = vpack.c.b16 %v237, %v236
      %v243 = vpack.c.b16 %v239, %v238
      %vm244 = vcmask 31744
      %v246 = vsel %vm244, %v240, 0
      %v249 = vsel %vm244, %v241, 0
      %v252 = vsel %vm244, %v242, 0
      %v255 = vsel %vm244, %v243, 0
      %vm257 = vcmask 1041408
      %v259 = vsel %vm257, %v220, 0
      %261 = vmatpush.bf16.msra.mxu0 0
      %262 = vmatpush.bf16.msra.mxu0 0
      %263 = vmatpush.bf16.msra.mxu0 0
      %264 = vmatpush.bf16.msra.mxu0 0
      %265 = vmatpush.bf16.msra.mxu0 0
      %266 = vmatpush.bf16.msra.mxu0 0
      %267 = vmatpush.bf16.msra.mxu0 0
      %268 = vmatpush.bf16.msra.mxu0 %v259
      %269 = vmatmul.bf16.gmra.mxu0 %v246
      %v270 = vpop.f32.mrf.mxu0
      %v271 = vadd.f32 %v222, %v270
      %v272 = vpop.f32.mrf.mxu0
      %v273 = vadd.f32 %v222, %v272
      %274 = vmatmul.bf16.gmra.mxu0 %v249
      %v275 = vpop.f32.mrf.mxu0
      %v276 = vadd.f32 %v222, %v275
      %v277 = vpop.f32.mrf.mxu0
      %v278 = vadd.f32 %v222, %v277
      %279 = vmatmul.bf16.gmra.mxu0 %v252
      %v280 = vpop.f32.mrf.mxu0
      %v281 = vadd.f32 %v222, %v280
      %v282 = vpop.f32.mrf.mxu0
      %v283 = vadd.f32 %v222, %v282
      %284 = vmatmul.bf16.gmra.mxu0 %v255
      %v285 = vpop.f32.mrf.mxu0
      %v286 = vadd.f32 %v222, %v285
      %v287 = vpop.f32.mrf.mxu0
      %v288 = vadd.f32 %v222, %v287
      %289 = vdwg.mxu0
      %v290 = vmax.f32 %v271, 0.0
      %v291 = vmax.f32 %v273, 0.0
      %v292 = vmax.f32 %v276, 0.0
      %v293 = vmax.f32 %v278, 0.0
      %v294 = vmax.f32 %v281, 0.0
      %v295 = vmax.f32 %v283, 0.0
      %v296 = vmax.f32 %v286, 0.0
      %v297 = vmax.f32 %v288, 0.0
      %v298 = vpack.c.bf16 %v290, %v290
      %v299 = vpack.c.bf16 %v291, %v291
      %v300 = vpack.c.bf16 %v292, %v292
      %v301 = vpack.c.bf16 %v293, %v293
      %v302 = vpack.c.bf16 %v294, %v294
      %v303 = vpack.c.bf16 %v295, %v295
      %v304 = vpack.c.bf16 %v296, %v296
      %v305 = vpack.c.bf16 %v297, %v297
      %vm306 = vcmask 27648
      %307 = vst.msk [vmem:[%s208] sm:$0xf] %vm306, %v298
      %308 = vst.msk [vmem:[%s208 + $0x4] sm:$0xf] %vm306, %v299
      %309 = vst.msk [vmem:[%s208 + $0x8] sm:$0xf] %vm306, %v300
      %310 = vst.msk [vmem:[%s208 + $0xc] sm:$0xf] %vm306, %v301
      %311 = vst.msk [vmem:[%s208 + $0x10] sm:$0xf] %vm306, %v302
      %312 = vst.msk [vmem:[%s208 + $0x14] sm:$0xf] %vm306, %v303
      %313 = vst.msk [vmem:[%s208 + $0x18] sm:$0xf] %vm306, %v304
      %314 = vst.msk [vmem:[%s208 + $0x1c] sm:$0xf] %vm306, %v305
      %s315 = scalar_lea.vmem %s1, 2
      %v316 = vld [vmem:[%s315] sm:$0x3]
      %v318 = vsel %vm257, %v316, 0
      %320 = vmatpush.bf16.msra.mxu0 0
      %321 = vmatpush.bf16.msra.mxu0 0
      %322 = vmatpush.bf16.msra.mxu0 0
      %323 = vmatpush.bf16.msra.mxu0 0
      %324 = vmatpush.bf16.msra.mxu0 0
      %325 = vmatpush.bf16.msra.mxu0 0
      %326 = vmatpush.bf16.msra.mxu0 0
      %327 = vmatpush.bf16.msra.mxu0 %v318
      %328 = vmatmul.bf16.gmra.mxu0 %v246
      %v329 = vpop.f32.mrf.mxu0
      %v330 = vadd.f32 %v222, %v329
      %v331 = vpop.f32.mrf.mxu0
      %v332 = vadd.f32 %v222, %v331
      %333 = vmatmul.bf16.gmra.mxu0 %v249
      %v334 = vpop.f32.mrf.mxu0
      %v335 = vadd.f32 %v222, %v334
      %v336 = vpop.f32.mrf.mxu0
      %v337 = vadd.f32 %v222, %v336
      %338 = vmatmul.bf16.gmra.mxu0 %v252
      %v339 = vpop.f32.mrf.mxu0
      %v340 = vadd.f32 %v222, %v339
      %v341 = vpop.f32.mrf.mxu0
      %v342 = vadd.f32 %v222, %v341
      %343 = vmatmul.bf16.gmra.mxu0 %v255
      %v344 = vpop.f32.mrf.mxu0
      %v345 = vadd.f32 %v222, %v344
      %v346 = vpop.f32.mrf.mxu0
      %v347 = vadd.f32 %v222, %v346
      %348 = vdwg.mxu0
      %v349 = vmax.f32 %v330, 0.0
      %v350 = vmax.f32 %v332, 0.0
      %v351 = vmax.f32 %v335, 0.0
      %v352 = vmax.f32 %v337, 0.0
      %v353 = vmax.f32 %v340, 0.0
      %v354 = vmax.f32 %v342, 0.0
      %v355 = vmax.f32 %v345, 0.0
      %v356 = vmax.f32 %v347, 0.0
      %v357 = vpack.c.bf16 %v349, %v349
      %v358 = vpack.c.bf16 %v350, %v350
      %v359 = vpack.c.bf16 %v351, %v351
      %v360 = vpack.c.bf16 %v352, %v352
      %v361 = vpack.c.bf16 %v353, %v353
      %v362 = vpack.c.bf16 %v354, %v354
      %v363 = vpack.c.bf16 %v355, %v355
      %v364 = vpack.c.bf16 %v356, %v356
      %s365 = scalar_lea.vmem %s208, 32
      %366 = vst.msk [vmem:[%s365] sm:$0xf] %vm306, %v357
      %367 = vst.msk [vmem:[%s365 + $0x4] sm:$0xf] %vm306, %v358
      %368 = vst.msk [vmem:[%s365 + $0x8] sm:$0xf] %vm306, %v359
      %369 = vst.msk [vmem:[%s365 + $0xc] sm:$0xf] %vm306, %v360
      %370 = vst.msk [vmem:[%s365 + $0x10] sm:$0xf] %vm306, %v361
      %371 = vst.msk [vmem:[%s365 + $0x14] sm:$0xf] %vm306, %v362
      %372 = vst.msk [vmem:[%s365 + $0x18] sm:$0xf] %vm306, %v363
      %373 = vst.msk [vmem:[%s365 + $0x1c] sm:$0xf] %vm306, %v364
      %s374 = smul.u32 2, %s19
      %p375 = scmp.lt.s32.totalorder %s18, 1
      %s376 = scalar_select %p375, %s18, 1
      %p377 = scmp.lt.s32.totalorder %s374, 127
      %s378 = scalar_select %p377, %s374, 127
      %s379 = smul.addr %s378, 8
      %s380 = smul.addr %s376, 1024
      %s381 = sadd.s32 %s379, %s380
      %s382 = smul.addr %s381, 4
      %s383 = scalar_lea.vmem %s3, %s382
      // Predicated region
      $region33: #{decoder_forward.19} parent=31 // pred_check
        %p384 = pneg %p116
      $region34: #{decoder_forward.19} parent=31 // pred_check_branch
        %386 = sbr.rel (%p384) target = $region36
      $region35: #{decoder_forward.19} parent=31 // pred_region
        %s387 = smul.u32 2, %s19
      $region36: #{decoder_forward.19} parent=31 // pred_fallthru
        _
    $region32: #{decoder_forward.19} parent=5 // pred_fallthru
      _
    %p388 = scmp.le.s32.totalorder 2, %s9
    // Predicated region
    $region37: #{decoder_forward.19} parent=5 // pred_check
      %p389 = pneg %p388
    $region38: #{decoder_forward.19} parent=5 // pred_check_branch
      %391 = sbr.rel (%p389) target = $region40
    $region39: #{decoder_forward.19} parent=5 // pred_region
      %s392 = ssub.s32 %s9, 2
      // Predicated region
      $region41: #{decoder_forward.19} parent=39 // pred_check
        %p393 = pneg %p122
      $region42: #{decoder_forward.19} parent=39 // pred_check_branch
        %395 = sbr.rel (%p393) target = $region44
      $region43: #{decoder_forward.19} parent=39 // pred_region
        %s396 = smul.u32 2, %s21
        %p397 = scmp.lt.s32.totalorder %s20, 1
        %s398 = scalar_select %p397, %s20, 1
        %p399 = scmp.lt.s32.totalorder %s396, 127
        %s400 = scalar_select %p399, %s396, 127
        %s401 = smul.addr %s400, 8
        %s402 = smul.addr %s398, 1024
        %s403 = sadd.s32 %s401, %s402
        %s404 = smul.addr %s403, 4
        %s405 = scalar_lea.vmem %s3, %s404
      $region44: #{decoder_forward.19} parent=39 // pred_fallthru
        _
    $region40: #{decoder_forward.19} parent=5 // pred_fallthru
      _
  $region6: #{decoder_forward.19} parent=0 // loop_footer
    %s13 = sadd.s32 1, %s9
  $region7: #{decoder_forward.19} parent=0 // loop_footer_branch
    %8 = sbr.rel target = $region3
  $region8: #{decoder_forward.19} parent=0 // loop_exit
    _

// kernel: decoder_forward.20
$region0: #{decoder_forward.20}
  #allocation0 [shape = 'u32[]', space=smem, size = 0x4, offset = 0x4, fixed_abs, tag = 'smem constant byte address 0x4 - core index']
  #allocation1 [shape = 'u32[72,128]{1,0:T(1,128)}', space=vmem, size = 0x9000, scoped, tag = 'internal scratch']
  %s0 = inlined_call_operand.vmem [shape: bf16[2,130,130,2], index: 0, kind: input, shape index: {}, may-alias: {0,1,2}]
  %s1 = inlined_call_operand.vmem [shape: bf16[2,130,130,2], index: 1, kind: input, shape index: {}, may-alias: {0,1,2}]
  %s2 = inlined_call_operand.vmem [shape: bf16[2,130,130,2], index: 2, kind: input, shape index: {}, may-alias: {0,1,2}]
  %s3 = inlined_call_operand.vmem [shape: bf16[9,2,2], index: 3, kind: input, shape index: {}]
  %s4 = inlined_call_operand.vmem [shape: f32[1,2], index: 4, kind: input, shape index: {}]
  %s5 = inlined_call_operand.vmem [shape: bf16[2,128,128,2], index: 5, kind: output, shape index: {}]
  %s6 = sld [smem:[#allocation0]]
  $region53: #{decoder_forward.20} parent=0
    _
  %s8 = ssub.s32 1, %s6
  %s9 = scalar_select 0, %s8, %s6
  loop: start=0, step=1, limit=258
  $region2: #{decoder_forward.20} parent=0 // loop_pre_header
    _
  $region3: #{decoder_forward.20} parent=0 // loop_header
    %s11 = sphi 0, %s15
    %p12 = scmp.ge.s32.totalorder %s11, 258
    %s18 = sphi 0, %s30
    %s19 = sphi 0, %s26
    %s20 = sphi 0, %s18
    %s21 = sphi 0, %s19
    %s22 = sphi 0, %s20
    %s23 = sphi 0, %s21
    %s35 = sphi 0, %s37
    %s38 = sphi 0, %s35
    %s39 = sphi 0, %s38
    %s55 = sphi 0, %s39
    %s65 = sphi 0, %s67
    %s68 = sphi 0, %s65
    %s69 = sphi 0, %s68
    %s85 = sphi 0, %s69
    %s95 = sphi 0, %s97
    %s98 = sphi 0, %s95
    %s99 = sphi 0, %s98
    %s115 = sphi 0, %s99
    %s119 = sphi 0, %s119
    %s121 = sphi 0, %s119
    %s122 = sphi 0, %s121
    %s136 = sphi 0, %s122
    %s140 = sphi 0, %s140
    %s142 = sphi 0, %s140
    %s143 = sphi 0, %s142
    %s157 = sphi 0, %s143
    %s165 = sphi 0, %s167
    %s168 = sphi 0, %s165
    %s169 = sphi 0, %s168
    %s185 = sphi 0, %s169
  $region4: #{decoder_forward.20} parent=0 // loop_header_branch
    %14 = sbr.rel (%p12) target = $region8
  $region5: #{decoder_forward.20} parent=0 // loop_body
    %s16 = ssub.s32 %s11, 1
    %s17 = ssub.s32 %s11, 2
    %s24 = sadd.s32 1, %s19
    %p25 = scmp.ge.s32.totalorder %s24, 128
    %s26 = scalar_select %p25, 0, %s24
    %s27 = sadd.s32 1, %s18
    %s28 = scalar_select %p25, %s27, %s18
    %p29 = scmp.ge.s32.totalorder %s28, 2
    %s30 = scalar_select %p29, 0, %s28
    %s31 = ssub.s32 %s18, %s30
    %s32 = ssub.s32 %s19, %s26
    %s33 = sor.u32 %s31, %s32
    %p34 = scmp.eq.s32.totalorder %s33, 0
    %s36 = sadd.s32 %s35, 1
    %s37 = scalar_select %p34, %s35, %s36
    %p40 = pneg %p34
    %p41 = scmp.eq.s32.totalorder %s11, 255
    %p42 = por %p40, %p41
    %p43 = scmp.ne.s32.totalorder %s35, %s38
    %p44 = scmp.eq.s32.totalorder %s11, 0
    %p45 = por %p43, %p44
    %p46 = scmp.ne.s32.totalorder %s35, %s38
    %p47 = scmp.eq.s32.totalorder %s16, 255
    %p48 = por %p46, %p47
    %p49 = scmp.ne.s32.totalorder %s38, %s39
    %p50 = scmp.eq.s32.totalorder %s16, 0
    %p51 = por %p49, %p50
    %p52 = scmp.ne.s32.totalorder %s38, %s39
    %p53 = scmp.eq.s32.totalorder %s17, 255
    %p54 = por %p52, %p53
    %p56 = scmp.ne.s32.totalorder %s39, %s55
    %p57 = scmp.eq.s32.totalorder %s17, 0
    %p58 = por %p56, %p57
    %s59 = sadd.s32 %s19, 1
    %s60 = sadd.s32 %s26, 1
    %s61 = ssub.s32 %s18, %s30
    %s62 = ssub.s32 %s59, %s60
    %s63 = sor.u32 %s61, %s62
    %p64 = scmp.eq.s32.totalorder %s63, 0
    %s66 = sadd.s32 %s65, 1
    %s67 = scalar_select %p64, %s65, %s66
    %p70 = pneg %p64
    %p71 = scmp.eq.s32.totalorder %s11, 255
    %p72 = por %p70, %p71
    %p73 = scmp.ne.s32.totalorder %s65, %s68
    %p74 = scmp.eq.s32.totalorder %s11, 0
    %p75 = por %p73, %p74
    %p76 = scmp.ne.s32.totalorder %s65, %s68
    %p77 = scmp.eq.s32.totalorder %s16, 255
    %p78 = por %p76, %p77
    %p79 = scmp.ne.s32.totalorder %s68, %s69
    %p80 = scmp.eq.s32.totalorder %s16, 0
    %p81 = por %p79, %p80
    %p82 = scmp.ne.s32.totalorder %s68, %s69
    %p83 = scmp.eq.s32.totalorder %s17, 255
    %p84 = por %p82, %p83
    %p86 = scmp.ne.s32.totalorder %s69, %s85
    %p87 = scmp.eq.s32.totalorder %s17, 0
    %p88 = por %p86, %p87
    %s89 = sadd.s32 %s19, 2
    %s90 = sadd.s32 %s26, 2
    %s91 = ssub.s32 %s18, %s30
    %s92 = ssub.s32 %s89, %s90
    %s93 = sor.u32 %s91, %s92
    %p94 = scmp.eq.s32.totalorder %s93, 0
    %s96 = sadd.s32 %s95, 1
    %s97 = scalar_select %p94, %s95, %s96
    %p100 = pneg %p94
    %p101 = scmp.eq.s32.totalorder %s11, 255
    %p102 = por %p100, %p101
    %p103 = scmp.ne.s32.totalorder %s95, %s98
    %p104 = scmp.eq.s32.totalorder %s11, 0
    %p105 = por %p103, %p104
    %p106 = scmp.ne.s32.totalorder %s95, %s98
    %p107 = scmp.eq.s32.totalorder %s16, 255
    %p108 = por %p106, %p107
    %p109 = scmp.ne.s32.totalorder %s98, %s99
    %p110 = scmp.eq.s32.totalorder %s16, 0
    %p111 = por %p109, %p110
    %p112 = scmp.ne.s32.totalorder %s98, %s99
    %p113 = scmp.eq.s32.totalorder %s17, 255
    %p114 = por %p112, %p113
    %p116 = scmp.ne.s32.totalorder %s99, %s115
    %p117 = scmp.eq.s32.totalorder %s17, 0
    %p118 = por %p116, %p117
    %s120 = sadd.s32 %s119, 1
    %p123 = scmp.eq.s32.totalorder %s11, 255
    %p124 = scmp.ne.s32.totalorder %s119, %s121
    %p125 = scmp.eq.s32.totalorder %s11, 0
    %p126 = por %p124, %p125
    %p127 = scmp.ne.s32.totalorder %s119, %s121
    %p128 = scmp.eq.s32.totalorder %s16, 255
    %p129 = por %p127, %p128
    %p130 = scmp.ne.s32.totalorder %s121, %s122
    %p131 = scmp.eq.s32.totalorder %s16, 0
    %p132 = por %p130, %p131
    %p133 = scmp.ne.s32.totalorder %s121, %s122
    %p134 = scmp.eq.s32.totalorder %s17, 255
    %p135 = por %p133, %p134
    %p137 = scmp.ne.s32.totalorder %s122, %s136
    %p138 = scmp.eq.s32.totalorder %s17, 0
    %p139 = por %p137, %p138
    %s141 = sadd.s32 %s140, 1
    %p144 = scmp.eq.s32.totalorder %s11, 255
    %p145 = scmp.ne.s32.totalorder %s140, %s142
    %p146 = scmp.eq.s32.totalorder %s11, 0
    %p147 = por %p145, %p146
    %p148 = scmp.ne.s32.totalorder %s140, %s142
    %p149 = scmp.eq.s32.totalorder %s16, 255
    %p150 = por %p148, %p149
    %p151 = scmp.ne.s32.totalorder %s142, %s143
    %p152 = scmp.eq.s32.totalorder %s16, 0
    %p153 = por %p151, %p152
    %p154 = scmp.ne.s32.totalorder %s142, %s143
    %p155 = scmp.eq.s32.totalorder %s17, 255
    %p156 = por %p154, %p155
    %p158 = scmp.ne.s32.totalorder %s143, %s157
    %p159 = scmp.eq.s32.totalorder %s17, 0
    %p160 = por %p158, %p159
    %s161 = ssub.s32 %s18, %s30
    %s162 = ssub.s32 %s19, %s26
    %s163 = sor.u32 %s161, %s162
    %p164 = scmp.eq.s32.totalorder %s163, 0
    %s166 = sadd.s32 %s165, 1
    %s167 = scalar_select %p164, %s165, %s166
    %p170 = pneg %p164
    %p171 = scmp.eq.s32.totalorder %s11, 255
    %p172 = por %p170, %p171
    %p173 = scmp.ne.s32.totalorder %s165, %s168
    %p174 = scmp.eq.s32.totalorder %s11, 0
    %p175 = por %p173, %p174
    %p176 = scmp.ne.s32.totalorder %s165, %s168
    %p177 = scmp.eq.s32.totalorder %s16, 255
    %p178 = por %p176, %p177
    %p179 = scmp.ne.s32.totalorder %s168, %s169
    %p180 = scmp.eq.s32.totalorder %s16, 0
    %p181 = por %p179, %p180
    %p182 = scmp.ne.s32.totalorder %s168, %s169
    %p183 = scmp.eq.s32.totalorder %s17, 255
    %p184 = por %p182, %p183
    %p186 = scmp.ne.s32.totalorder %s169, %s185
    %p187 = scmp.eq.s32.totalorder %s17, 0
    %p188 = por %p186, %p187
    %p189 = scmp.le.s32.totalorder 1, %s11
    %p190 = scmp.lt.s32.totalorder %s11, 257
    %p191 = pnand %p189, %p190
    %p192 = pneg %p191
    // Predicated region
    $region9: #{decoder_forward.20} parent=5 // pred_check
      _
    $region10: #{decoder_forward.20} parent=5 // pred_check_branch
      %194 = sbr.rel (%p191) target = $region12
    $region11: #{decoder_forward.20} parent=5 // pred_region
      %s195 = ssub.s32 %s11, 1
      // Predicated region
      $region13: #{decoder_forward.20} parent=11 // pred_check
        %p196 = pneg %p132
      $region14: #{decoder_forward.20} parent=11 // pred_check_branch
        %198 = sbr.rel (%p196) target = $region16
      $region15: #{decoder_forward.20} parent=11 // pred_region
        _
      $region16: #{decoder_forward.20} parent=11 // pred_fallthru
        _
      // Predicated region
      $region17: #{decoder_forward.20} parent=11 // pred_check
        %p199 = pneg %p153
      $region18: #{decoder_forward.20} parent=11 // pred_check_branch
        %201 = sbr.rel (%p199) target = $region20
      $region19: #{decoder_forward.20} parent=11 // pred_region
        _
      $region20: #{decoder_forward.20} parent=11 // pred_fallthru
        _
    $region12: #{decoder_forward.20} parent=5 // pred_fallthru
      _
    %p202 = scmp.lt.s32.totalorder %s11, 256
    // Predicated region
    $region21: #{decoder_forward.20} parent=5 // pred_check
      %p203 = pneg %p202
    $region22: #{decoder_forward.20} parent=5 // pred_check_branch
      %205 = sbr.rel (%p203) target = $region24
    $region23: #{decoder_forward.20} parent=5 // pred_region
      // Predicated region
      $region25: #{decoder_forward.20} parent=23 // pred_check
        %p206 = pneg %p45
      $region26: #{decoder_forward.20} parent=23 // pred_check_branch
        %208 = sbr.rel (%p206) target = $region28
      $region27: #{decoder_forward.20} parent=23 // pred_region
        %p209 = scmp.lt.s32.totalorder %s18, 1
        %s210 = scalar_select %p209, %s18, 1
        %p211 = scmp.lt.s32.totalorder %s19, 129
        %s212 = scalar_select %p211, %s19, 129
        %s213 = smul.addr %s212, 17
        %s214 = smul.addr %s210, 2210
        %s215 = sadd.s32 %s213, %s214
        %s216 = smul.addr %s215, 4
        %s217 = scalar_lea.vmem %s0, %s216
      $region28: #{decoder_forward.20} parent=23 // pred_fallthru
        _
      // Predicated region
      $region29: #{decoder_forward.20} parent=23 // pred_check
        %p218 = pneg %p75
      $region30: #{decoder_forward.20} parent=23 // pred_check_branch
        %220 = sbr.rel (%p218) target = $region32
      $region31: #{decoder_forward.20} parent=23 // pred_region
        %s221 = sadd.s32 %s19, 1
        %p222 = scmp.lt.s32.totalorder %s18, 1
        %s223 = scalar_select %p222, %s18, 1
        %p224 = scmp.lt.s32.totalorder %s221, 129
        %s225 = scalar_select %p224, %s221, 129
        %s226 = smul.addr %s225, 17
        %s227 = smul.addr %s223, 2210
        %s228 = sadd.s32 %s226, %s227
        %s229 = smul.addr %s228, 4
        %s230 = scalar_lea.vmem %s1, %s229
        %s231 = sadd.s32 %s19, 1
      $region32: #{decoder_forward.20} parent=23 // pred_fallthru
        _
      // Predicated region
      $region33: #{decoder_forward.20} parent=23 // pred_check
        %p232 = pneg %p105
      $region34: #{decoder_forward.20} parent=23 // pred_check_branch
        %234 = sbr.rel (%p232) target = $region36
      $region35: #{decoder_forward.20} parent=23 // pred_region
        %s235 = sadd.s32 %s19, 2
        %p236 = scmp.lt.s32.totalorder %s18, 1
        %s237 = scalar_select %p236, %s18, 1
        %p238 = scmp.lt.s32.totalorder %s235, 129
        %s239 = scalar_select %p238, %s235, 129
        %s240 = smul.addr %s239, 17
        %s241 = smul.addr %s237, 2210
        %s242 = sadd.s32 %s240, %s241
        %s243 = smul.addr %s242, 4
        %s244 = scalar_lea.vmem %s2, %s243
        %s245 = sadd.s32 %s19, 2
      $region36: #{decoder_forward.20} parent=23 // pred_fallthru
        _
    $region24: #{decoder_forward.20} parent=5 // pred_fallthru
      _
    %p246 = scmp.le.s32.totalorder 1, %s11
    %p247 = scmp.lt.s32.totalorder %s11, 257
    %p248 = pnand %p246, %p247
    %p249 = pneg %p248
    // Predicated region
    $region37: #{decoder_forward.20} parent=5 // pred_check
      _
    $region38: #{decoder_forward.20} parent=5 // pred_check_branch
      %251 = sbr.rel (%p248) target = $region40
    $region39: #{decoder_forward.20} parent=5 // pred_region
      %s252 = ssub.s32 %s11, 1
      %p253 = scmp.lt.s32.totalorder %s20, 1
      %s254 = scalar_select %p253, %s20, 1
      %p255 = scmp.lt.s32.totalorder %s21, 129
      %s256 = scalar_select %p255, %s21, 129
      %s257 = smul.addr %s256, 17
      %s258 = smul.addr %s254, 2210
      %s259 = sadd.s32 %s257, %s258
      %s260 = smul.addr %s259, 4
      %s261 = scalar_lea.vmem %s0, %s260
      %p262 = pneg %p51
      %p263 = pneg %p48
      %s264 = sadd.s32 %s21, 1
      %p265 = scmp.lt.s32.totalorder %s20, 1
      %s266 = scalar_select %p265, %s20, 1
      %p267 = scmp.lt.s32.totalorder %s264, 129
      %s268 = scalar_select %p267, %s264, 129
      %s269 = smul.addr %s268, 17
      %s270 = smul.addr %s266, 2210
      %s271 = sadd.s32 %s269, %s270
      %s272 = smul.addr %s271, 4
      %s273 = scalar_lea.vmem %s1, %s272
      %p274 = pneg %p81
      %p275 = pneg %p78
      %s276 = sadd.s32 %s21, 2
      %p277 = scmp.lt.s32.totalorder %s20, 1
      %s278 = scalar_select %p277, %s20, 1
      %p279 = scmp.lt.s32.totalorder %s276, 129
      %s280 = scalar_select %p279, %s276, 129
      %s281 = smul.addr %s280, 17
      %s282 = smul.addr %s278, 2210
      %s283 = sadd.s32 %s281, %s282
      %s284 = smul.addr %s283, 4
      %s285 = scalar_lea.vmem %s2, %s284
      %p286 = pneg %p111
      %p287 = pneg %p108
      %p288 = pneg %p132
      %p289 = pneg %p129
      %p290 = pneg %p153
      %p291 = pneg %p150
      %p292 = pneg %p181
      %p293 = pneg %p178
      %p294 = scmp.lt.s32.totalorder %s20, 1
      %s295 = scalar_select %p294, %s20, 1
      %p296 = scmp.lt.s32.totalorder %s21, 127
      %s297 = scalar_select %p296, %s21, 127
      %s298 = smul.addr %s297, 16
      %s299 = smul.addr %s295, 2048
      %s300 = sadd.s32 %s298, %s299
      %s301 = smul.addr %s300, 4
      %s302 = scalar_lea.vmem %s5, %s301
      %p303 = scmp.lt.s32.totalorder %s20, 1
      %s304 = scalar_select %p303, %s20, 1
      %p305 = scmp.lt.s32.totalorder %s21, 129
      %s306 = scalar_select %p305, %s21, 129
      %s307 = smul.addr %s306, 17
      %s308 = smul.addr %s304, 2210
      %s309 = sadd.s32 %s307, %s308
      %s310 = smul.addr %s309, 4
      %s311 = scalar_lea.vmem %s0, %s310
      %s312 = sadd.s32 %s21, 1
      %p313 = scmp.lt.s32.totalorder %s20, 1
      %s314 = scalar_select %p313, %s20, 1
      %p315 = scmp.lt.s32.totalorder %s312, 129
      %s316 = scalar_select %p315, %s312, 129
      %s317 = smul.addr %s316, 17
      %s318 = smul.addr %s314, 2210
      %s319 = sadd.s32 %s317, %s318
      %s320 = smul.addr %s319, 4
      %s321 = scalar_lea.vmem %s1, %s320
      %s322 = sadd.s32 %s21, 1
      %s323 = sadd.s32 %s21, 2
      %p324 = scmp.lt.s32.totalorder %s20, 1
      %s325 = scalar_select %p324, %s20, 1
      %p326 = scmp.lt.s32.totalorder %s323, 129
      %s327 = scalar_select %p326, %s323, 129
      %s328 = smul.addr %s327, 17
      %s329 = smul.addr %s325, 2210
      %s330 = sadd.s32 %s328, %s329
      %s331 = smul.addr %s330, 4
      %s332 = scalar_lea.vmem %s2, %s331
      %s333 = sadd.s32 %s21, 2
      %p334 = scmp.lt.s32.totalorder %s20, 1
      %s335 = scalar_select %p334, %s20, 1
      %p336 = scmp.lt.s32.totalorder %s21, 127
      %s337 = scalar_select %p336, %s21, 127
      %s338 = smul.addr %s337, 16
      %s339 = smul.addr %s335, 2048
      %s340 = sadd.s32 %s338, %s339
      %s341 = smul.addr %s340, 4
      %s342 = scalar_lea.vmem %s5, %s341
      %v344 = vld [vmem:[%s311] sm:$0xf]
      %v345 = vld [vmem:[%s311 + $0x4] sm:$0xf]
      %v346 = vld [vmem:[%s311 + $0x8] sm:$0xf]
      %v347 = vld [vmem:[%s311 + $0xc] sm:$0xf]
      %v348 = vld [vmem:[%s311 + $0x10] sm:$0xf]
      %v349 = vld [vmem:[%s311 + $0x14] sm:$0xf]
      %v350 = vld [vmem:[%s311 + $0x18] sm:$0xf]
      %v351 = vld [vmem:[%s311 + $0x1c] sm:$0xf]
      %v352 = vld [vmem:[%s311 + $0x20] sm:$0xf]
      %v353 = vld [vmem:[%s311 + $0x24] sm:$0xf]
      %v354 = vld [vmem:[%s311 + $0x28] sm:$0xf]
      %v355 = vld [vmem:[%s311 + $0x2c] sm:$0xf]
      %v356 = vld [vmem:[%s311 + $0x30] sm:$0xf]
      %v357 = vld [vmem:[%s311 + $0x34] sm:$0xf]
      %v358 = vld [vmem:[%s311 + $0x38] sm:$0xf]
      %v359 = vld [vmem:[%s311 + $0x3c] sm:$0xf]
      %v360 = vld [vmem:[%s3] sm:$0x1]
      %v361 = vld [vmem:[%s311 + $0x40] sm:$0x1]
      %s362 = scalar_lea.vmem %s3, 1
      %v363 = vld [vmem:[%s362] sm:$0x1]
      %v381 = vunpack.c.l.b16 %v344
      %v382 = vunpack.c.l.b16 %v345
      %v383 = vunpack.c.l.b16 %v346
      %v384 = vunpack.c.l.b16 %v347
      %v385 = vunpack.c.l.b16 %v348
      %v386 = vunpack.c.l.b16 %v349
      %v387 = vunpack.c.l.b16 %v350
      %v388 = vunpack.c.l.b16 %v351
      %v389 = vunpack.c.l.b16 %v352
      %v390 = vunpack.c.l.b16 %v353
      %v391 = vunpack.c.l.b16 %v354
      %v392 = vunpack.c.l.b16 %v355
      %v393 = vunpack.c.l.b16 %v356
      %v394 = vunpack.c.l.b16 %v357
      %v395 = vunpack.c.l.b16 %v358
      %v396 = vunpack.c.l.b16 %v359
      %v397 = vunpack.c.l.b16 %v361
      %v398 = vpack.c.b16 %v382, %v381
      %v399 = vpack.c.b16 %v384, %v383
      %v400 = vpack.c.b16 %v386, %v385
      %v401 = vpack.c.b16 %v388, %v387
      %v402 = vpack.c.b16 %v390, %v389
      %v403 = vpack.c.b16 %v392, %v391
      %v404 = vpack.c.b16 %v394, %v393
      %v405 = vpack.c.b16 %v396, %v395
      %v406 = vpack.c.b16 %v397, %v397
      %vm407 = vsmask.f32 7424
      %v409 = vshrl.u32 %v398, 16
      %v411 = vshll.u32 %v398, 16
      %v413 = vrot.slane %v411, 1
      %v414 = vor.u32 %v409, %v413
      %v416 = vshll.u32 %v399, 16
      %v418 = vrot.slane %v416, 1
      %v419 = vsel %vm407, %v414, %v418
      %v420 = vshrl.u32 %v399, 16
      %v422 = vor.u32 %v420, %v418
      %v424 = vshll.u32 %v400, 16
      %v426 = vrot.slane %v424, 1
      %v427 = vsel %vm407, %v422, %v426
      %v428 = vshrl.u32 %v400, 16
      %v430 = vor.u32 %v428, %v426
      %v432 = vshll.u32 %v401, 16
      %v434 = vrot.slane %v432, 1
      %v435 = vsel %vm407, %v430, %v434
      %v436 = vshrl.u32 %v401, 16
      %v438 = vor.u32 %v436, %v434
      %v440 = vshll.u32 %v402, 16
      %v442 = vrot.slane %v440, 1
      %v443 = vsel %vm407, %v438, %v442
      %v444 = vshrl.u32 %v402, 16
      %v446 = vor.u32 %v444, %v442
      %v448 = vshll.u32 %v403, 16
      %v450 = vrot.slane %v448, 1
      %v451 = vsel %vm407, %v446, %v450
      %v452 = vshrl.u32 %v403, 16
      %v454 = vor.u32 %v452, %v450
      %v456 = vshll.u32 %v404, 16
      %v458 = vrot.slane %v456, 1
      %v459 = vsel %vm407, %v454, %v458
      %v460 = vshrl.u32 %v404, 16
      %v462 = vor.u32 %v460, %v458
      %v464 = vshll.u32 %v405, 16
      %v466 = vrot.slane %v464, 1
      %v467 = vsel %vm407, %v462, %v466
      %v468 = vshrl.u32 %v405, 16
      %v470 = vor.u32 %v468, %v466
      %v472 = vshll.u32 %v406, 16
      %v474 = vrot.slane %v472, 1
      %v475 = vsel %vm407, %v470, %v474
      %vm476 = vcmask 15360
      %v478 = vsel %vm476, %v419, 0
      %v481 = vsel %vm476, %v427, 0
      %v484 = vsel %vm476, %v435, 0
      %v487 = vsel %vm476, %v443, 0
      %v490 = vsel %vm476, %v451, 0
      %v493 = vsel %vm476, %v459, 0
      %v496 = vsel %vm476, %v467, 0
      %v499 = vsel %vm476, %v475, 0
      %vm501 = vcmask 1040384
      %v503 = vsel %vm501, %v363, 0
      %505 = vmatpush.bf16.msra.mxu0 0
      %506 = vmatpush.bf16.msra.mxu0 0
      %507 = vmatpush.bf16.msra.mxu0 0
      %508 = vmatpush.bf16.msra.mxu0 0
      %509 = vmatpush.bf16.msra.mxu0 0
      %510 = vmatpush.bf16.msra.mxu0 0
      %511 = vmatpush.bf16.msra.mxu0 0
      %512 = vmatpush.bf16.msra.mxu0 %v503
      %513 = vmatmul.bf16.gmra.mxu0 %v478
      %v514 = vpop.f32.mrf.mxu0
      %v515 = vadd.f32 0.0, %v514
      %v516 = vpop.f32.mrf.mxu0
      %v517 = vadd.f32 0.0, %v516
      %518 = vmatmul.bf16.gmra.mxu0 %v481
      %v519 = vpop.f32.mrf.mxu0
      %v520 = vadd.f32 0.0, %v519
      %v521 = vpop.f32.mrf.mxu0
      %v522 = vadd.f32 0.0, %v521
      %523 = vmatmul.bf16.gmra.mxu0 %v484
      %v524 = vpop.f32.mrf.mxu0
      %v525 = vadd.f32 0.0, %v524
      %v526 = vpop.f32.mrf.mxu0
      %v527 = vadd.f32 0.0, %v526
      %528 = vmatmul.bf16.gmra.mxu0 %v487
      %v529 = vpop.f32.mrf.mxu0
      %v530 = vadd.f32 0.0, %v529
      %v531 = vpop.f32.mrf.mxu0
      %v532 = vadd.f32 0.0, %v531
      %533 = vmatmul.bf16.gmra.mxu0 %v490
      %v534 = vpop.f32.mrf.mxu0
      %v535 = vadd.f32 0.0, %v534
      %v536 = vpop.f32.mrf.mxu0
      %v537 = vadd.f32 0.0, %v536
      %538 = vmatmul.bf16.gmra.mxu0 %v493
      %v539 = vpop.f32.mrf.mxu0
      %v540 = vadd.f32 0.0, %v539
      %v541 = vpop.f32.mrf.mxu0
      %v542 = vadd.f32 0.0, %v541
      %543 = vmatmul.bf16.gmra.mxu0 %v496
      %v544 = vpop.f32.mrf.mxu0
      %v545 = vadd.f32 0.0, %v544
      %v546 = vpop.f32.mrf.mxu0
      %v547 = vadd.f32 0.0, %v546
      %548 = vmatmul.bf16.gmra.mxu0 %v499
      %v549 = vpop.f32.mrf.mxu0
      %v550 = vadd.f32 0.0, %v549
      %v551 = vpop.f32.mrf.mxu0
      %v552 = vadd.f32 0.0, %v551
      %553 = vdwg.mxu0
      %v554 = vsel %vm476, %v398, 0
      %v556 = vsel %vm476, %v399, 0
      %v558 = vsel %vm476, %v400, 0
      %v560 = vsel %vm476, %v401, 0
      %v562 = vsel %vm476, %v402, 0
      %v564 = vsel %vm476, %v403, 0
      %v566 = vsel %vm476, %v404, 0
      %v568 = vsel %vm476, %v405, 0
      %v571 = vsel %vm501, %v360, 0
      %573 = vmatpush.bf16.msra.mxu0 0
      %574 = vmatpush.bf16.msra.mxu0 0
      %575 = vmatpush.bf16.msra.mxu0 0
      %576 = vmatpush.bf16.msra.mxu0 0
      %577 = vmatpush.bf16.msra.mxu0 0
      %578 = vmatpush.bf16.msra.mxu0 0
      %579 = vmatpush.bf16.msra.mxu0 0
      %580 = vmatpush.bf16.msra.mxu0 %v571
      %581 = vmatmul.bf16.gmra.mxu0 %v554
      %v582 = vpop.f32.mrf.mxu0
      %v583 = vadd.f32 %v515, %v582
      %v584 = vpop.f32.mrf.mxu0
      %v585 = vadd.f32 %v517, %v584
      %586 = vmatmul.bf16.gmra.mxu0 %v556
      %v587 = vpop.f32.mrf.mxu0
      %v588 = vadd.f32 %v520, %v587
      %v589 = vpop.f32.mrf.mxu0
      %v590 = vadd.f32 %v522, %v589
      %591 = vmatmul.bf16.gmra.mxu0 %v558
      %v592 = vpop.f32.mrf.mxu0
      %v593 = vadd.f32 %v525, %v592
      %v594 = vpop.f32.mrf.mxu0
      %v595 = vadd.f32 %v527, %v594
      %596 = vmatmul.bf16.gmra.mxu0 %v560
      %v597 = vpop.f32.mrf.mxu0
      %v598 = vadd.f32 %v530, %v597
      %v599 = vpop.f32.mrf.mxu0
      %v600 = vadd.f32 %v532, %v599
      %601 = vmatmul.bf16.gmra.mxu0 %v562
      %v602 = vpop.f32.mrf.mxu0
      %v603 = vadd.f32 %v535, %v602
      %v604 = vpop.f32.mrf.mxu0
      %v605 = vadd.f32 %v537, %v604
      %606 = vmatmul.bf16.gmra.mxu0 %v564
      %v607 = vpop.f32.mrf.mxu0
      %v608 = vadd.f32 %v540, %v607
      %v609 = vpop.f32.mrf.mxu0
      %v610 = vadd.f32 %v542, %v609
      %611 = vmatmul.bf16.gmra.mxu0 %v566
      %v612 = vpop.f32.mrf.mxu0
      %v613 = vadd.f32 %v545, %v612
      %v614 = vpop.f32.mrf.mxu0
      %v615 = vadd.f32 %v547, %v614
      %616 = vmatmul.bf16.gmra.mxu0 %v568
      %v617 = vpop.f32.mrf.mxu0
      %v618 = vadd.f32 %v550, %v617
      %v619 = vpop.f32.mrf.mxu0
      %v620 = vadd.f32 %v552, %v619
      %621 = vdwg.mxu0
      %v622 = vld [vmem:[%s311] sm:$0xe]
      %s623 = scalar_lea.vmem %s3, 2
      %v624 = vld [vmem:[%s623] sm:$0x1]
      %v626 = vunpack.c.l.b16 %v622
      %v627 = vpack.c.b16 %v382, %v626
      %vm628 = vcmask 1046528
      %v629 = vrot.slane %v627, 1
      %v630 = vrot.slane %v399, 1
      %v631 = vsel %vm628, %v629, %v630
      %v632 = vrot.slane %v400, 1
      %v633 = vsel %vm628, %v630, %v632
      %v634 = vrot.slane %v401, 1
      %v635 = vsel %vm628, %v632, %v634
      %v636 = vrot.slane %v402, 1
      %v637 = vsel %vm628, %v634, %v636
      %v638 = vrot.slane %v403, 1
      %v639 = vsel %vm628, %v636, %v638
      %v640 = vrot.slane %v404, 1
      %v641 = vsel %vm628, %v638, %v640
      %v642 = vrot.slane %v405, 1
      %v643 = vsel %vm628, %v640, %v642
      %v644 = vrot.slane %v406, 1
      %v645 = vsel %vm628, %v642, %v644
      %v647 = vsel %vm476, %v631, 0
      %v650 = vsel %vm476, %v633, 0
      %v653 = vsel %vm476, %v635, 0
      %v656 = vsel %vm476, %v637, 0
      %v659 = vsel %vm476, %v639, 0
      %v662 = vsel %vm476, %v641, 0
      %v665 = vsel %vm476, %v643, 0
      %v668 = vsel %vm476, %v645, 0
      %v671 = vsel %vm501, %v624, 0
      %673 = vmatpush.bf16.msra.mxu0 0
      %674 = vmatpush.bf16.msra.mxu0 0
      %675 = vmatpush.bf16.msra.mxu0 0
      %676 = vmatpush.bf16.msra.mxu0 0
      %677 = vmatpush.bf16.msra.mxu0 0
      %678 = vmatpush.bf16.msra.mxu0 0
      %679 = vmatpush.bf16.msra.mxu0 0
      %680 = vmatpush.bf16.msra.mxu0 %v671
      %681 = vmatmul.bf16.gmra.mxu0 %v647
      %v682 = vpop.f32.mrf.mxu0
      %v683 = vadd.f32 0.0, %v682
      %v684 = vpop.f32.mrf.mxu0
      %v685 = vadd.f32 0.0, %v684
      %686 = vmatmul.bf16.gmra.mxu0 %v650
      %v687 = vpop.f32.mrf.mxu0
      %v688 = vadd.f32 0.0, %v687
      %v689 = vpop.f32.mrf.mxu0
      %v690 = vadd.f32 0.0, %v689
      %691 = vmatmul.bf16.gmra.mxu0 %v653
      %v692 = vpop.f32.mrf.mxu0
      %v693 = vadd.f32 0.0, %v692
      %v694 = vpop.f32.mrf.mxu0
      %v695 = vadd.f32 0.0, %v694
      %696 = vmatmul.bf16.gmra.mxu0 %v656
      %v697 = vpop.f32.mrf.mxu0
      %v698 = vadd.f32 0.0, %v697
      %v699 = vpop.f32.mrf.mxu0
      %v700 = vadd.f32 0.0, %v699
      %701 = vmatmul.bf16.gmra.mxu0 %v659
      %v702 = vpop.f32.mrf.mxu0
      %v703 = vadd.f32 0.0, %v702
      %v704 = vpop.f32.mrf.mxu0
      %v705 = vadd.f32 0.0, %v704
      %706 = vmatmul.bf16.gmra.mxu0 %v662
      %v707 = vpop.f32.mrf.mxu0
      %v708 = vadd.f32 0.0, %v707
      %v709 = vpop.f32.mrf.mxu0
      %v710 = vadd.f32 0.0, %v709
      %711 = vmatmul.bf16.gmra.mxu0 %v665
      %v712 = vpop.f32.mrf.mxu0
      %v713 = vadd.f32 0.0, %v712
      %v714 = vpop.f32.mrf.mxu0
      %v715 = vadd.f32 0.0, %v714
      %716 = vmatmul.bf16.gmra.mxu0 %v668
      %v717 = vpop.f32.mrf.mxu0
      %v718 = vadd.f32 0.0, %v717
      %v719 = vpop.f32.mrf.mxu0
      %v720 = vadd.f32 0.0, %v719
      %721 = vdwg.mxu0
      %v722 = vadd.f32 %v583, %v683
      %v723 = vadd.f32 %v585, %v685
      %v724 = vadd.f32 %v588, %v688
      %v725 = vadd.f32 %v590, %v690
      %v726 = vadd.f32 %v593, %v693
      %v727 = vadd.f32 %v595, %v695
      %v728 = vadd.f32 %v598, %v698
      %v729 = vadd.f32 %v600, %v700
      %v730 = vadd.f32 %v603, %v703
      %v731 = vadd.f32 %v605, %v705
      %v732 = vadd.f32 %v608, %v708
      %v733 = vadd.f32 %v610, %v710
      %v734 = vadd.f32 %v613, %v713
      %v735 = vadd.f32 %v615, %v715
      %v736 = vadd.f32 %v618, %v718
      %v737 = vadd.f32 %v620, %v720
      %v738 = vld [vmem:[%s321] sm:$0xf]
      %v739 = vld [vmem:[%s321 + $0x4] sm:$0xf]
      %v740 = vld [vmem:[%s321 + $0x8] sm:$0xf]
      %v741 = vld [vmem:[%s321 + $0xc] sm:$0xf]
      %v742 = vld [vmem:[%s321 + $0x10] sm:$0xf]
      %v743 = vld [vmem:[%s321 + $0x14] sm:$0xf]
      %v744 = vld [vmem:[%s321 + $0x18] sm:$0xf]
      %v745 = vld [vmem:[%s321 + $0x1c] sm:$0xf]
      %v746 = vld [vmem:[%s321 + $0x20] sm:$0xf]
      %v747 = vld [vmem:[%s321 + $0x24] sm:$0xf]
      %v748 = vld [vmem:[%s321 + $0x28] sm:$0xf]
      %v749 = vld [vmem:[%s321 + $0x2c] sm:$0xf]
      %v750 = vld [vmem:[%s321 + $0x30] sm:$0xf]
      %v751 = vld [vmem:[%s321 + $0x34] sm:$0xf]
      %v752 = vld [vmem:[%s321 + $0x38] sm:$0xf]
      %v753 = vld [vmem:[%s321 + $0x3c] sm:$0xf]
      %s754 = scalar_lea.vmem %s3, 3
      %v755 = vld [vmem:[%s754] sm:$0x1]
      %v772 = vunpack.c.l.b16 %v738
      %v773 = vunpack.c.l.b16 %v739
      %v774 = vunpack.c.l.b16 %v740
      %v775 = vunpack.c.l.b16 %v741
      %v776 = vunpack.c.l.b16 %v742
      %v777 = vunpack.c.l.b16 %v743
      %v778 = vunpack.c.l.b16 %v744
      %v779 = vunpack.c.l.b16 %v745
      %v780 = vunpack.c.l.b16 %v746
      %v781 = vunpack.c.l.b16 %v747
      %v782 = vunpack.c.l.b16 %v748
      %v783 = vunpack.c.l.b16 %v749
      %v784 = vunpack.c.l.b16 %v750
      %v785 = vunpack.c.l.b16 %v751
      %v786 = vunpack.c.l.b16 %v752
      %v787 = vunpack.c.l.b16 %v753
      %v788 = vpack.c.b16 %v773, %v772
      %v789 = vpack.c.b16 %v775, %v774
      %v790 = vpack.c.b16 %v777, %v776
      %v791 = vpack.c.b16 %v779, %v778
      %v792 = vpack.c.b16 %v781, %v780
      %v793 = vpack.c.b16 %v783, %v782
      %v794 = vpack.c.b16 %v785, %v784
      %v795 = vpack.c.b16 %v787, %v786
      %v797 = vsel %vm476, %v788, 0
      %v800 = vsel %vm476, %v789, 0
      %v803 = vsel %vm476, %v790, 0
      %v806 = vsel %vm476, %v791, 0
      %v809 = vsel %vm476, %v792, 0
      %v812 = vsel %vm476, %v793, 0
      %v815 = vsel %vm476, %v794, 0
      %v818 = vsel %vm476, %v795, 0
      %v821 = vsel %vm501, %v755, 0
      %823 = vmatpush.bf16.msra.mxu0 0
      %824 = vmatpush.bf16.msra.mxu0 0
      %825 = vmatpush.bf16.msra.mxu0 0
      %826 = vmatpush.bf16.msra.mxu0 0
      %827 = vmatpush.bf16.msra.mxu0 0
      %828 = vmatpush.bf16.msra.mxu0 0
      %829 = vmatpush.bf16.msra.mxu0 0
      %830 = vmatpush.bf16.msra.mxu0 %v821
      %831 = vmatmul.bf16.gmra.mxu0 %v797
      %v832 = vpop.f32.mrf.mxu0
      %v833 = vadd.f32 0.0, %v832
      %v834 = vpop.f32.mrf.mxu0
      %v835 = vadd.f32 0.0, %v834
      %836 = vmatmul.bf16.gmra.mxu0 %v800
      %v837 = vpop.f32.mrf.mxu0
      %v838 = vadd.f32 0.0, %v837
      %v839 = vpop.f32.mrf.mxu0
      %v840 = vadd.f32 0.0, %v839
      %841 = vmatmul.bf16.gmra.mxu0 %v803
      %v842 = vpop.f32.mrf.mxu0
      %v843 = vadd.f32 0.0, %v842
      %v844 = vpop.f32.mrf.mxu0
      %v845 = vadd.f32 0.0, %v844
      %846 = vmatmul.bf16.gmra.mxu0 %v806
      %v847 = vpop.f32.mrf.mxu0
      %v848 = vadd.f32 0.0, %v847
      %v849 = vpop.f32.mrf.mxu0
      %v850 = vadd.f32 0.0, %v849
      %851 = vmatmul.bf16.gmra.mxu0 %v809
      %v852 = vpop.f32.mrf.mxu0
      %v853 = vadd.f32 0.0, %v852
      %v854 = vpop.f32.mrf.mxu0
      %v855 = vadd.f32 0.0, %v854
      %856 = vmatmul.bf16.gmra.mxu0 %v812
      %v857 = vpop.f32.mrf.mxu0
      %v858 = vadd.f32 0.0, %v857
      %v859 = vpop.f32.mrf.mxu0
      %v860 = vadd.f32 0.0, %v859
      %861 = vmatmul.bf16.gmra.mxu0 %v815
      %v862 = vpop.f32.mrf.mxu0
      %v863 = vadd.f32 0.0, %v862
      %v864 = vpop.f32.mrf.mxu0
      %v865 = vadd.f32 0.0, %v864
      %866 = vmatmul.bf16.gmra.mxu0 %v818
      %v867 = vpop.f32.mrf.mxu0
      %v868 = vadd.f32 0.0, %v867
      %v869 = vpop.f32.mrf.mxu0
      %v870 = vadd.f32 0.0, %v869
      %871 = vdwg.mxu0
      %v872 = vadd.f32 %v722, %v833
      %v873 = vadd.f32 %v723, %v835
      %v874 = vadd.f32 %v724, %v838
      %v875 = vadd.f32 %v725, %v840
      %v876 = vadd.f32 %v726, %v843
      %v877 = vadd.f32 %v727, %v845
      %v878 = vadd.f32 %v728, %v848
      %v879 = vadd.f32 %v729, %v850
      %v880 = vadd.f32 %v730, %v853
      %v881 = vadd.f32 %v731, %v855
      %v882 = vadd.f32 %v732, %v858
      %v883 = vadd.f32 %v733, %v860
      %v884 = vadd.f32 %v734, %v863
      %v885 = vadd.f32 %v735, %v865
      %v886 = vadd.f32 %v736, %v868
      %v887 = vadd.f32 %v737, %v870
      %v888 = vld [vmem:[%s321] sm:$0xf]
      %v889 = vld [vmem:[%s321 + $0x4] sm:$0xf]
      %v890 = vld [vmem:[%s321 + $0x8] sm:$0xf]
      %v891 = vld [vmem:[%s321 + $0xc] sm:$0xf]
      %v892 = vld [vmem:[%s321 + $0x10] sm:$0xf]
      %v893 = vld [vmem:[%s321 + $0x14] sm:$0xf]
      %v894 = vld [vmem:[%s321 + $0x18] sm:$0xf]
      %v895 = vld [vmem:[%s321 + $0x1c] sm:$0xf]
      %v896 = vld [vmem:[%s321 + $0x20] sm:$0xf]
      %v897 = vld [vmem:[%s321 + $0x24] sm:$0xf]
      %v898 = vld [vmem:[%s321 + $0x28] sm:$0xf]
      %v899 = vld [vmem:[%s321 + $0x2c] sm:$0xf]
      %v900 = vld [vmem:[%s321 + $0x30] sm:$0xf]
      %v901 = vld [vmem:[%s321 + $0x34] sm:$0xf]
      %v902 = vld [vmem:[%s321 + $0x38] sm:$0xf]
      %v903 = vld [vmem:[%s321 + $0x3c] sm:$0xf]
      %v904 = vld [vmem:[%s321 + $0x40] sm:$0x1]
      %s905 = scalar_lea.vmem %s3, 4
      %v906 = vld [vmem:[%s905] sm:$0x1]
      %v924 = vunpack.c.l.b16 %v888
      %v925 = vunpack.c.l.b16 %v889
      %v926 = vunpack.c.l.b16 %v890
      %v927 = vunpack.c.l.b16 %v891
      %v928 = vunpack.c.l.b16 %v892
      %v929 = vunpack.c.l.b16 %v893
      %v930 = vunpack.c.l.b16 %v894
      %v931 = vunpack.c.l.b16 %v895
      %v932 = vunpack.c.l.b16 %v896
      %v933 = vunpack.c.l.b16 %v897
      %v934 = vunpack.c.l.b16 %v898
      %v935 = vunpack.c.l.b16 %v899
      %v936 = vunpack.c.l.b16 %v900
      %v937 = vunpack.c.l.b16 %v901
      %v938 = vunpack.c.l.b16 %v902
      %v939 = vunpack.c.l.b16 %v903
      %v940 = vunpack.c.l.b16 %v904
      %v941 = vpack.c.b16 %v925, %v924
      %v942 = vpack.c.b16 %v927, %v926
      %v943 = vpack.c.b16 %v929, %v928
      %v944 = vpack.c.b16 %v931, %v930
      %v945 = vpack.c.b16 %v933, %v932
      %v946 = vpack.c.b16 %v935, %v934
      %v947 = vpack.c.b16 %v937, %v936
      %v948 = vpack.c.b16 %v939, %v938
      %v949 = vpack.c.b16 %v940, %v940
      %v951 = vshrl.u32 %v941, 16
      %v953 = vshll.u32 %v941, 16
      %v955 = vrot.slane %v953, 1
      %v956 = vor.u32 %v951, %v955
      %v958 = vshll.u32 %v942, 16
      %v960 = vrot.slane %v958, 1
      %v961 = vsel %vm407, %v956, %v960
      %v962 = vshrl.u32 %v942, 16
      %v964 = vor.u32 %v962, %v960
      %v966 = vshll.u32 %v943, 16
      %v968 = vrot.slane %v966, 1
      %v969 = vsel %vm407, %v964, %v968
      %v970 = vshrl.u32 %v943, 16
      %v972 = vor.u32 %v970, %v968
      %v974 = vshll.u32 %v944, 16
      %v976 = vrot.slane %v974, 1
      %v977 = vsel %vm407, %v972, %v976
      %v978 = vshrl.u32 %v944, 16
      %v980 = vor.u32 %v978, %v976
      %v982 = vshll.u32 %v945, 16
      %v984 = vrot.slane %v982, 1
      %v985 = vsel %vm407, %v980, %v984
      %v986 = vshrl.u32 %v945, 16
      %v988 = vor.u32 %v986, %v984
      %v990 = vshll.u32 %v946, 16
      %v992 = vrot.slane %v990, 1
      %v993 = vsel %vm407, %v988, %v992
      %v994 = vshrl.u32 %v946, 16
      %v996 = vor.u32 %v994, %v992
      %v998 = vshll.u32 %v947, 16
      %v1000 = vrot.slane %v998, 1
      %v1001 = vsel %vm407, %v996, %v1000
      %v1002 = vshrl.u32 %v947, 16
      %v1004 = vor.u32 %v1002, %v1000
      %v1006 = vshll.u32 %v948, 16
      %v1008 = vrot.slane %v1006, 1
      %v1009 = vsel %vm407, %v1004, %v1008
      %v1010 = vshrl.u32 %v948, 16
      %v1012 = vor.u32 %v1010, %v1008
      %v1014 = vshll.u32 %v949, 16
      %v1016 = vrot.slane %v1014, 1
      %v1017 = vsel %vm407, %v1012, %v1016
      %v1019 = vsel %vm476, %v961, 0
      %v1022 = vsel %vm476, %v969, 0
      %v1025 = vsel %vm476, %v977, 0
      %v1028 = vsel %vm476, %v985, 0
      %v1031 = vsel %vm476, %v993, 0
      %v1034 = vsel %vm476, %v1001, 0
      %v1037 = vsel %vm476, %v1009, 0
      %v1040 = vsel %vm476, %v1017, 0
      %v1043 = vsel %vm501, %v906, 0
      %1045 = vmatpush.bf16.msra.mxu0 0
      %1046 = vmatpush.bf16.msra.mxu0 0
      %1047 = vmatpush.bf16.msra.mxu0 0
      %1048 = vmatpush.bf16.msra.mxu0 0
      %1049 = vmatpush.bf16.msra.mxu0 0
      %1050 = vmatpush.bf16.msra.mxu0 0
      %1051 = vmatpush.bf16.msra.mxu0 0
      %1052 = vmatpush.bf16.msra.mxu0 %v1043
      %1053 = vmatmul.bf16.gmra.mxu0 %v1019
      %v1054 = vpop.f32.mrf.mxu0
      %v1055 = vadd.f32 0.0, %v1054
      %v1056 = vpop.f32.mrf.mxu0
      %v1057 = vadd.f32 0.0, %v1056
      %1058 = vmatmul.bf16.gmra.mxu0 %v1022
      %v1059 = vpop.f32.mrf.mxu0
      %v1060 = vadd.f32 0.0, %v1059
      %v1061 = vpop.f32.mrf.mxu0
      %v1062 = vadd.f32 0.0, %v1061
      %1063 = vmatmul.bf16.gmra.mxu0 %v1025
      %v1064 = vpop.f32.mrf.mxu0
      %v1065 = vadd.f32 0.0, %v1064
      %v1066 = vpop.f32.mrf.mxu0
      %v1067 = vadd.f32 0.0, %v1066
      %1068 = vmatmul.bf16.gmra.mxu0 %v1028
      %v1069 = vpop.f32.mrf.mxu0
      %v1070 = vadd.f32 0.0, %v1069
      %v1071 = vpop.f32.mrf.mxu0
      %v1072 = vadd.f32 0.0, %v1071
      %1073 = vmatmul.bf16.gmra.mxu0 %v1031
      %v1074 = vpop.f32.mrf.mxu0
      %v1075 = vadd.f32 0.0, %v1074
      %v1076 = vpop.f32.mrf.mxu0
      %v1077 = vadd.f32 0.0, %v1076
      %1078 = vmatmul.bf16.gmra.mxu0 %v1034
      %v1079 = vpop.f32.mrf.mxu0
      %v1080 = vadd.f32 0.0, %v1079
      %v1081 = vpop.f32.mrf.mxu0
      %v1082 = vadd.f32 0.0, %v1081
      %1083 = vmatmul.bf16.gmra.mxu0 %v1037
      %v1084 = vpop.f32.mrf.mxu0
      %v1085 = vadd.f32 0.0, %v1084
      %v1086 = vpop.f32.mrf.mxu0
      %v1087 = vadd.f32 0.0, %v1086
      %1088 = vmatmul.bf16.gmra.mxu0 %v1040
      %v1089 = vpop.f32.mrf.mxu0
      %v1090 = vadd.f32 0.0, %v1089
      %v1091 = vpop.f32.mrf.mxu0
      %v1092 = vadd.f32 0.0, %v1091
      %1093 = vdwg.mxu0
      %v1094 = vadd.f32 %v872, %v1055
      %v1095 = vadd.f32 %v873, %v1057
      %v1096 = vadd.f32 %v874, %v1060
      %v1097 = vadd.f32 %v875, %v1062
      %v1098 = vadd.f32 %v876, %v1065
      %v1099 = vadd.f32 %v877, %v1067
      %v1100 = vadd.f32 %v878, %v1070
      %v1101 = vadd.f32 %v879, %v1072
      %v1102 = vadd.f32 %v880, %v1075
      %v1103 = vadd.f32 %v881, %v1077
      %v1104 = vadd.f32 %v882, %v1080
      %v1105 = vadd.f32 %v883, %v1082
      %v1106 = vadd.f32 %v884, %v1085
      %v1107 = vadd.f32 %v885, %v1087
      %v1108 = vadd.f32 %v886, %v1090
      %v1109 = vadd.f32 %v887, %v1092
      %v1110 = vld [vmem:[%s321] sm:$0xe]
      %s1111 = scalar_lea.vmem %s3, 5
      %v1112 = vld [vmem:[%s1111] sm:$0x1]
      %v1114 = vunpack.c.l.b16 %v1110
      %v1115 = vpack.c.b16 %v925, %v1114
      %v1116 = vrot.slane %v1115, 1
      %v1117 = vrot.slane %v942, 1
      %v1118 = vsel %vm628, %v1116, %v1117
      %v1119 = vrot.slane %v943, 1
      %v1120 = vsel %vm628, %v1117, %v1119
      %v1121 = vrot.slane %v944, 1
      %v1122 = vsel %vm628, %v1119, %v1121
      %v1123 = vrot.slane %v945, 1
      %v1124 = vsel %vm628, %v1121, %v1123
      %v1125 = vrot.slane %v946, 1
      %v1126 = vsel %vm628, %v1123, %v1125
      %v1127 = vrot.slane %v947, 1
      %v1128 = vsel %vm628, %v1125, %v1127
      %v1129 = vrot.slane %v948, 1
      %v1130 = vsel %vm628, %v1127, %v1129
      %v1131 = vrot.slane %v949, 1
      %v1132 = vsel %vm628, %v1129, %v1131
      %v1134 = vsel %vm476, %v1118, 0
      %v1137 = vsel %vm476, %v1120, 0
      %v1140 = vsel %vm476, %v1122, 0
      %v1143 = vsel %vm476, %v1124, 0
      %v1146 = vsel %vm476, %v1126, 0
      %v1149 = vsel %vm476, %v1128, 0
      %v1152 = vsel %vm476, %v1130, 0
      %v1155 = vsel %vm476, %v1132, 0
      %v1158 = vsel %vm501, %v1112, 0
      %1160 = vmatpush.bf16.msra.mxu0 0
      %1161 = vmatpush.bf16.msra.mxu0 0
      %1162 = vmatpush.bf16.msra.mxu0 0
      %1163 = vmatpush.bf16.msra.mxu0 0
      %1164 = vmatpush.bf16.msra.mxu0 0
      %1165 = vmatpush.bf16.msra.mxu0 0
      %1166 = vmatpush.bf16.msra.mxu0 0
      %1167 = vmatpush.bf16.msra.mxu0 %v1158
      %1168 = vmatmul.bf16.gmra.mxu0 %v1134
      %v1169 = vpop.f32.mrf.mxu0
      %v1170 = vadd.f32 0.0, %v1169
      %v1171 = vpop.f32.mrf.mxu0
      %v1172 = vadd.f32 0.0, %v1171
      %1173 = vmatmul.bf16.gmra.mxu0 %v1137
      %v1174 = vpop.f32.mrf.mxu0
      %v1175 = vadd.f32 0.0, %v1174
      %v1176 = vpop.f32.mrf.mxu0
      %v1177 = vadd.f32 0.0, %v1176
      %1178 = vmatmul.bf16.gmra.mxu0 %v1140
      %v1179 = vpop.f32.mrf.mxu0
      %v1180 = vadd.f32 0.0, %v1179
      %v1181 = vpop.f32.mrf.mxu0
      %v1182 = vadd.f32 0.0, %v1181
      %1183 = vmatmul.bf16.gmra.mxu0 %v1143
      %v1184 = vpop.f32.mrf.mxu0
      %v1185 = vadd.f32 0.0, %v1184
      %v1186 = vpop.f32.mrf.mxu0
      %v1187 = vadd.f32 0.0, %v1186
      %1188 = vmatmul.bf16.gmra.mxu0 %v1146
      %v1189 = vpop.f32.mrf.mxu0
      %v1190 = vadd.f32 0.0, %v1189
      %v1191 = vpop.f32.mrf.mxu0
      %v1192 = vadd.f32 0.0, %v1191
      %1193 = vmatmul.bf16.gmra.mxu0 %v1149
      %v1194 = vpop.f32.mrf.mxu0
      %v1195 = vadd.f32 0.0, %v1194
      %v1196 = vpop.f32.mrf.mxu0
      %v1197 = vadd.f32 0.0, %v1196
      %1198 = vmatmul.bf16.gmra.mxu0 %v1152
      %v1199 = vpop.f32.mrf.mxu0
      %v1200 = vadd.f32 0.0, %v1199
      %v1201 = vpop.f32.mrf.mxu0
      %v1202 = vadd.f32 0.0, %v1201
      %1203 = vmatmul.bf16.gmra.mxu0 %v1155
      %v1204 = vpop.f32.mrf.mxu0
      %v1205 = vadd.f32 0.0, %v1204
      %v1206 = vpop.f32.mrf.mxu0
      %v1207 = vadd.f32 0.0, %v1206
      %1208 = vdwg.mxu0
      %v1209 = vadd.f32 %v1094, %v1170
      %v1210 = vadd.f32 %v1095, %v1172
      %v1211 = vadd.f32 %v1096, %v1175
      %v1212 = vadd.f32 %v1097, %v1177
      %v1213 = vadd.f32 %v1098, %v1180
      %v1214 = vadd.f32 %v1099, %v1182
      %v1215 = vadd.f32 %v1100, %v1185
      %v1216 = vadd.f32 %v1101, %v1187
      %v1217 = vadd.f32 %v1102, %v1190
      %v1218 = vadd.f32 %v1103, %v1192
      %v1219 = vadd.f32 %v1104, %v1195
      %v1220 = vadd.f32 %v1105, %v1197
      %v1221 = vadd.f32 %v1106, %v1200
      %v1222 = vadd.f32 %v1107, %v1202
      %v1223 = vadd.f32 %v1108, %v1205
      %v1224 = vadd.f32 %v1109, %v1207
      %v1225 = vld [vmem:[%s332] sm:$0xf]
      %v1226 = vld [vmem:[%s332 + $0x4] sm:$0xf]
      %v1227 = vld [vmem:[%s332 + $0x8] sm:$0xf]
      %v1228 = vld [vmem:[%s332 + $0xc] sm:$0xf]
      %v1229 = vld [vmem:[%s332 + $0x10] sm:$0xf]
      %v1230 = vld [vmem:[%s332 + $0x14] sm:$0xf]
      %v1231 = vld [vmem:[%s332 + $0x18] sm:$0xf]
      %v1232 = vld [vmem:[%s332 + $0x1c] sm:$0xf]
      %v1233 = vld [vmem:[%s332 + $0x20] sm:$0xf]
      %v1234 = vld [vmem:[%s332 + $0x24] sm:$0xf]
      %v1235 = vld [vmem:[%s332 + $0x28] sm:$0xf]
      %v1236 = vld [vmem:[%s332 + $0x2c] sm:$0xf]
      %v1237 = vld [vmem:[%s332 + $0x30] sm:$0xf]
      %v1238 = vld [vmem:[%s332 + $0x34] sm:$0xf]
      %v1239 = vld [vmem:[%s332 + $0x38] sm:$0xf]
      %v1240 = vld [vmem:[%s332 + $0x3c] sm:$0xf]
      %s1241 = scalar_lea.vmem %s3, 6
      %v1242 = vld [vmem:[%s1241] sm:$0x1]
      %v1259 = vunpack.c.l.b16 %v1225
      %v1260 = vunpack.c.l.b16 %v1226
      %v1261 = vunpack.c.l.b16 %v1227
      %v1262 = vunpack.c.l.b16 %v1228
      %v1263 = vunpack.c.l.b16 %v1229
      %v1264 = vunpack.c.l.b16 %v1230
      %v1265 = vunpack.c.l.b16 %v1231
      %v1266 = vunpack.c.l.b16 %v1232
      %v1267 = vunpack.c.l.b16 %v1233
      %v1268 = vunpack.c.l.b16 %v1234
      %v1269 = vunpack.c.l.b16 %v1235
      %v1270 = vunpack.c.l.b16 %v1236
      %v1271 = vunpack.c.l.b16 %v1237
      %v1272 = vunpack.c.l.b16 %v1238
      %v1273 = vunpack.c.l.b16 %v1239
      %v1274 = vunpack.c.l.b16 %v1240
      %v1275 = vpack.c.b16 %v1260, %v1259
      %v1276 = vpack.c.b16 %v1262, %v1261
      %v1277 = vpack.c.b16 %v1264, %v1263
      %v1278 = vpack.c.b16 %v1266, %v1265
      %v1279 = vpack.c.b16 %v1268, %v1267
      %v1280 = vpack.c.b16 %v1270, %v1269
      %v1281 = vpack.c.b16 %v1272, %v1271
      %v1282 = vpack.c.b16 %v1274, %v1273
      %v1284 = vsel %vm476, %v1275, 0
      %v1287 = vsel %vm476, %v1276, 0
      %v1290 = vsel %vm476, %v1277, 0
      %v1293 = vsel %vm476, %v1278, 0
      %v1296 = vsel %vm476, %v1279, 0
      %v1299 = vsel %vm476, %v1280, 0
      %v1302 = vsel %vm476, %v1281, 0
      %v1305 = vsel %vm476, %v1282, 0
      %v1308 = vsel %vm501, %v1242, 0
      %1310 = vmatpush.bf16.msra.mxu0 0
      %1311 = vmatpush.bf16.msra.mxu0 0
      %1312 = vmatpush.bf16.msra.mxu0 0
      %1313 = vmatpush.bf16.msra.mxu0 0
      %1314 = vmatpush.bf16.msra.mxu0 0
      %1315 = vmatpush.bf16.msra.mxu0 0
      %1316 = vmatpush.bf16.msra.mxu0 0
      %1317 = vmatpush.bf16.msra.mxu0 %v1308
      %1318 = vmatmul.bf16.gmra.mxu0 %v1284
      %v1319 = vpop.f32.mrf.mxu0
      %v1320 = vadd.f32 0.0, %v1319
      %v1321 = vpop.f32.mrf.mxu0
      %v1322 = vadd.f32 0.0, %v1321
      %1323 = vmatmul.bf16.gmra.mxu0 %v1287
      %v1324 = vpop.f32.mrf.mxu0
      %v1325 = vadd.f32 0.0, %v1324
      %v1326 = vpop.f32.mrf.mxu0
      %v1327 = vadd.f32 0.0, %v1326
      %1328 = vmatmul.bf16.gmra.mxu0 %v1290
      %v1329 = vpop.f32.mrf.mxu0
      %v1330 = vadd.f32 0.0, %v1329
      %v1331 = vpop.f32.mrf.mxu0
      %v1332 = vadd.f32 0.0, %v1331
      %1333 = vmatmul.bf16.gmra.mxu0 %v1293
      %v1334 = vpop.f32.mrf.mxu0
      %v1335 = vadd.f32 0.0, %v1334
      %v1336 = vpop.f32.mrf.mxu0
      %v1337 = vadd.f32 0.0, %v1336
      %1338 = vmatmul.bf16.gmra.mxu0 %v1296
      %v1339 = vpop.f32.mrf.mxu0
      %v1340 = vadd.f32 0.0, %v1339
      %v1341 = vpop.f32.mrf.mxu0
      %v1342 = vadd.f32 0.0, %v1341
      %1343 = vmatmul.bf16.gmra.mxu0 %v1299
      %v1344 = vpop.f32.mrf.mxu0
      %v1345 = vadd.f32 0.0, %v1344
      %v1346 = vpop.f32.mrf.mxu0
      %v1347 = vadd.f32 0.0, %v1346
      %1348 = vmatmul.bf16.gmra.mxu0 %v1302
      %v1349 = vpop.f32.mrf.mxu0
      %v1350 = vadd.f32 0.0, %v1349
      %v1351 = vpop.f32.mrf.mxu0
      %v1352 = vadd.f32 0.0, %v1351
      %1353 = vmatmul.bf16.gmra.mxu0 %v1305
      %v1354 = vpop.f32.mrf.mxu0
      %v1355 = vadd.f32 0.0, %v1354
      %v1356 = vpop.f32.mrf.mxu0
      %v1357 = vadd.f32 0.0, %v1356
      %1358 = vdwg.mxu0
      %v1359 = vadd.f32 %v1209, %v1320
      %v1360 = vadd.f32 %v1210, %v1322
      %v1361 = vadd.f32 %v1211, %v1325
      %v1362 = vadd.f32 %v1212, %v1327
      %v1363 = vadd.f32 %v1213, %v1330
      %v1364 = vadd.f32 %v1214, %v1332
      %v1365 = vadd.f32 %v1215, %v1335
      %v1366 = vadd.f32 %v1216, %v1337
      %v1367 = vadd.f32 %v1217, %v1340
      %v1368 = vadd.f32 %v1218, %v1342
      %v1369 = vadd.f32 %v1219, %v1345
      %v1370 = vadd.f32 %v1220, %v1347
      %v1371 = vadd.f32 %v1221, %v1350
      %v1372 = vadd.f32 %v1222, %v1352
      %v1373 = vadd.f32 %v1223, %v1355
      %v1374 = vadd.f32 %v1224, %v1357
      %v1375 = vld [vmem:[%s332] sm:$0xf]
      %v1376 = vld [vmem:[%s332 + $0x4] sm:$0xf]
      %v1377 = vld [vmem:[%s332 + $0x8] sm:$0xf]
      %v1378 = vld [vmem:[%s332 + $0xc] sm:$0xf]
      %v1379 = vld [vmem:[%s332 + $0x10] sm:$0xf]
      %v1380 = vld [vmem:[%s332 + $0x14] sm:$0xf]
      %v1381 = vld [vmem:[%s332 + $0x18] sm:$0xf]
      %v1382 = vld [vmem:[%s332 + $0x1c] sm:$0xf]
      %v1383 = vld [vmem:[%s332 + $0x20] sm:$0xf]
      %v1384 = vld [vmem:[%s332 + $0x24] sm:$0xf]
      %v1385 = vld [vmem:[%s332 + $0x28] sm:$0xf]
      %v1386 = vld [vmem:[%s332 + $0x2c] sm:$0xf]
      %v1387 = vld [vmem:[%s332 + $0x30] sm:$0xf]
      %v1388 = vld [vmem:[%s332 + $0x34] sm:$0xf]
      %v1389 = vld [vmem:[%s332 + $0x38] sm:$0xf]
      %v1390 = vld [vmem:[%s332 + $0x3c] sm:$0xf]
      %v1391 = vld [vmem:[%s332 + $0x40] sm:$0x1]
      %s1392 = scalar_lea.vmem %s3, 7
      %v1393 = vld [vmem:[%s1392] sm:$0x1]
      %v1411 = vunpack.c.l.b16 %v1375
      %v1412 = vunpack.c.l.b16 %v1376
      %v1413 = vunpack.c.l.b16 %v1377
      %v1414 = vunpack.c.l.b16 %v1378
      %v1415 = vunpack.c.l.b16 %v1379
      %v1416 = vunpack.c.l.b16 %v1380
      %v1417 = vunpack.c.l.b16 %v1381
      %v1418 = vunpack.c.l.b16 %v1382
      %v1419 = vunpack.c.l.b16 %v1383
      %v1420 = vunpack.c.l.b16 %v1384
      %v1421 = vunpack.c.l.b16 %v1385
      %v1422 = vunpack.c.l.b16 %v1386
      %v1423 = vunpack.c.l.b16 %v1387
      %v1424 = vunpack.c.l.b16 %v1388
      %v1425 = vunpack.c.l.b16 %v1389
      %v1426 = vunpack.c.l.b16 %v1390
      %v1427 = vunpack.c.l.b16 %v1391
      %v1428 = vpack.c.b16 %v1412, %v1411
      %v1429 = vpack.c.b16 %v1414, %v1413
      %v1430 = vpack.c.b16 %v1416, %v1415
      %v1431 = vpack.c.b16 %v1418, %v1417
      %v1432 = vpack.c.b16 %v1420, %v1419
      %v1433 = vpack.c.b16 %v1422, %v1421
      %v1434 = vpack.c.b16 %v1424, %v1423
      %v1435 = vpack.c.b16 %v1426, %v1425
      %v1436 = vpack.c.b16 %v1427, %v1427
      %v1438 = vshrl.u32 %v1428, 16
      %v1440 = vshll.u32 %v1428, 16
      %v1442 = vrot.slane %v1440, 1
      %v1443 = vor.u32 %v1438, %v1442
      %v1445 = vshll.u32 %v1429, 16
      %v1447 = vrot.slane %v1445, 1
      %v1448 = vsel %vm407, %v1443, %v1447
      %v1449 = vshrl.u32 %v1429, 16
      %v1451 = vor.u32 %v1449, %v1447
      %v1453 = vshll.u32 %v1430, 16
      %v1455 = vrot.slane %v1453, 1
      %v1456 = vsel %vm407, %v1451, %v1455
      %v1457 = vshrl.u32 %v1430, 16
      %v1459 = vor.u32 %v1457, %v1455
      %v1461 = vshll.u32 %v1431, 16
      %v1463 = vrot.slane %v1461, 1
      %v1464 = vsel %vm407, %v1459, %v1463
      %v1465 = vshrl.u32 %v1431, 16
      %v1467 = vor.u32 %v1465, %v1463
      %v1469 = vshll.u32 %v1432, 16
      %v1471 = vrot.slane %v1469, 1
      %v1472 = vsel %vm407, %v1467, %v1471
      %v1473 = vshrl.u32 %v1432, 16
      %v1475 = vor.u32 %v1473, %v1471
      %v1477 = vshll.u32 %v1433, 16
      %v1479 = vrot.slane %v1477, 1
      %v1480 = vsel %vm407, %v1475, %v1479
      %v1481 = vshrl.u32 %v1433, 16
      %v1483 = vor.u32 %v1481, %v1479
      %v1485 = vshll.u32 %v1434, 16
      %v1487 = vrot.slane %v1485, 1
      %v1488 = vsel %vm407, %v1483, %v1487
      %v1489 = vshrl.u32 %v1434, 16
      %v1491 = vor.u32 %v1489, %v1487
      %v1493 = vshll.u32 %v1435, 16
      %v1495 = vrot.slane %v1493, 1
      %v1496 = vsel %vm407, %v1491, %v1495
      %v1497 = vshrl.u32 %v1435, 16
      %v1499 = vor.u32 %v1497, %v1495
      %v1501 = vshll.u32 %v1436, 16
      %v1503 = vrot.slane %v1501, 1
      %v1504 = vsel %vm407, %v1499, %v1503
      %v1506 = vsel %vm476, %v1448, 0
      %v1509 = vsel %vm476, %v1456, 0
      %v1512 = vsel %vm476, %v1464, 0
      %v1515 = vsel %vm476, %v1472, 0
      %v1518 = vsel %vm476, %v1480, 0
      %v1521 = vsel %vm476, %v1488, 0
      %v1524 = vsel %vm476, %v1496, 0
      %v1527 = vsel %vm476, %v1504, 0
      %v1530 = vsel %vm501, %v1393, 0
      %1532 = vmatpush.bf16.msra.mxu0 0
      %1533 = vmatpush.bf16.msra.mxu0 0
      %1534 = vmatpush.bf16.msra.mxu0 0
      %1535 = vmatpush.bf16.msra.mxu0 0
      %1536 = vmatpush.bf16.msra.mxu0 0
      %1537 = vmatpush.bf16.msra.mxu0 0
      %1538 = vmatpush.bf16.msra.mxu0 0
      %1539 = vmatpush.bf16.msra.mxu0 %v1530
      %1540 = vmatmul.bf16.gmra.mxu0 %v1506
      %v1541 = vpop.f32.mrf.mxu0
      %v1542 = vadd.f32 0.0, %v1541
      %v1543 = vpop.f32.mrf.mxu0
      %v1544 = vadd.f32 0.0, %v1543
      %1545 = vmatmul.bf16.gmra.mxu0 %v1509
      %v1546 = vpop.f32.mrf.mxu0
      %v1547 = vadd.f32 0.0, %v1546
      %v1548 = vpop.f32.mrf.mxu0
      %v1549 = vadd.f32 0.0, %v1548
      %1550 = vmatmul.bf16.gmra.mxu0 %v1512
      %v1551 = vpop.f32.mrf.mxu0
      %v1552 = vadd.f32 0.0, %v1551
      %v1553 = vpop.f32.mrf.mxu0
      %v1554 = vadd.f32 0.0, %v1553
      %1555 = vmatmul.bf16.gmra.mxu0 %v1515
      %v1556 = vpop.f32.mrf.mxu0
      %v1557 = vadd.f32 0.0, %v1556
      %v1558 = vpop.f32.mrf.mxu0
      %v1559 = vadd.f32 0.0, %v1558
      %1560 = vmatmul.bf16.gmra.mxu0 %v1518
      %v1561 = vpop.f32.mrf.mxu0
      %v1562 = vadd.f32 0.0, %v1561
      %v1563 = vpop.f32.mrf.mxu0
      %v1564 = vadd.f32 0.0, %v1563
      %1565 = vmatmul.bf16.gmra.mxu0 %v1521
      %v1566 = vpop.f32.mrf.mxu0
      %v1567 = vadd.f32 0.0, %v1566
      %v1568 = vpop.f32.mrf.mxu0
      %v1569 = vadd.f32 0.0, %v1568
      %1570 = vmatmul.bf16.gmra.mxu0 %v1524
      %v1571 = vpop.f32.mrf.mxu0
      %v1572 = vadd.f32 0.0, %v1571
      %v1573 = vpop.f32.mrf.mxu0
      %v1574 = vadd.f32 0.0, %v1573
      %1575 = vmatmul.bf16.gmra.mxu0 %v1527
      %v1576 = vpop.f32.mrf.mxu0
      %v1577 = vadd.f32 0.0, %v1576
      %v1578 = vpop.f32.mrf.mxu0
      %v1579 = vadd.f32 0.0, %v1578
      %1580 = vdwg.mxu0
      %v1581 = vadd.f32 %v1359, %v1542
      %v1582 = vadd.f32 %v1360, %v1544
      %v1583 = vadd.f32 %v1361, %v1547
      %v1584 = vadd.f32 %v1362, %v1549
      %v1585 = vadd.f32 %v1363, %v1552
      %v1586 = vadd.f32 %v1364, %v1554
      %v1587 = vadd.f32 %v1365, %v1557
      %v1588 = vadd.f32 %v1366, %v1559
      %v1589 = vadd.f32 %v1367, %v1562
      %v1590 = vadd.f32 %v1368, %v1564
      %v1591 = vadd.f32 %v1369, %v1567
      %v1592 = vadd.f32 %v1370, %v1569
      %v1593 = vadd.f32 %v1371, %v1572
      %v1594 = vadd.f32 %v1372, %v1574
      %v1595 = vadd.f32 %v1373, %v1577
      %v1596 = vadd.f32 %v1374, %v1579
      %v1597 = vld [vmem:[%s332] sm:$0xe]
      %s1598 = scalar_lea.vmem %s3, 8
      %v1599 = vld [vmem:[%s1598] sm:$0x1]
      %v1601 = vunpack.c.l.b16 %v1597
      %v1602 = vpack.c.b16 %v1412, %v1601
      %v1603 = vrot.slane %v1602, 1
      %v1604 = vrot.slane %v1429, 1
      %v1605 = vsel %vm628, %v1603, %v1604
      %v1606 = vrot.slane %v1430, 1
      %v1607 = vsel %vm628, %v1604, %v1606
      %v1608 = vrot.slane %v1431, 1
      %v1609 = vsel %vm628, %v1606, %v1608
      %v1610 = vrot.slane %v1432, 1
      %v1611 = vsel %vm628, %v1608, %v1610
      %v1612 = vrot.slane %v1433, 1
      %v1613 = vsel %vm628, %v1610, %v1612
      %v1614 = vrot.slane %v1434, 1
      %v1615 = vsel %vm628, %v1612, %v1614
      %v1616 = vrot.slane %v1435, 1
      %v1617 = vsel %vm628, %v1614, %v1616
      %v1618 = vrot.slane %v1436, 1
      %v1619 = vsel %vm628, %v1616, %v1618
      %v1621 = vsel %vm476, %v1605, 0
      %v1624 = vsel %vm476, %v1607, 0
      %v1627 = vsel %vm476, %v1609, 0
      %v1630 = vsel %vm476, %v1611, 0
      %v1633 = vsel %vm476, %v1613, 0
      %v1636 = vsel %vm476, %v1615, 0
      %v1639 = vsel %vm476, %v1617, 0
      %v1642 = vsel %vm476, %v1619, 0
      %v1645 = vsel %vm501, %v1599, 0
      %1647 = vmatpush.bf16.msra.mxu0 0
      %1648 = vmatpush.bf16.msra.mxu0 0
      %1649 = vmatpush.bf16.msra.mxu0 0
      %1650 = vmatpush.bf16.msra.mxu0 0
      %1651 = vmatpush.bf16.msra.mxu0 0
      %1652 = vmatpush.bf16.msra.mxu0 0
      %1653 = vmatpush.bf16.msra.mxu0 0
      %1654 = vmatpush.bf16.msra.mxu0 %v1645
      %1655 = vmatmul.bf16.gmra.mxu0 %v1621
      %v1656 = vpop.f32.mrf.mxu0
      %v1657 = vadd.f32 0.0, %v1656
      %v1658 = vpop.f32.mrf.mxu0
      %v1659 = vadd.f32 0.0, %v1658
      %1660 = vmatmul.bf16.gmra.mxu0 %v1624
      %v1661 = vpop.f32.mrf.mxu0
      %v1662 = vadd.f32 0.0, %v1661
      %v1663 = vpop.f32.mrf.mxu0
      %v1664 = vadd.f32 0.0, %v1663
      %1665 = vmatmul.bf16.gmra.mxu0 %v1627
      %v1666 = vpop.f32.mrf.mxu0
      %v1667 = vadd.f32 0.0, %v1666
      %v1668 = vpop.f32.mrf.mxu0
      %v1669 = vadd.f32 0.0, %v1668
      %1670 = vmatmul.bf16.gmra.mxu0 %v1630
      %v1671 = vpop.f32.mrf.mxu0
      %v1672 = vadd.f32 0.0, %v1671
      %v1673 = vpop.f32.mrf.mxu0
      %v1674 = vadd.f32 0.0, %v1673
      %1675 = vmatmul.bf16.gmra.mxu0 %v1633
      %v1676 = vpop.f32.mrf.mxu0
      %v1677 = vadd.f32 0.0, %v1676
      %v1678 = vpop.f32.mrf.mxu0
      %v1679 = vadd.f32 0.0, %v1678
      %1680 = vmatmul.bf16.gmra.mxu0 %v1636
      %v1681 = vpop.f32.mrf.mxu0
      %v1682 = vadd.f32 0.0, %v1681
      %v1683 = vpop.f32.mrf.mxu0
      %v1684 = vadd.f32 0.0, %v1683
      %1685 = vmatmul.bf16.gmra.mxu0 %v1639
      %v1686 = vpop.f32.mrf.mxu0
      %v1687 = vadd.f32 0.0, %v1686
      %v1688 = vpop.f32.mrf.mxu0
      %v1689 = vadd.f32 0.0, %v1688
      %1690 = vmatmul.bf16.gmra.mxu0 %v1642
      %v1691 = vpop.f32.mrf.mxu0
      %v1692 = vadd.f32 0.0, %v1691
      %v1693 = vpop.f32.mrf.mxu0
      %v1694 = vadd.f32 0.0, %v1693
      %1695 = vdwg.mxu0
      %v1696 = vadd.f32 %v1581, %v1657
      %v1697 = vadd.f32 %v1582, %v1659
      %v1698 = vadd.f32 %v1583, %v1662
      %v1699 = vadd.f32 %v1584, %v1664
      %v1700 = vadd.f32 %v1585, %v1667
      %v1701 = vadd.f32 %v1586, %v1669
      %v1702 = vadd.f32 %v1587, %v1672
      %v1703 = vadd.f32 %v1588, %v1674
      %v1704 = vadd.f32 %v1589, %v1677
      %v1705 = vadd.f32 %v1590, %v1679
      %v1706 = vadd.f32 %v1591, %v1682
      %v1707 = vadd.f32 %v1592, %v1684
      %v1708 = vadd.f32 %v1593, %v1687
      %v1709 = vadd.f32 %v1594, %v1689
      %v1710 = vadd.f32 %v1595, %v1692
      %v1711 = vadd.f32 %v1596, %v1694
      %v1712 = vld [vmem:[%s4] sm:$0x1]
      %v1714 = vperm.slane %v1712, 0
      %v1716 = vadd.f32 %v1696, %v1714
      %v1717 = vadd.f32 %v1697, %v1714
      %v1718 = vadd.f32 %v1698, %v1714
      %v1719 = vadd.f32 %v1699, %v1714
      %v1720 = vadd.f32 %v1700, %v1714
      %v1721 = vadd.f32 %v1701, %v1714
      %v1722 = vadd.f32 %v1702, %v1714
      %v1723 = vadd.f32 %v1703, %v1714
      %v1724 = vadd.f32 %v1704, %v1714
      %v1725 = vadd.f32 %v1705, %v1714
      %v1726 = vadd.f32 %v1706, %v1714
      %v1727 = vadd.f32 %v1707, %v1714
      %v1728 = vadd.f32 %v1708, %v1714
      %v1729 = vadd.f32 %v1709, %v1714
      %v1730 = vadd.f32 %v1710, %v1714
      %v1731 = vadd.f32 %v1711, %v1714
      %v1732 = vmax.f32 %v1716, 0.0
      %v1733 = vmax.f32 %v1717, 0.0
      %v1734 = vmax.f32 %v1718, 0.0
      %v1735 = vmax.f32 %v1719, 0.0
      %v1736 = vmax.f32 %v1720, 0.0
      %v1737 = vmax.f32 %v1721, 0.0
      %v1738 = vmax.f32 %v1722, 0.0
      %v1739 = vmax.f32 %v1723, 0.0
      %v1740 = vmax.f32 %v1724, 0.0
      %v1741 = vmax.f32 %v1725, 0.0
      %v1742 = vmax.f32 %v1726, 0.0
      %v1743 = vmax.f32 %v1727, 0.0
      %v1744 = vmax.f32 %v1728, 0.0
      %v1745 = vmax.f32 %v1729, 0.0
      %v1746 = vmax.f32 %v1730, 0.0
      %v1747 = vmax.f32 %v1731, 0.0
      %v1748 = vpack.c.bf16 %v1732, %v1732
      %v1749 = vpack.c.bf16 %v1733, %v1733
      %v1750 = vpack.c.bf16 %v1734, %v1734
      %v1751 = vpack.c.bf16 %v1735, %v1735
      %v1752 = vpack.c.bf16 %v1736, %v1736
      %v1753 = vpack.c.bf16 %v1737, %v1737
      %v1754 = vpack.c.bf16 %v1738, %v1738
      %v1755 = vpack.c.bf16 %v1739, %v1739
      %v1756 = vpack.c.bf16 %v1740, %v1740
      %v1757 = vpack.c.bf16 %v1741, %v1741
      %v1758 = vpack.c.bf16 %v1742, %v1742
      %v1759 = vpack.c.bf16 %v1743, %v1743
      %v1760 = vpack.c.bf16 %v1744, %v1744
      %v1761 = vpack.c.bf16 %v1745, %v1745
      %v1762 = vpack.c.bf16 %v1746, %v1746
      %v1763 = vpack.c.bf16 %v1747, %v1747
      %vm1764 = vcmask 11264
      %1765 = vst.msk [vmem:[%s342] sm:$0xf] %vm1764, %v1748
      %1766 = vst.msk [vmem:[%s342 + $0x4] sm:$0xf] %vm1764, %v1749
      %1767 = vst.msk [vmem:[%s342 + $0x8] sm:$0xf] %vm1764, %v1750
      %1768 = vst.msk [vmem:[%s342 + $0xc] sm:$0xf] %vm1764, %v1751
      %1769 = vst.msk [vmem:[%s342 + $0x10] sm:$0xf] %vm1764, %v1752
      %1770 = vst.msk [vmem:[%s342 + $0x14] sm:$0xf] %vm1764, %v1753
      %1771 = vst.msk [vmem:[%s342 + $0x18] sm:$0xf] %vm1764, %v1754
      %1772 = vst.msk [vmem:[%s342 + $0x1c] sm:$0xf] %vm1764, %v1755
      %1773 = vst.msk [vmem:[%s342 + $0x20] sm:$0xf] %vm1764, %v1756
      %1774 = vst.msk [vmem:[%s342 + $0x24] sm:$0xf] %vm1764, %v1757
      %1775 = vst.msk [vmem:[%s342 + $0x28] sm:$0xf] %vm1764, %v1758
      %1776 = vst.msk [vmem:[%s342 + $0x2c] sm:$0xf] %vm1764, %v1759
      %1777 = vst.msk [vmem:[%s342 + $0x30] sm:$0xf] %vm1764, %v1760
      %1778 = vst.msk [vmem:[%s342 + $0x34] sm:$0xf] %vm1764, %v1761
      %1779 = vst.msk [vmem:[%s342 + $0x38] sm:$0xf] %vm1764, %v1762
      %1780 = vst.msk [vmem:[%s342 + $0x3c] sm:$0xf] %vm1764, %v1763
      %p1781 = scmp.lt.s32.totalorder %s20, 1
      %s1782 = scalar_select %p1781, %s20, 1
      %p1783 = scmp.lt.s32.totalorder %s21, 127
      %s1784 = scalar_select %p1783, %s21, 127
      %s1785 = smul.addr %s1784, 16
      %s1786 = smul.addr %s1782, 2048
      %s1787 = sadd.s32 %s1785, %s1786
      %s1788 = smul.addr %s1787, 4
      %s1789 = scalar_lea.vmem %s5, %s1788
      // Predicated region
      $region41: #{decoder_forward.20} parent=39 // pred_check
        %p1790 = pneg %p178
      $region42: #{decoder_forward.20} parent=39 // pred_check_branch
        %1792 = sbr.rel (%p1790) target = $region44
      $region43: #{decoder_forward.20} parent=39 // pred_region
        _
      $region44: #{decoder_forward.20} parent=39 // pred_fallthru
        _
    $region40: #{decoder_forward.20} parent=5 // pred_fallthru
      _
    %p1793 = scmp.le.s32.totalorder 2, %s11
    // Predicated region
    $region45: #{decoder_forward.20} parent=5 // pred_check
      %p1794 = pneg %p1793
    $region46: #{decoder_forward.20} parent=5 // pred_check_branch
      %1796 = sbr.rel (%p1794) target = $region48
    $region47: #{decoder_forward.20} parent=5 // pred_region
      %s1797 = ssub.s32 %s11, 2
      // Predicated region
      $region49: #{decoder_forward.20} parent=47 // pred_check
        %p1798 = pneg %p184
      $region50: #{decoder_forward.20} parent=47 // pred_check_branch
        %1800 = sbr.rel (%p1798) target = $region52
      $region51: #{decoder_forward.20} parent=47 // pred_region
        %p1801 = scmp.lt.s32.totalorder %s22, 1
        %s1802 = scalar_select %p1801, %s22, 1
        %p1803 = scmp.lt.s32.totalorder %s23, 127
        %s1804 = scalar_select %p1803, %s23, 127
        %s1805 = smul.addr %s1804, 16
        %s1806 = smul.addr %s1802, 2048
        %s1807 = sadd.s32 %s1805, %s1806
        %s1808 = smul.addr %s1807, 4
        %s1809 = scalar_lea.vmem %s5, %s1808
      $region52: #{decoder_forward.20} parent=47 // pred_fallthru
        _
    $region48: #{decoder_forward.20} parent=5 // pred_fallthru
      _
  $region6: #{decoder_forward.20} parent=0 // loop_footer
    %s15 = sadd.s32 1, %s11
  $region7: #{decoder_forward.20} parent=0 // loop_footer_branch
    %10 = sbr.rel target = $region3
  $region8: #{decoder_forward.20} parent=0 // loop_exit
    _

// kernel: decoder_forward.21
$region0: #{decoder_forward.21}
  #allocation0 [shape = 'u32[]', space=smem, size = 0x4, offset = 0x4, fixed_abs, tag = 'smem constant byte address 0x4 - core index']
  #allocation1 [shape = 'u32[72,128]{1,0:T(1,128)}', space=vmem, size = 0x9000, scoped, tag = 'internal scratch']
  #allocation2 [shape = 'f32[1,1]{1,0:T(1,128)S(1)}', space=vmem, size = 0x200, scoped, tag = 'scoped memory for decoder_forward.21']
  %s0 = inlined_call_operand.vmem [shape: bf16[2,130,130,2], index: 0, kind: input, shape index: {}, may-alias: {0,1,2}]
  %s1 = inlined_call_operand.vmem [shape: bf16[2,130,130,2], index: 1, kind: input, shape index: {}, may-alias: {0,1,2}]
  %s2 = inlined_call_operand.vmem [shape: bf16[2,130,130,2], index: 2, kind: input, shape index: {}, may-alias: {0,1,2}]
  %s3 = inlined_call_operand.vmem [shape: bf16[9,2,1], index: 3, kind: input, shape index: {}]
  %s4 = inlined_call_operand.<no memory space> [shape: f32[1,1], index: 4, kind: input, shape index: {}]
  %s5 = inlined_call_operand.vmem [shape: f32[2,128,128,1], index: 5, kind: output, shape index: {}]
  %s6 = sld [smem:[#allocation0]]
  $region53: #{decoder_forward.21} parent=0
    _
  %s8 = ssub.s32 1, %s6
  %s9 = scalar_select 0, %s8, %s6
  %v10 = vstv %s4
  %11 = vst [vmem:[#allocation2] sm:$0x1] %v10
  loop: start=0, step=1, limit=258
  $region2: #{decoder_forward.21} parent=0 // loop_pre_header
    _
  $region3: #{decoder_forward.21} parent=0 // loop_header
    %s13 = sphi 0, %s17
    %p14 = scmp.ge.s32.totalorder %s13, 258
    %s20 = sphi 0, %s32
    %s21 = sphi 0, %s28
    %s22 = sphi 0, %s20
    %s23 = sphi 0, %s21
    %s24 = sphi 0, %s22
    %s25 = sphi 0, %s23
    %s37 = sphi 0, %s39
    %s40 = sphi 0, %s37
    %s41 = sphi 0, %s40
    %s57 = sphi 0, %s41
    %s67 = sphi 0, %s69
    %s70 = sphi 0, %s67
    %s71 = sphi 0, %s70
    %s87 = sphi 0, %s71
    %s97 = sphi 0, %s99
    %s100 = sphi 0, %s97
    %s101 = sphi 0, %s100
    %s117 = sphi 0, %s101
    %s121 = sphi 0, %s121
    %s123 = sphi 0, %s121
    %s124 = sphi 0, %s123
    %s138 = sphi 0, %s124
    %s142 = sphi 0, %s142
    %s144 = sphi 0, %s142
    %s145 = sphi 0, %s144
    %s159 = sphi 0, %s145
    %s167 = sphi 0, %s169
    %s170 = sphi 0, %s167
    %s171 = sphi 0, %s170
    %s187 = sphi 0, %s171
  $region4: #{decoder_forward.21} parent=0 // loop_header_branch
    %16 = sbr.rel (%p14) target = $region8
  $region5: #{decoder_forward.21} parent=0 // loop_body
    %s18 = ssub.s32 %s13, 1
    %s19 = ssub.s32 %s13, 2
    %s26 = sadd.s32 1, %s21
    %p27 = scmp.ge.s32.totalorder %s26, 128
    %s28 = scalar_select %p27, 0, %s26
    %s29 = sadd.s32 1, %s20
    %s30 = scalar_select %p27, %s29, %s20
    %p31 = scmp.ge.s32.totalorder %s30, 2
    %s32 = scalar_select %p31, 0, %s30
    %s33 = ssub.s32 %s20, %s32
    %s34 = ssub.s32 %s21, %s28
    %s35 = sor.u32 %s33, %s34
    %p36 = scmp.eq.s32.totalorder %s35, 0
    %s38 = sadd.s32 %s37, 1
    %s39 = scalar_select %p36, %s37, %s38
    %p42 = pneg %p36
    %p43 = scmp.eq.s32.totalorder %s13, 255
    %p44 = por %p42, %p43
    %p45 = scmp.ne.s32.totalorder %s37, %s40
    %p46 = scmp.eq.s32.totalorder %s13, 0
    %p47 = por %p45, %p46
    %p48 = scmp.ne.s32.totalorder %s37, %s40
    %p49 = scmp.eq.s32.totalorder %s18, 255
    %p50 = por %p48, %p49
    %p51 = scmp.ne.s32.totalorder %s40, %s41
    %p52 = scmp.eq.s32.totalorder %s18, 0
    %p53 = por %p51, %p52
    %p54 = scmp.ne.s32.totalorder %s40, %s41
    %p55 = scmp.eq.s32.totalorder %s19, 255
    %p56 = por %p54, %p55
    %p58 = scmp.ne.s32.totalorder %s41, %s57
    %p59 = scmp.eq.s32.totalorder %s19, 0
    %p60 = por %p58, %p59
    %s61 = sadd.s32 %s21, 1
    %s62 = sadd.s32 %s28, 1
    %s63 = ssub.s32 %s20, %s32
    %s64 = ssub.s32 %s61, %s62
    %s65 = sor.u32 %s63, %s64
    %p66 = scmp.eq.s32.totalorder %s65, 0
    %s68 = sadd.s32 %s67, 1
    %s69 = scalar_select %p66, %s67, %s68
    %p72 = pneg %p66
    %p73 = scmp.eq.s32.totalorder %s13, 255
    %p74 = por %p72, %p73
    %p75 = scmp.ne.s32.totalorder %s67, %s70
    %p76 = scmp.eq.s32.totalorder %s13, 0
    %p77 = por %p75, %p76
    %p78 = scmp.ne.s32.totalorder %s67, %s70
    %p79 = scmp.eq.s32.totalorder %s18, 255
    %p80 = por %p78, %p79
    %p81 = scmp.ne.s32.totalorder %s70, %s71
    %p82 = scmp.eq.s32.totalorder %s18, 0
    %p83 = por %p81, %p82
    %p84 = scmp.ne.s32.totalorder %s70, %s71
    %p85 = scmp.eq.s32.totalorder %s19, 255
    %p86 = por %p84, %p85
    %p88 = scmp.ne.s32.totalorder %s71, %s87
    %p89 = scmp.eq.s32.totalorder %s19, 0
    %p90 = por %p88, %p89
    %s91 = sadd.s32 %s21, 2
    %s92 = sadd.s32 %s28, 2
    %s93 = ssub.s32 %s20, %s32
    %s94 = ssub.s32 %s91, %s92
    %s95 = sor.u32 %s93, %s94
    %p96 = scmp.eq.s32.totalorder %s95, 0
    %s98 = sadd.s32 %s97, 1
    %s99 = scalar_select %p96, %s97, %s98
    %p102 = pneg %p96
    %p103 = scmp.eq.s32.totalorder %s13, 255
    %p104 = por %p102, %p103
    %p105 = scmp.ne.s32.totalorder %s97, %s100
    %p106 = scmp.eq.s32.totalorder %s13, 0
    %p107 = por %p105, %p106
    %p108 = scmp.ne.s32.totalorder %s97, %s100
    %p109 = scmp.eq.s32.totalorder %s18, 255
    %p110 = por %p108, %p109
    %p111 = scmp.ne.s32.totalorder %s100, %s101
    %p112 = scmp.eq.s32.totalorder %s18, 0
    %p113 = por %p111, %p112
    %p114 = scmp.ne.s32.totalorder %s100, %s101
    %p115 = scmp.eq.s32.totalorder %s19, 255
    %p116 = por %p114, %p115
    %p118 = scmp.ne.s32.totalorder %s101, %s117
    %p119 = scmp.eq.s32.totalorder %s19, 0
    %p120 = por %p118, %p119
    %s122 = sadd.s32 %s121, 1
    %p125 = scmp.eq.s32.totalorder %s13, 255
    %p126 = scmp.ne.s32.totalorder %s121, %s123
    %p127 = scmp.eq.s32.totalorder %s13, 0
    %p128 = por %p126, %p127
    %p129 = scmp.ne.s32.totalorder %s121, %s123
    %p130 = scmp.eq.s32.totalorder %s18, 255
    %p131 = por %p129, %p130
    %p132 = scmp.ne.s32.totalorder %s123, %s124
    %p133 = scmp.eq.s32.totalorder %s18, 0
    %p134 = por %p132, %p133
    %p135 = scmp.ne.s32.totalorder %s123, %s124
    %p136 = scmp.eq.s32.totalorder %s19, 255
    %p137 = por %p135, %p136
    %p139 = scmp.ne.s32.totalorder %s124, %s138
    %p140 = scmp.eq.s32.totalorder %s19, 0
    %p141 = por %p139, %p140
    %s143 = sadd.s32 %s142, 1
    %p146 = scmp.eq.s32.totalorder %s13, 255
    %p147 = scmp.ne.s32.totalorder %s142, %s144
    %p148 = scmp.eq.s32.totalorder %s13, 0
    %p149 = por %p147, %p148
    %p150 = scmp.ne.s32.totalorder %s142, %s144
    %p151 = scmp.eq.s32.totalorder %s18, 255
    %p152 = por %p150, %p151
    %p153 = scmp.ne.s32.totalorder %s144, %s145
    %p154 = scmp.eq.s32.totalorder %s18, 0
    %p155 = por %p153, %p154
    %p156 = scmp.ne.s32.totalorder %s144, %s145
    %p157 = scmp.eq.s32.totalorder %s19, 255
    %p158 = por %p156, %p157
    %p160 = scmp.ne.s32.totalorder %s145, %s159
    %p161 = scmp.eq.s32.totalorder %s19, 0
    %p162 = por %p160, %p161
    %s163 = ssub.s32 %s20, %s32
    %s164 = ssub.s32 %s21, %s28
    %s165 = sor.u32 %s163, %s164
    %p166 = scmp.eq.s32.totalorder %s165, 0
    %s168 = sadd.s32 %s167, 1
    %s169 = scalar_select %p166, %s167, %s168
    %p172 = pneg %p166
    %p173 = scmp.eq.s32.totalorder %s13, 255
    %p174 = por %p172, %p173
    %p175 = scmp.ne.s32.totalorder %s167, %s170
    %p176 = scmp.eq.s32.totalorder %s13, 0
    %p177 = por %p175, %p176
    %p178 = scmp.ne.s32.totalorder %s167, %s170
    %p179 = scmp.eq.s32.totalorder %s18, 255
    %p180 = por %p178, %p179
    %p181 = scmp.ne.s32.totalorder %s170, %s171
    %p182 = scmp.eq.s32.totalorder %s18, 0
    %p183 = por %p181, %p182
    %p184 = scmp.ne.s32.totalorder %s170, %s171
    %p185 = scmp.eq.s32.totalorder %s19, 255
    %p186 = por %p184, %p185
    %p188 = scmp.ne.s32.totalorder %s171, %s187
    %p189 = scmp.eq.s32.totalorder %s19, 0
    %p190 = por %p188, %p189
    %p191 = scmp.le.s32.totalorder 1, %s13
    %p192 = scmp.lt.s32.totalorder %s13, 257
    %p193 = pnand %p191, %p192
    %p194 = pneg %p193
    // Predicated region
    $region9: #{decoder_forward.21} parent=5 // pred_check
      _
    $region10: #{decoder_forward.21} parent=5 // pred_check_branch
      %196 = sbr.rel (%p193) target = $region12
    $region11: #{decoder_forward.21} parent=5 // pred_region
      %s197 = ssub.s32 %s13, 1
      // Predicated region
      $region13: #{decoder_forward.21} parent=11 // pred_check
        %p198 = pneg %p134
      $region14: #{decoder_forward.21} parent=11 // pred_check_branch
        %200 = sbr.rel (%p198) target = $region16
      $region15: #{decoder_forward.21} parent=11 // pred_region
        _
      $region16: #{decoder_forward.21} parent=11 // pred_fallthru
        _
      // Predicated region
      $region17: #{decoder_forward.21} parent=11 // pred_check
        %p201 = pneg %p155
      $region18: #{decoder_forward.21} parent=11 // pred_check_branch
        %203 = sbr.rel (%p201) target = $region20
      $region19: #{decoder_forward.21} parent=11 // pred_region
        _
      $region20: #{decoder_forward.21} parent=11 // pred_fallthru
        _
    $region12: #{decoder_forward.21} parent=5 // pred_fallthru
      _
    %p204 = scmp.lt.s32.totalorder %s13, 256
    // Predicated region
    $region21: #{decoder_forward.21} parent=5 // pred_check
      %p205 = pneg %p204
    $region22: #{decoder_forward.21} parent=5 // pred_check_branch
      %207 = sbr.rel (%p205) target = $region24
    $region23: #{decoder_forward.21} parent=5 // pred_region
      // Predicated region
      $region25: #{decoder_forward.21} parent=23 // pred_check
        %p208 = pneg %p47
      $region26: #{decoder_forward.21} parent=23 // pred_check_branch
        %210 = sbr.rel (%p208) target = $region28
      $region27: #{decoder_forward.21} parent=23 // pred_region
        %p211 = scmp.lt.s32.totalorder %s20, 1
        %s212 = scalar_select %p211, %s20, 1
        %p213 = scmp.lt.s32.totalorder %s21, 129
        %s214 = scalar_select %p213, %s21, 129
        %s215 = smul.addr %s214, 17
        %s216 = smul.addr %s212, 2210
        %s217 = sadd.s32 %s215, %s216
        %s218 = smul.addr %s217, 4
        %s219 = scalar_lea.vmem %s0, %s218
      $region28: #{decoder_forward.21} parent=23 // pred_fallthru
        _
      // Predicated region
      $region29: #{decoder_forward.21} parent=23 // pred_check
        %p220 = pneg %p77
      $region30: #{decoder_forward.21} parent=23 // pred_check_branch
        %222 = sbr.rel (%p220) target = $region32
      $region31: #{decoder_forward.21} parent=23 // pred_region
        %s223 = sadd.s32 %s21, 1
        %p224 = scmp.lt.s32.totalorder %s20, 1
        %s225 = scalar_select %p224, %s20, 1
        %p226 = scmp.lt.s32.totalorder %s223, 129
        %s227 = scalar_select %p226, %s223, 129
        %s228 = smul.addr %s227, 17
        %s229 = smul.addr %s225, 2210
        %s230 = sadd.s32 %s228, %s229
        %s231 = smul.addr %s230, 4
        %s232 = scalar_lea.vmem %s1, %s231
        %s233 = sadd.s32 %s21, 1
      $region32: #{decoder_forward.21} parent=23 // pred_fallthru
        _
      // Predicated region
      $region33: #{decoder_forward.21} parent=23 // pred_check
        %p234 = pneg %p107
      $region34: #{decoder_forward.21} parent=23 // pred_check_branch
        %236 = sbr.rel (%p234) target = $region36
      $region35: #{decoder_forward.21} parent=23 // pred_region
        %s237 = sadd.s32 %s21, 2
        %p238 = scmp.lt.s32.totalorder %s20, 1
        %s239 = scalar_select %p238, %s20, 1
        %p240 = scmp.lt.s32.totalorder %s237, 129
        %s241 = scalar_select %p240, %s237, 129
        %s242 = smul.addr %s241, 17
        %s243 = smul.addr %s239, 2210
        %s244 = sadd.s32 %s242, %s243
        %s245 = smul.addr %s244, 4
        %s246 = scalar_lea.vmem %s2, %s245
        %s247 = sadd.s32 %s21, 2
      $region36: #{decoder_forward.21} parent=23 // pred_fallthru
        _
    $region24: #{decoder_forward.21} parent=5 // pred_fallthru
      _
    %p248 = scmp.le.s32.totalorder 1, %s13
    %p249 = scmp.lt.s32.totalorder %s13, 257
    %p250 = pnand %p248, %p249
    %p251 = pneg %p250
    // Predicated region
    $region37: #{decoder_forward.21} parent=5 // pred_check
      _
    $region38: #{decoder_forward.21} parent=5 // pred_check_branch
      %253 = sbr.rel (%p250) target = $region40
    $region39: #{decoder_forward.21} parent=5 // pred_region
      %s254 = ssub.s32 %s13, 1
      %p255 = scmp.lt.s32.totalorder %s22, 1
      %s256 = scalar_select %p255, %s22, 1
      %p257 = scmp.lt.s32.totalorder %s23, 129
      %s258 = scalar_select %p257, %s23, 129
      %s259 = smul.addr %s258, 17
      %s260 = smul.addr %s256, 2210
      %s261 = sadd.s32 %s259, %s260
      %s262 = smul.addr %s261, 4
      %s263 = scalar_lea.vmem %s0, %s262
      %p264 = pneg %p53
      %p265 = pneg %p50
      %s266 = sadd.s32 %s23, 1
      %p267 = scmp.lt.s32.totalorder %s22, 1
      %s268 = scalar_select %p267, %s22, 1
      %p269 = scmp.lt.s32.totalorder %s266, 129
      %s270 = scalar_select %p269, %s266, 129
      %s271 = smul.addr %s270, 17
      %s272 = smul.addr %s268, 2210
      %s273 = sadd.s32 %s271, %s272
      %s274 = smul.addr %s273, 4
      %s275 = scalar_lea.vmem %s1, %s274
      %p276 = pneg %p83
      %p277 = pneg %p80
      %s278 = sadd.s32 %s23, 2
      %p279 = scmp.lt.s32.totalorder %s22, 1
      %s280 = scalar_select %p279, %s22, 1
      %p281 = scmp.lt.s32.totalorder %s278, 129
      %s282 = scalar_select %p281, %s278, 129
      %s283 = smul.addr %s282, 17
      %s284 = smul.addr %s280, 2210
      %s285 = sadd.s32 %s283, %s284
      %s286 = smul.addr %s285, 4
      %s287 = scalar_lea.vmem %s2, %s286
      %p288 = pneg %p113
      %p289 = pneg %p110
      %p290 = pneg %p134
      %p291 = pneg %p131
      %p292 = pneg %p155
      %p293 = pneg %p152
      %p294 = pneg %p183
      %p295 = pneg %p180
      %p296 = scmp.lt.s32.totalorder %s22, 1
      %s297 = scalar_select %p296, %s22, 1
      %p298 = scmp.lt.s32.totalorder %s23, 127
      %s299 = scalar_select %p298, %s23, 127
      %s300 = smul.addr %s299, 16
      %s301 = smul.addr %s297, 2048
      %s302 = sadd.s32 %s300, %s301
      %s303 = smul.addr %s302, 8
      %s304 = scalar_lea.vmem %s5, %s303
      %p305 = scmp.lt.s32.totalorder %s22, 1
      %s306 = scalar_select %p305, %s22, 1
      %p307 = scmp.lt.s32.totalorder %s23, 129
      %s308 = scalar_select %p307, %s23, 129
      %s309 = smul.addr %s308, 17
      %s310 = smul.addr %s306, 2210
      %s311 = sadd.s32 %s309, %s310
      %s312 = smul.addr %s311, 4
      %s313 = scalar_lea.vmem %s0, %s312
      %s314 = sadd.s32 %s23, 1
      %p315 = scmp.lt.s32.totalorder %s22, 1
      %s316 = scalar_select %p315, %s22, 1
      %p317 = scmp.lt.s32.totalorder %s314, 129
      %s318 = scalar_select %p317, %s314, 129
      %s319 = smul.addr %s318, 17
      %s320 = smul.addr %s316, 2210
      %s321 = sadd.s32 %s319, %s320
      %s322 = smul.addr %s321, 4
      %s323 = scalar_lea.vmem %s1, %s322
      %s324 = sadd.s32 %s23, 1
      %s325 = sadd.s32 %s23, 2
      %p326 = scmp.lt.s32.totalorder %s22, 1
      %s327 = scalar_select %p326, %s22, 1
      %p328 = scmp.lt.s32.totalorder %s325, 129
      %s329 = scalar_select %p328, %s325, 129
      %s330 = smul.addr %s329, 17
      %s331 = smul.addr %s327, 2210
      %s332 = sadd.s32 %s330, %s331
      %s333 = smul.addr %s332, 4
      %s334 = scalar_lea.vmem %s2, %s333
      %s335 = sadd.s32 %s23, 2
      %p336 = scmp.lt.s32.totalorder %s22, 1
      %s337 = scalar_select %p336, %s22, 1
      %p338 = scmp.lt.s32.totalorder %s23, 127
      %s339 = scalar_select %p338, %s23, 127
      %s340 = smul.addr %s339, 16
      %s341 = smul.addr %s337, 2048
      %s342 = sadd.s32 %s340, %s341
      %s343 = smul.addr %s342, 8
      %s344 = scalar_lea.vmem %s5, %s343
      %v346 = vld [vmem:[%s313] sm:$0xf]
      %v347 = vld [vmem:[%s313 + $0x4] sm:$0xf]
      %v348 = vld [vmem:[%s313 + $0x8] sm:$0xf]
      %v349 = vld [vmem:[%s313 + $0xc] sm:$0xf]
      %v350 = vld [vmem:[%s313 + $0x10] sm:$0xf]
      %v351 = vld [vmem:[%s313 + $0x14] sm:$0xf]
      %v352 = vld [vmem:[%s313 + $0x18] sm:$0xf]
      %v353 = vld [vmem:[%s313 + $0x1c] sm:$0xf]
      %v354 = vld [vmem:[%s313 + $0x20] sm:$0xf]
      %v355 = vld [vmem:[%s313 + $0x24] sm:$0xf]
      %v356 = vld [vmem:[%s313 + $0x28] sm:$0xf]
      %v357 = vld [vmem:[%s313 + $0x2c] sm:$0xf]
      %v358 = vld [vmem:[%s313 + $0x30] sm:$0xf]
      %v359 = vld [vmem:[%s313 + $0x34] sm:$0xf]
      %v360 = vld [vmem:[%s313 + $0x38] sm:$0xf]
      %v361 = vld [vmem:[%s313 + $0x3c] sm:$0xf]
      %v362 = vld [vmem:[%s3] sm:$0x1]
      %v363 = vld [vmem:[%s313 + $0x40] sm:$0x1]
      %s364 = scalar_lea.vmem %s3, 1
      %v365 = vld [vmem:[%s364] sm:$0x1]
      %v383 = vunpack.c.l.b16 %v346
      %v384 = vunpack.c.l.b16 %v347
      %v385 = vunpack.c.l.b16 %v348
      %v386 = vunpack.c.l.b16 %v349
      %v387 = vunpack.c.l.b16 %v350
      %v388 = vunpack.c.l.b16 %v351
      %v389 = vunpack.c.l.b16 %v352
      %v390 = vunpack.c.l.b16 %v353
      %v391 = vunpack.c.l.b16 %v354
      %v392 = vunpack.c.l.b16 %v355
      %v393 = vunpack.c.l.b16 %v356
      %v394 = vunpack.c.l.b16 %v357
      %v395 = vunpack.c.l.b16 %v358
      %v396 = vunpack.c.l.b16 %v359
      %v397 = vunpack.c.l.b16 %v360
      %v398 = vunpack.c.l.b16 %v361
      %v399 = vunpack.c.l.b16 %v363
      %v400 = vpack.c.b16 %v384, %v383
      %v401 = vpack.c.b16 %v386, %v385
      %v402 = vpack.c.b16 %v388, %v387
      %v403 = vpack.c.b16 %v390, %v389
      %v404 = vpack.c.b16 %v392, %v391
      %v405 = vpack.c.b16 %v394, %v393
      %v406 = vpack.c.b16 %v396, %v395
      %v407 = vpack.c.b16 %v398, %v397
      %v408 = vpack.c.b16 %v399, %v399
      %vm409 = vsmask.f32 7424
      %v411 = vshrl.u32 %v400, 16
      %v413 = vshll.u32 %v400, 16
      %v415 = vrot.slane %v413, 1
      %v416 = vor.u32 %v411, %v415
      %v418 = vshll.u32 %v401, 16
      %v420 = vrot.slane %v418, 1
      %v421 = vsel %vm409, %v416, %v420
      %v422 = vshrl.u32 %v401, 16
      %v424 = vor.u32 %v422, %v420
      %v426 = vshll.u32 %v402, 16
      %v428 = vrot.slane %v426, 1
      %v429 = vsel %vm409, %v424, %v428
      %v430 = vshrl.u32 %v402, 16
      %v432 = vor.u32 %v430, %v428
      %v434 = vshll.u32 %v403, 16
      %v436 = vrot.slane %v434, 1
      %v437 = vsel %vm409, %v432, %v436
      %v438 = vshrl.u32 %v403, 16
      %v440 = vor.u32 %v438, %v436
      %v442 = vshll.u32 %v404, 16
      %v444 = vrot.slane %v442, 1
      %v445 = vsel %vm409, %v440, %v444
      %v446 = vshrl.u32 %v404, 16
      %v448 = vor.u32 %v446, %v444
      %v450 = vshll.u32 %v405, 16
      %v452 = vrot.slane %v450, 1
      %v453 = vsel %vm409, %v448, %v452
      %v454 = vshrl.u32 %v405, 16
      %v456 = vor.u32 %v454, %v452
      %v458 = vshll.u32 %v406, 16
      %v460 = vrot.slane %v458, 1
      %v461 = vsel %vm409, %v456, %v460
      %v462 = vshrl.u32 %v406, 16
      %v464 = vor.u32 %v462, %v460
      %v466 = vshll.u32 %v407, 16
      %v468 = vrot.slane %v466, 1
      %v469 = vsel %vm409, %v464, %v468
      %v470 = vshrl.u32 %v407, 16
      %v472 = vor.u32 %v470, %v468
      %v474 = vshll.u32 %v408, 16
      %v476 = vrot.slane %v474, 1
      %v477 = vsel %vm409, %v472, %v476
      %vm478 = vcmask 15360
      %v480 = vsel %vm478, %v421, 0
      %v483 = vsel %vm478, %v429, 0
      %v486 = vsel %vm478, %v437, 0
      %v489 = vsel %vm478, %v445, 0
      %v492 = vsel %vm478, %v453, 0
      %v495 = vsel %vm478, %v461, 0
      %v498 = vsel %vm478, %v469, 0
      %v501 = vsel %vm478, %v477, 0
      %vm503 = vcmask 1040384
      %v505 = vsel %vm503, %v365, 0
      %507 = vmatpush.bf16.msra.mxu0 0
      %508 = vmatpush.bf16.msra.mxu0 0
      %509 = vmatpush.bf16.msra.mxu0 0
      %510 = vmatpush.bf16.msra.mxu0 0
      %511 = vmatpush.bf16.msra.mxu0 0
      %512 = vmatpush.bf16.msra.mxu0 0
      %513 = vmatpush.bf16.msra.mxu0 0
      %514 = vmatpush.bf16.msra.mxu0 %v505
      %515 = vmatmul.bf16.gmra.mxu0 %v480
      %v516 = vpop.f32.mrf.mxu0
      %v517 = vadd.f32 0.0, %v516
      %v518 = vpop.f32.mrf.mxu0
      %v519 = vadd.f32 0.0, %v518
      %520 = vmatmul.bf16.gmra.mxu0 %v483
      %v521 = vpop.f32.mrf.mxu0
      %v522 = vadd.f32 0.0, %v521
      %v523 = vpop.f32.mrf.mxu0
      %v524 = vadd.f32 0.0, %v523
      %525 = vmatmul.bf16.gmra.mxu0 %v486
      %v526 = vpop.f32.mrf.mxu0
      %v527 = vadd.f32 0.0, %v526
      %v528 = vpop.f32.mrf.mxu0
      %v529 = vadd.f32 0.0, %v528
      %530 = vmatmul.bf16.gmra.mxu0 %v489
      %v531 = vpop.f32.mrf.mxu0
      %v532 = vadd.f32 0.0, %v531
      %v533 = vpop.f32.mrf.mxu0
      %v534 = vadd.f32 0.0, %v533
      %535 = vmatmul.bf16.gmra.mxu0 %v492
      %v536 = vpop.f32.mrf.mxu0
      %v537 = vadd.f32 0.0, %v536
      %v538 = vpop.f32.mrf.mxu0
      %v539 = vadd.f32 0.0, %v538
      %540 = vmatmul.bf16.gmra.mxu0 %v495
      %v541 = vpop.f32.mrf.mxu0
      %v542 = vadd.f32 0.0, %v541
      %v543 = vpop.f32.mrf.mxu0
      %v544 = vadd.f32 0.0, %v543
      %545 = vmatmul.bf16.gmra.mxu0 %v498
      %v546 = vpop.f32.mrf.mxu0
      %v547 = vadd.f32 0.0, %v546
      %v548 = vpop.f32.mrf.mxu0
      %v549 = vadd.f32 0.0, %v548
      %550 = vmatmul.bf16.gmra.mxu0 %v501
      %v551 = vpop.f32.mrf.mxu0
      %v552 = vadd.f32 0.0, %v551
      %v553 = vpop.f32.mrf.mxu0
      %v554 = vadd.f32 0.0, %v553
      %555 = vdwg.mxu0
      %v556 = vsel %vm478, %v400, 0
      %v558 = vsel %vm478, %v401, 0
      %v560 = vsel %vm478, %v402, 0
      %v562 = vsel %vm478, %v403, 0
      %v564 = vsel %vm478, %v404, 0
      %v566 = vsel %vm478, %v405, 0
      %v568 = vsel %vm478, %v406, 0
      %v570 = vsel %vm478, %v407, 0
      %v573 = vsel %vm503, %v362, 0
      %575 = vmatpush.bf16.msra.mxu0 0
      %576 = vmatpush.bf16.msra.mxu0 0
      %577 = vmatpush.bf16.msra.mxu0 0
      %578 = vmatpush.bf16.msra.mxu0 0
      %579 = vmatpush.bf16.msra.mxu0 0
      %580 = vmatpush.bf16.msra.mxu0 0
      %581 = vmatpush.bf16.msra.mxu0 0
      %582 = vmatpush.bf16.msra.mxu0 %v573
      %583 = vmatmul.bf16.gmra.mxu0 %v556
      %v584 = vpop.f32.mrf.mxu0
      %v585 = vadd.f32 %v517, %v584
      %v586 = vpop.f32.mrf.mxu0
      %v587 = vadd.f32 %v519, %v586
      %588 = vmatmul.bf16.gmra.mxu0 %v558
      %v589 = vpop.f32.mrf.mxu0
      %v590 = vadd.f32 %v522, %v589
      %v591 = vpop.f32.mrf.mxu0
      %v592 = vadd.f32 %v524, %v591
      %593 = vmatmul.bf16.gmra.mxu0 %v560
      %v594 = vpop.f32.mrf.mxu0
      %v595 = vadd.f32 %v527, %v594
      %v596 = vpop.f32.mrf.mxu0
      %v597 = vadd.f32 %v529, %v596
      %598 = vmatmul.bf16.gmra.mxu0 %v562
      %v599 = vpop.f32.mrf.mxu0
      %v600 = vadd.f32 %v532, %v599
      %v601 = vpop.f32.mrf.mxu0
      %v602 = vadd.f32 %v534, %v601
      %603 = vmatmul.bf16.gmra.mxu0 %v564
      %v604 = vpop.f32.mrf.mxu0
      %v605 = vadd.f32 %v537, %v604
      %v606 = vpop.f32.mrf.mxu0
      %v607 = vadd.f32 %v539, %v606
      %608 = vmatmul.bf16.gmra.mxu0 %v566
      %v609 = vpop.f32.mrf.mxu0
      %v610 = vadd.f32 %v542, %v609
      %v611 = vpop.f32.mrf.mxu0
      %v612 = vadd.f32 %v544, %v611
      %613 = vmatmul.bf16.gmra.mxu0 %v568
      %v614 = vpop.f32.mrf.mxu0
      %v615 = vadd.f32 %v547, %v614
      %v616 = vpop.f32.mrf.mxu0
      %v617 = vadd.f32 %v549, %v616
      %618 = vmatmul.bf16.gmra.mxu0 %v570
      %v619 = vpop.f32.mrf.mxu0
      %v620 = vadd.f32 %v552, %v619
      %v621 = vpop.f32.mrf.mxu0
      %v622 = vadd.f32 %v554, %v621
      %623 = vdwg.mxu0
      %v624 = vld [vmem:[%s313] sm:$0xe]
      %s625 = scalar_lea.vmem %s3, 2
      %v626 = vld [vmem:[%s625] sm:$0x1]
      %v628 = vunpack.c.l.b16 %v624
      %v629 = vpack.c.b16 %v384, %v628
      %vm630 = vcmask 1046528
      %v631 = vrot.slane %v629, 1
      %v632 = vrot.slane %v401, 1
      %v633 = vsel %vm630, %v631, %v632
      %v634 = vrot.slane %v402, 1
      %v635 = vsel %vm630, %v632, %v634
      %v636 = vrot.slane %v403, 1
      %v637 = vsel %vm630, %v634, %v636
      %v638 = vrot.slane %v404, 1
      %v639 = vsel %vm630, %v636, %v638
      %v640 = vrot.slane %v405, 1
      %v641 = vsel %vm630, %v638, %v640
      %v642 = vrot.slane %v406, 1
      %v643 = vsel %vm630, %v640, %v642
      %v644 = vrot.slane %v407, 1
      %v645 = vsel %vm630, %v642, %v644
      %v646 = vrot.slane %v408, 1
      %v647 = vsel %vm630, %v644, %v646
      %v649 = vsel %vm478, %v633, 0
      %v652 = vsel %vm478, %v635, 0
      %v655 = vsel %vm478, %v637, 0
      %v658 = vsel %vm478, %v639, 0
      %v661 = vsel %vm478, %v641, 0
      %v664 = vsel %vm478, %v643, 0
      %v667 = vsel %vm478, %v645, 0
      %v670 = vsel %vm478, %v647, 0
      %v673 = vsel %vm503, %v626, 0
      %675 = vmatpush.bf16.msra.mxu0 0
      %676 = vmatpush.bf16.msra.mxu0 0
      %677 = vmatpush.bf16.msra.mxu0 0
      %678 = vmatpush.bf16.msra.mxu0 0
      %679 = vmatpush.bf16.msra.mxu0 0
      %680 = vmatpush.bf16.msra.mxu0 0
      %681 = vmatpush.bf16.msra.mxu0 0
      %682 = vmatpush.bf16.msra.mxu0 %v673
      %683 = vmatmul.bf16.gmra.mxu0 %v649
      %v684 = vpop.f32.mrf.mxu0
      %v685 = vadd.f32 0.0, %v684
      %v686 = vpop.f32.mrf.mxu0
      %v687 = vadd.f32 0.0, %v686
      %688 = vmatmul.bf16.gmra.mxu0 %v652
      %v689 = vpop.f32.mrf.mxu0
      %v690 = vadd.f32 0.0, %v689
      %v691 = vpop.f32.mrf.mxu0
      %v692 = vadd.f32 0.0, %v691
      %693 = vmatmul.bf16.gmra.mxu0 %v655
      %v694 = vpop.f32.mrf.mxu0
      %v695 = vadd.f32 0.0, %v694
      %v696 = vpop.f32.mrf.mxu0
      %v697 = vadd.f32 0.0, %v696
      %698 = vmatmul.bf16.gmra.mxu0 %v658
      %v699 = vpop.f32.mrf.mxu0
      %v700 = vadd.f32 0.0, %v699
      %v701 = vpop.f32.mrf.mxu0
      %v702 = vadd.f32 0.0, %v701
      %703 = vmatmul.bf16.gmra.mxu0 %v661
      %v704 = vpop.f32.mrf.mxu0
      %v705 = vadd.f32 0.0, %v704
      %v706 = vpop.f32.mrf.mxu0
      %v707 = vadd.f32 0.0, %v706
      %708 = vmatmul.bf16.gmra.mxu0 %v664
      %v709 = vpop.f32.mrf.mxu0
      %v710 = vadd.f32 0.0, %v709
      %v711 = vpop.f32.mrf.mxu0
      %v712 = vadd.f32 0.0, %v711
      %713 = vmatmul.bf16.gmra.mxu0 %v667
      %v714 = vpop.f32.mrf.mxu0
      %v715 = vadd.f32 0.0, %v714
      %v716 = vpop.f32.mrf.mxu0
      %v717 = vadd.f32 0.0, %v716
      %718 = vmatmul.bf16.gmra.mxu0 %v670
      %v719 = vpop.f32.mrf.mxu0
      %v720 = vadd.f32 0.0, %v719
      %v721 = vpop.f32.mrf.mxu0
      %v722 = vadd.f32 0.0, %v721
      %723 = vdwg.mxu0
      %v724 = vadd.f32 %v585, %v685
      %v725 = vadd.f32 %v587, %v687
      %v726 = vadd.f32 %v590, %v690
      %v727 = vadd.f32 %v592, %v692
      %v728 = vadd.f32 %v595, %v695
      %v729 = vadd.f32 %v597, %v697
      %v730 = vadd.f32 %v600, %v700
      %v731 = vadd.f32 %v602, %v702
      %v732 = vadd.f32 %v605, %v705
      %v733 = vadd.f32 %v607, %v707
      %v734 = vadd.f32 %v610, %v710
      %v735 = vadd.f32 %v612, %v712
      %v736 = vadd.f32 %v615, %v715
      %v737 = vadd.f32 %v617, %v717
      %v738 = vadd.f32 %v620, %v720
      %v739 = vadd.f32 %v622, %v722
      %v740 = vld [vmem:[%s323] sm:$0xf]
      %v741 = vld [vmem:[%s323 + $0x4] sm:$0xf]
      %v742 = vld [vmem:[%s323 + $0x8] sm:$0xf]
      %v743 = vld [vmem:[%s323 + $0xc] sm:$0xf]
      %v744 = vld [vmem:[%s323 + $0x10] sm:$0xf]
      %v745 = vld [vmem:[%s323 + $0x14] sm:$0xf]
      %v746 = vld [vmem:[%s323 + $0x18] sm:$0xf]
      %v747 = vld [vmem:[%s323 + $0x1c] sm:$0xf]
      %v748 = vld [vmem:[%s323 + $0x20] sm:$0xf]
      %v749 = vld [vmem:[%s323 + $0x24] sm:$0xf]
      %v750 = vld [vmem:[%s323 + $0x28] sm:$0xf]
      %v751 = vld [vmem:[%s323 + $0x2c] sm:$0xf]
      %v752 = vld [vmem:[%s323 + $0x30] sm:$0xf]
      %v753 = vld [vmem:[%s323 + $0x34] sm:$0xf]
      %v754 = vld [vmem:[%s323 + $0x38] sm:$0xf]
      %v755 = vld [vmem:[%s323 + $0x3c] sm:$0xf]
      %s756 = scalar_lea.vmem %s3, 3
      %v757 = vld [vmem:[%s756] sm:$0x1]
      %v774 = vunpack.c.l.b16 %v740
      %v775 = vunpack.c.l.b16 %v741
      %v776 = vunpack.c.l.b16 %v742
      %v777 = vunpack.c.l.b16 %v743
      %v778 = vunpack.c.l.b16 %v744
      %v779 = vunpack.c.l.b16 %v745
      %v780 = vunpack.c.l.b16 %v746
      %v781 = vunpack.c.l.b16 %v747
      %v782 = vunpack.c.l.b16 %v748
      %v783 = vunpack.c.l.b16 %v749
      %v784 = vunpack.c.l.b16 %v750
      %v785 = vunpack.c.l.b16 %v751
      %v786 = vunpack.c.l.b16 %v752
      %v787 = vunpack.c.l.b16 %v753
      %v788 = vunpack.c.l.b16 %v754
      %v789 = vunpack.c.l.b16 %v755
      %v790 = vpack.c.b16 %v775, %v774
      %v791 = vpack.c.b16 %v777, %v776
      %v792 = vpack.c.b16 %v779, %v778
      %v793 = vpack.c.b16 %v781, %v780
      %v794 = vpack.c.b16 %v783, %v782
      %v795 = vpack.c.b16 %v785, %v784
      %v796 = vpack.c.b16 %v787, %v786
      %v797 = vpack.c.b16 %v789, %v788
      %v799 = vsel %vm478, %v790, 0
      %v802 = vsel %vm478, %v791, 0
      %v805 = vsel %vm478, %v792, 0
      %v808 = vsel %vm478, %v793, 0
      %v811 = vsel %vm478, %v794, 0
      %v814 = vsel %vm478, %v795, 0
      %v817 = vsel %vm478, %v796, 0
      %v820 = vsel %vm478, %v797, 0
      %v823 = vsel %vm503, %v757, 0
      %825 = vmatpush.bf16.msra.mxu0 0
      %826 = vmatpush.bf16.msra.mxu0 0
      %827 = vmatpush.bf16.msra.mxu0 0
      %828 = vmatpush.bf16.msra.mxu0 0
      %829 = vmatpush.bf16.msra.mxu0 0
      %830 = vmatpush.bf16.msra.mxu0 0
      %831 = vmatpush.bf16.msra.mxu0 0
      %832 = vmatpush.bf16.msra.mxu0 %v823
      %833 = vmatmul.bf16.gmra.mxu0 %v799
      %v834 = vpop.f32.mrf.mxu0
      %v835 = vadd.f32 0.0, %v834
      %v836 = vpop.f32.mrf.mxu0
      %v837 = vadd.f32 0.0, %v836
      %838 = vmatmul.bf16.gmra.mxu0 %v802
      %v839 = vpop.f32.mrf.mxu0
      %v840 = vadd.f32 0.0, %v839
      %v841 = vpop.f32.mrf.mxu0
      %v842 = vadd.f32 0.0, %v841
      %843 = vmatmul.bf16.gmra.mxu0 %v805
      %v844 = vpop.f32.mrf.mxu0
      %v845 = vadd.f32 0.0, %v844
      %v846 = vpop.f32.mrf.mxu0
      %v847 = vadd.f32 0.0, %v846
      %848 = vmatmul.bf16.gmra.mxu0 %v808
      %v849 = vpop.f32.mrf.mxu0
      %v850 = vadd.f32 0.0, %v849
      %v851 = vpop.f32.mrf.mxu0
      %v852 = vadd.f32 0.0, %v851
      %853 = vmatmul.bf16.gmra.mxu0 %v811
      %v854 = vpop.f32.mrf.mxu0
      %v855 = vadd.f32 0.0, %v854
      %v856 = vpop.f32.mrf.mxu0
      %v857 = vadd.f32 0.0, %v856
      %858 = vmatmul.bf16.gmra.mxu0 %v814
      %v859 = vpop.f32.mrf.mxu0
      %v860 = vadd.f32 0.0, %v859
      %v861 = vpop.f32.mrf.mxu0
      %v862 = vadd.f32 0.0, %v861
      %863 = vmatmul.bf16.gmra.mxu0 %v817
      %v864 = vpop.f32.mrf.mxu0
      %v865 = vadd.f32 0.0, %v864
      %v866 = vpop.f32.mrf.mxu0
      %v867 = vadd.f32 0.0, %v866
      %868 = vmatmul.bf16.gmra.mxu0 %v820
      %v869 = vpop.f32.mrf.mxu0
      %v870 = vadd.f32 0.0, %v869
      %v871 = vpop.f32.mrf.mxu0
      %v872 = vadd.f32 0.0, %v871
      %873 = vdwg.mxu0
      %v874 = vadd.f32 %v724, %v835
      %v875 = vadd.f32 %v725, %v837
      %v876 = vadd.f32 %v726, %v840
      %v877 = vadd.f32 %v727, %v842
      %v878 = vadd.f32 %v728, %v845
      %v879 = vadd.f32 %v729, %v847
      %v880 = vadd.f32 %v730, %v850
      %v881 = vadd.f32 %v731, %v852
      %v882 = vadd.f32 %v732, %v855
      %v883 = vadd.f32 %v733, %v857
      %v884 = vadd.f32 %v734, %v860
      %v885 = vadd.f32 %v735, %v862
      %v886 = vadd.f32 %v736, %v865
      %v887 = vadd.f32 %v737, %v867
      %v888 = vadd.f32 %v738, %v870
      %v889 = vadd.f32 %v739, %v872
      %v890 = vld [vmem:[%s323] sm:$0xf]
      %v891 = vld [vmem:[%s323 + $0x4] sm:$0xf]
      %v892 = vld [vmem:[%s323 + $0x8] sm:$0xf]
      %v893 = vld [vmem:[%s323 + $0xc] sm:$0xf]
      %v894 = vld [vmem:[%s323 + $0x10] sm:$0xf]
      %v895 = vld [vmem:[%s323 + $0x14] sm:$0xf]
      %v896 = vld [vmem:[%s323 + $0x18] sm:$0xf]
      %v897 = vld [vmem:[%s323 + $0x1c] sm:$0xf]
      %v898 = vld [vmem:[%s323 + $0x20] sm:$0xf]
      %v899 = vld [vmem:[%s323 + $0x24] sm:$0xf]
      %v900 = vld [vmem:[%s323 + $0x28] sm:$0xf]
      %v901 = vld [vmem:[%s323 + $0x2c] sm:$0xf]
      %v902 = vld [vmem:[%s323 + $0x30] sm:$0xf]
      %v903 = vld [vmem:[%s323 + $0x34] sm:$0xf]
      %v904 = vld [vmem:[%s323 + $0x38] sm:$0xf]
      %v905 = vld [vmem:[%s323 + $0x3c] sm:$0xf]
      %v906 = vld [vmem:[%s323 + $0x40] sm:$0x1]
      %s907 = scalar_lea.vmem %s3, 4
      %v908 = vld [vmem:[%s907] sm:$0x1]
      %v926 = vunpack.c.l.b16 %v890
      %v927 = vunpack.c.l.b16 %v891
      %v928 = vunpack.c.l.b16 %v892
      %v929 = vunpack.c.l.b16 %v893
      %v930 = vunpack.c.l.b16 %v894
      %v931 = vunpack.c.l.b16 %v895
      %v932 = vunpack.c.l.b16 %v896
      %v933 = vunpack.c.l.b16 %v897
      %v934 = vunpack.c.l.b16 %v898
      %v935 = vunpack.c.l.b16 %v899
      %v936 = vunpack.c.l.b16 %v900
      %v937 = vunpack.c.l.b16 %v901
      %v938 = vunpack.c.l.b16 %v902
      %v939 = vunpack.c.l.b16 %v903
      %v940 = vunpack.c.l.b16 %v904
      %v941 = vunpack.c.l.b16 %v905
      %v942 = vunpack.c.l.b16 %v906
      %v943 = vpack.c.b16 %v927, %v926
      %v944 = vpack.c.b16 %v929, %v928
      %v945 = vpack.c.b16 %v931, %v930
      %v946 = vpack.c.b16 %v933, %v932
      %v947 = vpack.c.b16 %v935, %v934
      %v948 = vpack.c.b16 %v937, %v936
      %v949 = vpack.c.b16 %v939, %v938
      %v950 = vpack.c.b16 %v941, %v940
      %v951 = vpack.c.b16 %v942, %v942
      %v953 = vshrl.u32 %v943, 16
      %v955 = vshll.u32 %v943, 16
      %v957 = vrot.slane %v955, 1
      %v958 = vor.u32 %v953, %v957
      %v960 = vshll.u32 %v944, 16
      %v962 = vrot.slane %v960, 1
      %v963 = vsel %vm409, %v958, %v962
      %v964 = vshrl.u32 %v944, 16
      %v966 = vor.u32 %v964, %v962
      %v968 = vshll.u32 %v945, 16
      %v970 = vrot.slane %v968, 1
      %v971 = vsel %vm409, %v966, %v970
      %v972 = vshrl.u32 %v945, 16
      %v974 = vor.u32 %v972, %v970
      %v976 = vshll.u32 %v946, 16
      %v978 = vrot.slane %v976, 1
      %v979 = vsel %vm409, %v974, %v978
      %v980 = vshrl.u32 %v946, 16
      %v982 = vor.u32 %v980, %v978
      %v984 = vshll.u32 %v947, 16
      %v986 = vrot.slane %v984, 1
      %v987 = vsel %vm409, %v982, %v986
      %v988 = vshrl.u32 %v947, 16
      %v990 = vor.u32 %v988, %v986
      %v992 = vshll.u32 %v948, 16
      %v994 = vrot.slane %v992, 1
      %v995 = vsel %vm409, %v990, %v994
      %v996 = vshrl.u32 %v948, 16
      %v998 = vor.u32 %v996, %v994
      %v1000 = vshll.u32 %v949, 16
      %v1002 = vrot.slane %v1000, 1
      %v1003 = vsel %vm409, %v998, %v1002
      %v1004 = vshrl.u32 %v949, 16
      %v1006 = vor.u32 %v1004, %v1002
      %v1008 = vshll.u32 %v950, 16
      %v1010 = vrot.slane %v1008, 1
      %v1011 = vsel %vm409, %v1006, %v1010
      %v1012 = vshrl.u32 %v950, 16
      %v1014 = vor.u32 %v1012, %v1010
      %v1016 = vshll.u32 %v951, 16
      %v1018 = vrot.slane %v1016, 1
      %v1019 = vsel %vm409, %v1014, %v1018
      %v1021 = vsel %vm478, %v963, 0
      %v1024 = vsel %vm478, %v971, 0
      %v1027 = vsel %vm478, %v979, 0
      %v1030 = vsel %vm478, %v987, 0
      %v1033 = vsel %vm478, %v995, 0
      %v1036 = vsel %vm478, %v1003, 0
      %v1039 = vsel %vm478, %v1011, 0
      %v1042 = vsel %vm478, %v1019, 0
      %v1045 = vsel %vm503, %v908, 0
      %1047 = vmatpush.bf16.msra.mxu0 0
      %1048 = vmatpush.bf16.msra.mxu0 0
      %1049 = vmatpush.bf16.msra.mxu0 0
      %1050 = vmatpush.bf16.msra.mxu0 0
      %1051 = vmatpush.bf16.msra.mxu0 0
      %1052 = vmatpush.bf16.msra.mxu0 0
      %1053 = vmatpush.bf16.msra.mxu0 0
      %1054 = vmatpush.bf16.msra.mxu0 %v1045
      %1055 = vmatmul.bf16.gmra.mxu0 %v1021
      %v1056 = vpop.f32.mrf.mxu0
      %v1057 = vadd.f32 0.0, %v1056
      %v1058 = vpop.f32.mrf.mxu0
      %v1059 = vadd.f32 0.0, %v1058
      %1060 = vmatmul.bf16.gmra.mxu0 %v1024
      %v1061 = vpop.f32.mrf.mxu0
      %v1062 = vadd.f32 0.0, %v1061
      %v1063 = vpop.f32.mrf.mxu0
      %v1064 = vadd.f32 0.0, %v1063
      %1065 = vmatmul.bf16.gmra.mxu0 %v1027
      %v1066 = vpop.f32.mrf.mxu0
      %v1067 = vadd.f32 0.0, %v1066
      %v1068 = vpop.f32.mrf.mxu0
      %v1069 = vadd.f32 0.0, %v1068
      %1070 = vmatmul.bf16.gmra.mxu0 %v1030
      %v1071 = vpop.f32.mrf.mxu0
      %v1072 = vadd.f32 0.0, %v1071
      %v1073 = vpop.f32.mrf.mxu0
      %v1074 = vadd.f32 0.0, %v1073
      %1075 = vmatmul.bf16.gmra.mxu0 %v1033
      %v1076 = vpop.f32.mrf.mxu0
      %v1077 = vadd.f32 0.0, %v1076
      %v1078 = vpop.f32.mrf.mxu0
      %v1079 = vadd.f32 0.0, %v1078
      %1080 = vmatmul.bf16.gmra.mxu0 %v1036
      %v1081 = vpop.f32.mrf.mxu0
      %v1082 = vadd.f32 0.0, %v1081
      %v1083 = vpop.f32.mrf.mxu0
      %v1084 = vadd.f32 0.0, %v1083
      %1085 = vmatmul.bf16.gmra.mxu0 %v1039
      %v1086 = vpop.f32.mrf.mxu0
      %v1087 = vadd.f32 0.0, %v1086
      %v1088 = vpop.f32.mrf.mxu0
      %v1089 = vadd.f32 0.0, %v1088
      %1090 = vmatmul.bf16.gmra.mxu0 %v1042
      %v1091 = vpop.f32.mrf.mxu0
      %v1092 = vadd.f32 0.0, %v1091
      %v1093 = vpop.f32.mrf.mxu0
      %v1094 = vadd.f32 0.0, %v1093
      %1095 = vdwg.mxu0
      %v1096 = vadd.f32 %v874, %v1057
      %v1097 = vadd.f32 %v875, %v1059
      %v1098 = vadd.f32 %v876, %v1062
      %v1099 = vadd.f32 %v877, %v1064
      %v1100 = vadd.f32 %v878, %v1067
      %v1101 = vadd.f32 %v879, %v1069
      %v1102 = vadd.f32 %v880, %v1072
      %v1103 = vadd.f32 %v881, %v1074
      %v1104 = vadd.f32 %v882, %v1077
      %v1105 = vadd.f32 %v883, %v1079
      %v1106 = vadd.f32 %v884, %v1082
      %v1107 = vadd.f32 %v885, %v1084
      %v1108 = vadd.f32 %v886, %v1087
      %v1109 = vadd.f32 %v887, %v1089
      %v1110 = vadd.f32 %v888, %v1092
      %v1111 = vadd.f32 %v889, %v1094
      %v1112 = vld [vmem:[%s323] sm:$0xe]
      %s1113 = scalar_lea.vmem %s3, 5
      %v1114 = vld [vmem:[%s1113] sm:$0x1]
      %v1116 = vunpack.c.l.b16 %v1112
      %v1117 = vpack.c.b16 %v927, %v1116
      %v1118 = vrot.slane %v1117, 1
      %v1119 = vrot.slane %v944, 1
      %v1120 = vsel %vm630, %v1118, %v1119
      %v1121 = vrot.slane %v945, 1
      %v1122 = vsel %vm630, %v1119, %v1121
      %v1123 = vrot.slane %v946, 1
      %v1124 = vsel %vm630, %v1121, %v1123
      %v1125 = vrot.slane %v947, 1
      %v1126 = vsel %vm630, %v1123, %v1125
      %v1127 = vrot.slane %v948, 1
      %v1128 = vsel %vm630, %v1125, %v1127
      %v1129 = vrot.slane %v949, 1
      %v1130 = vsel %vm630, %v1127, %v1129
      %v1131 = vrot.slane %v950, 1
      %v1132 = vsel %vm630, %v1129, %v1131
      %v1133 = vrot.slane %v951, 1
      %v1134 = vsel %vm630, %v1131, %v1133
      %v1136 = vsel %vm478, %v1120, 0
      %v1139 = vsel %vm478, %v1122, 0
      %v1142 = vsel %vm478, %v1124, 0
      %v1145 = vsel %vm478, %v1126, 0
      %v1148 = vsel %vm478, %v1128, 0
      %v1151 = vsel %vm478, %v1130, 0
      %v1154 = vsel %vm478, %v1132, 0
      %v1157 = vsel %vm478, %v1134, 0
      %v1160 = vsel %vm503, %v1114, 0
      %1162 = vmatpush.bf16.msra.mxu0 0
      %1163 = vmatpush.bf16.msra.mxu0 0
      %1164 = vmatpush.bf16.msra.mxu0 0
      %1165 = vmatpush.bf16.msra.mxu0 0
      %1166 = vmatpush.bf16.msra.mxu0 0
      %1167 = vmatpush.bf16.msra.mxu0 0
      %1168 = vmatpush.bf16.msra.mxu0 0
      %1169 = vmatpush.bf16.msra.mxu0 %v1160
      %1170 = vmatmul.bf16.gmra.mxu0 %v1136
      %v1171 = vpop.f32.mrf.mxu0
      %v1172 = vadd.f32 0.0, %v1171
      %v1173 = vpop.f32.mrf.mxu0
      %v1174 = vadd.f32 0.0, %v1173
      %1175 = vmatmul.bf16.gmra.mxu0 %v1139
      %v1176 = vpop.f32.mrf.mxu0
      %v1177 = vadd.f32 0.0, %v1176
      %v1178 = vpop.f32.mrf.mxu0
      %v1179 = vadd.f32 0.0, %v1178
      %1180 = vmatmul.bf16.gmra.mxu0 %v1142
      %v1181 = vpop.f32.mrf.mxu0
      %v1182 = vadd.f32 0.0, %v1181
      %v1183 = vpop.f32.mrf.mxu0
      %v1184 = vadd.f32 0.0, %v1183
      %1185 = vmatmul.bf16.gmra.mxu0 %v1145
      %v1186 = vpop.f32.mrf.mxu0
      %v1187 = vadd.f32 0.0, %v1186
      %v1188 = vpop.f32.mrf.mxu0
      %v1189 = vadd.f32 0.0, %v1188
      %1190 = vmatmul.bf16.gmra.mxu0 %v1148
      %v1191 = vpop.f32.mrf.mxu0
      %v1192 = vadd.f32 0.0, %v1191
      %v1193 = vpop.f32.mrf.mxu0
      %v1194 = vadd.f32 0.0, %v1193
      %1195 = vmatmul.bf16.gmra.mxu0 %v1151
      %v1196 = vpop.f32.mrf.mxu0
      %v1197 = vadd.f32 0.0, %v1196
      %v1198 = vpop.f32.mrf.mxu0
      %v1199 = vadd.f32 0.0, %v1198
      %1200 = vmatmul.bf16.gmra.mxu0 %v1154
      %v1201 = vpop.f32.mrf.mxu0
      %v1202 = vadd.f32 0.0, %v1201
      %v1203 = vpop.f32.mrf.mxu0
      %v1204 = vadd.f32 0.0, %v1203
      %1205 = vmatmul.bf16.gmra.mxu0 %v1157
      %v1206 = vpop.f32.mrf.mxu0
      %v1207 = vadd.f32 0.0, %v1206
      %v1208 = vpop.f32.mrf.mxu0
      %v1209 = vadd.f32 0.0, %v1208
      %1210 = vdwg.mxu0
      %v1211 = vadd.f32 %v1096, %v1172
      %v1212 = vadd.f32 %v1097, %v1174
      %v1213 = vadd.f32 %v1098, %v1177
      %v1214 = vadd.f32 %v1099, %v1179
      %v1215 = vadd.f32 %v1100, %v1182
      %v1216 = vadd.f32 %v1101, %v1184
      %v1217 = vadd.f32 %v1102, %v1187
      %v1218 = vadd.f32 %v1103, %v1189
      %v1219 = vadd.f32 %v1104, %v1192
      %v1220 = vadd.f32 %v1105, %v1194
      %v1221 = vadd.f32 %v1106, %v1197
      %v1222 = vadd.f32 %v1107, %v1199
      %v1223 = vadd.f32 %v1108, %v1202
      %v1224 = vadd.f32 %v1109, %v1204
      %v1225 = vadd.f32 %v1110, %v1207
      %v1226 = vadd.f32 %v1111, %v1209
      %v1227 = vld [vmem:[%s334] sm:$0xf]
      %v1228 = vld [vmem:[%s334 + $0x4] sm:$0xf]
      %v1229 = vld [vmem:[%s334 + $0x8] sm:$0xf]
      %v1230 = vld [vmem:[%s334 + $0xc] sm:$0xf]
      %v1231 = vld [vmem:[%s334 + $0x10] sm:$0xf]
      %v1232 = vld [vmem:[%s334 + $0x14] sm:$0xf]
      %v1233 = vld [vmem:[%s334 + $0x18] sm:$0xf]
      %v1234 = vld [vmem:[%s334 + $0x1c] sm:$0xf]
      %v1235 = vld [vmem:[%s334 + $0x20] sm:$0xf]
      %v1236 = vld [vmem:[%s334 + $0x24] sm:$0xf]
      %v1237 = vld [vmem:[%s334 + $0x28] sm:$0xf]
      %v1238 = vld [vmem:[%s334 + $0x2c] sm:$0xf]
      %v1239 = vld [vmem:[%s334 + $0x30] sm:$0xf]
      %v1240 = vld [vmem:[%s334 + $0x34] sm:$0xf]
      %v1241 = vld [vmem:[%s334 + $0x38] sm:$0xf]
      %v1242 = vld [vmem:[%s334 + $0x3c] sm:$0xf]
      %s1243 = scalar_lea.vmem %s3, 6
      %v1244 = vld [vmem:[%s1243] sm:$0x1]
      %v1261 = vunpack.c.l.b16 %v1227
      %v1262 = vunpack.c.l.b16 %v1228
      %v1263 = vunpack.c.l.b16 %v1229
      %v1264 = vunpack.c.l.b16 %v1230
      %v1265 = vunpack.c.l.b16 %v1231
      %v1266 = vunpack.c.l.b16 %v1232
      %v1267 = vunpack.c.l.b16 %v1233
      %v1268 = vunpack.c.l.b16 %v1234
      %v1269 = vunpack.c.l.b16 %v1235
      %v1270 = vunpack.c.l.b16 %v1236
      %v1271 = vunpack.c.l.b16 %v1237
      %v1272 = vunpack.c.l.b16 %v1238
      %v1273 = vunpack.c.l.b16 %v1239
      %v1274 = vunpack.c.l.b16 %v1240
      %v1275 = vunpack.c.l.b16 %v1241
      %v1276 = vunpack.c.l.b16 %v1242
      %v1277 = vpack.c.b16 %v1262, %v1261
      %v1278 = vpack.c.b16 %v1264, %v1263
      %v1279 = vpack.c.b16 %v1266, %v1265
      %v1280 = vpack.c.b16 %v1268, %v1267
      %v1281 = vpack.c.b16 %v1270, %v1269
      %v1282 = vpack.c.b16 %v1272, %v1271
      %v1283 = vpack.c.b16 %v1274, %v1273
      %v1284 = vpack.c.b16 %v1276, %v1275
      %v1286 = vsel %vm478, %v1277, 0
      %v1289 = vsel %vm478, %v1278, 0
      %v1292 = vsel %vm478, %v1279, 0
      %v1295 = vsel %vm478, %v1280, 0
      %v1298 = vsel %vm478, %v1281, 0
      %v1301 = vsel %vm478, %v1282, 0
      %v1304 = vsel %vm478, %v1283, 0
      %v1307 = vsel %vm478, %v1284, 0
      %v1310 = vsel %vm503, %v1244, 0
      %1312 = vmatpush.bf16.msra.mxu0 0
      %1313 = vmatpush.bf16.msra.mxu0 0
      %1314 = vmatpush.bf16.msra.mxu0 0
      %1315 = vmatpush.bf16.msra.mxu0 0
      %1316 = vmatpush.bf16.msra.mxu0 0
      %1317 = vmatpush.bf16.msra.mxu0 0
      %1318 = vmatpush.bf16.msra.mxu0 0
      %1319 = vmatpush.bf16.msra.mxu0 %v1310
      %1320 = vmatmul.bf16.gmra.mxu0 %v1286
      %v1321 = vpop.f32.mrf.mxu0
      %v1322 = vadd.f32 0.0, %v1321
      %v1323 = vpop.f32.mrf.mxu0
      %v1324 = vadd.f32 0.0, %v1323
      %1325 = vmatmul.bf16.gmra.mxu0 %v1289
      %v1326 = vpop.f32.mrf.mxu0
      %v1327 = vadd.f32 0.0, %v1326
      %v1328 = vpop.f32.mrf.mxu0
      %v1329 = vadd.f32 0.0, %v1328
      %1330 = vmatmul.bf16.gmra.mxu0 %v1292
      %v1331 = vpop.f32.mrf.mxu0
      %v1332 = vadd.f32 0.0, %v1331
      %v1333 = vpop.f32.mrf.mxu0
      %v1334 = vadd.f32 0.0, %v1333
      %1335 = vmatmul.bf16.gmra.mxu0 %v1295
      %v1336 = vpop.f32.mrf.mxu0
      %v1337 = vadd.f32 0.0, %v1336
      %v1338 = vpop.f32.mrf.mxu0
      %v1339 = vadd.f32 0.0, %v1338
      %1340 = vmatmul.bf16.gmra.mxu0 %v1298
      %v1341 = vpop.f32.mrf.mxu0
      %v1342 = vadd.f32 0.0, %v1341
      %v1343 = vpop.f32.mrf.mxu0
      %v1344 = vadd.f32 0.0, %v1343
      %1345 = vmatmul.bf16.gmra.mxu0 %v1301
      %v1346 = vpop.f32.mrf.mxu0
      %v1347 = vadd.f32 0.0, %v1346
      %v1348 = vpop.f32.mrf.mxu0
      %v1349 = vadd.f32 0.0, %v1348
      %1350 = vmatmul.bf16.gmra.mxu0 %v1304
      %v1351 = vpop.f32.mrf.mxu0
      %v1352 = vadd.f32 0.0, %v1351
      %v1353 = vpop.f32.mrf.mxu0
      %v1354 = vadd.f32 0.0, %v1353
      %1355 = vmatmul.bf16.gmra.mxu0 %v1307
      %v1356 = vpop.f32.mrf.mxu0
      %v1357 = vadd.f32 0.0, %v1356
      %v1358 = vpop.f32.mrf.mxu0
      %v1359 = vadd.f32 0.0, %v1358
      %1360 = vdwg.mxu0
      %v1361 = vadd.f32 %v1211, %v1322
      %v1362 = vadd.f32 %v1212, %v1324
      %v1363 = vadd.f32 %v1213, %v1327
      %v1364 = vadd.f32 %v1214, %v1329
      %v1365 = vadd.f32 %v1215, %v1332
      %v1366 = vadd.f32 %v1216, %v1334
      %v1367 = vadd.f32 %v1217, %v1337
      %v1368 = vadd.f32 %v1218, %v1339
      %v1369 = vadd.f32 %v1219, %v1342
      %v1370 = vadd.f32 %v1220, %v1344
      %v1371 = vadd.f32 %v1221, %v1347
      %v1372 = vadd.f32 %v1222, %v1349
      %v1373 = vadd.f32 %v1223, %v1352
      %v1374 = vadd.f32 %v1224, %v1354
      %v1375 = vadd.f32 %v1225, %v1357
      %v1376 = vadd.f32 %v1226, %v1359
      %v1377 = vld [vmem:[%s334] sm:$0xf]
      %v1378 = vld [vmem:[%s334 + $0x4] sm:$0xf]
      %v1379 = vld [vmem:[%s334 + $0x8] sm:$0xf]
      %v1380 = vld [vmem:[%s334 + $0xc] sm:$0xf]
      %v1381 = vld [vmem:[%s334 + $0x10] sm:$0xf]
      %v1382 = vld [vmem:[%s334 + $0x14] sm:$0xf]
      %v1383 = vld [vmem:[%s334 + $0x18] sm:$0xf]
      %v1384 = vld [vmem:[%s334 + $0x1c] sm:$0xf]
      %v1385 = vld [vmem:[%s334 + $0x20] sm:$0xf]
      %v1386 = vld [vmem:[%s334 + $0x24] sm:$0xf]
      %v1387 = vld [vmem:[%s334 + $0x28] sm:$0xf]
      %v1388 = vld [vmem:[%s334 + $0x2c] sm:$0xf]
      %v1389 = vld [vmem:[%s334 + $0x30] sm:$0xf]
      %v1390 = vld [vmem:[%s334 + $0x34] sm:$0xf]
      %v1391 = vld [vmem:[%s334 + $0x38] sm:$0xf]
      %v1392 = vld [vmem:[%s334 + $0x3c] sm:$0xf]
      %v1393 = vld [vmem:[%s334 + $0x40] sm:$0x1]
      %s1394 = scalar_lea.vmem %s3, 7
      %v1395 = vld [vmem:[%s1394] sm:$0x1]
      %v1413 = vunpack.c.l.b16 %v1377
      %v1414 = vunpack.c.l.b16 %v1378
      %v1415 = vunpack.c.l.b16 %v1379
      %v1416 = vunpack.c.l.b16 %v1380
      %v1417 = vunpack.c.l.b16 %v1381
      %v1418 = vunpack.c.l.b16 %v1382
      %v1419 = vunpack.c.l.b16 %v1383
      %v1420 = vunpack.c.l.b16 %v1384
      %v1421 = vunpack.c.l.b16 %v1385
      %v1422 = vunpack.c.l.b16 %v1386
      %v1423 = vunpack.c.l.b16 %v1387
      %v1424 = vunpack.c.l.b16 %v1388
      %v1425 = vunpack.c.l.b16 %v1389
      %v1426 = vunpack.c.l.b16 %v1390
      %v1427 = vunpack.c.l.b16 %v1391
      %v1428 = vunpack.c.l.b16 %v1392
      %v1429 = vunpack.c.l.b16 %v1393
      %v1430 = vpack.c.b16 %v1414, %v1413
      %v1431 = vpack.c.b16 %v1416, %v1415
      %v1432 = vpack.c.b16 %v1418, %v1417
      %v1433 = vpack.c.b16 %v1420, %v1419
      %v1434 = vpack.c.b16 %v1422, %v1421
      %v1435 = vpack.c.b16 %v1424, %v1423
      %v1436 = vpack.c.b16 %v1426, %v1425
      %v1437 = vpack.c.b16 %v1428, %v1427
      %v1438 = vpack.c.b16 %v1429, %v1429
      %v1440 = vshrl.u32 %v1430, 16
      %v1442 = vshll.u32 %v1430, 16
      %v1444 = vrot.slane %v1442, 1
      %v1445 = vor.u32 %v1440, %v1444
      %v1447 = vshll.u32 %v1431, 16
      %v1449 = vrot.slane %v1447, 1
      %v1450 = vsel %vm409, %v1445, %v1449
      %v1451 = vshrl.u32 %v1431, 16
      %v1453 = vor.u32 %v1451, %v1449
      %v1455 = vshll.u32 %v1432, 16
      %v1457 = vrot.slane %v1455, 1
      %v1458 = vsel %vm409, %v1453, %v1457
      %v1459 = vshrl.u32 %v1432, 16
      %v1461 = vor.u32 %v1459, %v1457
      %v1463 = vshll.u32 %v1433, 16
      %v1465 = vrot.slane %v1463, 1
      %v1466 = vsel %vm409, %v1461, %v1465
      %v1467 = vshrl.u32 %v1433, 16
      %v1469 = vor.u32 %v1467, %v1465
      %v1471 = vshll.u32 %v1434, 16
      %v1473 = vrot.slane %v1471, 1
      %v1474 = vsel %vm409, %v1469, %v1473
      %v1475 = vshrl.u32 %v1434, 16
      %v1477 = vor.u32 %v1475, %v1473
      %v1479 = vshll.u32 %v1435, 16
      %v1481 = vrot.slane %v1479, 1
      %v1482 = vsel %vm409, %v1477, %v1481
      %v1483 = vshrl.u32 %v1435, 16
      %v1485 = vor.u32 %v1483, %v1481
      %v1487 = vshll.u32 %v1436, 16
      %v1489 = vrot.slane %v1487, 1
      %v1490 = vsel %vm409, %v1485, %v1489
      %v1491 = vshrl.u32 %v1436, 16
      %v1493 = vor.u32 %v1491, %v1489
      %v1495 = vshll.u32 %v1437, 16
      %v1497 = vrot.slane %v1495, 1
      %v1498 = vsel %vm409, %v1493, %v1497
      %v1499 = vshrl.u32 %v1437, 16
      %v1501 = vor.u32 %v1499, %v1497
      %v1503 = vshll.u32 %v1438, 16
      %v1505 = vrot.slane %v1503, 1
      %v1506 = vsel %vm409, %v1501, %v1505
      %v1508 = vsel %vm478, %v1450, 0
      %v1511 = vsel %vm478, %v1458, 0
      %v1514 = vsel %vm478, %v1466, 0
      %v1517 = vsel %vm478, %v1474, 0
      %v1520 = vsel %vm478, %v1482, 0
      %v1523 = vsel %vm478, %v1490, 0
      %v1526 = vsel %vm478, %v1498, 0
      %v1529 = vsel %vm478, %v1506, 0
      %v1532 = vsel %vm503, %v1395, 0
      %1534 = vmatpush.bf16.msra.mxu0 0
      %1535 = vmatpush.bf16.msra.mxu0 0
      %1536 = vmatpush.bf16.msra.mxu0 0
      %1537 = vmatpush.bf16.msra.mxu0 0
      %1538 = vmatpush.bf16.msra.mxu0 0
      %1539 = vmatpush.bf16.msra.mxu0 0
      %1540 = vmatpush.bf16.msra.mxu0 0
      %1541 = vmatpush.bf16.msra.mxu0 %v1532
      %1542 = vmatmul.bf16.gmra.mxu0 %v1508
      %v1543 = vpop.f32.mrf.mxu0
      %v1544 = vadd.f32 0.0, %v1543
      %v1545 = vpop.f32.mrf.mxu0
      %v1546 = vadd.f32 0.0, %v1545
      %1547 = vmatmul.bf16.gmra.mxu0 %v1511
      %v1548 = vpop.f32.mrf.mxu0
      %v1549 = vadd.f32 0.0, %v1548
      %v1550 = vpop.f32.mrf.mxu0
      %v1551 = vadd.f32 0.0, %v1550
      %1552 = vmatmul.bf16.gmra.mxu0 %v1514
      %v1553 = vpop.f32.mrf.mxu0
      %v1554 = vadd.f32 0.0, %v1553
      %v1555 = vpop.f32.mrf.mxu0
      %v1556 = vadd.f32 0.0, %v1555
      %1557 = vmatmul.bf16.gmra.mxu0 %v1517
      %v1558 = vpop.f32.mrf.mxu0
      %v1559 = vadd.f32 0.0, %v1558
      %v1560 = vpop.f32.mrf.mxu0
      %v1561 = vadd.f32 0.0, %v1560
      %1562 = vmatmul.bf16.gmra.mxu0 %v1520
      %v1563 = vpop.f32.mrf.mxu0
      %v1564 = vadd.f32 0.0, %v1563
      %v1565 = vpop.f32.mrf.mxu0
      %v1566 = vadd.f32 0.0, %v1565
      %1567 = vmatmul.bf16.gmra.mxu0 %v1523
      %v1568 = vpop.f32.mrf.mxu0
      %v1569 = vadd.f32 0.0, %v1568
      %v1570 = vpop.f32.mrf.mxu0
      %v1571 = vadd.f32 0.0, %v1570
      %1572 = vmatmul.bf16.gmra.mxu0 %v1526
      %v1573 = vpop.f32.mrf.mxu0
      %v1574 = vadd.f32 0.0, %v1573
      %v1575 = vpop.f32.mrf.mxu0
      %v1576 = vadd.f32 0.0, %v1575
      %1577 = vmatmul.bf16.gmra.mxu0 %v1529
      %v1578 = vpop.f32.mrf.mxu0
      %v1579 = vadd.f32 0.0, %v1578
      %v1580 = vpop.f32.mrf.mxu0
      %v1581 = vadd.f32 0.0, %v1580
      %1582 = vdwg.mxu0
      %v1583 = vadd.f32 %v1361, %v1544
      %v1584 = vadd.f32 %v1362, %v1546
      %v1585 = vadd.f32 %v1363, %v1549
      %v1586 = vadd.f32 %v1364, %v1551
      %v1587 = vadd.f32 %v1365, %v1554
      %v1588 = vadd.f32 %v1366, %v1556
      %v1589 = vadd.f32 %v1367, %v1559
      %v1590 = vadd.f32 %v1368, %v1561
      %v1591 = vadd.f32 %v1369, %v1564
      %v1592 = vadd.f32 %v1370, %v1566
      %v1593 = vadd.f32 %v1371, %v1569
      %v1594 = vadd.f32 %v1372, %v1571
      %v1595 = vadd.f32 %v1373, %v1574
      %v1596 = vadd.f32 %v1374, %v1576
      %v1597 = vadd.f32 %v1375, %v1579
      %v1598 = vadd.f32 %v1376, %v1581
      %v1599 = vld [vmem:[%s334] sm:$0xe]
      %s1600 = scalar_lea.vmem %s3, 8
      %v1601 = vld [vmem:[%s1600] sm:$0x1]
      %v1603 = vunpack.c.l.b16 %v1599
      %v1604 = vpack.c.b16 %v1414, %v1603
      %v1605 = vrot.slane %v1604, 1
      %v1606 = vrot.slane %v1431, 1
      %v1607 = vsel %vm630, %v1605, %v1606
      %v1608 = vrot.slane %v1432, 1
      %v1609 = vsel %vm630, %v1606, %v1608
      %v1610 = vrot.slane %v1433, 1
      %v1611 = vsel %vm630, %v1608, %v1610
      %v1612 = vrot.slane %v1434, 1
      %v1613 = vsel %vm630, %v1610, %v1612
      %v1614 = vrot.slane %v1435, 1
      %v1615 = vsel %vm630, %v1612, %v1614
      %v1616 = vrot.slane %v1436, 1
      %v1617 = vsel %vm630, %v1614, %v1616
      %v1618 = vrot.slane %v1437, 1
      %v1619 = vsel %vm630, %v1616, %v1618
      %v1620 = vrot.slane %v1438, 1
      %v1621 = vsel %vm630, %v1618, %v1620
      %v1623 = vsel %vm478, %v1607, 0
      %v1626 = vsel %vm478, %v1609, 0
      %v1629 = vsel %vm478, %v1611, 0
      %v1632 = vsel %vm478, %v1613, 0
      %v1635 = vsel %vm478, %v1615, 0
      %v1638 = vsel %vm478, %v1617, 0
      %v1641 = vsel %vm478, %v1619, 0
      %v1644 = vsel %vm478, %v1621, 0
      %v1647 = vsel %vm503, %v1601, 0
      %1649 = vmatpush.bf16.msra.mxu0 0
      %1650 = vmatpush.bf16.msra.mxu0 0
      %1651 = vmatpush.bf16.msra.mxu0 0
      %1652 = vmatpush.bf16.msra.mxu0 0
      %1653 = vmatpush.bf16.msra.mxu0 0
      %1654 = vmatpush.bf16.msra.mxu0 0
      %1655 = vmatpush.bf16.msra.mxu0 0
      %1656 = vmatpush.bf16.msra.mxu0 %v1647
      %1657 = vmatmul.bf16.gmra.mxu0 %v1623
      %v1658 = vpop.f32.mrf.mxu0
      %v1659 = vadd.f32 0.0, %v1658
      %v1660 = vpop.f32.mrf.mxu0
      %v1661 = vadd.f32 0.0, %v1660
      %1662 = vmatmul.bf16.gmra.mxu0 %v1626
      %v1663 = vpop.f32.mrf.mxu0
      %v1664 = vadd.f32 0.0, %v1663
      %v1665 = vpop.f32.mrf.mxu0
      %v1666 = vadd.f32 0.0, %v1665
      %1667 = vmatmul.bf16.gmra.mxu0 %v1629
      %v1668 = vpop.f32.mrf.mxu0
      %v1669 = vadd.f32 0.0, %v1668
      %v1670 = vpop.f32.mrf.mxu0
      %v1671 = vadd.f32 0.0, %v1670
      %1672 = vmatmul.bf16.gmra.mxu0 %v1632
      %v1673 = vpop.f32.mrf.mxu0
      %v1674 = vadd.f32 0.0, %v1673
      %v1675 = vpop.f32.mrf.mxu0
      %v1676 = vadd.f32 0.0, %v1675
      %1677 = vmatmul.bf16.gmra.mxu0 %v1635
      %v1678 = vpop.f32.mrf.mxu0
      %v1679 = vadd.f32 0.0, %v1678
      %v1680 = vpop.f32.mrf.mxu0
      %v1681 = vadd.f32 0.0, %v1680
      %1682 = vmatmul.bf16.gmra.mxu0 %v1638
      %v1683 = vpop.f32.mrf.mxu0
      %v1684 = vadd.f32 0.0, %v1683
      %v1685 = vpop.f32.mrf.mxu0
      %v1686 = vadd.f32 0.0, %v1685
      %1687 = vmatmul.bf16.gmra.mxu0 %v1641
      %v1688 = vpop.f32.mrf.mxu0
      %v1689 = vadd.f32 0.0, %v1688
      %v1690 = vpop.f32.mrf.mxu0
      %v1691 = vadd.f32 0.0, %v1690
      %1692 = vmatmul.bf16.gmra.mxu0 %v1644
      %v1693 = vpop.f32.mrf.mxu0
      %v1694 = vadd.f32 0.0, %v1693
      %v1695 = vpop.f32.mrf.mxu0
      %v1696 = vadd.f32 0.0, %v1695
      %1697 = vdwg.mxu0
      %v1698 = vadd.f32 %v1583, %v1659
      %v1699 = vadd.f32 %v1584, %v1661
      %v1700 = vadd.f32 %v1585, %v1664
      %v1701 = vadd.f32 %v1586, %v1666
      %v1702 = vadd.f32 %v1587, %v1669
      %v1703 = vadd.f32 %v1588, %v1671
      %v1704 = vadd.f32 %v1589, %v1674
      %v1705 = vadd.f32 %v1590, %v1676
      %v1706 = vadd.f32 %v1591, %v1679
      %v1707 = vadd.f32 %v1592, %v1681
      %v1708 = vadd.f32 %v1593, %v1684
      %v1709 = vadd.f32 %v1594, %v1686
      %v1710 = vadd.f32 %v1595, %v1689
      %v1711 = vadd.f32 %v1596, %v1691
      %v1712 = vadd.f32 %v1597, %v1694
      %v1713 = vadd.f32 %v1598, %v1696
      %v1714 = vld [vmem:[#allocation2] sm:$0x1]
      %v1716 = vperm.slane %v1714, 0
      %v1718 = vadd.f32 %v1698, %v1716
      %v1719 = vadd.f32 %v1699, %v1716
      %v1720 = vadd.f32 %v1700, %v1716
      %v1721 = vadd.f32 %v1701, %v1716
      %v1722 = vadd.f32 %v1702, %v1716
      %v1723 = vadd.f32 %v1703, %v1716
      %v1724 = vadd.f32 %v1704, %v1716
      %v1725 = vadd.f32 %v1705, %v1716
      %v1726 = vadd.f32 %v1706, %v1716
      %v1727 = vadd.f32 %v1707, %v1716
      %v1728 = vadd.f32 %v1708, %v1716
      %v1729 = vadd.f32 %v1709, %v1716
      %v1730 = vadd.f32 %v1710, %v1716
      %v1731 = vadd.f32 %v1711, %v1716
      %v1732 = vadd.f32 %v1712, %v1716
      %v1733 = vadd.f32 %v1713, %v1716
      %vm1734 = vcmask 7168
      %1735 = vst.msk [vmem:[%s344] sm:$0xff] %vm1734, %v1718
      %1736 = vst.msk [vmem:[%s344 + $0x8] sm:$0xff] %vm1734, %v1719
      %1737 = vst.msk [vmem:[%s344 + $0x10] sm:$0xff] %vm1734, %v1720
      %1738 = vst.msk [vmem:[%s344 + $0x18] sm:$0xff] %vm1734, %v1721
      %1739 = vst.msk [vmem:[%s344 + $0x20] sm:$0xff] %vm1734, %v1722
      %1740 = vst.msk [vmem:[%s344 + $0x28] sm:$0xff] %vm1734, %v1723
      %1741 = vst.msk [vmem:[%s344 + $0x30] sm:$0xff] %vm1734, %v1724
      %1742 = vst.msk [vmem:[%s344 + $0x38] sm:$0xff] %vm1734, %v1725
      %1743 = vst.msk [vmem:[%s344 + $0x40] sm:$0xff] %vm1734, %v1726
      %1744 = vst.msk [vmem:[%s344 + $0x48] sm:$0xff] %vm1734, %v1727
      %1745 = vst.msk [vmem:[%s344 + $0x50] sm:$0xff] %vm1734, %v1728
      %1746 = vst.msk [vmem:[%s344 + $0x58] sm:$0xff] %vm1734, %v1729
      %1747 = vst.msk [vmem:[%s344 + $0x60] sm:$0xff] %vm1734, %v1730
      %1748 = vst.msk [vmem:[%s344 + $0x68] sm:$0xff] %vm1734, %v1731
      %1749 = vst.msk [vmem:[%s344 + $0x70] sm:$0xff] %vm1734, %v1732
      %1750 = vst.msk [vmem:[%s344 + $0x78] sm:$0xff] %vm1734, %v1733
      %p1751 = scmp.lt.s32.totalorder %s22, 1
      %s1752 = scalar_select %p1751, %s22, 1
      %p1753 = scmp.lt.s32.totalorder %s23, 127
      %s1754 = scalar_select %p1753, %s23, 127
      %s1755 = smul.addr %s1754, 16
      %s1756 = smul.addr %s1752, 2048
      %s1757 = sadd.s32 %s1755, %s1756
      %s1758 = smul.addr %s1757, 8
      %s1759 = scalar_lea.vmem %s5, %s1758
      // Predicated region
      $region41: #{decoder_forward.21} parent=39 // pred_check
        %p1760 = pneg %p180
      $region42: #{decoder_forward.21} parent=39 // pred_check_branch
        %1762 = sbr.rel (%p1760) target = $region44
      $region43: #{decoder_forward.21} parent=39 // pred_region
        _
      $region44: #{decoder_forward.21} parent=39 // pred_fallthru
        _
    $region40: #{decoder_forward.21} parent=5 // pred_fallthru
      _
    %p1763 = scmp.le.s32.totalorder 2, %s13
    // Predicated region
    $region45: #{decoder_forward.21} parent=5 // pred_check
      %p1764 = pneg %p1763
    $region46: #{decoder_forward.21} parent=5 // pred_check_branch
      %1766 = sbr.rel (%p1764) target = $region48
    $region47: #{decoder_forward.21} parent=5 // pred_region
      %s1767 = ssub.s32 %s13, 2
      // Predicated region
      $region49: #{decoder_forward.21} parent=47 // pred_check
        %p1768 = pneg %p186
      $region50: #{decoder_forward.21} parent=47 // pred_check_branch
        %1770 = sbr.rel (%p1768) target = $region52
      $region51: #{decoder_forward.21} parent=47 // pred_region
        %p1771 = scmp.lt.s32.totalorder %s24, 1
        %s1772 = scalar_select %p1771, %s24, 1
        %p1773 = scmp.lt.s32.totalorder %s25, 127
        %s1774 = scalar_select %p1773, %s25, 127
        %s1775 = smul.addr %s1774, 16
        %s1776 = smul.addr %s1772, 2048
        %s1777 = sadd.s32 %s1775, %s1776
        %s1778 = smul.addr %s1777, 8
        %s1779 = scalar_lea.vmem %s5, %s1778
      $region52: #{decoder_forward.21} parent=47 // pred_fallthru
        _
    $region48: #{decoder_forward.21} parent=5 // pred_fallthru
      _
  $region6: #{decoder_forward.21} parent=0 // loop_footer
    %s17 = sadd.s32 1, %s13
  $region7: #{decoder_forward.21} parent=0 // loop_footer_branch
    %12 = sbr.rel target = $region3
  $region8: #{decoder_forward.21} parent=0 // loop_exit
    _

</llo_original>
